<compile_context>
chip_gen: v6e
topology: v6e:2x2x1
jax: 0.10.0
libtpu: 0.0.40
codegen_flags: <defaults>
</compile_context>

<pallas_src>
import functools

import jax
import jax.numpy as jnp
from jax import lax
from jax.experimental import pallas as pl
from jax.experimental.pallas import tpu as pltpu


def _round_up(x, m):
    return ((x + m - 1) // m) * m


# ---------------------------------------------------------------------------
# Fused Pallas kernel
# ---------------------------------------------------------------------------
def _augode_fused_kernel(lhs1_ref, w1_ref, w2_ref, pp_ref, o_ref,
                         k1pad_ref, slab_ref,
                         *, n, h, w, spad, ksize, eps, slope):
    m = n * h * w
    hw = h * w
    c1p = w1_ref.shape[1]          # padded conv1-out == conv2-in channels (128)
    c2p = w2_ref.shape[1]          # padded conv2-out channels (128)
    hp = h + 2 * spad
    wp = w + 2 * spad
    inv_m = 1.0 / m

    def batchnorm(acc, g, be):
        # training-mode BN (biased variance over all N*H*W rows, f32 math);
        # rsqrt(var+eps)*gamma folded into one (1,C) scale before the wide mul.
        mean = jnp.sum(acc, axis=0, keepdims=True) * inv_m
        cen = acc - mean
        var = jnp.sum(cen * cen, axis=0, keepdims=True) * inv_m
        scale = lax.rsqrt(var + eps) * g
        return cen * scale + be

    # ---- conv1: one MXU pass over the wrapper-built im2col LHS (bf16 -> f32)
    # (conv bias omitted: cancelled exactly by the BN mean subtraction)
    acc1 = jnp.dot(lhs1_ref[...], w1_ref[...],
                   preferred_element_type=jnp.float32)           # (m, c1p)

    # ---- BN1 + LeakyReLU(0.1), then inject conv2's t channel (lane n_feats)
    y1 = batchnorm(acc1, pp_ref[0:1, :c1p], pp_ref[1:2, :c1p])
    y1 = jnp.maximum(y1, slope * y1)
    y1 = y1 + pp_ref[2:3, :c1p]          # one-hot row: t at the reserved lane

    # ---- stage k1 with a zero spatial halo: zero ONLY the halo ring
    k1pad_ref[:, 0:spad, :, :] = jnp.zeros((n, spad, wp, c1p), jnp.float32)
    k1pad_ref[:, h + spad:hp, :, :] = jnp.zeros((n, spad, wp, c1p), jnp.float32)
    k1pad_ref[:, spad:h + spad, 0:spad, :] = jnp.zeros((n, h, spad, c1p),
                                                       jnp.float32)
    k1pad_ref[:, spad:h + spad, w + spad:wp, :] = jnp.zeros((n, h, spad, c1p),
                                                            jnp.float32)
    k1pad_ref[:, spad:h + spad, spad:w + spad, :] = y1.reshape(n, h, w, c1p)

    # ---- conv2 im2col: each shifted window written ONCE into the bf16 slab
    # (lane offsets are multiples of c1p=128 -> aligned, unmasked stores)
    for kh in range(ksize):
        for kw in range(ksize):
            tap = kh * ksize + kw
            ks = k1pad_ref[:, kh:kh + h, kw:kw + w, :]            # (n,h,w,c1p)
            slab_ref[:, tap * c1p:(tap + 1) * c1p] = (
                ks.reshape(m, c1p).astype(jnp.bfloat16))

    # ---- conv2: ONE matmul, contraction depth = K*K*c1p (accumulates in the
    # MXU result path instead of bouncing a 256 KB f32 value through VMEM)
    acc2 = jnp.dot(slab_ref[...], w2_ref[...],
                   preferred_element_type=jnp.float32)            # (m, c2p)

    # ---- BN2 -> (n, c2p, h*w) output via per-batch XLU transposes
    y2 = batchnorm(acc2, pp_ref[3:4, :c2p], pp_ref[4:5, :c2p])
    for b in range(n):
        o_ref[b, :, :] = jnp.transpose(y2[b * hw:(b + 1) * hw, :])


# ---------------------------------------------------------------------------
# Plain-JAX layout glue (tiny; conv1's im2col LHS is ~128 KB bf16 in HBM)
# ---------------------------------------------------------------------------
def _prep_lhs1(t, x_nchw, ksize, kc1p):
    n, c, h, w = x_nchw.shape
    spad = ksize // 2
    x = jnp.transpose(x_nchw, (0, 2, 3, 1)).astype(jnp.float32)   # NCHW -> NHWC
    tch = jnp.full((n, h, w, 1), t, jnp.float32)                  # concat([t, x])
    xc = jnp.concatenate([tch, x], axis=-1)                       # (n,h,w,c+1)
    xp = jnp.pad(xc, ((0, 0), (spad, spad), (spad, spad), (0, 0)))
    cols = [xp[:, kh:kh + h, kw:kw + w, :]
            for kh in range(ksize) for kw in range(ksize)]
    lhs = jnp.concatenate(cols, axis=-1).reshape(n * h * w,
                                                 ksize * ksize * (c + 1))
    lhs = jnp.pad(lhs, ((0, 0), (0, kc1p - lhs.shape[-1])))
    return lhs.astype(jnp.bfloat16)


def _prep_w1(w_oihw, kc1p, c1p):
    # torch OIHW (cout, cin, K, K) -> (kc1p, c1p); rows ordered (kh, kw, cin)
    # to match the im2col LHS columns; input-channel order is [t, x...].
    cout, cin, k, _ = w_oihw.shape
    wt = jnp.transpose(w_oihw, (2, 3, 1, 0)).reshape(k * k * cin, cout)
    wt = jnp.pad(wt, ((0, kc1p - k * k * cin), (0, c1p - cout)))
    return wt.astype(jnp.bfloat16)


def _prep_w2(w_oihw, c1p, c2p):
    # torch input order is [t, k1...]; the kernel keeps k1 at lanes 0..n_feats-1
    # and t at lane n_feats, so rotate the input-channel axis accordingly, then
    # fold the K*K taps into the contraction dim (rows ordered (kh, kw, lane)).
    cout, cin, k, _ = w_oihw.shape
    wt = jnp.transpose(w_oihw, (2, 3, 1, 0))                      # (K,K,cin,cout)
    wt = jnp.concatenate([wt[:, :, 1:, :], wt[:, :, :1, :]], axis=2)
    wt = jnp.pad(wt, ((0, 0), (0, 0), (0, c1p - cin), (0, c2p - cout)))
    return wt.reshape(k * k * c1p, c2p).astype(jnp.bfloat16)


def _pack_params(t, params, n_feats, cpk):
    # rows: 0=g1, 1=be1, 2=t one-hot (conv2 t lane), 3=g2, 4=be2, 5..7=0
    def row(v):
        return jnp.pad(v.astype(jnp.float32), (0, cpk - v.shape[0]))
    trow = jnp.zeros((cpk,), jnp.float32).at[n_feats].set(
        jnp.asarray(t, jnp.float32))
    zero = jnp.zeros((cpk,), jnp.float32)
    return jnp.stack([row(params["g1"]), row(params["be1"]), trow,
                      row(params["g2"]), row(params["be2"]),
                      zero, zero, zero], axis=0)                  # (8, cpk)


# ---------------------------------------------------------------------------
# augodefunc forward
# ---------------------------------------------------------------------------
def augodefunc_forward(t, x_nchw, params, *, kernel_size):
    n, c, h, w = x_nchw.shape                    # c == input_feats
    spad = kernel_size // 2
    n_feats = params["w1"].shape[0]
    kk = kernel_size * kernel_size
    kc1p = _round_up(kk * (c + 1), 128)          # conv1 im2col contraction pad
    c1p = _round_up(n_feats + 1, 128)            # conv1 out (+ reserved t lane)
    c2p = _round_up(c, 128)                      # conv2 out (lane-dense)
    cpk = max(c1p, c2p)
    m = n * h * w

    lhs1 = _prep_lhs1(t, x_nchw, kernel_size, kc1p)
    w1 = _prep_w1(params["w1"], kc1p, c1p)
    w2 = _prep_w2(params["w2"], c1p, c2p)
    pp = _pack_params(t, params, n_feats, cpk)

    kernel = functools.partial(
        _augode_fused_kernel, n=n, h=h, w=w, spad=spad, ksize=kernel_size,
        eps=1e-5, slope=0.1)

    vmem = pl.BlockSpec(memory_space=pltpu.MemorySpace.VMEM)
    out3 = pl.pallas_call(
        kernel,
        out_shape=jax.ShapeDtypeStruct((n, c2p, h * w), jnp.float32),
        in_specs=[vmem] * 4,
        out_specs=vmem,
        scratch_shapes=[
            pltpu.VMEM((n, h + 2 * spad, w + 2 * spad, c1p), jnp.float32),
            pltpu.VMEM((m, kk * c1p), jnp.bfloat16),
        ],
        compiler_params=pltpu.CompilerParams(vmem_limit_bytes=32 * 1024 * 1024),
    )(lhs1, w1, w2, pp)

    # transpose-free epilogue: slice off padded channel rows, reshape to NCHW
    return out3[:, :c, :].reshape(n, c, h, w)


# ---------------------------------------------------------------------------
# Deterministic parameter init (shapes from the module's __init__)
# ---------------------------------------------------------------------------
def init_params(key, n_feats, augment_feats, kernel_size):
    input_feats = n_feats + augment_feats
    ks = jax.random.split(key, 8)

    def conv_w(k, cout, cin):
        fan_in = cin * kernel_size * kernel_size
        bound = 1.0 / jnp.sqrt(jnp.float32(fan_in))
        return jax.random.uniform(k, (cout, cin, kernel_size, kernel_size),
                                  jnp.float32, -bound, bound)

    return {
        "w1": conv_w(ks[0], n_feats, input_feats + 1),
        "b1": 0.1 * jax.random.normal(ks[1], (n_feats,), jnp.float32),
        "w2": conv_w(ks[2], input_feats, n_feats + 1),
        "b2": 0.1 * jax.random.normal(ks[3], (input_feats,), jnp.float32),
        "g1": 1.0 + 0.1 * jax.random.normal(ks[4], (n_feats,), jnp.float32),
        "be1": 0.1 * jax.random.normal(ks[5], (n_feats,), jnp.float32),
        "g2": 1.0 + 0.1 * jax.random.normal(ks[6], (input_feats,), jnp.float32),
        "be2": 0.1 * jax.random.normal(ks[7], (input_feats,), jnp.float32),
    }


# ---------------------------------------------------------------------------
# Pure-JAX f32 reference (mirrors the PyTorch forward) for a correctness check
# ---------------------------------------------------------------------------
def _reference(t, x_nchw, params, *, kernel_size):
    pad = kernel_size // 2

    def concat_conv(t, x, w, b):
        n, _, h, w_ = x.shape
        tt = jnp.full((n, 1, h, w_), t, x.dtype)
        ttx = jnp.concatenate([tt, x], axis=1)
        y = lax.conv_general_dilated(
            ttx, w, (1, 1), [(pad, pad), (pad, pad)],
            dimension_numbers=("NCHW", "OIHW", "NCHW"),
            precision=lax.Precision.HIGHEST)
        return y + b[None, :, None, None]

    def bn(x, g, be, eps=1e-5):
        mean = jnp.mean(x, axis=(0, 2, 3), keepdims=True)
        var = jnp.mean((x - mean) ** 2, axis=(0, 2, 3), keepdims=True)
        return ((x - mean) / jnp.sqrt(var + eps)) * g[None, :, None, None] \
            + be[None, :, None, None]

    k1 = concat_conv(t, x_nchw, params["w1"], params["b1"])
    k1 = bn(k1, params["g1"], params["be1"])
    k1 = jnp.where(k1 >= 0, k1, 0.1 * k1)
    k2 = concat_conv(t, k1, params["w2"], params["b2"])
    return bn(k2, params["g2"], params["be2"])


if __name__ == "__main__":
    n_feats, augment_feats, kernel_size = 4, 2, 3
    input_feats = n_feats + augment_feats

    key = jax.random.PRNGKey(0)
    kx, kp = jax.random.split(key)
    x = jax.random.normal(kx, (2, input_feats, 16, 16), jnp.float32)   # NCHW
    t = jnp.float32(0.5)
    params = init_params(kp, n_feats, augment_feats, kernel_size)

    fwd = jax.jit(functools.partial(augodefunc_forward, kernel_size=kernel_size))
    out = jax.block_until_ready(fwd(t, x, params))
    ref = jax.block_until_ready(_reference(t, x, params, kernel_size=kernel_size))

    assert out.shape == (2, input_feats, 16, 16)
    err = float(jnp.max(jnp.abs(out - ref)))
    # bf16 matmul operands (f32 accumulation); tolerance set accordingly vs. the
    # f32/HIGHEST reference.  Dropping the pre-BN biases is bit-neutral (they
    # are cancelled by the BN mean subtraction in the reference too).
    assert jnp.allclose(out, ref, rtol=2e-2, atol=2e-2), f"max abs err {err}"

    print("KERNEL_OK")
</pallas_src>

<mosaic_0001>
module attributes {stable_mosaic.version = 11 : i64} {
  func.func @_augode_fused_kernel(%arg0: memref<512x128xbf16, #tpu.memory_space<vmem>>, %arg1: memref<128x128xbf16, #tpu.memory_space<vmem>>, %arg2: memref<1152x128xbf16, #tpu.memory_space<vmem>>, %arg3: memref<8x128xf32, #tpu.memory_space<vmem>>, %arg4: memref<2x128x256xf32, #tpu.memory_space<vmem>>, %arg5: memref<2x18x18x128xf32, #tpu.memory_space<vmem>>, %arg6: memref<512x1152xbf16, #tpu.memory_space<vmem>>) attributes {dimension_semantics = [], scalar_prefetch = 0 : i64, scratch_operands = 2 : i64, tpu.core_type = #tpu.core_type<tc>} {
    %c0 = arith.constant 0 : index
    %c0_0 = arith.constant 0 : index
    %0 = vector.load %arg0[%c0, %c0_0] : memref<512x128xbf16, #tpu.memory_space<vmem>>, vector<512x128xbf16>
    %c0_1 = arith.constant 0 : index
    %c0_2 = arith.constant 0 : index
    %1 = vector.load %arg1[%c0_1, %c0_2] : memref<128x128xbf16, #tpu.memory_space<vmem>>, vector<128x128xbf16>
    %cst = arith.constant dense<0.000000e+00> : vector<512x128xf32>
    %2 = tpu.matmul %0, %1, %cst {dimension_numbers = #tpu.dot_dimension_numbers<[1], [0], [0], [1], [0, 0, 1, 1], [], []>} : vector<512x128xbf16>, vector<128x128xbf16>, vector<512x128xf32> -> vector<512x128xf32>
    %c0_3 = arith.constant 0 : index
    %c0_4 = arith.constant 0 : index
    %3 = vector.load %arg3[%c0_3, %c0_4] : memref<8x128xf32, #tpu.memory_space<vmem>>, vector<1x128xf32>
    %c1 = arith.constant 1 : index
    %c0_5 = arith.constant 0 : index
    %4 = vector.load %arg3[%c1, %c0_5] : memref<8x128xf32, #tpu.memory_space<vmem>>, vector<1x128xf32>
    %cst_6 = arith.constant dense<0.000000e+00> : vector<128xf32>
    %5 = vector.multi_reduction <add>, %2, %cst_6 [0] : vector<512x128xf32> to vector<128xf32>
    %6 = vector.shape_cast %5 : vector<128xf32> to vector<1x128xf32>
    %cst_7 = arith.constant 0.001953125 : f32
    %7 = vector.broadcast %cst_7 : f32 to vector<1x128xf32>
    %8 = arith.mulf %6, %7 : vector<1x128xf32>
    %9 = vector.broadcast %8 : vector<1x128xf32> to vector<512x128xf32>
    %10 = arith.subf %2, %9 : vector<512x128xf32>
    %11 = arith.mulf %10, %10 : vector<512x128xf32>
    %cst_8 = arith.constant dense<0.000000e+00> : vector<128xf32>
    %12 = vector.multi_reduction <add>, %11, %cst_8 [0] : vector<512x128xf32> to vector<128xf32>
    %13 = vector.shape_cast %12 : vector<128xf32> to vector<1x128xf32>
    %cst_9 = arith.constant 0.001953125 : f32
    %14 = vector.broadcast %cst_9 : f32 to vector<1x128xf32>
    %15 = arith.mulf %13, %14 : vector<1x128xf32>
    %cst_10 = arith.constant 9.99999974E-6 : f32
    %16 = vector.broadcast %cst_10 : f32 to vector<1x128xf32>
    %17 = arith.addf %15, %16 : vector<1x128xf32>
    %18 = math.rsqrt %17 : vector<1x128xf32>
    %19 = arith.mulf %18, %3 : vector<1x128xf32>
    %20 = vector.broadcast %19 : vector<1x128xf32> to vector<512x128xf32>
    %21 = arith.mulf %10, %20 : vector<512x128xf32>
    %22 = vector.broadcast %4 : vector<1x128xf32> to vector<512x128xf32>
    %23 = arith.addf %21, %22 : vector<512x128xf32>
    %cst_11 = arith.constant 1.000000e-01 : f32
    %24 = vector.broadcast %cst_11 : f32 to vector<512x128xf32>
    %25 = arith.mulf %24, %23 : vector<512x128xf32>
    %26 = arith.maximumf %23, %25 : vector<512x128xf32>
    %c2 = arith.constant 2 : index
    %c0_12 = arith.constant 0 : index
    %27 = vector.load %arg3[%c2, %c0_12] : memref<8x128xf32, #tpu.memory_space<vmem>>, vector<1x128xf32>
    %28 = vector.broadcast %27 : vector<1x128xf32> to vector<512x128xf32>
    %29 = arith.addf %26, %28 : vector<512x128xf32>
    %cst_13 = arith.constant 0.000000e+00 : f32
    %30 = vector.broadcast %cst_13 : f32 to vector<2x1x18x128xf32>
    %c0_14 = arith.constant 0 : index
    %c0_15 = arith.constant 0 : index
    %c0_16 = arith.constant 0 : index
    %c0_17 = arith.constant 0 : index
    %31 = vector.load %arg5[%c0_14, %c0_15, %c0_16, %c0_17] : memref<2x18x18x128xf32, #tpu.memory_space<vmem>>, vector<2x1x18x128xf32>
    tpu.vector_store %arg5[%c0_14, %c0_15, %c0_16, %c0_17], %30 {strides = array<i32>} : memref<2x18x18x128xf32, #tpu.memory_space<vmem>>, vector<2x1x18x128xf32>,
    %cst_18 = arith.constant 0.000000e+00 : f32
    %32 = vector.broadcast %cst_18 : f32 to vector<2x1x18x128xf32>
    %c0_19 = arith.constant 0 : index
    %c17 = arith.constant 17 : index
    %c0_20 = arith.constant 0 : index
    %c0_21 = arith.constant 0 : index
    %33 = vector.load %arg5[%c0_19, %c17, %c0_20, %c0_21] : memref<2x18x18x128xf32, #tpu.memory_space<vmem>>, vector<2x1x18x128xf32>
    tpu.vector_store %arg5[%c0_19, %c17, %c0_20, %c0_21], %32 {strides = array<i32>} : memref<2x18x18x128xf32, #tpu.memory_space<vmem>>, vector<2x1x18x128xf32>,
    %cst_22 = arith.constant 0.000000e+00 : f32
    %34 = vector.broadcast %cst_22 : f32 to vector<2x16x1x128xf32>
    %c0_23 = arith.constant 0 : index
    %c1_24 = arith.constant 1 : index
    %c0_25 = arith.constant 0 : index
    %c0_26 = arith.constant 0 : index
    %35 = vector.load %arg5[%c0_23, %c1_24, %c0_25, %c0_26] : memref<2x18x18x128xf32, #tpu.memory_space<vmem>>, vector<2x16x1x128xf32>
    tpu.vector_store %arg5[%c0_23, %c1_24, %c0_25, %c0_26], %34 {strides = array<i32>} : memref<2x18x18x128xf32, #tpu.memory_space<vmem>>, vector<2x16x1x128xf32>,
    %cst_27 = arith.constant 0.000000e+00 : f32
    %36 = vector.broadcast %cst_27 : f32 to vector<2x16x1x128xf32>
    %c0_28 = arith.constant 0 : index
    %c1_29 = arith.constant 1 : index
    %c17_30 = arith.constant 17 : index
    %c0_31 = arith.constant 0 : index
    %37 = vector.load %arg5[%c0_28, %c1_29, %c17_30, %c0_31] : memref<2x18x18x128xf32, #tpu.memory_space<vmem>>, vector<2x16x1x128xf32>
    tpu.vector_store %arg5[%c0_28, %c1_29, %c17_30, %c0_31], %36 {strides = array<i32>} : memref<2x18x18x128xf32, #tpu.memory_space<vmem>>, vector<2x16x1x128xf32>,
    %38 = vector.shape_cast %29 : vector<512x128xf32> to vector<2x16x16x128xf32>
    %c0_32 = arith.constant 0 : index
    %c1_33 = arith.constant 1 : index
    %c1_34 = arith.constant 1 : index
    %c0_35 = arith.constant 0 : index
    %39 = vector.load %arg5[%c0_32, %c1_33, %c1_34, %c0_35] : memref<2x18x18x128xf32, #tpu.memory_space<vmem>>, vector<2x16x16x128xf32>
    tpu.vector_store %arg5[%c0_32, %c1_33, %c1_34, %c0_35], %38 {strides = array<i32>} : memref<2x18x18x128xf32, #tpu.memory_space<vmem>>, vector<2x16x16x128xf32>,
    %c0_36 = arith.constant 0 : index
    %c0_37 = arith.constant 0 : index
    %c0_38 = arith.constant 0 : index
    %c0_39 = arith.constant 0 : index
    %40 = vector.load %arg5[%c0_36, %c0_37, %c0_38, %c0_39] : memref<2x18x18x128xf32, #tpu.memory_space<vmem>>, vector<2x16x16x128xf32>
    %41 = vector.shape_cast %40 : vector<2x16x16x128xf32> to vector<512x128xf32>
    %42 = arith.truncf %41 : vector<512x128xf32> to vector<512x128xbf16>
    %c0_40 = arith.constant 0 : index
    %c0_41 = arith.constant 0 : index
    %43 = vector.load %arg6[%c0_40, %c0_41] : memref<512x1152xbf16, #tpu.memory_space<vmem>>, vector<512x128xbf16>
    tpu.vector_store %arg6[%c0_40, %c0_41], %42 {strides = array<i32>} : memref<512x1152xbf16, #tpu.memory_space<vmem>>, vector<512x128xbf16>,
    %c0_42 = arith.constant 0 : index
    %c0_43 = arith.constant 0 : index
    %c1_44 = arith.constant 1 : index
    %c0_45 = arith.constant 0 : index
    %44 = vector.load %arg5[%c0_42, %c0_43, %c1_44, %c0_45] : memref<2x18x18x128xf32, #tpu.memory_space<vmem>>, vector<2x16x16x128xf32>
    %45 = vector.shape_cast %44 : vector<2x16x16x128xf32> to vector<512x128xf32>
    %46 = arith.truncf %45 : vector<512x128xf32> to vector<512x128xbf16>
    %c0_46 = arith.constant 0 : index
    %c128 = arith.constant 128 : index
    %47 = vector.load %arg6[%c0_46, %c128] : memref<512x1152xbf16, #tpu.memory_space<vmem>>, vector<512x128xbf16>
    tpu.vector_store %arg6[%c0_46, %c128], %46 {strides = array<i32>} : memref<512x1152xbf16, #tpu.memory_space<vmem>>, vector<512x128xbf16>,
    %c0_47 = arith.constant 0 : index
    %c0_48 = arith.constant 0 : index
    %c2_49 = arith.constant 2 : index
    %c0_50 = arith.constant 0 : index
    %48 = vector.load %arg5[%c0_47, %c0_48, %c2_49, %c0_50] : memref<2x18x18x128xf32, #tpu.memory_space<vmem>>, vector<2x16x16x128xf32>
    %49 = vector.shape_cast %48 : vector<2x16x16x128xf32> to vector<512x128xf32>
    %50 = arith.truncf %49 : vector<512x128xf32> to vector<512x128xbf16>
    %c0_51 = arith.constant 0 : index
    %c256 = arith.constant 256 : index
    %51 = vector.load %arg6[%c0_51, %c256] : memref<512x1152xbf16, #tpu.memory_space<vmem>>, vector<512x128xbf16>
    tpu.vector_store %arg6[%c0_51, %c256], %50 {strides = array<i32>} : memref<512x1152xbf16, #tpu.memory_space<vmem>>, vector<512x128xbf16>,
    %c0_52 = arith.constant 0 : index
    %c1_53 = arith.constant 1 : index
    %c0_54 = arith.constant 0 : index
    %c0_55 = arith.constant 0 : index
    %52 = vector.load %arg5[%c0_52, %c1_53, %c0_54, %c0_55] : memref<2x18x18x128xf32, #tpu.memory_space<vmem>>, vector<2x16x16x128xf32>
    %53 = vector.shape_cast %52 : vector<2x16x16x128xf32> to vector<512x128xf32>
    %54 = arith.truncf %53 : vector<512x128xf32> to vector<512x128xbf16>
    %c0_56 = arith.constant 0 : index
    %c384 = arith.constant 384 : index
    %55 = vector.load %arg6[%c0_56, %c384] : memref<512x1152xbf16, #tpu.memory_space<vmem>>, vector<512x128xbf16>
    tpu.vector_store %arg6[%c0_56, %c384], %54 {strides = array<i32>} : memref<512x1152xbf16, #tpu.memory_space<vmem>>, vector<512x128xbf16>,
    %c0_57 = arith.constant 0 : index
    %c1_58 = arith.constant 1 : index
    %c1_59 = arith.constant 1 : index
    %c0_60 = arith.constant 0 : index
    %56 = vector.load %arg5[%c0_57, %c1_58, %c1_59, %c0_60] : memref<2x18x18x128xf32, #tpu.memory_space<vmem>>, vector<2x16x16x128xf32>
    %57 = vector.shape_cast %56 : vector<2x16x16x128xf32> to vector<512x128xf32>
    %58 = arith.truncf %57 : vector<512x128xf32> to vector<512x128xbf16>
    %c0_61 = arith.constant 0 : index
    %c512 = arith.constant 512 : index
    %59 = vector.load %arg6[%c0_61, %c512] : memref<512x1152xbf16, #tpu.memory_space<vmem>>, vector<512x128xbf16>
    tpu.vector_store %arg6[%c0_61, %c512], %58 {strides = array<i32>} : memref<512x1152xbf16, #tpu.memory_space<vmem>>, vector<512x128xbf16>,
    %c0_62 = arith.constant 0 : index
    %c1_63 = arith.constant 1 : index
    %c2_64 = arith.constant 2 : index
    %c0_65 = arith.constant 0 : index
    %60 = vector.load %arg5[%c0_62, %c1_63, %c2_64, %c0_65] : memref<2x18x18x128xf32, #tpu.memory_space<vmem>>, vector<2x16x16x128xf32>
    %61 = vector.shape_cast %60 : vector<2x16x16x128xf32> to vector<512x128xf32>
    %62 = arith.truncf %61 : vector<512x128xf32> to vector<512x128xbf16>
    %c0_66 = arith.constant 0 : index
    %c640 = arith.constant 640 : index
    %63 = vector.load %arg6[%c0_66, %c640] : memref<512x1152xbf16, #tpu.memory_space<vmem>>, vector<512x128xbf16>
    tpu.vector_store %arg6[%c0_66, %c640], %62 {strides = array<i32>} : memref<512x1152xbf16, #tpu.memory_space<vmem>>, vector<512x128xbf16>,
    %c0_67 = arith.constant 0 : index
    %c2_68 = arith.constant 2 : index
    %c0_69 = arith.constant 0 : index
    %c0_70 = arith.constant 0 : index
    %64 = vector.load %arg5[%c0_67, %c2_68, %c0_69, %c0_70] : memref<2x18x18x128xf32, #tpu.memory_space<vmem>>, vector<2x16x16x128xf32>
    %65 = vector.shape_cast %64 : vector<2x16x16x128xf32> to vector<512x128xf32>
    %66 = arith.truncf %65 : vector<512x128xf32> to vector<512x128xbf16>
    %c0_71 = arith.constant 0 : index
    %c768 = arith.constant 768 : index
    %67 = vector.load %arg6[%c0_71, %c768] : memref<512x1152xbf16, #tpu.memory_space<vmem>>, vector<512x128xbf16>
    tpu.vector_store %arg6[%c0_71, %c768], %66 {strides = array<i32>} : memref<512x1152xbf16, #tpu.memory_space<vmem>>, vector<512x128xbf16>,
    %c0_72 = arith.constant 0 : index
    %c2_73 = arith.constant 2 : index
    %c1_74 = arith.constant 1 : index
    %c0_75 = arith.constant 0 : index
    %68 = vector.load %arg5[%c0_72, %c2_73, %c1_74, %c0_75] : memref<2x18x18x128xf32, #tpu.memory_space<vmem>>, vector<2x16x16x128xf32>
    %69 = vector.shape_cast %68 : vector<2x16x16x128xf32> to vector<512x128xf32>
    %70 = arith.truncf %69 : vector<512x128xf32> to vector<512x128xbf16>
    %c0_76 = arith.constant 0 : index
    %c896 = arith.constant 896 : index
    %71 = vector.load %arg6[%c0_76, %c896] : memref<512x1152xbf16, #tpu.memory_space<vmem>>, vector<512x128xbf16>
    tpu.vector_store %arg6[%c0_76, %c896], %70 {strides = array<i32>} : memref<512x1152xbf16, #tpu.memory_space<vmem>>, vector<512x128xbf16>,
    %c0_77 = arith.constant 0 : index
    %c2_78 = arith.constant 2 : index
    %c2_79 = arith.constant 2 : index
    %c0_80 = arith.constant 0 : index
    %72 = vector.load %arg5[%c0_77, %c2_78, %c2_79, %c0_80] : memref<2x18x18x128xf32, #tpu.memory_space<vmem>>, vector<2x16x16x128xf32>
    %73 = vector.shape_cast %72 : vector<2x16x16x128xf32> to vector<512x128xf32>
    %74 = arith.truncf %73 : vector<512x128xf32> to vector<512x128xbf16>
    %c0_81 = arith.constant 0 : index
    %c1024 = arith.constant 1024 : index
    %75 = vector.load %arg6[%c0_81, %c1024] : memref<512x1152xbf16, #tpu.memory_space<vmem>>, vector<512x128xbf16>
    tpu.vector_store %arg6[%c0_81, %c1024], %74 {strides = array<i32>} : memref<512x1152xbf16, #tpu.memory_space<vmem>>, vector<512x128xbf16>,
    %c0_82 = arith.constant 0 : index
    %c0_83 = arith.constant 0 : index
    %76 = vector.load %arg6[%c0_82, %c0_83] : memref<512x1152xbf16, #tpu.memory_space<vmem>>, vector<512x1152xbf16>
    %c0_84 = arith.constant 0 : index
    %c0_85 = arith.constant 0 : index
    %77 = vector.load %arg2[%c0_84, %c0_85] : memref<1152x128xbf16, #tpu.memory_space<vmem>>, vector<1152x128xbf16>
    %cst_86 = arith.constant dense<0.000000e+00> : vector<512x128xf32>
    %78 = tpu.matmul %76, %77, %cst_86 {dimension_numbers = #tpu.dot_dimension_numbers<[1], [0], [0], [1], [0, 0, 1, 1], [], []>} : vector<512x1152xbf16>, vector<1152x128xbf16>, vector<512x128xf32> -> vector<512x128xf32>
    %c3 = arith.constant 3 : index
    %c0_87 = arith.constant 0 : index
    %79 = vector.load %arg3[%c3, %c0_87] : memref<8x128xf32, #tpu.memory_space<vmem>>, vector<1x128xf32>
    %c4 = arith.constant 4 : index
    %c0_88 = arith.constant 0 : index
    %80 = vector.load %arg3[%c4, %c0_88] : memref<8x128xf32, #tpu.memory_space<vmem>>, vector<1x128xf32>
    %cst_89 = arith.constant dense<0.000000e+00> : vector<128xf32>
    %81 = vector.multi_reduction <add>, %78, %cst_89 [0] : vector<512x128xf32> to vector<128xf32>
    %82 = vector.shape_cast %81 : vector<128xf32> to vector<1x128xf32>
    %cst_90 = arith.constant 0.001953125 : f32
    %83 = vector.broadcast %cst_90 : f32 to vector<1x128xf32>
    %84 = arith.mulf %82, %83 : vector<1x128xf32>
    %85 = vector.broadcast %84 : vector<1x128xf32> to vector<512x128xf32>
    %86 = arith.subf %78, %85 : vector<512x128xf32>
    %87 = arith.mulf %86, %86 : vector<512x128xf32>
    %cst_91 = arith.constant dense<0.000000e+00> : vector<128xf32>
    %88 = vector.multi_reduction <add>, %87, %cst_91 [0] : vector<512x128xf32> to vector<128xf32>
    %89 = vector.shape_cast %88 : vector<128xf32> to vector<1x128xf32>
    %cst_92 = arith.constant 0.001953125 : f32
    %90 = vector.broadcast %cst_92 : f32 to vector<1x128xf32>
    %91 = arith.mulf %89, %90 : vector<1x128xf32>
    %cst_93 = arith.constant 9.99999974E-6 : f32
    %92 = vector.broadcast %cst_93 : f32 to vector<1x128xf32>
    %93 = arith.addf %91, %92 : vector<1x128xf32>
    %94 = math.rsqrt %93 : vector<1x128xf32>
    %95 = arith.mulf %94, %79 : vector<1x128xf32>
    %96 = vector.broadcast %95 : vector<1x128xf32> to vector<512x128xf32>
    %97 = arith.mulf %86, %96 : vector<512x128xf32>
    %98 = vector.broadcast %80 : vector<1x128xf32> to vector<512x128xf32>
    %99 = arith.addf %97, %98 : vector<512x128xf32>
    %100 = vector.extract_strided_slice %99 {offsets = [0, 0], sizes = [256, 128], strides = [1, 1]} : vector<512x128xf32> to vector<256x128xf32>
    %101 = tpu.transpose %100, [1, 0] : vector<256x128xf32> -> vector<128x256xf32>
    %c0_94 = arith.constant 0 : index
    %c0_95 = arith.constant 0 : index
    %c0_96 = arith.constant 0 : index
    %102 = vector.load %arg4[%c0_94, %c0_95, %c0_96] : memref<2x128x256xf32, #tpu.memory_space<vmem>>, vector<1x128x256xf32>
    %103 = vector.shape_cast %102 : vector<1x128x256xf32> to vector<128x256xf32>
    %104 = vector.shape_cast %101 : vector<128x256xf32> to vector<1x128x256xf32>
    tpu.vector_store %arg4[%c0_94, %c0_95, %c0_96], %104 {strides = array<i32>} : memref<2x128x256xf32, #tpu.memory_space<vmem>>, vector<1x128x256xf32>,
    %105 = vector.extract_strided_slice %99 {offsets = [256, 0], sizes = [256, 128], strides = [1, 1]} : vector<512x128xf32> to vector<256x128xf32>
    %106 = tpu.transpose %105, [1, 0] : vector<256x128xf32> -> vector<128x256xf32>
    %c1_97 = arith.constant 1 : index
    %c0_98 = arith.constant 0 : index
    %c0_99 = arith.constant 0 : index
    %107 = vector.load %arg4[%c1_97, %c0_98, %c0_99] : memref<2x128x256xf32, #tpu.memory_space<vmem>>, vector<1x128x256xf32>
    %108 = vector.shape_cast %107 : vector<1x128x256xf32> to vector<128x256xf32>
    %109 = vector.shape_cast %106 : vector<128x256xf32> to vector<1x128x256xf32>
    tpu.vector_store %arg4[%c1_97, %c0_98, %c0_99], %109 {strides = array<i32>} : memref<2x128x256xf32, #tpu.memory_space<vmem>>, vector<1x128x256xf32>,
    return
  }
}

</mosaic_0001>

<llo_original>
// kernel: augodefunc_forward.1
$region0: #{augodefunc_forward.1}
  #allocation0 [shape = 'u32[]', space=smem, size = 0x4, offset = 0x4, fixed_abs, tag = 'smem constant byte address 0x4 - core index']
  #allocation1 [shape = 'u32[144,128]{1,0:T(1,128)}', space=vmem, size = 0x12000, scoped, tag = 'internal scratch']
  #allocation2 [shape = 'f32[2,18,18,128]{3,2,1,0:T(8,128)}', space=vmem, size = 0x6c000, scoped, tag = 'scratch operand']
  #allocation3 [shape = 'bf16[512,1152]{1,0:T(8,128)(2,1)}', space=vmem, size = 0x120000, scoped, tag = 'scratch operand']
  %s0 = inlined_call_operand.vmem [shape: bf16[512,128], index: 0, kind: input, shape index: {}]
  %s1 = inlined_call_operand.vmem [shape: bf16[128,128], index: 1, kind: input, shape index: {}]
  %s2 = inlined_call_operand.vmem [shape: bf16[1152,128], index: 2, kind: input, shape index: {}]
  %s3 = inlined_call_operand.vmem [shape: f32[8,128], index: 3, kind: input, shape index: {}]
  %s4 = inlined_call_operand.vmem [shape: f32[2,128,256], index: 4, kind: output, shape index: {}]
  %s5 = sld [smem:[#allocation0]]
  $region26: #{augodefunc_forward.1} parent=0
    _
  %s7 = ssub.s32 1, %s5
  %s8 = scalar_select 0, %s7, %s5
  // Predicated region
  $region2: #{augodefunc_forward.1} parent=0 // pred_check
    _
  $region3: #{augodefunc_forward.1} parent=0 // pred_check_branch
    %10 = sbr.rel (0) target = $region5
  $region4: #{augodefunc_forward.1} parent=0 // pred_region
    _
  $region5: #{augodefunc_forward.1} parent=0 // pred_fallthru
    _
  // Predicated region
  $region6: #{augodefunc_forward.1} parent=0 // pred_check
    _
  $region7: #{augodefunc_forward.1} parent=0 // pred_check_branch
    %12 = sbr.rel (0) target = $region9
  $region8: #{augodefunc_forward.1} parent=0 // pred_region
    _
  $region9: #{augodefunc_forward.1} parent=0 // pred_fallthru
    _
  // Predicated region
  $region10: #{augodefunc_forward.1} parent=0 // pred_check
    _
  $region11: #{augodefunc_forward.1} parent=0 // pred_check_branch
    %14 = sbr.rel (0) target = $region13
  $region12: #{augodefunc_forward.1} parent=0 // pred_region
    _
  $region13: #{augodefunc_forward.1} parent=0 // pred_fallthru
    _
  // Predicated region
  $region14: #{augodefunc_forward.1} parent=0 // pred_check
    _
  $region15: #{augodefunc_forward.1} parent=0 // pred_check_branch
    %16 = sbr.rel (0) target = $region17
  $region16: #{augodefunc_forward.1} parent=0 // pred_region
    _
  $region17: #{augodefunc_forward.1} parent=0 // pred_fallthru
    _
  %v18 = vld [vmem:[%s0] sm:$0xf]
  %v19 = vld [vmem:[%s0 + $0x4] sm:$0xf]
  %v20 = vld [vmem:[%s0 + $0x8] sm:$0xf]
  %v21 = vld [vmem:[%s0 + $0xc] sm:$0xf]
  %v22 = vld [vmem:[%s0 + $0x10] sm:$0xf]
  %v23 = vld [vmem:[%s0 + $0x14] sm:$0xf]
  %v24 = vld [vmem:[%s0 + $0x18] sm:$0xf]
  %v25 = vld [vmem:[%s0 + $0x1c] sm:$0xf]
  %v26 = vld [vmem:[%s0 + $0x20] sm:$0xf]
  %v27 = vld [vmem:[%s0 + $0x24] sm:$0xf]
  %v28 = vld [vmem:[%s0 + $0x28] sm:$0xf]
  %v29 = vld [vmem:[%s0 + $0x2c] sm:$0xf]
  %v30 = vld [vmem:[%s0 + $0x30] sm:$0xf]
  %v31 = vld [vmem:[%s0 + $0x34] sm:$0xf]
  %v32 = vld [vmem:[%s0 + $0x38] sm:$0xf]
  %v33 = vld [vmem:[%s0 + $0x3c] sm:$0xf]
  %v34 = vld [vmem:[%s0 + $0x40] sm:$0xf]
  %v35 = vld [vmem:[%s0 + $0x44] sm:$0xf]
  %v36 = vld [vmem:[%s0 + $0x48] sm:$0xf]
  %v37 = vld [vmem:[%s0 + $0x4c] sm:$0xf]
  %v38 = vld [vmem:[%s0 + $0x50] sm:$0xf]
  %v39 = vld [vmem:[%s0 + $0x54] sm:$0xf]
  %v40 = vld [vmem:[%s0 + $0x58] sm:$0xf]
  %v41 = vld [vmem:[%s0 + $0x5c] sm:$0xf]
  %v42 = vld [vmem:[%s0 + $0x60] sm:$0xf]
  %v43 = vld [vmem:[%s0 + $0x64] sm:$0xf]
  %v44 = vld [vmem:[%s0 + $0x68] sm:$0xf]
  %v45 = vld [vmem:[%s0 + $0x6c] sm:$0xf]
  %v46 = vld [vmem:[%s0 + $0x70] sm:$0xf]
  %v47 = vld [vmem:[%s0 + $0x74] sm:$0xf]
  %v48 = vld [vmem:[%s0 + $0x78] sm:$0xf]
  %v49 = vld [vmem:[%s0 + $0x7c] sm:$0xf]
  %v50 = vld [vmem:[%s0 + $0x80] sm:$0xf]
  %v51 = vld [vmem:[%s0 + $0x84] sm:$0xf]
  %v52 = vld [vmem:[%s0 + $0x88] sm:$0xf]
  %v53 = vld [vmem:[%s0 + $0x8c] sm:$0xf]
  %v54 = vld [vmem:[%s0 + $0x90] sm:$0xf]
  %v55 = vld [vmem:[%s0 + $0x94] sm:$0xf]
  %v56 = vld [vmem:[%s0 + $0x98] sm:$0xf]
  %v57 = vld [vmem:[%s0 + $0x9c] sm:$0xf]
  %v58 = vld [vmem:[%s0 + $0xa0] sm:$0xf]
  %v59 = vld [vmem:[%s0 + $0xa4] sm:$0xf]
  %v60 = vld [vmem:[%s0 + $0xa8] sm:$0xf]
  %v61 = vld [vmem:[%s0 + $0xac] sm:$0xf]
  %v62 = vld [vmem:[%s0 + $0xb0] sm:$0xf]
  %v63 = vld [vmem:[%s0 + $0xb4] sm:$0xf]
  %v64 = vld [vmem:[%s0 + $0xb8] sm:$0xf]
  %v65 = vld [vmem:[%s0 + $0xbc] sm:$0xf]
  %v66 = vld [vmem:[%s0 + $0xc0] sm:$0xf]
  %v67 = vld [vmem:[%s0 + $0xc4] sm:$0xf]
  %v68 = vld [vmem:[%s0 + $0xc8] sm:$0xf]
  %v69 = vld [vmem:[%s0 + $0xcc] sm:$0xf]
  %v70 = vld [vmem:[%s0 + $0xd0] sm:$0xf]
  %v71 = vld [vmem:[%s0 + $0xd4] sm:$0xf]
  %v72 = vld [vmem:[%s0 + $0xd8] sm:$0xf]
  %v73 = vld [vmem:[%s0 + $0xdc] sm:$0xf]
  %v74 = vld [vmem:[%s0 + $0xe0] sm:$0xf]
  %v75 = vld [vmem:[%s0 + $0xe4] sm:$0xf]
  %v76 = vld [vmem:[%s0 + $0xe8] sm:$0xf]
  %v77 = vld [vmem:[%s0 + $0xec] sm:$0xf]
  %v78 = vld [vmem:[%s0 + $0xf0] sm:$0xf]
  %v79 = vld [vmem:[%s0 + $0xf4] sm:$0xf]
  %v80 = vld [vmem:[%s0 + $0xf8] sm:$0xf]
  %v81 = vld [vmem:[%s0 + $0xfc] sm:$0xf]
  %v82 = vld [vmem:[%s1] sm:$0xf]
  %v83 = vld [vmem:[%s1 + $0x4] sm:$0xf]
  %v84 = vld [vmem:[%s1 + $0x8] sm:$0xf]
  %v85 = vld [vmem:[%s1 + $0xc] sm:$0xf]
  %v86 = vld [vmem:[%s1 + $0x10] sm:$0xf]
  %v87 = vld [vmem:[%s1 + $0x14] sm:$0xf]
  %v88 = vld [vmem:[%s1 + $0x18] sm:$0xf]
  %v89 = vld [vmem:[%s1 + $0x1c] sm:$0xf]
  %v90 = vld [vmem:[%s1 + $0x20] sm:$0xf]
  %v91 = vld [vmem:[%s1 + $0x24] sm:$0xf]
  %v92 = vld [vmem:[%s1 + $0x28] sm:$0xf]
  %v93 = vld [vmem:[%s1 + $0x2c] sm:$0xf]
  %v94 = vld [vmem:[%s1 + $0x30] sm:$0xf]
  %v95 = vld [vmem:[%s1 + $0x34] sm:$0xf]
  %v96 = vld [vmem:[%s1 + $0x38] sm:$0xf]
  %v97 = vld [vmem:[%s1 + $0x3c] sm:$0xf]
  %v162 = vunpack.c.l.b16 %v18
  %v163 = vunpack.c.l.b16 %v19
  %v164 = vunpack.c.l.b16 %v20
  %v165 = vunpack.c.l.b16 %v21
  %v166 = vunpack.c.l.b16 %v22
  %v167 = vunpack.c.l.b16 %v23
  %v168 = vunpack.c.l.b16 %v24
  %v169 = vunpack.c.l.b16 %v25
  %v170 = vunpack.c.l.b16 %v26
  %v171 = vunpack.c.l.b16 %v27
  %v172 = vunpack.c.l.b16 %v28
  %v173 = vunpack.c.l.b16 %v29
  %v174 = vunpack.c.l.b16 %v30
  %v175 = vunpack.c.l.b16 %v31
  %v176 = vunpack.c.l.b16 %v32
  %v177 = vunpack.c.l.b16 %v33
  %v178 = vunpack.c.l.b16 %v34
  %v179 = vunpack.c.l.b16 %v35
  %v180 = vunpack.c.l.b16 %v36
  %v181 = vunpack.c.l.b16 %v37
  %v182 = vunpack.c.l.b16 %v38
  %v183 = vunpack.c.l.b16 %v39
  %v184 = vunpack.c.l.b16 %v40
  %v185 = vunpack.c.l.b16 %v41
  %v186 = vunpack.c.l.b16 %v42
  %v187 = vunpack.c.l.b16 %v43
  %v188 = vunpack.c.l.b16 %v44
  %v189 = vunpack.c.l.b16 %v45
  %v190 = vunpack.c.l.b16 %v46
  %v191 = vunpack.c.l.b16 %v47
  %v192 = vunpack.c.l.b16 %v48
  %v193 = vunpack.c.l.b16 %v49
  %v194 = vunpack.c.l.b16 %v50
  %v195 = vunpack.c.l.b16 %v51
  %v196 = vunpack.c.l.b16 %v52
  %v197 = vunpack.c.l.b16 %v53
  %v198 = vunpack.c.l.b16 %v54
  %v199 = vunpack.c.l.b16 %v55
  %v200 = vunpack.c.l.b16 %v56
  %v201 = vunpack.c.l.b16 %v57
  %v202 = vunpack.c.l.b16 %v58
  %v203 = vunpack.c.l.b16 %v59
  %v204 = vunpack.c.l.b16 %v60
  %v205 = vunpack.c.l.b16 %v61
  %v206 = vunpack.c.l.b16 %v62
  %v207 = vunpack.c.l.b16 %v63
  %v208 = vunpack.c.l.b16 %v64
  %v209 = vunpack.c.l.b16 %v65
  %v210 = vunpack.c.l.b16 %v66
  %v211 = vunpack.c.l.b16 %v67
  %v212 = vunpack.c.l.b16 %v68
  %v213 = vunpack.c.l.b16 %v69
  %v214 = vunpack.c.l.b16 %v70
  %v215 = vunpack.c.l.b16 %v71
  %v216 = vunpack.c.l.b16 %v72
  %v217 = vunpack.c.l.b16 %v73
  %v218 = vunpack.c.l.b16 %v74
  %v219 = vunpack.c.l.b16 %v75
  %v220 = vunpack.c.l.b16 %v76
  %v221 = vunpack.c.l.b16 %v77
  %v222 = vunpack.c.l.b16 %v78
  %v223 = vunpack.c.l.b16 %v79
  %v224 = vunpack.c.l.b16 %v80
  %v225 = vunpack.c.l.b16 %v81
  %v226 = vpack.c.b16 %v163, %v162
  %v227 = vpack.c.b16 %v165, %v164
  %v228 = vpack.c.b16 %v167, %v166
  %v229 = vpack.c.b16 %v169, %v168
  %v230 = vpack.c.b16 %v171, %v170
  %v231 = vpack.c.b16 %v173, %v172
  %v232 = vpack.c.b16 %v175, %v174
  %v233 = vpack.c.b16 %v177, %v176
  %v234 = vpack.c.b16 %v179, %v178
  %v235 = vpack.c.b16 %v181, %v180
  %v236 = vpack.c.b16 %v183, %v182
  %v237 = vpack.c.b16 %v185, %v184
  %v238 = vpack.c.b16 %v187, %v186
  %v239 = vpack.c.b16 %v189, %v188
  %v240 = vpack.c.b16 %v191, %v190
  %v241 = vpack.c.b16 %v193, %v192
  %v242 = vpack.c.b16 %v195, %v194
  %v243 = vpack.c.b16 %v197, %v196
  %v244 = vpack.c.b16 %v199, %v198
  %v245 = vpack.c.b16 %v201, %v200
  %v246 = vpack.c.b16 %v203, %v202
  %v247 = vpack.c.b16 %v205, %v204
  %v248 = vpack.c.b16 %v207, %v206
  %v249 = vpack.c.b16 %v209, %v208
  %v250 = vpack.c.b16 %v211, %v210
  %v251 = vpack.c.b16 %v213, %v212
  %v252 = vpack.c.b16 %v215, %v214
  %v253 = vpack.c.b16 %v217, %v216
  %v254 = vpack.c.b16 %v219, %v218
  %v255 = vpack.c.b16 %v221, %v220
  %v256 = vpack.c.b16 %v223, %v222
  %v257 = vpack.c.b16 %v225, %v224
  %v306 = vunpack.c.l.b16 %v82
  %v307 = vunpack.c.l.b16 %v83
  %v308 = vunpack.c.l.b16 %v84
  %v309 = vunpack.c.l.b16 %v85
  %v310 = vunpack.c.l.b16 %v86
  %v311 = vunpack.c.l.b16 %v87
  %v312 = vunpack.c.l.b16 %v88
  %v313 = vunpack.c.l.b16 %v89
  %v314 = vunpack.c.l.b16 %v90
  %v315 = vunpack.c.l.b16 %v91
  %v316 = vunpack.c.l.b16 %v92
  %v317 = vunpack.c.l.b16 %v93
  %v318 = vunpack.c.l.b16 %v94
  %v319 = vunpack.c.l.b16 %v95
  %v320 = vunpack.c.l.b16 %v96
  %v321 = vunpack.c.l.b16 %v97
  %v322 = vpack.c.b16 %v307, %v306
  %v323 = vpack.c.b16 %v309, %v308
  %v324 = vpack.c.b16 %v311, %v310
  %v325 = vpack.c.b16 %v313, %v312
  %v326 = vpack.c.b16 %v315, %v314
  %v327 = vpack.c.b16 %v317, %v316
  %v328 = vpack.c.b16 %v319, %v318
  %v329 = vpack.c.b16 %v321, %v320
  %338 = vmatprep.subr.bf16.mxu0 0
  %339 = vmatpush1.bf16.msra.mxu0 %v329
  %340 = vmatprep.subr.bf16.mxu0 0
  %341 = vmatpush1.bf16.msra.mxu0 %v328
  %342 = vmatprep.subr.bf16.mxu0 0
  %343 = vmatpush1.bf16.msra.mxu0 %v327
  %344 = vmatprep.subr.bf16.mxu0 0
  %345 = vmatpush1.bf16.msra.mxu0 %v326
  %346 = vmatprep.subr.bf16.mxu0 0
  %347 = vmatpush1.bf16.msra.mxu0 %v325
  %348 = vmatprep.subr.bf16.mxu0 0
  %349 = vmatpush1.bf16.msra.mxu0 %v324
  %350 = vmatprep.subr.bf16.mxu0 0
  %351 = vmatpush1.bf16.msra.mxu0 %v323
  %352 = vmatprep.subr.bf16.mxu0 0
  %353 = vmatpush1.bf16.msra.mxu0 %v322
  %354 = vmatprep.subr.bf16.mxu0 0
  %355 = vmatpush2.bf16.msra.mxu0 0
  %356 = vmatprep.subr.bf16.mxu0 0
  %357 = vmatpush2.bf16.msra.mxu0 0
  %358 = vmatprep.subr.bf16.mxu0 0
  %359 = vmatpush2.bf16.msra.mxu0 0
  %360 = vmatprep.subr.bf16.mxu0 0
  %361 = vmatpush2.bf16.msra.mxu0 0
  %362 = vmatprep.subr.bf16.mxu0 0
  %363 = vmatpush2.bf16.msra.mxu0 0
  %364 = vmatprep.subr.bf16.mxu0 0
  %365 = vmatpush2.bf16.msra.mxu0 0
  %366 = vmatprep.subr.bf16.mxu0 0
  %367 = vmatpush2.bf16.msra.mxu0 0
  %368 = vmatprep.subr.bf16.mxu0 0
  %369 = vmatpush2.bf16.msra.mxu0 0
  %370 = vmatprep.mubr.bf16.mxu0 0
  %371 = vmatmul.mubr.bf16.gmra.mxu0 %v226
  %v372 = vpop.f32.mrf.mxu0
  %v373 = vadd.f32 0.0, %v372
  %v374 = vpop.f32.mrf.mxu0
  %v375 = vpop.f32.mrf.mxu0
  %v376 = vadd.f32 0.0, %v375
  %v377 = vpop.f32.mrf.mxu0
  %378 = vmatprep.mubr.bf16.mxu0 0
  %379 = vmatmul.mubr.bf16.gmra.mxu0 %v227
  %v380 = vpop.f32.mrf.mxu0
  %v381 = vadd.f32 0.0, %v380
  %v382 = vpop.f32.mrf.mxu0
  %v383 = vpop.f32.mrf.mxu0
  %v384 = vadd.f32 0.0, %v383
  %v385 = vpop.f32.mrf.mxu0
  %386 = vmatprep.mubr.bf16.mxu0 0
  %387 = vmatmul.mubr.bf16.gmra.mxu0 %v228
  %v388 = vpop.f32.mrf.mxu0
  %v389 = vadd.f32 0.0, %v388
  %v390 = vpop.f32.mrf.mxu0
  %v391 = vpop.f32.mrf.mxu0
  %v392 = vadd.f32 0.0, %v391
  %v393 = vpop.f32.mrf.mxu0
  %394 = vmatprep.mubr.bf16.mxu0 0
  %395 = vmatmul.mubr.bf16.gmra.mxu0 %v229
  %v396 = vpop.f32.mrf.mxu0
  %v397 = vadd.f32 0.0, %v396
  %v398 = vpop.f32.mrf.mxu0
  %v399 = vpop.f32.mrf.mxu0
  %v400 = vadd.f32 0.0, %v399
  %v401 = vpop.f32.mrf.mxu0
  %402 = vmatprep.mubr.bf16.mxu0 0
  %403 = vmatmul.mubr.bf16.gmra.mxu0 %v230
  %v404 = vpop.f32.mrf.mxu0
  %v405 = vadd.f32 0.0, %v404
  %v406 = vpop.f32.mrf.mxu0
  %v407 = vpop.f32.mrf.mxu0
  %v408 = vadd.f32 0.0, %v407
  %v409 = vpop.f32.mrf.mxu0
  %410 = vmatprep.mubr.bf16.mxu0 0
  %411 = vmatmul.mubr.bf16.gmra.mxu0 %v231
  %v412 = vpop.f32.mrf.mxu0
  %v413 = vadd.f32 0.0, %v412
  %v414 = vpop.f32.mrf.mxu0
  %v415 = vpop.f32.mrf.mxu0
  %v416 = vadd.f32 0.0, %v415
  %v417 = vpop.f32.mrf.mxu0
  %418 = vmatprep.mubr.bf16.mxu0 0
  %419 = vmatmul.mubr.bf16.gmra.mxu0 %v232
  %v420 = vpop.f32.mrf.mxu0
  %v421 = vadd.f32 0.0, %v420
  %v422 = vpop.f32.mrf.mxu0
  %v423 = vpop.f32.mrf.mxu0
  %v424 = vadd.f32 0.0, %v423
  %v425 = vpop.f32.mrf.mxu0
  %426 = vmatprep.mubr.bf16.mxu0 0
  %427 = vmatmul.mubr.bf16.gmra.mxu0 %v233
  %v428 = vpop.f32.mrf.mxu0
  %v429 = vadd.f32 0.0, %v428
  %v430 = vpop.f32.mrf.mxu0
  %v431 = vpop.f32.mrf.mxu0
  %v432 = vadd.f32 0.0, %v431
  %v433 = vpop.f32.mrf.mxu0
  %434 = vmatprep.mubr.bf16.mxu0 0
  %435 = vmatmul.mubr.bf16.gmra.mxu0 %v234
  %v436 = vpop.f32.mrf.mxu0
  %v437 = vadd.f32 0.0, %v436
  %v438 = vpop.f32.mrf.mxu0
  %v439 = vpop.f32.mrf.mxu0
  %v440 = vadd.f32 0.0, %v439
  %v441 = vpop.f32.mrf.mxu0
  %442 = vmatprep.mubr.bf16.mxu0 0
  %443 = vmatmul.mubr.bf16.gmra.mxu0 %v235
  %v444 = vpop.f32.mrf.mxu0
  %v445 = vadd.f32 0.0, %v444
  %v446 = vpop.f32.mrf.mxu0
  %v447 = vpop.f32.mrf.mxu0
  %v448 = vadd.f32 0.0, %v447
  %v449 = vpop.f32.mrf.mxu0
  %450 = vmatprep.mubr.bf16.mxu0 0
  %451 = vmatmul.mubr.bf16.gmra.mxu0 %v236
  %v452 = vpop.f32.mrf.mxu0
  %v453 = vadd.f32 0.0, %v452
  %v454 = vpop.f32.mrf.mxu0
  %v455 = vpop.f32.mrf.mxu0
  %v456 = vadd.f32 0.0, %v455
  %v457 = vpop.f32.mrf.mxu0
  %458 = vmatprep.mubr.bf16.mxu0 0
  %459 = vmatmul.mubr.bf16.gmra.mxu0 %v237
  %v460 = vpop.f32.mrf.mxu0
  %v461 = vadd.f32 0.0, %v460
  %v462 = vpop.f32.mrf.mxu0
  %v463 = vpop.f32.mrf.mxu0
  %v464 = vadd.f32 0.0, %v463
  %v465 = vpop.f32.mrf.mxu0
  %466 = vmatprep.mubr.bf16.mxu0 0
  %467 = vmatmul.mubr.bf16.gmra.mxu0 %v238
  %v468 = vpop.f32.mrf.mxu0
  %v469 = vadd.f32 0.0, %v468
  %v470 = vpop.f32.mrf.mxu0
  %v471 = vpop.f32.mrf.mxu0
  %v472 = vadd.f32 0.0, %v471
  %v473 = vpop.f32.mrf.mxu0
  %474 = vmatprep.mubr.bf16.mxu0 0
  %475 = vmatmul.mubr.bf16.gmra.mxu0 %v239
  %v476 = vpop.f32.mrf.mxu0
  %v477 = vadd.f32 0.0, %v476
  %v478 = vpop.f32.mrf.mxu0
  %v479 = vpop.f32.mrf.mxu0
  %v480 = vadd.f32 0.0, %v479
  %v481 = vpop.f32.mrf.mxu0
  %482 = vmatprep.mubr.bf16.mxu0 0
  %483 = vmatmul.mubr.bf16.gmra.mxu0 %v240
  %v484 = vpop.f32.mrf.mxu0
  %v485 = vadd.f32 0.0, %v484
  %v486 = vpop.f32.mrf.mxu0
  %v487 = vpop.f32.mrf.mxu0
  %v488 = vadd.f32 0.0, %v487
  %v489 = vpop.f32.mrf.mxu0
  %490 = vmatprep.mubr.bf16.mxu0 0
  %491 = vmatmul.mubr.bf16.gmra.mxu0 %v241
  %v492 = vpop.f32.mrf.mxu0
  %v493 = vadd.f32 0.0, %v492
  %v494 = vpop.f32.mrf.mxu0
  %v495 = vpop.f32.mrf.mxu0
  %v496 = vadd.f32 0.0, %v495
  %v497 = vpop.f32.mrf.mxu0
  %498 = vmatprep.mubr.bf16.mxu0 0
  %499 = vmatmul.mubr.bf16.gmra.mxu0 %v242
  %v500 = vpop.f32.mrf.mxu0
  %v501 = vadd.f32 0.0, %v500
  %v502 = vpop.f32.mrf.mxu0
  %v503 = vpop.f32.mrf.mxu0
  %v504 = vadd.f32 0.0, %v503
  %v505 = vpop.f32.mrf.mxu0
  %506 = vmatprep.mubr.bf16.mxu0 0
  %507 = vmatmul.mubr.bf16.gmra.mxu0 %v243
  %v508 = vpop.f32.mrf.mxu0
  %v509 = vadd.f32 0.0, %v508
  %v510 = vpop.f32.mrf.mxu0
  %v511 = vpop.f32.mrf.mxu0
  %v512 = vadd.f32 0.0, %v511
  %v513 = vpop.f32.mrf.mxu0
  %514 = vmatprep.mubr.bf16.mxu0 0
  %515 = vmatmul.mubr.bf16.gmra.mxu0 %v244
  %v516 = vpop.f32.mrf.mxu0
  %v517 = vadd.f32 0.0, %v516
  %v518 = vpop.f32.mrf.mxu0
  %v519 = vpop.f32.mrf.mxu0
  %v520 = vadd.f32 0.0, %v519
  %v521 = vpop.f32.mrf.mxu0
  %522 = vmatprep.mubr.bf16.mxu0 0
  %523 = vmatmul.mubr.bf16.gmra.mxu0 %v245
  %v524 = vpop.f32.mrf.mxu0
  %v525 = vadd.f32 0.0, %v524
  %v526 = vpop.f32.mrf.mxu0
  %v527 = vpop.f32.mrf.mxu0
  %v528 = vadd.f32 0.0, %v527
  %v529 = vpop.f32.mrf.mxu0
  %530 = vmatprep.mubr.bf16.mxu0 0
  %531 = vmatmul.mubr.bf16.gmra.mxu0 %v246
  %v532 = vpop.f32.mrf.mxu0
  %v533 = vadd.f32 0.0, %v532
  %v534 = vpop.f32.mrf.mxu0
  %v535 = vpop.f32.mrf.mxu0
  %v536 = vadd.f32 0.0, %v535
  %v537 = vpop.f32.mrf.mxu0
  %538 = vmatprep.mubr.bf16.mxu0 0
  %539 = vmatmul.mubr.bf16.gmra.mxu0 %v247
  %v540 = vpop.f32.mrf.mxu0
  %v541 = vadd.f32 0.0, %v540
  %v542 = vpop.f32.mrf.mxu0
  %v543 = vpop.f32.mrf.mxu0
  %v544 = vadd.f32 0.0, %v543
  %v545 = vpop.f32.mrf.mxu0
  %546 = vmatprep.mubr.bf16.mxu0 0
  %547 = vmatmul.mubr.bf16.gmra.mxu0 %v248
  %v548 = vpop.f32.mrf.mxu0
  %v549 = vadd.f32 0.0, %v548
  %v550 = vpop.f32.mrf.mxu0
  %v551 = vpop.f32.mrf.mxu0
  %v552 = vadd.f32 0.0, %v551
  %v553 = vpop.f32.mrf.mxu0
  %554 = vmatprep.mubr.bf16.mxu0 0
  %555 = vmatmul.mubr.bf16.gmra.mxu0 %v249
  %v556 = vpop.f32.mrf.mxu0
  %v557 = vadd.f32 0.0, %v556
  %v558 = vpop.f32.mrf.mxu0
  %v559 = vpop.f32.mrf.mxu0
  %v560 = vadd.f32 0.0, %v559
  %v561 = vpop.f32.mrf.mxu0
  %562 = vmatprep.mubr.bf16.mxu0 0
  %563 = vmatmul.mubr.bf16.gmra.mxu0 %v250
  %v564 = vpop.f32.mrf.mxu0
  %v565 = vadd.f32 0.0, %v564
  %v566 = vpop.f32.mrf.mxu0
  %v567 = vpop.f32.mrf.mxu0
  %v568 = vadd.f32 0.0, %v567
  %v569 = vpop.f32.mrf.mxu0
  %570 = vmatprep.mubr.bf16.mxu0 0
  %571 = vmatmul.mubr.bf16.gmra.mxu0 %v251
  %v572 = vpop.f32.mrf.mxu0
  %v573 = vadd.f32 0.0, %v572
  %v574 = vpop.f32.mrf.mxu0
  %v575 = vpop.f32.mrf.mxu0
  %v576 = vadd.f32 0.0, %v575
  %v577 = vpop.f32.mrf.mxu0
  %578 = vmatprep.mubr.bf16.mxu0 0
  %579 = vmatmul.mubr.bf16.gmra.mxu0 %v252
  %v580 = vpop.f32.mrf.mxu0
  %v581 = vadd.f32 0.0, %v580
  %v582 = vpop.f32.mrf.mxu0
  %v583 = vpop.f32.mrf.mxu0
  %v584 = vadd.f32 0.0, %v583
  %v585 = vpop.f32.mrf.mxu0
  %586 = vmatprep.mubr.bf16.mxu0 0
  %587 = vmatmul.mubr.bf16.gmra.mxu0 %v253
  %v588 = vpop.f32.mrf.mxu0
  %v589 = vadd.f32 0.0, %v588
  %v590 = vpop.f32.mrf.mxu0
  %v591 = vpop.f32.mrf.mxu0
  %v592 = vadd.f32 0.0, %v591
  %v593 = vpop.f32.mrf.mxu0
  %594 = vmatprep.mubr.bf16.mxu0 0
  %595 = vmatmul.mubr.bf16.gmra.mxu0 %v254
  %v596 = vpop.f32.mrf.mxu0
  %v597 = vadd.f32 0.0, %v596
  %v598 = vpop.f32.mrf.mxu0
  %v599 = vpop.f32.mrf.mxu0
  %v600 = vadd.f32 0.0, %v599
  %v601 = vpop.f32.mrf.mxu0
  %602 = vmatprep.mubr.bf16.mxu0 0
  %603 = vmatmul.mubr.bf16.gmra.mxu0 %v255
  %v604 = vpop.f32.mrf.mxu0
  %v605 = vadd.f32 0.0, %v604
  %v606 = vpop.f32.mrf.mxu0
  %v607 = vpop.f32.mrf.mxu0
  %v608 = vadd.f32 0.0, %v607
  %v609 = vpop.f32.mrf.mxu0
  %610 = vmatprep.mubr.bf16.mxu0 0
  %611 = vmatmul.mubr.bf16.gmra.mxu0 %v256
  %v612 = vpop.f32.mrf.mxu0
  %v613 = vadd.f32 0.0, %v612
  %v614 = vpop.f32.mrf.mxu0
  %v615 = vpop.f32.mrf.mxu0
  %v616 = vadd.f32 0.0, %v615
  %v617 = vpop.f32.mrf.mxu0
  %618 = vmatprep.mubr.bf16.mxu0 0
  %619 = vmatmul.mubr.bf16.gmra.mxu0 %v257
  %v620 = vpop.f32.mrf.mxu0
  %v621 = vadd.f32 0.0, %v620
  %v622 = vpop.f32.mrf.mxu0
  %v623 = vpop.f32.mrf.mxu0
  %v624 = vadd.f32 0.0, %v623
  %v625 = vpop.f32.mrf.mxu0
  %626 = vdwg.mxu0
  %v627 = vld [vmem:[%s3] sm:$0x1]
  %v628 = vld [vmem:[%s3 + $0x1] sm:$0x1]
  %v629 = vadd.f32 %v373, %v376
  %v630 = vadd.f32 %v629, %v381
  %v631 = vadd.f32 %v630, %v384
  %v632 = vadd.f32 %v631, %v389
  %v633 = vadd.f32 %v632, %v392
  %v634 = vadd.f32 %v633, %v397
  %v635 = vadd.f32 %v634, %v400
  %v636 = vadd.f32 %v635, %v405
  %v637 = vadd.f32 %v636, %v408
  %v638 = vadd.f32 %v637, %v413
  %v639 = vadd.f32 %v638, %v416
  %v640 = vadd.f32 %v639, %v421
  %v641 = vadd.f32 %v640, %v424
  %v642 = vadd.f32 %v641, %v429
  %v643 = vadd.f32 %v642, %v432
  %v644 = vadd.f32 %v643, %v437
  %v645 = vadd.f32 %v644, %v440
  %v646 = vadd.f32 %v645, %v445
  %v647 = vadd.f32 %v646, %v448
  %v648 = vadd.f32 %v647, %v453
  %v649 = vadd.f32 %v648, %v456
  %v650 = vadd.f32 %v649, %v461
  %v651 = vadd.f32 %v650, %v464
  %v652 = vadd.f32 %v651, %v469
  %v653 = vadd.f32 %v652, %v472
  %v654 = vadd.f32 %v653, %v477
  %v655 = vadd.f32 %v654, %v480
  %v656 = vadd.f32 %v655, %v485
  %v657 = vadd.f32 %v656, %v488
  %v658 = vadd.f32 %v657, %v493
  %v659 = vadd.f32 %v658, %v496
  %v660 = vadd.f32 %v659, %v501
  %v661 = vadd.f32 %v660, %v504
  %v662 = vadd.f32 %v661, %v509
  %v663 = vadd.f32 %v662, %v512
  %v664 = vadd.f32 %v663, %v517
  %v665 = vadd.f32 %v664, %v520
  %v666 = vadd.f32 %v665, %v525
  %v667 = vadd.f32 %v666, %v528
  %v668 = vadd.f32 %v667, %v533
  %v669 = vadd.f32 %v668, %v536
  %v670 = vadd.f32 %v669, %v541
  %v671 = vadd.f32 %v670, %v544
  %v672 = vadd.f32 %v671, %v549
  %v673 = vadd.f32 %v672, %v552
  %v674 = vadd.f32 %v673, %v557
  %v675 = vadd.f32 %v674, %v560
  %v676 = vadd.f32 %v675, %v565
  %v677 = vadd.f32 %v676, %v568
  %v678 = vadd.f32 %v677, %v573
  %v679 = vadd.f32 %v678, %v576
  %v680 = vadd.f32 %v679, %v581
  %v681 = vadd.f32 %v680, %v584
  %v682 = vadd.f32 %v681, %v589
  %v683 = vadd.f32 %v682, %v592
  %v684 = vadd.f32 %v683, %v597
  %v685 = vadd.f32 %v684, %v600
  %v686 = vadd.f32 %v685, %v605
  %v687 = vadd.f32 %v686, %v608
  %v688 = vadd.f32 %v687, %v613
  %v689 = vadd.f32 %v688, %v616
  %v690 = vadd.f32 %v689, %v621
  %v691 = vadd.f32 %v690, %v624
  %v692 = vrot.slane %v691, 4
  %v693 = vadd.f32 %v691, %v692
  %v694 = vrot.slane %v693, 2
  %v695 = vadd.f32 %v693, %v694
  %v696 = vrot.slane %v695, 1
  %v697 = vadd.f32 %v695, %v696
  %v698 = vmul.f32 %v697, 0.001953125
  %v699 = vsub.f32 %v373, %v698
  %v700 = vsub.f32 %v376, %v698
  %v701 = vsub.f32 %v381, %v698
  %v702 = vsub.f32 %v384, %v698
  %v703 = vsub.f32 %v389, %v698
  %v704 = vsub.f32 %v392, %v698
  %v705 = vsub.f32 %v397, %v698
  %v706 = vsub.f32 %v400, %v698
  %v707 = vsub.f32 %v405, %v698
  %v708 = vsub.f32 %v408, %v698
  %v709 = vsub.f32 %v413, %v698
  %v710 = vsub.f32 %v416, %v698
  %v711 = vsub.f32 %v421, %v698
  %v712 = vsub.f32 %v424, %v698
  %v713 = vsub.f32 %v429, %v698
  %v714 = vsub.f32 %v432, %v698
  %v715 = vsub.f32 %v437, %v698
  %v716 = vsub.f32 %v440, %v698
  %v717 = vsub.f32 %v445, %v698
  %v718 = vsub.f32 %v448, %v698
  %v719 = vsub.f32 %v453, %v698
  %v720 = vsub.f32 %v456, %v698
  %v721 = vsub.f32 %v461, %v698
  %v722 = vsub.f32 %v464, %v698
  %v723 = vsub.f32 %v469, %v698
  %v724 = vsub.f32 %v472, %v698
  %v725 = vsub.f32 %v477, %v698
  %v726 = vsub.f32 %v480, %v698
  %v727 = vsub.f32 %v485, %v698
  %v728 = vsub.f32 %v488, %v698
  %v729 = vsub.f32 %v493, %v698
  %v730 = vsub.f32 %v496, %v698
  %v731 = vsub.f32 %v501, %v698
  %v732 = vsub.f32 %v504, %v698
  %v733 = vsub.f32 %v509, %v698
  %v734 = vsub.f32 %v512, %v698
  %v735 = vsub.f32 %v517, %v698
  %v736 = vsub.f32 %v520, %v698
  %v737 = vsub.f32 %v525, %v698
  %v738 = vsub.f32 %v528, %v698
  %v739 = vsub.f32 %v533, %v698
  %v740 = vsub.f32 %v536, %v698
  %v741 = vsub.f32 %v541, %v698
  %v742 = vsub.f32 %v544, %v698
  %v743 = vsub.f32 %v549, %v698
  %v744 = vsub.f32 %v552, %v698
  %v745 = vsub.f32 %v557, %v698
  %v746 = vsub.f32 %v560, %v698
  %v747 = vsub.f32 %v565, %v698
  %v748 = vsub.f32 %v568, %v698
  %v749 = vsub.f32 %v573, %v698
  %v750 = vsub.f32 %v576, %v698
  %v751 = vsub.f32 %v581, %v698
  %v752 = vsub.f32 %v584, %v698
  %v753 = vsub.f32 %v589, %v698
  %v754 = vsub.f32 %v592, %v698
  %v755 = vsub.f32 %v597, %v698
  %v756 = vsub.f32 %v600, %v698
  %v757 = vsub.f32 %v605, %v698
  %v758 = vsub.f32 %v608, %v698
  %v759 = vsub.f32 %v613, %v698
  %v760 = vsub.f32 %v616, %v698
  %v761 = vsub.f32 %v621, %v698
  %v762 = vsub.f32 %v624, %v698
  %v763 = vmul.f32 %v699, %v699
  %v764 = vmul.f32 %v700, %v700
  %v765 = vmul.f32 %v701, %v701
  %v766 = vmul.f32 %v702, %v702
  %v767 = vmul.f32 %v703, %v703
  %v768 = vmul.f32 %v704, %v704
  %v769 = vmul.f32 %v705, %v705
  %v770 = vmul.f32 %v706, %v706
  %v771 = vmul.f32 %v707, %v707
  %v772 = vmul.f32 %v708, %v708
  %v773 = vmul.f32 %v709, %v709
  %v774 = vmul.f32 %v710, %v710
  %v775 = vmul.f32 %v711, %v711
  %v776 = vmul.f32 %v712, %v712
  %v777 = vmul.f32 %v713, %v713
  %v778 = vmul.f32 %v714, %v714
  %v779 = vmul.f32 %v715, %v715
  %v780 = vmul.f32 %v716, %v716
  %v781 = vmul.f32 %v717, %v717
  %v782 = vmul.f32 %v718, %v718
  %v783 = vmul.f32 %v719, %v719
  %v784 = vmul.f32 %v720, %v720
  %v785 = vmul.f32 %v721, %v721
  %v786 = vmul.f32 %v722, %v722
  %v787 = vmul.f32 %v723, %v723
  %v788 = vmul.f32 %v724, %v724
  %v789 = vmul.f32 %v725, %v725
  %v790 = vmul.f32 %v726, %v726
  %v791 = vmul.f32 %v727, %v727
  %v792 = vmul.f32 %v728, %v728
  %v793 = vmul.f32 %v729, %v729
  %v794 = vmul.f32 %v730, %v730
  %v795 = vmul.f32 %v731, %v731
  %v796 = vmul.f32 %v732, %v732
  %v797 = vmul.f32 %v733, %v733
  %v798 = vmul.f32 %v734, %v734
  %v799 = vmul.f32 %v735, %v735
  %v800 = vmul.f32 %v736, %v736
  %v801 = vmul.f32 %v737, %v737
  %v802 = vmul.f32 %v738, %v738
  %v803 = vmul.f32 %v739, %v739
  %v804 = vmul.f32 %v740, %v740
  %v805 = vmul.f32 %v741, %v741
  %v806 = vmul.f32 %v742, %v742
  %v807 = vmul.f32 %v743, %v743
  %v808 = vmul.f32 %v744, %v744
  %v809 = vmul.f32 %v745, %v745
  %v810 = vmul.f32 %v746, %v746
  %v811 = vmul.f32 %v747, %v747
  %v812 = vmul.f32 %v748, %v748
  %v813 = vmul.f32 %v749, %v749
  %v814 = vmul.f32 %v750, %v750
  %v815 = vmul.f32 %v751, %v751
  %v816 = vmul.f32 %v752, %v752
  %v817 = vmul.f32 %v753, %v753
  %v818 = vmul.f32 %v754, %v754
  %v819 = vmul.f32 %v755, %v755
  %v820 = vmul.f32 %v756, %v756
  %v821 = vmul.f32 %v757, %v757
  %v822 = vmul.f32 %v758, %v758
  %v823 = vmul.f32 %v759, %v759
  %v824 = vmul.f32 %v760, %v760
  %v825 = vmul.f32 %v761, %v761
  %v826 = vmul.f32 %v762, %v762
  %v827 = vadd.f32 %v763, %v764
  %v828 = vadd.f32 %v827, %v765
  %v829 = vadd.f32 %v828, %v766
  %v830 = vadd.f32 %v829, %v767
  %v831 = vadd.f32 %v830, %v768
  %v832 = vadd.f32 %v831, %v769
  %v833 = vadd.f32 %v832, %v770
  %v834 = vadd.f32 %v833, %v771
  %v835 = vadd.f32 %v834, %v772
  %v836 = vadd.f32 %v835, %v773
  %v837 = vadd.f32 %v836, %v774
  %v838 = vadd.f32 %v837, %v775
  %v839 = vadd.f32 %v838, %v776
  %v840 = vadd.f32 %v839, %v777
  %v841 = vadd.f32 %v840, %v778
  %v842 = vadd.f32 %v841, %v779
  %v843 = vadd.f32 %v842, %v780
  %v844 = vadd.f32 %v843, %v781
  %v845 = vadd.f32 %v844, %v782
  %v846 = vadd.f32 %v845, %v783
  %v847 = vadd.f32 %v846, %v784
  %v848 = vadd.f32 %v847, %v785
  %v849 = vadd.f32 %v848, %v786
  %v850 = vadd.f32 %v849, %v787
  %v851 = vadd.f32 %v850, %v788
  %v852 = vadd.f32 %v851, %v789
  %v853 = vadd.f32 %v852, %v790
  %v854 = vadd.f32 %v853, %v791
  %v855 = vadd.f32 %v854, %v792
  %v856 = vadd.f32 %v855, %v793
  %v857 = vadd.f32 %v856, %v794
  %v858 = vadd.f32 %v857, %v795
  %v859 = vadd.f32 %v858, %v796
  %v860 = vadd.f32 %v859, %v797
  %v861 = vadd.f32 %v860, %v798
  %v862 = vadd.f32 %v861, %v799
  %v863 = vadd.f32 %v862, %v800
  %v864 = vadd.f32 %v863, %v801
  %v865 = vadd.f32 %v864, %v802
  %v866 = vadd.f32 %v865, %v803
  %v867 = vadd.f32 %v866, %v804
  %v868 = vadd.f32 %v867, %v805
  %v869 = vadd.f32 %v868, %v806
  %v870 = vadd.f32 %v869, %v807
  %v871 = vadd.f32 %v870, %v808
  %v872 = vadd.f32 %v871, %v809
  %v873 = vadd.f32 %v872, %v810
  %v874 = vadd.f32 %v873, %v811
  %v875 = vadd.f32 %v874, %v812
  %v876 = vadd.f32 %v875, %v813
  %v877 = vadd.f32 %v876, %v814
  %v878 = vadd.f32 %v877, %v815
  %v879 = vadd.f32 %v878, %v816
  %v880 = vadd.f32 %v879, %v817
  %v881 = vadd.f32 %v880, %v818
  %v882 = vadd.f32 %v881, %v819
  %v883 = vadd.f32 %v882, %v820
  %v884 = vadd.f32 %v883, %v821
  %v885 = vadd.f32 %v884, %v822
  %v886 = vadd.f32 %v885, %v823
  %v887 = vadd.f32 %v886, %v824
  %v888 = vadd.f32 %v887, %v825
  %v889 = vadd.f32 %v888, %v826
  %v890 = vrot.slane %v889, 4
  %v891 = vadd.f32 %v889, %v890
  %v892 = vrot.slane %v891, 2
  %v893 = vadd.f32 %v891, %v892
  %v894 = vrot.slane %v893, 1
  %v895 = vadd.f32 %v893, %v894
  %v896 = vmul.f32 %v895, 0.001953125
  %v897 = vadd.f32 %v896, 1e-05
  %v898 = vrsqrt.pop %v897
  %v899 = vmul.f32 %v898, %v627
  %v900 = vlaneseq
  %v901 = vshrl.u32 %v900, 7
  %v902 = vsub.s32 0, %v901
  %v903 = vrot.slane %v899, %v902
  %v904 = vmul.f32 %v699, %v903
  %v905 = vmul.f32 %v700, %v903
  %v906 = vmul.f32 %v701, %v903
  %v907 = vmul.f32 %v702, %v903
  %v908 = vmul.f32 %v703, %v903
  %v909 = vmul.f32 %v704, %v903
  %v910 = vmul.f32 %v705, %v903
  %v911 = vmul.f32 %v706, %v903
  %v912 = vmul.f32 %v707, %v903
  %v913 = vmul.f32 %v708, %v903
  %v914 = vmul.f32 %v709, %v903
  %v915 = vmul.f32 %v710, %v903
  %v916 = vmul.f32 %v711, %v903
  %v917 = vmul.f32 %v712, %v903
  %v918 = vmul.f32 %v713, %v903
  %v919 = vmul.f32 %v714, %v903
  %v920 = vmul.f32 %v715, %v903
  %v921 = vmul.f32 %v716, %v903
  %v922 = vmul.f32 %v717, %v903
  %v923 = vmul.f32 %v718, %v903
  %v924 = vmul.f32 %v719, %v903
  %v925 = vmul.f32 %v720, %v903
  %v926 = vmul.f32 %v721, %v903
  %v927 = vmul.f32 %v722, %v903
  %v928 = vmul.f32 %v723, %v903
  %v929 = vmul.f32 %v724, %v903
  %v930 = vmul.f32 %v725, %v903
  %v931 = vmul.f32 %v726, %v903
  %v932 = vmul.f32 %v727, %v903
  %v933 = vmul.f32 %v728, %v903
  %v934 = vmul.f32 %v729, %v903
  %v935 = vmul.f32 %v730, %v903
  %v936 = vmul.f32 %v731, %v903
  %v937 = vmul.f32 %v732, %v903
  %v938 = vmul.f32 %v733, %v903
  %v939 = vmul.f32 %v734, %v903
  %v940 = vmul.f32 %v735, %v903
  %v941 = vmul.f32 %v736, %v903
  %v942 = vmul.f32 %v737, %v903
  %v943 = vmul.f32 %v738, %v903
  %v944 = vmul.f32 %v739, %v903
  %v945 = vmul.f32 %v740, %v903
  %v946 = vmul.f32 %v741, %v903
  %v947 = vmul.f32 %v742, %v903
  %v948 = vmul.f32 %v743, %v903
  %v949 = vmul.f32 %v744, %v903
  %v950 = vmul.f32 %v745, %v903
  %v951 = vmul.f32 %v746, %v903
  %v952 = vmul.f32 %v747, %v903
  %v953 = vmul.f32 %v748, %v903
  %v954 = vmul.f32 %v749, %v903
  %v955 = vmul.f32 %v750, %v903
  %v956 = vmul.f32 %v751, %v903
  %v957 = vmul.f32 %v752, %v903
  %v958 = vmul.f32 %v753, %v903
  %v959 = vmul.f32 %v754, %v903
  %v960 = vmul.f32 %v755, %v903
  %v961 = vmul.f32 %v756, %v903
  %v962 = vmul.f32 %v757, %v903
  %v963 = vmul.f32 %v758, %v903
  %v964 = vmul.f32 %v759, %v903
  %v965 = vmul.f32 %v760, %v903
  %v966 = vmul.f32 %v761, %v903
  %v967 = vmul.f32 %v762, %v903
  %v968 = vlaneseq
  %v969 = vshrl.u32 %v968, 7
  %v970 = vsub.s32 0, %v969
  %v971 = vrot.slane %v628, %v970
  %v972 = vadd.f32 %v904, %v971
  %v973 = vadd.f32 %v905, %v971
  %v974 = vadd.f32 %v906, %v971
  %v975 = vadd.f32 %v907, %v971
  %v976 = vadd.f32 %v908, %v971
  %v977 = vadd.f32 %v909, %v971
  %v978 = vadd.f32 %v910, %v971
  %v979 = vadd.f32 %v911, %v971
  %v980 = vadd.f32 %v912, %v971
  %v981 = vadd.f32 %v913, %v971
  %v982 = vadd.f32 %v914, %v971
  %v983 = vadd.f32 %v915, %v971
  %v984 = vadd.f32 %v916, %v971
  %v985 = vadd.f32 %v917, %v971
  %v986 = vadd.f32 %v918, %v971
  %v987 = vadd.f32 %v919, %v971
  %v988 = vadd.f32 %v920, %v971
  %v989 = vadd.f32 %v921, %v971
  %v990 = vadd.f32 %v922, %v971
  %v991 = vadd.f32 %v923, %v971
  %v992 = vadd.f32 %v924, %v971
  %v993 = vadd.f32 %v925, %v971
  %v994 = vadd.f32 %v926, %v971
  %v995 = vadd.f32 %v927, %v971
  %v996 = vadd.f32 %v928, %v971
  %v997 = vadd.f32 %v929, %v971
  %v998 = vadd.f32 %v930, %v971
  %v999 = vadd.f32 %v931, %v971
  %v1000 = vadd.f32 %v932, %v971
  %v1001 = vadd.f32 %v933, %v971
  %v1002 = vadd.f32 %v934, %v971
  %v1003 = vadd.f32 %v935, %v971
  %v1004 = vadd.f32 %v936, %v971
  %v1005 = vadd.f32 %v937, %v971
  %v1006 = vadd.f32 %v938, %v971
  %v1007 = vadd.f32 %v939, %v971
  %v1008 = vadd.f32 %v940, %v971
  %v1009 = vadd.f32 %v941, %v971
  %v1010 = vadd.f32 %v942, %v971
  %v1011 = vadd.f32 %v943, %v971
  %v1012 = vadd.f32 %v944, %v971
  %v1013 = vadd.f32 %v945, %v971
  %v1014 = vadd.f32 %v946, %v971
  %v1015 = vadd.f32 %v947, %v971
  %v1016 = vadd.f32 %v948, %v971
  %v1017 = vadd.f32 %v949, %v971
  %v1018 = vadd.f32 %v950, %v971
  %v1019 = vadd.f32 %v951, %v971
  %v1020 = vadd.f32 %v952, %v971
  %v1021 = vadd.f32 %v953, %v971
  %v1022 = vadd.f32 %v954, %v971
  %v1023 = vadd.f32 %v955, %v971
  %v1024 = vadd.f32 %v956, %v971
  %v1025 = vadd.f32 %v957, %v971
  %v1026 = vadd.f32 %v958, %v971
  %v1027 = vadd.f32 %v959, %v971
  %v1028 = vadd.f32 %v960, %v971
  %v1029 = vadd.f32 %v961, %v971
  %v1030 = vadd.f32 %v962, %v971
  %v1031 = vadd.f32 %v963, %v971
  %v1032 = vadd.f32 %v964, %v971
  %v1033 = vadd.f32 %v965, %v971
  %v1034 = vadd.f32 %v966, %v971
  %v1035 = vadd.f32 %v967, %v971
  %v1036 = vmul.f32 %v972, 0.1
  %v1037 = vmul.f32 %v973, 0.1
  %v1038 = vmul.f32 %v974, 0.1
  %v1039 = vmul.f32 %v975, 0.1
  %v1040 = vmul.f32 %v976, 0.1
  %v1041 = vmul.f32 %v977, 0.1
  %v1042 = vmul.f32 %v978, 0.1
  %v1043 = vmul.f32 %v979, 0.1
  %v1044 = vmul.f32 %v980, 0.1
  %v1045 = vmul.f32 %v981, 0.1
  %v1046 = vmul.f32 %v982, 0.1
  %v1047 = vmul.f32 %v983, 0.1
  %v1048 = vmul.f32 %v984, 0.1
  %v1049 = vmul.f32 %v985, 0.1
  %v1050 = vmul.f32 %v986, 0.1
  %v1051 = vmul.f32 %v987, 0.1
  %v1052 = vmul.f32 %v988, 0.1
  %v1053 = vmul.f32 %v989, 0.1
  %v1054 = vmul.f32 %v990, 0.1
  %v1055 = vmul.f32 %v991, 0.1
  %v1056 = vmul.f32 %v992, 0.1
  %v1057 = vmul.f32 %v993, 0.1
  %v1058 = vmul.f32 %v994, 0.1
  %v1059 = vmul.f32 %v995, 0.1
  %v1060 = vmul.f32 %v996, 0.1
  %v1061 = vmul.f32 %v997, 0.1
  %v1062 = vmul.f32 %v998, 0.1
  %v1063 = vmul.f32 %v999, 0.1
  %v1064 = vmul.f32 %v1000, 0.1
  %v1065 = vmul.f32 %v1001, 0.1
  %v1066 = vmul.f32 %v1002, 0.1
  %v1067 = vmul.f32 %v1003, 0.1
  %v1068 = vmul.f32 %v1004, 0.1
  %v1069 = vmul.f32 %v1005, 0.1
  %v1070 = vmul.f32 %v1006, 0.1
  %v1071 = vmul.f32 %v1007, 0.1
  %v1072 = vmul.f32 %v1008, 0.1
  %v1073 = vmul.f32 %v1009, 0.1
  %v1074 = vmul.f32 %v1010, 0.1
  %v1075 = vmul.f32 %v1011, 0.1
  %v1076 = vmul.f32 %v1012, 0.1
  %v1077 = vmul.f32 %v1013, 0.1
  %v1078 = vmul.f32 %v1014, 0.1
  %v1079 = vmul.f32 %v1015, 0.1
  %v1080 = vmul.f32 %v1016, 0.1
  %v1081 = vmul.f32 %v1017, 0.1
  %v1082 = vmul.f32 %v1018, 0.1
  %v1083 = vmul.f32 %v1019, 0.1
  %v1084 = vmul.f32 %v1020, 0.1
  %v1085 = vmul.f32 %v1021, 0.1
  %v1086 = vmul.f32 %v1022, 0.1
  %v1087 = vmul.f32 %v1023, 0.1
  %v1088 = vmul.f32 %v1024, 0.1
  %v1089 = vmul.f32 %v1025, 0.1
  %v1090 = vmul.f32 %v1026, 0.1
  %v1091 = vmul.f32 %v1027, 0.1
  %v1092 = vmul.f32 %v1028, 0.1
  %v1093 = vmul.f32 %v1029, 0.1
  %v1094 = vmul.f32 %v1030, 0.1
  %v1095 = vmul.f32 %v1031, 0.1
  %v1096 = vmul.f32 %v1032, 0.1
  %v1097 = vmul.f32 %v1033, 0.1
  %v1098 = vmul.f32 %v1034, 0.1
  %v1099 = vmul.f32 %v1035, 0.1
  %v1100 = vmax.f32 %v972, %v1036
  %v1101 = vmax.f32 %v973, %v1037
  %v1102 = vmax.f32 %v974, %v1038
  %v1103 = vmax.f32 %v975, %v1039
  %v1104 = vmax.f32 %v976, %v1040
  %v1105 = vmax.f32 %v977, %v1041
  %v1106 = vmax.f32 %v978, %v1042
  %v1107 = vmax.f32 %v979, %v1043
  %v1108 = vmax.f32 %v980, %v1044
  %v1109 = vmax.f32 %v981, %v1045
  %v1110 = vmax.f32 %v982, %v1046
  %v1111 = vmax.f32 %v983, %v1047
  %v1112 = vmax.f32 %v984, %v1048
  %v1113 = vmax.f32 %v985, %v1049
  %v1114 = vmax.f32 %v986, %v1050
  %v1115 = vmax.f32 %v987, %v1051
  %v1116 = vmax.f32 %v988, %v1052
  %v1117 = vmax.f32 %v989, %v1053
  %v1118 = vmax.f32 %v990, %v1054
  %v1119 = vmax.f32 %v991, %v1055
  %v1120 = vmax.f32 %v992, %v1056
  %v1121 = vmax.f32 %v993, %v1057
  %v1122 = vmax.f32 %v994, %v1058
  %v1123 = vmax.f32 %v995, %v1059
  %v1124 = vmax.f32 %v996, %v1060
  %v1125 = vmax.f32 %v997, %v1061
  %v1126 = vmax.f32 %v998, %v1062
  %v1127 = vmax.f32 %v999, %v1063
  %v1128 = vmax.f32 %v1000, %v1064
  %v1129 = vmax.f32 %v1001, %v1065
  %v1130 = vmax.f32 %v1002, %v1066
  %v1131 = vmax.f32 %v1003, %v1067
  %v1132 = vmax.f32 %v1004, %v1068
  %v1133 = vmax.f32 %v1005, %v1069
  %v1134 = vmax.f32 %v1006, %v1070
  %v1135 = vmax.f32 %v1007, %v1071
  %v1136 = vmax.f32 %v1008, %v1072
  %v1137 = vmax.f32 %v1009, %v1073
  %v1138 = vmax.f32 %v1010, %v1074
  %v1139 = vmax.f32 %v1011, %v1075
  %v1140 = vmax.f32 %v1012, %v1076
  %v1141 = vmax.f32 %v1013, %v1077
  %v1142 = vmax.f32 %v1014, %v1078
  %v1143 = vmax.f32 %v1015, %v1079
  %v1144 = vmax.f32 %v1016, %v1080
  %v1145 = vmax.f32 %v1017, %v1081
  %v1146 = vmax.f32 %v1018, %v1082
  %v1147 = vmax.f32 %v1019, %v1083
  %v1148 = vmax.f32 %v1020, %v1084
  %v1149 = vmax.f32 %v1021, %v1085
  %v1150 = vmax.f32 %v1022, %v1086
  %v1151 = vmax.f32 %v1023, %v1087
  %v1152 = vmax.f32 %v1024, %v1088
  %v1153 = vmax.f32 %v1025, %v1089
  %v1154 = vmax.f32 %v1026, %v1090
  %v1155 = vmax.f32 %v1027, %v1091
  %v1156 = vmax.f32 %v1028, %v1092
  %v1157 = vmax.f32 %v1029, %v1093
  %v1158 = vmax.f32 %v1030, %v1094
  %v1159 = vmax.f32 %v1031, %v1095
  %v1160 = vmax.f32 %v1032, %v1096
  %v1161 = vmax.f32 %v1033, %v1097
  %v1162 = vmax.f32 %v1034, %v1098
  %v1163 = vmax.f32 %v1035, %v1099
  %v1164 = vld [vmem:[%s3 + $0x2] sm:$0x1]
  %v1165 = vlaneseq
  %v1166 = vshrl.u32 %v1165, 7
  %v1167 = vsub.s32 0, %v1166
  %v1168 = vrot.slane %v1164, %v1167
  %v1169 = vadd.f32 %v1100, %v1168
  %v1170 = vadd.f32 %v1101, %v1168
  %v1171 = vadd.f32 %v1102, %v1168
  %v1172 = vadd.f32 %v1103, %v1168
  %v1173 = vadd.f32 %v1104, %v1168
  %v1174 = vadd.f32 %v1105, %v1168
  %v1175 = vadd.f32 %v1106, %v1168
  %v1176 = vadd.f32 %v1107, %v1168
  %v1177 = vadd.f32 %v1108, %v1168
  %v1178 = vadd.f32 %v1109, %v1168
  %v1179 = vadd.f32 %v1110, %v1168
  %v1180 = vadd.f32 %v1111, %v1168
  %v1181 = vadd.f32 %v1112, %v1168
  %v1182 = vadd.f32 %v1113, %v1168
  %v1183 = vadd.f32 %v1114, %v1168
  %v1184 = vadd.f32 %v1115, %v1168
  %v1185 = vadd.f32 %v1116, %v1168
  %v1186 = vadd.f32 %v1117, %v1168
  %v1187 = vadd.f32 %v1118, %v1168
  %v1188 = vadd.f32 %v1119, %v1168
  %v1189 = vadd.f32 %v1120, %v1168
  %v1190 = vadd.f32 %v1121, %v1168
  %v1191 = vadd.f32 %v1122, %v1168
  %v1192 = vadd.f32 %v1123, %v1168
  %v1193 = vadd.f32 %v1124, %v1168
  %v1194 = vadd.f32 %v1125, %v1168
  %v1195 = vadd.f32 %v1126, %v1168
  %v1196 = vadd.f32 %v1127, %v1168
  %v1197 = vadd.f32 %v1128, %v1168
  %v1198 = vadd.f32 %v1129, %v1168
  %v1199 = vadd.f32 %v1130, %v1168
  %v1200 = vadd.f32 %v1131, %v1168
  %v1201 = vadd.f32 %v1132, %v1168
  %v1202 = vadd.f32 %v1133, %v1168
  %v1203 = vadd.f32 %v1134, %v1168
  %v1204 = vadd.f32 %v1135, %v1168
  %v1205 = vadd.f32 %v1136, %v1168
  %v1206 = vadd.f32 %v1137, %v1168
  %v1207 = vadd.f32 %v1138, %v1168
  %v1208 = vadd.f32 %v1139, %v1168
  %v1209 = vadd.f32 %v1140, %v1168
  %v1210 = vadd.f32 %v1141, %v1168
  %v1211 = vadd.f32 %v1142, %v1168
  %v1212 = vadd.f32 %v1143, %v1168
  %v1213 = vadd.f32 %v1144, %v1168
  %v1214 = vadd.f32 %v1145, %v1168
  %v1215 = vadd.f32 %v1146, %v1168
  %v1216 = vadd.f32 %v1147, %v1168
  %v1217 = vadd.f32 %v1148, %v1168
  %v1218 = vadd.f32 %v1149, %v1168
  %v1219 = vadd.f32 %v1150, %v1168
  %v1220 = vadd.f32 %v1151, %v1168
  %v1221 = vadd.f32 %v1152, %v1168
  %v1222 = vadd.f32 %v1153, %v1168
  %v1223 = vadd.f32 %v1154, %v1168
  %v1224 = vadd.f32 %v1155, %v1168
  %v1225 = vadd.f32 %v1156, %v1168
  %v1226 = vadd.f32 %v1157, %v1168
  %v1227 = vadd.f32 %v1158, %v1168
  %v1228 = vadd.f32 %v1159, %v1168
  %v1229 = vadd.f32 %v1160, %v1168
  %v1230 = vadd.f32 %v1161, %v1168
  %v1231 = vadd.f32 %v1162, %v1168
  %v1232 = vadd.f32 %v1163, %v1168
  %1233 = vst [vmem:[#allocation2] sm:$0xff] 0.0
  %1234 = vst [vmem:[#allocation2 + $0x8] sm:$0xff] 0.0
  %1235 = vst [vmem:[#allocation2 + $0x10] sm:$0x3] 0.0
  %1236 = vst [vmem:[#allocation2 + $0x1b0] sm:$0xff] 0.0
  %1237 = vst [vmem:[#allocation2 + $0x1b8] sm:$0xff] 0.0
  %1238 = vst [vmem:[#allocation2 + $0x1c0] sm:$0x3] 0.0
  %s1239 = scalar_lea.vmem [#allocation2], 408
  %1240 = vst [vmem:[%s1239] sm:$0xff] 0.0
  %1241 = vst [vmem:[%s1239 + $0x8] sm:$0xff] 0.0
  %1242 = vst [vmem:[%s1239 + $0x10] sm:$0x3] 0.0
  %1243 = vst [vmem:[%s1239 + $0x1b0] sm:$0xff] 0.0
  %1244 = vst [vmem:[%s1239 + $0x1b8] sm:$0xff] 0.0
  %1245 = vst [vmem:[%s1239 + $0x1c0] sm:$0x3] 0.0
  %s1246 = scalar_lea.vmem [#allocation2], 24
  %1247 = vst [vmem:[%s1246] sm:$0x1] 0.0
  %1248 = vst [vmem:[%s1246 + $0x18] sm:$0x1] 0.0
  %1249 = vst [vmem:[%s1246 + $0x30] sm:$0x1] 0.0
  %1250 = vst [vmem:[%s1246 + $0x48] sm:$0x1] 0.0
  %1251 = vst [vmem:[%s1246 + $0x60] sm:$0x1] 0.0
  %1252 = vst [vmem:[%s1246 + $0x78] sm:$0x1] 0.0
  %1253 = vst [vmem:[%s1246 + $0x90] sm:$0x1] 0.0
  %1254 = vst [vmem:[%s1246 + $0xa8] sm:$0x1] 0.0
  %1255 = vst [vmem:[%s1246 + $0xc0] sm:$0x1] 0.0
  %1256 = vst [vmem:[%s1246 + $0xd8] sm:$0x1] 0.0
  %1257 = vst [vmem:[%s1246 + $0xf0] sm:$0x1] 0.0
  %1258 = vst [vmem:[%s1246 + $0x108] sm:$0x1] 0.0
  %1259 = vst [vmem:[%s1246 + $0x120] sm:$0x1] 0.0
  %1260 = vst [vmem:[%s1246 + $0x138] sm:$0x1] 0.0
  %1261 = vst [vmem:[%s1246 + $0x150] sm:$0x1] 0.0
  %1262 = vst [vmem:[%s1246 + $0x168] sm:$0x1] 0.0
  %1263 = vst [vmem:[%s1246 + $0x1b0] sm:$0x1] 0.0
  %1264 = vst [vmem:[%s1246 + $0x1c8] sm:$0x1] 0.0
  %1265 = vst [vmem:[%s1246 + $0x1e0] sm:$0x1] 0.0
  %1266 = vst [vmem:[%s1246 + $0x1f8] sm:$0x1] 0.0
  %1267 = vst [vmem:[%s1246 + $0x210] sm:$0x1] 0.0
  %1268 = vst [vmem:[%s1246 + $0x228] sm:$0x1] 0.0
  %1269 = vst [vmem:[%s1246 + $0x240] sm:$0x1] 0.0
  %1270 = vst [vmem:[%s1246 + $0x258] sm:$0x1] 0.0
  %1271 = vst [vmem:[%s1246 + $0x270] sm:$0x1] 0.0
  %1272 = vst [vmem:[%s1246 + $0x288] sm:$0x1] 0.0
  %1273 = vst [vmem:[%s1246 + $0x2a0] sm:$0x1] 0.0
  %1274 = vst [vmem:[%s1246 + $0x2b8] sm:$0x1] 0.0
  %1275 = vst [vmem:[%s1246 + $0x2d0] sm:$0x1] 0.0
  %1276 = vst [vmem:[%s1246 + $0x2e8] sm:$0x1] 0.0
  %1277 = vst [vmem:[%s1246 + $0x300] sm:$0x1] 0.0
  %1278 = vst [vmem:[%s1246 + $0x318] sm:$0x1] 0.0
  %1279 = vst [vmem:[%s1246 + $0x11] sm:$0x1] 0.0
  %1280 = vst [vmem:[%s1246 + $0x29] sm:$0x1] 0.0
  %1281 = vst [vmem:[%s1246 + $0x41] sm:$0x1] 0.0
  %1282 = vst [vmem:[%s1246 + $0x59] sm:$0x1] 0.0
  %1283 = vst [vmem:[%s1246 + $0x71] sm:$0x1] 0.0
  %1284 = vst [vmem:[%s1246 + $0x89] sm:$0x1] 0.0
  %1285 = vst [vmem:[%s1246 + $0xa1] sm:$0x1] 0.0
  %1286 = vst [vmem:[%s1246 + $0xb9] sm:$0x1] 0.0
  %1287 = vst [vmem:[%s1246 + $0xd1] sm:$0x1] 0.0
  %1288 = vst [vmem:[%s1246 + $0xe9] sm:$0x1] 0.0
  %1289 = vst [vmem:[%s1246 + $0x101] sm:$0x1] 0.0
  %1290 = vst [vmem:[%s1246 + $0x119] sm:$0x1] 0.0
  %1291 = vst [vmem:[%s1246 + $0x131] sm:$0x1] 0.0
  %1292 = vst [vmem:[%s1246 + $0x149] sm:$0x1] 0.0
  %1293 = vst [vmem:[%s1246 + $0x161] sm:$0x1] 0.0
  %1294 = vst [vmem:[%s1246 + $0x179] sm:$0x1] 0.0
  %1295 = vst [vmem:[%s1246 + $0x1c1] sm:$0x1] 0.0
  %1296 = vst [vmem:[%s1246 + $0x1d9] sm:$0x1] 0.0
  %1297 = vst [vmem:[%s1246 + $0x1f1] sm:$0x1] 0.0
  %1298 = vst [vmem:[%s1246 + $0x209] sm:$0x1] 0.0
  %1299 = vst [vmem:[%s1246 + $0x221] sm:$0x1] 0.0
  %1300 = vst [vmem:[%s1246 + $0x239] sm:$0x1] 0.0
  %1301 = vst [vmem:[%s1246 + $0x251] sm:$0x1] 0.0
  %1302 = vst [vmem:[%s1246 + $0x269] sm:$0x1] 0.0
  %1303 = vst [vmem:[%s1246 + $0x281] sm:$0x1] 0.0
  %1304 = vst [vmem:[%s1246 + $0x299] sm:$0x1] 0.0
  %1305 = vst [vmem:[%s1246 + $0x2b1] sm:$0x1] 0.0
  %1306 = vst [vmem:[%s1246 + $0x2c9] sm:$0x1] 0.0
  %1307 = vst [vmem:[%s1246 + $0x2e1] sm:$0x1] 0.0
  %1308 = vst [vmem:[%s1246 + $0x2f9] sm:$0x1] 0.0
  %1309 = vst [vmem:[%s1246 + $0x311] sm:$0x1] 0.0
  %1310 = vst [vmem:[%s1246 + $0x329] sm:$0x1] 0.0
  %1311 = vst [vmem:[%s1246 + $0x1] sm:$0xff] %v1169
  %1312 = vst [vmem:[%s1246 + $0x9] sm:$0xff] %v1170
  %1313 = vst [vmem:[%s1246 + $0x19] sm:$0xff] %v1171
  %1314 = vst [vmem:[%s1246 + $0x21] sm:$0xff] %v1172
  %1315 = vst [vmem:[%s1246 + $0x31] sm:$0xff] %v1173
  %1316 = vst [vmem:[%s1246 + $0x39] sm:$0xff] %v1174
  %1317 = vst [vmem:[%s1246 + $0x49] sm:$0xff] %v1175
  %1318 = vst [vmem:[%s1246 + $0x51] sm:$0xff] %v1176
  %1319 = vst [vmem:[%s1246 + $0x61] sm:$0xff] %v1177
  %1320 = vst [vmem:[%s1246 + $0x69] sm:$0xff] %v1178
  %1321 = vst [vmem:[%s1246 + $0x79] sm:$0xff] %v1179
  %1322 = vst [vmem:[%s1246 + $0x81] sm:$0xff] %v1180
  %1323 = vst [vmem:[%s1246 + $0x91] sm:$0xff] %v1181
  %1324 = vst [vmem:[%s1246 + $0x99] sm:$0xff] %v1182
  %1325 = vst [vmem:[%s1246 + $0xa9] sm:$0xff] %v1183
  %1326 = vst [vmem:[%s1246 + $0xb1] sm:$0xff] %v1184
  %1327 = vst [vmem:[%s1246 + $0xc1] sm:$0xff] %v1185
  %1328 = vst [vmem:[%s1246 + $0xc9] sm:$0xff] %v1186
  %1329 = vst [vmem:[%s1246 + $0xd9] sm:$0xff] %v1187
  %1330 = vst [vmem:[%s1246 + $0xe1] sm:$0xff] %v1188
  %1331 = vst [vmem:[%s1246 + $0xf1] sm:$0xff] %v1189
  %1332 = vst [vmem:[%s1246 + $0xf9] sm:$0xff] %v1190
  %1333 = vst [vmem:[%s1246 + $0x109] sm:$0xff] %v1191
  %1334 = vst [vmem:[%s1246 + $0x111] sm:$0xff] %v1192
  %1335 = vst [vmem:[%s1246 + $0x121] sm:$0xff] %v1193
  %1336 = vst [vmem:[%s1246 + $0x129] sm:$0xff] %v1194
  %1337 = vst [vmem:[%s1246 + $0x139] sm:$0xff] %v1195
  %1338 = vst [vmem:[%s1246 + $0x141] sm:$0xff] %v1196
  %1339 = vst [vmem:[%s1246 + $0x151] sm:$0xff] %v1197
  %1340 = vst [vmem:[%s1246 + $0x159] sm:$0xff] %v1198
  %1341 = vst [vmem:[%s1246 + $0x169] sm:$0xff] %v1199
  %1342 = vst [vmem:[%s1246 + $0x171] sm:$0xff] %v1200
  %1343 = vst [vmem:[%s1246 + $0x1b1] sm:$0xff] %v1201
  %1344 = vst [vmem:[%s1246 + $0x1b9] sm:$0xff] %v1202
  %1345 = vst [vmem:[%s1246 + $0x1c9] sm:$0xff] %v1203
  %1346 = vst [vmem:[%s1246 + $0x1d1] sm:$0xff] %v1204
  %1347 = vst [vmem:[%s1246 + $0x1e1] sm:$0xff] %v1205
  %1348 = vst [vmem:[%s1246 + $0x1e9] sm:$0xff] %v1206
  %1349 = vst [vmem:[%s1246 + $0x1f9] sm:$0xff] %v1207
  %1350 = vst [vmem:[%s1246 + $0x201] sm:$0xff] %v1208
  %1351 = vst [vmem:[%s1246 + $0x211] sm:$0xff] %v1209
  %1352 = vst [vmem:[%s1246 + $0x219] sm:$0xff] %v1210
  %1353 = vst [vmem:[%s1246 + $0x229] sm:$0xff] %v1211
  %1354 = vst [vmem:[%s1246 + $0x231] sm:$0xff] %v1212
  %1355 = vst [vmem:[%s1246 + $0x241] sm:$0xff] %v1213
  %1356 = vst [vmem:[%s1246 + $0x249] sm:$0xff] %v1214
  %1357 = vst [vmem:[%s1246 + $0x259] sm:$0xff] %v1215
  %1358 = vst [vmem:[%s1246 + $0x261] sm:$0xff] %v1216
  %1359 = vst [vmem:[%s1246 + $0x271] sm:$0xff] %v1217
  %1360 = vst [vmem:[%s1246 + $0x279] sm:$0xff] %v1218
  %1361 = vst [vmem:[%s1246 + $0x289] sm:$0xff] %v1219
  %1362 = vst [vmem:[%s1246 + $0x291] sm:$0xff] %v1220
  %1363 = vst [vmem:[%s1246 + $0x2a1] sm:$0xff] %v1221
  %1364 = vst [vmem:[%s1246 + $0x2a9] sm:$0xff] %v1222
  %1365 = vst [vmem:[%s1246 + $0x2b9] sm:$0xff] %v1223
  %1366 = vst [vmem:[%s1246 + $0x2c1] sm:$0xff] %v1224
  %1367 = vst [vmem:[%s1246 + $0x2d1] sm:$0xff] %v1225
  %1368 = vst [vmem:[%s1246 + $0x2d9] sm:$0xff] %v1226
  %1369 = vst [vmem:[%s1246 + $0x2e9] sm:$0xff] %v1227
  %1370 = vst [vmem:[%s1246 + $0x2f1] sm:$0xff] %v1228
  %1371 = vst [vmem:[%s1246 + $0x301] sm:$0xff] %v1229
  %1372 = vst [vmem:[%s1246 + $0x309] sm:$0xff] %v1230
  %1373 = vst [vmem:[%s1246 + $0x319] sm:$0xff] %v1231
  %1374 = vst [vmem:[%s1246 + $0x321] sm:$0xff] %v1232
  %v1375 = vld [vmem:[#allocation2] sm:$0xff]
  %v1376 = vld [vmem:[#allocation2 + $0x8] sm:$0xff]
  %v1377 = vld [vmem:[#allocation2 + $0x18] sm:$0xff]
  %v1378 = vld [vmem:[#allocation2 + $0x20] sm:$0xff]
  %v1379 = vld [vmem:[#allocation2 + $0x30] sm:$0xff]
  %v1380 = vld [vmem:[#allocation2 + $0x38] sm:$0xff]
  %v1381 = vld [vmem:[#allocation2 + $0x48] sm:$0xff]
  %v1382 = vld [vmem:[#allocation2 + $0x50] sm:$0xff]
  %v1383 = vld [vmem:[#allocation2 + $0x60] sm:$0xff]
  %v1384 = vld [vmem:[#allocation2 + $0x68] sm:$0xff]
  %v1385 = vld [vmem:[#allocation2 + $0x78] sm:$0xff]
  %v1386 = vld [vmem:[#allocation2 + $0x80] sm:$0xff]
  %v1387 = vld [vmem:[#allocation2 + $0x90] sm:$0xff]
  %v1388 = vld [vmem:[#allocation2 + $0x98] sm:$0xff]
  %v1389 = vld [vmem:[#allocation2 + $0xa8] sm:$0xff]
  %v1390 = vld [vmem:[#allocation2 + $0xb0] sm:$0xff]
  %v1391 = vld [vmem:[#allocation2 + $0xc0] sm:$0xff]
  %v1392 = vld [vmem:[#allocation2 + $0xc8] sm:$0xff]
  %v1393 = vld [vmem:[#allocation2 + $0xd8] sm:$0xff]
  %v1394 = vld [vmem:[#allocation2 + $0xe0] sm:$0xff]
  %v1395 = vld [vmem:[#allocation2 + $0xf0] sm:$0xff]
  %v1396 = vld [vmem:[#allocation2 + $0xf8] sm:$0xff]
  %v1397 = vld [vmem:[#allocation2 + $0x108] sm:$0xff]
  %v1398 = vld [vmem:[#allocation2 + $0x110] sm:$0xff]
  %v1399 = vld [vmem:[#allocation2 + $0x120] sm:$0xff]
  %v1400 = vld [vmem:[#allocation2 + $0x128] sm:$0xff]
  %v1401 = vld [vmem:[#allocation2 + $0x138] sm:$0xff]
  %v1402 = vld [vmem:[#allocation2 + $0x140] sm:$0xff]
  %v1403 = vld [vmem:[#allocation2 + $0x150] sm:$0xff]
  %v1404 = vld [vmem:[#allocation2 + $0x158] sm:$0xff]
  %v1405 = vld [vmem:[#allocation2 + $0x168] sm:$0xff]
  %v1406 = vld [vmem:[#allocation2 + $0x170] sm:$0xff]
  %v1407 = vld [vmem:[#allocation2 + $0x1b0] sm:$0xff]
  %v1408 = vld [vmem:[#allocation2 + $0x1b8] sm:$0xff]
  %v1409 = vld [vmem:[#allocation2 + $0x1c8] sm:$0xff]
  %v1410 = vld [vmem:[#allocation2 + $0x1d0] sm:$0xff]
  %v1411 = vld [vmem:[#allocation2 + $0x1e0] sm:$0xff]
  %v1412 = vld [vmem:[#allocation2 + $0x1e8] sm:$0xff]
  %v1413 = vld [vmem:[#allocation2 + $0x1f8] sm:$0xff]
  %v1414 = vld [vmem:[#allocation2 + $0x200] sm:$0xff]
  %v1415 = vld [vmem:[#allocation2 + $0x210] sm:$0xff]
  %v1416 = vld [vmem:[#allocation2 + $0x218] sm:$0xff]
  %v1417 = vld [vmem:[#allocation2 + $0x228] sm:$0xff]
  %v1418 = vld [vmem:[#allocation2 + $0x230] sm:$0xff]
  %v1419 = vld [vmem:[#allocation2 + $0x240] sm:$0xff]
  %v1420 = vld [vmem:[#allocation2 + $0x248] sm:$0xff]
  %v1421 = vld [vmem:[#allocation2 + $0x258] sm:$0xff]
  %v1422 = vld [vmem:[#allocation2 + $0x260] sm:$0xff]
  %v1423 = vld [vmem:[#allocation2 + $0x270] sm:$0xff]
  %v1424 = vld [vmem:[#allocation2 + $0x278] sm:$0xff]
  %v1425 = vld [vmem:[#allocation2 + $0x288] sm:$0xff]
  %v1426 = vld [vmem:[#allocation2 + $0x290] sm:$0xff]
  %v1427 = vld [vmem:[#allocation2 + $0x2a0] sm:$0xff]
  %v1428 = vld [vmem:[#allocation2 + $0x2a8] sm:$0xff]
  %v1429 = vld [vmem:[#allocation2 + $0x2b8] sm:$0xff]
  %v1430 = vld [vmem:[#allocation2 + $0x2c0] sm:$0xff]
  %v1431 = vld [vmem:[#allocation2 + $0x2d0] sm:$0xff]
  %v1432 = vld [vmem:[#allocation2 + $0x2d8] sm:$0xff]
  %v1433 = vld [vmem:[#allocation2 + $0x2e8] sm:$0xff]
  %v1434 = vld [vmem:[#allocation2 + $0x2f0] sm:$0xff]
  %v1435 = vld [vmem:[#allocation2 + $0x300] sm:$0xff]
  %v1436 = vld [vmem:[#allocation2 + $0x308] sm:$0xff]
  %v1437 = vld [vmem:[#allocation2 + $0x318] sm:$0xff]
  %v1438 = vld [vmem:[#allocation2 + $0x320] sm:$0xff]
  %v1439 = vpack.c.bf16 %v1376, %v1375
  %v1440 = vpack.c.bf16 %v1378, %v1377
  %v1441 = vpack.c.bf16 %v1380, %v1379
  %v1442 = vpack.c.bf16 %v1382, %v1381
  %v1443 = vpack.c.bf16 %v1384, %v1383
  %v1444 = vpack.c.bf16 %v1386, %v1385
  %v1445 = vpack.c.bf16 %v1388, %v1387
  %v1446 = vpack.c.bf16 %v1390, %v1389
  %v1447 = vpack.c.bf16 %v1392, %v1391
  %v1448 = vpack.c.bf16 %v1394, %v1393
  %v1449 = vpack.c.bf16 %v1396, %v1395
  %v1450 = vpack.c.bf16 %v1398, %v1397
  %v1451 = vpack.c.bf16 %v1400, %v1399
  %v1452 = vpack.c.bf16 %v1402, %v1401
  %v1453 = vpack.c.bf16 %v1404, %v1403
  %v1454 = vpack.c.bf16 %v1406, %v1405
  %v1455 = vpack.c.bf16 %v1408, %v1407
  %v1456 = vpack.c.bf16 %v1410, %v1409
  %v1457 = vpack.c.bf16 %v1412, %v1411
  %v1458 = vpack.c.bf16 %v1414, %v1413
  %v1459 = vpack.c.bf16 %v1416, %v1415
  %v1460 = vpack.c.bf16 %v1418, %v1417
  %v1461 = vpack.c.bf16 %v1420, %v1419
  %v1462 = vpack.c.bf16 %v1422, %v1421
  %v1463 = vpack.c.bf16 %v1424, %v1423
  %v1464 = vpack.c.bf16 %v1426, %v1425
  %v1465 = vpack.c.bf16 %v1428, %v1427
  %v1466 = vpack.c.bf16 %v1430, %v1429
  %v1467 = vpack.c.bf16 %v1432, %v1431
  %v1468 = vpack.c.bf16 %v1434, %v1433
  %v1469 = vpack.c.bf16 %v1436, %v1435
  %v1470 = vpack.c.bf16 %v1438, %v1437
  %v1503 = vunpack.c.l.b16 %v1439
  %v1504 = vunpack.c.h.b16 %v1439
  %v1505 = vunpack.c.l.b16 %v1440
  %v1506 = vunpack.c.h.b16 %v1440
  %v1507 = vunpack.c.l.b16 %v1441
  %v1508 = vunpack.c.h.b16 %v1441
  %v1509 = vunpack.c.l.b16 %v1442
  %v1510 = vunpack.c.h.b16 %v1442
  %v1511 = vunpack.c.l.b16 %v1443
  %v1512 = vunpack.c.h.b16 %v1443
  %v1513 = vunpack.c.l.b16 %v1444
  %v1514 = vunpack.c.h.b16 %v1444
  %v1515 = vunpack.c.l.b16 %v1445
  %v1516 = vunpack.c.h.b16 %v1445
  %v1517 = vunpack.c.l.b16 %v1446
  %v1518 = vunpack.c.h.b16 %v1446
  %v1519 = vunpack.c.l.b16 %v1447
  %v1520 = vunpack.c.h.b16 %v1447
  %v1521 = vunpack.c.l.b16 %v1448
  %v1522 = vunpack.c.h.b16 %v1448
  %v1523 = vunpack.c.l.b16 %v1449
  %v1524 = vunpack.c.h.b16 %v1449
  %v1525 = vunpack.c.l.b16 %v1450
  %v1526 = vunpack.c.h.b16 %v1450
  %v1527 = vunpack.c.l.b16 %v1451
  %v1528 = vunpack.c.h.b16 %v1451
  %v1529 = vunpack.c.l.b16 %v1452
  %v1530 = vunpack.c.h.b16 %v1452
  %v1531 = vunpack.c.l.b16 %v1453
  %v1532 = vunpack.c.h.b16 %v1453
  %v1533 = vunpack.c.l.b16 %v1454
  %v1534 = vunpack.c.h.b16 %v1454
  %v1535 = vunpack.c.l.b16 %v1455
  %v1536 = vunpack.c.h.b16 %v1455
  %v1537 = vunpack.c.l.b16 %v1456
  %v1538 = vunpack.c.h.b16 %v1456
  %v1539 = vunpack.c.l.b16 %v1457
  %v1540 = vunpack.c.h.b16 %v1457
  %v1541 = vunpack.c.l.b16 %v1458
  %v1542 = vunpack.c.h.b16 %v1458
  %v1543 = vunpack.c.l.b16 %v1459
  %v1544 = vunpack.c.h.b16 %v1459
  %v1545 = vunpack.c.l.b16 %v1460
  %v1546 = vunpack.c.h.b16 %v1460
  %v1547 = vunpack.c.l.b16 %v1461
  %v1548 = vunpack.c.h.b16 %v1461
  %v1549 = vunpack.c.l.b16 %v1462
  %v1550 = vunpack.c.h.b16 %v1462
  %v1551 = vunpack.c.l.b16 %v1463
  %v1552 = vunpack.c.h.b16 %v1463
  %v1553 = vunpack.c.l.b16 %v1464
  %v1554 = vunpack.c.h.b16 %v1464
  %v1555 = vunpack.c.l.b16 %v1465
  %v1556 = vunpack.c.h.b16 %v1465
  %v1557 = vunpack.c.l.b16 %v1466
  %v1558 = vunpack.c.h.b16 %v1466
  %v1559 = vunpack.c.l.b16 %v1467
  %v1560 = vunpack.c.h.b16 %v1467
  %v1561 = vunpack.c.l.b16 %v1468
  %v1562 = vunpack.c.h.b16 %v1468
  %v1563 = vunpack.c.l.b16 %v1469
  %v1564 = vunpack.c.h.b16 %v1469
  %v1565 = vunpack.c.l.b16 %v1470
  %v1566 = vunpack.c.h.b16 %v1470
  %v1567 = vpack.c.b16 %v1503, %v1503
  %v1568 = vpack.c.b16 %v1504, %v1504
  %v1569 = vpack.c.b16 %v1505, %v1505
  %v1570 = vpack.c.b16 %v1506, %v1506
  %v1571 = vpack.c.b16 %v1507, %v1507
  %v1572 = vpack.c.b16 %v1508, %v1508
  %v1573 = vpack.c.b16 %v1509, %v1509
  %v1574 = vpack.c.b16 %v1510, %v1510
  %v1575 = vpack.c.b16 %v1511, %v1511
  %v1576 = vpack.c.b16 %v1512, %v1512
  %v1577 = vpack.c.b16 %v1513, %v1513
  %v1578 = vpack.c.b16 %v1514, %v1514
  %v1579 = vpack.c.b16 %v1515, %v1515
  %v1580 = vpack.c.b16 %v1516, %v1516
  %v1581 = vpack.c.b16 %v1517, %v1517
  %v1582 = vpack.c.b16 %v1518, %v1518
  %v1583 = vpack.c.b16 %v1519, %v1519
  %v1584 = vpack.c.b16 %v1520, %v1520
  %v1585 = vpack.c.b16 %v1521, %v1521
  %v1586 = vpack.c.b16 %v1522, %v1522
  %v1587 = vpack.c.b16 %v1523, %v1523
  %v1588 = vpack.c.b16 %v1524, %v1524
  %v1589 = vpack.c.b16 %v1525, %v1525
  %v1590 = vpack.c.b16 %v1526, %v1526
  %v1591 = vpack.c.b16 %v1527, %v1527
  %v1592 = vpack.c.b16 %v1528, %v1528
  %v1593 = vpack.c.b16 %v1529, %v1529
  %v1594 = vpack.c.b16 %v1530, %v1530
  %v1595 = vpack.c.b16 %v1531, %v1531
  %v1596 = vpack.c.b16 %v1532, %v1532
  %v1597 = vpack.c.b16 %v1533, %v1533
  %v1598 = vpack.c.b16 %v1534, %v1534
  %v1599 = vpack.c.b16 %v1535, %v1535
  %v1600 = vpack.c.b16 %v1536, %v1536
  %v1601 = vpack.c.b16 %v1537, %v1537
  %v1602 = vpack.c.b16 %v1538, %v1538
  %v1603 = vpack.c.b16 %v1539, %v1539
  %v1604 = vpack.c.b16 %v1540, %v1540
  %v1605 = vpack.c.b16 %v1541, %v1541
  %v1606 = vpack.c.b16 %v1542, %v1542
  %v1607 = vpack.c.b16 %v1543, %v1543
  %v1608 = vpack.c.b16 %v1544, %v1544
  %v1609 = vpack.c.b16 %v1545, %v1545
  %v1610 = vpack.c.b16 %v1546, %v1546
  %v1611 = vpack.c.b16 %v1547, %v1547
  %v1612 = vpack.c.b16 %v1548, %v1548
  %v1613 = vpack.c.b16 %v1549, %v1549
  %v1614 = vpack.c.b16 %v1550, %v1550
  %v1615 = vpack.c.b16 %v1551, %v1551
  %v1616 = vpack.c.b16 %v1552, %v1552
  %v1617 = vpack.c.b16 %v1553, %v1553
  %v1618 = vpack.c.b16 %v1554, %v1554
  %v1619 = vpack.c.b16 %v1555, %v1555
  %v1620 = vpack.c.b16 %v1556, %v1556
  %v1621 = vpack.c.b16 %v1557, %v1557
  %v1622 = vpack.c.b16 %v1558, %v1558
  %v1623 = vpack.c.b16 %v1559, %v1559
  %v1624 = vpack.c.b16 %v1560, %v1560
  %v1625 = vpack.c.b16 %v1561, %v1561
  %v1626 = vpack.c.b16 %v1562, %v1562
  %v1627 = vpack.c.b16 %v1563, %v1563
  %v1628 = vpack.c.b16 %v1564, %v1564
  %v1629 = vpack.c.b16 %v1565, %v1565
  %v1630 = vpack.c.b16 %v1566, %v1566
  %1695 = vst [vmem:[#allocation3] sm:$0xf] %v1567
  %1696 = vst [vmem:[#allocation3 + $0x24] sm:$0xf] %v1568
  %1697 = vst [vmem:[#allocation3 + $0x48] sm:$0xf] %v1569
  %1698 = vst [vmem:[#allocation3 + $0x6c] sm:$0xf] %v1570
  %1699 = vst [vmem:[#allocation3 + $0x90] sm:$0xf] %v1571
  %1700 = vst [vmem:[#allocation3 + $0xb4] sm:$0xf] %v1572
  %1701 = vst [vmem:[#allocation3 + $0xd8] sm:$0xf] %v1573
  %1702 = vst [vmem:[#allocation3 + $0xfc] sm:$0xf] %v1574
  %1703 = vst [vmem:[#allocation3 + $0x120] sm:$0xf] %v1575
  %1704 = vst [vmem:[#allocation3 + $0x144] sm:$0xf] %v1576
  %1705 = vst [vmem:[#allocation3 + $0x168] sm:$0xf] %v1577
  %1706 = vst [vmem:[#allocation3 + $0x18c] sm:$0xf] %v1578
  %1707 = vst [vmem:[#allocation3 + $0x1b0] sm:$0xf] %v1579
  %1708 = vst [vmem:[#allocation3 + $0x1d4] sm:$0xf] %v1580
  %1709 = vst [vmem:[#allocation3 + $0x1f8] sm:$0xf] %v1581
  %1710 = vst [vmem:[#allocation3 + $0x21c] sm:$0xf] %v1582
  %1711 = vst [vmem:[#allocation3 + $0x240] sm:$0xf] %v1583
  %1712 = vst [vmem:[#allocation3 + $0x264] sm:$0xf] %v1584
  %1713 = vst [vmem:[#allocation3 + $0x288] sm:$0xf] %v1585
  %1714 = vst [vmem:[#allocation3 + $0x2ac] sm:$0xf] %v1586
  %1715 = vst [vmem:[#allocation3 + $0x2d0] sm:$0xf] %v1587
  %1716 = vst [vmem:[#allocation3 + $0x2f4] sm:$0xf] %v1588
  %1717 = vst [vmem:[#allocation3 + $0x318] sm:$0xf] %v1589
  %1718 = vst [vmem:[#allocation3 + $0x33c] sm:$0xf] %v1590
  %1719 = vst [vmem:[#allocation3 + $0x360] sm:$0xf] %v1591
  %1720 = vst [vmem:[#allocation3 + $0x384] sm:$0xf] %v1592
  %1721 = vst [vmem:[#allocation3 + $0x3a8] sm:$0xf] %v1593
  %1722 = vst [vmem:[#allocation3 + $0x3cc] sm:$0xf] %v1594
  %1723 = vst [vmem:[#allocation3 + $0x3f0] sm:$0xf] %v1595
  %1724 = vst [vmem:[#allocation3 + $0x414] sm:$0xf] %v1596
  %1725 = vst [vmem:[#allocation3 + $0x438] sm:$0xf] %v1597
  %1726 = vst [vmem:[#allocation3 + $0x45c] sm:$0xf] %v1598
  %1727 = vst [vmem:[#allocation3 + $0x480] sm:$0xf] %v1599
  %1728 = vst [vmem:[#allocation3 + $0x4a4] sm:$0xf] %v1600
  %1729 = vst [vmem:[#allocation3 + $0x4c8] sm:$0xf] %v1601
  %1730 = vst [vmem:[#allocation3 + $0x4ec] sm:$0xf] %v1602
  %1731 = vst [vmem:[#allocation3 + $0x510] sm:$0xf] %v1603
  %1732 = vst [vmem:[#allocation3 + $0x534] sm:$0xf] %v1604
  %1733 = vst [vmem:[#allocation3 + $0x558] sm:$0xf] %v1605
  %1734 = vst [vmem:[#allocation3 + $0x57c] sm:$0xf] %v1606
  %1735 = vst [vmem:[#allocation3 + $0x5a0] sm:$0xf] %v1607
  %1736 = vst [vmem:[#allocation3 + $0x5c4] sm:$0xf] %v1608
  %1737 = vst [vmem:[#allocation3 + $0x5e8] sm:$0xf] %v1609
  %1738 = vst [vmem:[#allocation3 + $0x60c] sm:$0xf] %v1610
  %1739 = vst [vmem:[#allocation3 + $0x630] sm:$0xf] %v1611
  %1740 = vst [vmem:[#allocation3 + $0x654] sm:$0xf] %v1612
  %1741 = vst [vmem:[#allocation3 + $0x678] sm:$0xf] %v1613
  %1742 = vst [vmem:[#allocation3 + $0x69c] sm:$0xf] %v1614
  %1743 = vst [vmem:[#allocation3 + $0x6c0] sm:$0xf] %v1615
  %1744 = vst [vmem:[#allocation3 + $0x6e4] sm:$0xf] %v1616
  %1745 = vst [vmem:[#allocation3 + $0x708] sm:$0xf] %v1617
  %1746 = vst [vmem:[#allocation3 + $0x72c] sm:$0xf] %v1618
  %1747 = vst [vmem:[#allocation3 + $0x750] sm:$0xf] %v1619
  %1748 = vst [vmem:[#allocation3 + $0x774] sm:$0xf] %v1620
  %1749 = vst [vmem:[#allocation3 + $0x798] sm:$0xf] %v1621
  %1750 = vst [vmem:[#allocation3 + $0x7bc] sm:$0xf] %v1622
  %1751 = vst [vmem:[#allocation3 + $0x7e0] sm:$0xf] %v1623
  %1752 = vst [vmem:[#allocation3 + $0x804] sm:$0xf] %v1624
  %1753 = vst [vmem:[#allocation3 + $0x828] sm:$0xf] %v1625
  %1754 = vst [vmem:[#allocation3 + $0x84c] sm:$0xf] %v1626
  %1755 = vst [vmem:[#allocation3 + $0x870] sm:$0xf] %v1627
  %1756 = vst [vmem:[#allocation3 + $0x894] sm:$0xf] %v1628
  %1757 = vst [vmem:[#allocation3 + $0x8b8] sm:$0xf] %v1629
  %1758 = vst [vmem:[#allocation3 + $0x8dc] sm:$0xf] %v1630
  %v1759 = vld [vmem:[#allocation2 + $0x1] sm:$0xff]
  %v1760 = vld [vmem:[#allocation2 + $0x9] sm:$0xff]
  %v1761 = vld [vmem:[#allocation2 + $0x19] sm:$0xff]
  %v1762 = vld [vmem:[#allocation2 + $0x21] sm:$0xff]
  %v1763 = vld [vmem:[#allocation2 + $0x31] sm:$0xff]
  %v1764 = vld [vmem:[#allocation2 + $0x39] sm:$0xff]
  %v1765 = vld [vmem:[#allocation2 + $0x49] sm:$0xff]
  %v1766 = vld [vmem:[#allocation2 + $0x51] sm:$0xff]
  %v1767 = vld [vmem:[#allocation2 + $0x61] sm:$0xff]
  %v1768 = vld [vmem:[#allocation2 + $0x69] sm:$0xff]
  %v1769 = vld [vmem:[#allocation2 + $0x79] sm:$0xff]
  %v1770 = vld [vmem:[#allocation2 + $0x81] sm:$0xff]
  %v1771 = vld [vmem:[#allocation2 + $0x91] sm:$0xff]
  %v1772 = vld [vmem:[#allocation2 + $0x99] sm:$0xff]
  %v1773 = vld [vmem:[#allocation2 + $0xa9] sm:$0xff]
  %v1774 = vld [vmem:[#allocation2 + $0xb1] sm:$0xff]
  %v1775 = vld [vmem:[#allocation2 + $0xc1] sm:$0xff]
  %v1776 = vld [vmem:[#allocation2 + $0xc9] sm:$0xff]
  %v1777 = vld [vmem:[#allocation2 + $0xd9] sm:$0xff]
  %v1778 = vld [vmem:[#allocation2 + $0xe1] sm:$0xff]
  %v1779 = vld [vmem:[#allocation2 + $0xf1] sm:$0xff]
  %v1780 = vld [vmem:[#allocation2 + $0xf9] sm:$0xff]
  %v1781 = vld [vmem:[#allocation2 + $0x109] sm:$0xff]
  %v1782 = vld [vmem:[#allocation2 + $0x111] sm:$0xff]
  %v1783 = vld [vmem:[#allocation2 + $0x121] sm:$0xff]
  %v1784 = vld [vmem:[#allocation2 + $0x129] sm:$0xff]
  %v1785 = vld [vmem:[#allocation2 + $0x139] sm:$0xff]
  %v1786 = vld [vmem:[#allocation2 + $0x141] sm:$0xff]
  %v1787 = vld [vmem:[#allocation2 + $0x151] sm:$0xff]
  %v1788 = vld [vmem:[#allocation2 + $0x159] sm:$0xff]
  %v1789 = vld [vmem:[#allocation2 + $0x169] sm:$0xff]
  %v1790 = vld [vmem:[#allocation2 + $0x171] sm:$0xff]
  %v1791 = vld [vmem:[#allocation2 + $0x1b1] sm:$0xff]
  %v1792 = vld [vmem:[#allocation2 + $0x1b9] sm:$0xff]
  %v1793 = vld [vmem:[#allocation2 + $0x1c9] sm:$0xff]
  %v1794 = vld [vmem:[#allocation2 + $0x1d1] sm:$0xff]
  %v1795 = vld [vmem:[#allocation2 + $0x1e1] sm:$0xff]
  %v1796 = vld [vmem:[#allocation2 + $0x1e9] sm:$0xff]
  %v1797 = vld [vmem:[#allocation2 + $0x1f9] sm:$0xff]
  %v1798 = vld [vmem:[#allocation2 + $0x201] sm:$0xff]
  %v1799 = vld [vmem:[#allocation2 + $0x211] sm:$0xff]
  %v1800 = vld [vmem:[#allocation2 + $0x219] sm:$0xff]
  %v1801 = vld [vmem:[#allocation2 + $0x229] sm:$0xff]
  %v1802 = vld [vmem:[#allocation2 + $0x231] sm:$0xff]
  %v1803 = vld [vmem:[#allocation2 + $0x241] sm:$0xff]
  %v1804 = vld [vmem:[#allocation2 + $0x249] sm:$0xff]
  %v1805 = vld [vmem:[#allocation2 + $0x259] sm:$0xff]
  %v1806 = vld [vmem:[#allocation2 + $0x261] sm:$0xff]
  %v1807 = vld [vmem:[#allocation2 + $0x271] sm:$0xff]
  %v1808 = vld [vmem:[#allocation2 + $0x279] sm:$0xff]
  %v1809 = vld [vmem:[#allocation2 + $0x289] sm:$0xff]
  %v1810 = vld [vmem:[#allocation2 + $0x291] sm:$0xff]
  %v1811 = vld [vmem:[#allocation2 + $0x2a1] sm:$0xff]
  %v1812 = vld [vmem:[#allocation2 + $0x2a9] sm:$0xff]
  %v1813 = vld [vmem:[#allocation2 + $0x2b9] sm:$0xff]
  %v1814 = vld [vmem:[#allocation2 + $0x2c1] sm:$0xff]
  %v1815 = vld [vmem:[#allocation2 + $0x2d1] sm:$0xff]
  %v1816 = vld [vmem:[#allocation2 + $0x2d9] sm:$0xff]
  %v1817 = vld [vmem:[#allocation2 + $0x2e9] sm:$0xff]
  %v1818 = vld [vmem:[#allocation2 + $0x2f1] sm:$0xff]
  %v1819 = vld [vmem:[#allocation2 + $0x301] sm:$0xff]
  %v1820 = vld [vmem:[#allocation2 + $0x309] sm:$0xff]
  %v1821 = vld [vmem:[#allocation2 + $0x319] sm:$0xff]
  %v1822 = vld [vmem:[#allocation2 + $0x321] sm:$0xff]
  %v1823 = vpack.c.bf16 %v1760, %v1759
  %v1824 = vpack.c.bf16 %v1762, %v1761
  %v1825 = vpack.c.bf16 %v1764, %v1763
  %v1826 = vpack.c.bf16 %v1766, %v1765
  %v1827 = vpack.c.bf16 %v1768, %v1767
  %v1828 = vpack.c.bf16 %v1770, %v1769
  %v1829 = vpack.c.bf16 %v1772, %v1771
  %v1830 = vpack.c.bf16 %v1774, %v1773
  %v1831 = vpack.c.bf16 %v1776, %v1775
  %v1832 = vpack.c.bf16 %v1778, %v1777
  %v1833 = vpack.c.bf16 %v1780, %v1779
  %v1834 = vpack.c.bf16 %v1782, %v1781
  %v1835 = vpack.c.bf16 %v1784, %v1783
  %v1836 = vpack.c.bf16 %v1786, %v1785
  %v1837 = vpack.c.bf16 %v1788, %v1787
  %v1838 = vpack.c.bf16 %v1790, %v1789
  %v1839 = vpack.c.bf16 %v1792, %v1791
  %v1840 = vpack.c.bf16 %v1794, %v1793
  %v1841 = vpack.c.bf16 %v1796, %v1795
  %v1842 = vpack.c.bf16 %v1798, %v1797
  %v1843 = vpack.c.bf16 %v1800, %v1799
  %v1844 = vpack.c.bf16 %v1802, %v1801
  %v1845 = vpack.c.bf16 %v1804, %v1803
  %v1846 = vpack.c.bf16 %v1806, %v1805
  %v1847 = vpack.c.bf16 %v1808, %v1807
  %v1848 = vpack.c.bf16 %v1810, %v1809
  %v1849 = vpack.c.bf16 %v1812, %v1811
  %v1850 = vpack.c.bf16 %v1814, %v1813
  %v1851 = vpack.c.bf16 %v1816, %v1815
  %v1852 = vpack.c.bf16 %v1818, %v1817
  %v1853 = vpack.c.bf16 %v1820, %v1819
  %v1854 = vpack.c.bf16 %v1822, %v1821
  %v1887 = vunpack.c.l.b16 %v1823
  %v1888 = vunpack.c.h.b16 %v1823
  %v1889 = vunpack.c.l.b16 %v1824
  %v1890 = vunpack.c.h.b16 %v1824
  %v1891 = vunpack.c.l.b16 %v1825
  %v1892 = vunpack.c.h.b16 %v1825
  %v1893 = vunpack.c.l.b16 %v1826
  %v1894 = vunpack.c.h.b16 %v1826
  %v1895 = vunpack.c.l.b16 %v1827
  %v1896 = vunpack.c.h.b16 %v1827
  %v1897 = vunpack.c.l.b16 %v1828
  %v1898 = vunpack.c.h.b16 %v1828
  %v1899 = vunpack.c.l.b16 %v1829
  %v1900 = vunpack.c.h.b16 %v1829
  %v1901 = vunpack.c.l.b16 %v1830
  %v1902 = vunpack.c.h.b16 %v1830
  %v1903 = vunpack.c.l.b16 %v1831
  %v1904 = vunpack.c.h.b16 %v1831
  %v1905 = vunpack.c.l.b16 %v1832
  %v1906 = vunpack.c.h.b16 %v1832
  %v1907 = vunpack.c.l.b16 %v1833
  %v1908 = vunpack.c.h.b16 %v1833
  %v1909 = vunpack.c.l.b16 %v1834
  %v1910 = vunpack.c.h.b16 %v1834
  %v1911 = vunpack.c.l.b16 %v1835
  %v1912 = vunpack.c.h.b16 %v1835
  %v1913 = vunpack.c.l.b16 %v1836
  %v1914 = vunpack.c.h.b16 %v1836
  %v1915 = vunpack.c.l.b16 %v1837
  %v1916 = vunpack.c.h.b16 %v1837
  %v1917 = vunpack.c.l.b16 %v1838
  %v1918 = vunpack.c.h.b16 %v1838
  %v1919 = vunpack.c.l.b16 %v1839
  %v1920 = vunpack.c.h.b16 %v1839
  %v1921 = vunpack.c.l.b16 %v1840
  %v1922 = vunpack.c.h.b16 %v1840
  %v1923 = vunpack.c.l.b16 %v1841
  %v1924 = vunpack.c.h.b16 %v1841
  %v1925 = vunpack.c.l.b16 %v1842
  %v1926 = vunpack.c.h.b16 %v1842
  %v1927 = vunpack.c.l.b16 %v1843
  %v1928 = vunpack.c.h.b16 %v1843
  %v1929 = vunpack.c.l.b16 %v1844
  %v1930 = vunpack.c.h.b16 %v1844
  %v1931 = vunpack.c.l.b16 %v1845
  %v1932 = vunpack.c.h.b16 %v1845
  %v1933 = vunpack.c.l.b16 %v1846
  %v1934 = vunpack.c.h.b16 %v1846
  %v1935 = vunpack.c.l.b16 %v1847
  %v1936 = vunpack.c.h.b16 %v1847
  %v1937 = vunpack.c.l.b16 %v1848
  %v1938 = vunpack.c.h.b16 %v1848
  %v1939 = vunpack.c.l.b16 %v1849
  %v1940 = vunpack.c.h.b16 %v1849
  %v1941 = vunpack.c.l.b16 %v1850
  %v1942 = vunpack.c.h.b16 %v1850
  %v1943 = vunpack.c.l.b16 %v1851
  %v1944 = vunpack.c.h.b16 %v1851
  %v1945 = vunpack.c.l.b16 %v1852
  %v1946 = vunpack.c.h.b16 %v1852
  %v1947 = vunpack.c.l.b16 %v1853
  %v1948 = vunpack.c.h.b16 %v1853
  %v1949 = vunpack.c.l.b16 %v1854
  %v1950 = vunpack.c.h.b16 %v1854
  %v1951 = vpack.c.b16 %v1887, %v1887
  %v1952 = vpack.c.b16 %v1888, %v1888
  %v1953 = vpack.c.b16 %v1889, %v1889
  %v1954 = vpack.c.b16 %v1890, %v1890
  %v1955 = vpack.c.b16 %v1891, %v1891
  %v1956 = vpack.c.b16 %v1892, %v1892
  %v1957 = vpack.c.b16 %v1893, %v1893
  %v1958 = vpack.c.b16 %v1894, %v1894
  %v1959 = vpack.c.b16 %v1895, %v1895
  %v1960 = vpack.c.b16 %v1896, %v1896
  %v1961 = vpack.c.b16 %v1897, %v1897
  %v1962 = vpack.c.b16 %v1898, %v1898
  %v1963 = vpack.c.b16 %v1899, %v1899
  %v1964 = vpack.c.b16 %v1900, %v1900
  %v1965 = vpack.c.b16 %v1901, %v1901
  %v1966 = vpack.c.b16 %v1902, %v1902
  %v1967 = vpack.c.b16 %v1903, %v1903
  %v1968 = vpack.c.b16 %v1904, %v1904
  %v1969 = vpack.c.b16 %v1905, %v1905
  %v1970 = vpack.c.b16 %v1906, %v1906
  %v1971 = vpack.c.b16 %v1907, %v1907
  %v1972 = vpack.c.b16 %v1908, %v1908
  %v1973 = vpack.c.b16 %v1909, %v1909
  %v1974 = vpack.c.b16 %v1910, %v1910
  %v1975 = vpack.c.b16 %v1911, %v1911
  %v1976 = vpack.c.b16 %v1912, %v1912
  %v1977 = vpack.c.b16 %v1913, %v1913
  %v1978 = vpack.c.b16 %v1914, %v1914
  %v1979 = vpack.c.b16 %v1915, %v1915
  %v1980 = vpack.c.b16 %v1916, %v1916
  %v1981 = vpack.c.b16 %v1917, %v1917
  %v1982 = vpack.c.b16 %v1918, %v1918
  %v1983 = vpack.c.b16 %v1919, %v1919
  %v1984 = vpack.c.b16 %v1920, %v1920
  %v1985 = vpack.c.b16 %v1921, %v1921
  %v1986 = vpack.c.b16 %v1922, %v1922
  %v1987 = vpack.c.b16 %v1923, %v1923
  %v1988 = vpack.c.b16 %v1924, %v1924
  %v1989 = vpack.c.b16 %v1925, %v1925
  %v1990 = vpack.c.b16 %v1926, %v1926
  %v1991 = vpack.c.b16 %v1927, %v1927
  %v1992 = vpack.c.b16 %v1928, %v1928
  %v1993 = vpack.c.b16 %v1929, %v1929
  %v1994 = vpack.c.b16 %v1930, %v1930
  %v1995 = vpack.c.b16 %v1931, %v1931
  %v1996 = vpack.c.b16 %v1932, %v1932
  %v1997 = vpack.c.b16 %v1933, %v1933
  %v1998 = vpack.c.b16 %v1934, %v1934
  %v1999 = vpack.c.b16 %v1935, %v1935
  %v2000 = vpack.c.b16 %v1936, %v1936
  %v2001 = vpack.c.b16 %v1937, %v1937
  %v2002 = vpack.c.b16 %v1938, %v1938
  %v2003 = vpack.c.b16 %v1939, %v1939
  %v2004 = vpack.c.b16 %v1940, %v1940
  %v2005 = vpack.c.b16 %v1941, %v1941
  %v2006 = vpack.c.b16 %v1942, %v1942
  %v2007 = vpack.c.b16 %v1943, %v1943
  %v2008 = vpack.c.b16 %v1944, %v1944
  %v2009 = vpack.c.b16 %v1945, %v1945
  %v2010 = vpack.c.b16 %v1946, %v1946
  %v2011 = vpack.c.b16 %v1947, %v1947
  %v2012 = vpack.c.b16 %v1948, %v1948
  %v2013 = vpack.c.b16 %v1949, %v1949
  %v2014 = vpack.c.b16 %v1950, %v1950
  %2079 = vst [vmem:[#allocation3 + $0x4] sm:$0xf] %v1951
  %2080 = vst [vmem:[#allocation3 + $0x28] sm:$0xf] %v1952
  %2081 = vst [vmem:[#allocation3 + $0x4c] sm:$0xf] %v1953
  %2082 = vst [vmem:[#allocation3 + $0x70] sm:$0xf] %v1954
  %2083 = vst [vmem:[#allocation3 + $0x94] sm:$0xf] %v1955
  %2084 = vst [vmem:[#allocation3 + $0xb8] sm:$0xf] %v1956
  %2085 = vst [vmem:[#allocation3 + $0xdc] sm:$0xf] %v1957
  %2086 = vst [vmem:[#allocation3 + $0x100] sm:$0xf] %v1958
  %2087 = vst [vmem:[#allocation3 + $0x124] sm:$0xf] %v1959
  %2088 = vst [vmem:[#allocation3 + $0x148] sm:$0xf] %v1960
  %2089 = vst [vmem:[#allocation3 + $0x16c] sm:$0xf] %v1961
  %2090 = vst [vmem:[#allocation3 + $0x190] sm:$0xf] %v1962
  %2091 = vst [vmem:[#allocation3 + $0x1b4] sm:$0xf] %v1963
  %2092 = vst [vmem:[#allocation3 + $0x1d8] sm:$0xf] %v1964
  %2093 = vst [vmem:[#allocation3 + $0x1fc] sm:$0xf] %v1965
  %2094 = vst [vmem:[#allocation3 + $0x220] sm:$0xf] %v1966
  %2095 = vst [vmem:[#allocation3 + $0x244] sm:$0xf] %v1967
  %2096 = vst [vmem:[#allocation3 + $0x268] sm:$0xf] %v1968
  %2097 = vst [vmem:[#allocation3 + $0x28c] sm:$0xf] %v1969
  %2098 = vst [vmem:[#allocation3 + $0x2b0] sm:$0xf] %v1970
  %2099 = vst [vmem:[#allocation3 + $0x2d4] sm:$0xf] %v1971
  %2100 = vst [vmem:[#allocation3 + $0x2f8] sm:$0xf] %v1972
  %2101 = vst [vmem:[#allocation3 + $0x31c] sm:$0xf] %v1973
  %2102 = vst [vmem:[#allocation3 + $0x340] sm:$0xf] %v1974
  %2103 = vst [vmem:[#allocation3 + $0x364] sm:$0xf] %v1975
  %2104 = vst [vmem:[#allocation3 + $0x388] sm:$0xf] %v1976
  %2105 = vst [vmem:[#allocation3 + $0x3ac] sm:$0xf] %v1977
  %2106 = vst [vmem:[#allocation3 + $0x3d0] sm:$0xf] %v1978
  %2107 = vst [vmem:[#allocation3 + $0x3f4] sm:$0xf] %v1979
  %2108 = vst [vmem:[#allocation3 + $0x418] sm:$0xf] %v1980
  %2109 = vst [vmem:[#allocation3 + $0x43c] sm:$0xf] %v1981
  %2110 = vst [vmem:[#allocation3 + $0x460] sm:$0xf] %v1982
  %2111 = vst [vmem:[#allocation3 + $0x484] sm:$0xf] %v1983
  %2112 = vst [vmem:[#allocation3 + $0x4a8] sm:$0xf] %v1984
  %2113 = vst [vmem:[#allocation3 + $0x4cc] sm:$0xf] %v1985
  %2114 = vst [vmem:[#allocation3 + $0x4f0] sm:$0xf] %v1986
  %2115 = vst [vmem:[#allocation3 + $0x514] sm:$0xf] %v1987
  %2116 = vst [vmem:[#allocation3 + $0x538] sm:$0xf] %v1988
  %2117 = vst [vmem:[#allocation3 + $0x55c] sm:$0xf] %v1989
  %2118 = vst [vmem:[#allocation3 + $0x580] sm:$0xf] %v1990
  %2119 = vst [vmem:[#allocation3 + $0x5a4] sm:$0xf] %v1991
  %2120 = vst [vmem:[#allocation3 + $0x5c8] sm:$0xf] %v1992
  %2121 = vst [vmem:[#allocation3 + $0x5ec] sm:$0xf] %v1993
  %2122 = vst [vmem:[#allocation3 + $0x610] sm:$0xf] %v1994
  %2123 = vst [vmem:[#allocation3 + $0x634] sm:$0xf] %v1995
  %2124 = vst [vmem:[#allocation3 + $0x658] sm:$0xf] %v1996
  %2125 = vst [vmem:[#allocation3 + $0x67c] sm:$0xf] %v1997
  %2126 = vst [vmem:[#allocation3 + $0x6a0] sm:$0xf] %v1998
  %2127 = vst [vmem:[#allocation3 + $0x6c4] sm:$0xf] %v1999
  %2128 = vst [vmem:[#allocation3 + $0x6e8] sm:$0xf] %v2000
  %2129 = vst [vmem:[#allocation3 + $0x70c] sm:$0xf] %v2001
  %2130 = vst [vmem:[#allocation3 + $0x730] sm:$0xf] %v2002
  %2131 = vst [vmem:[#allocation3 + $0x754] sm:$0xf] %v2003
  %2132 = vst [vmem:[#allocation3 + $0x778] sm:$0xf] %v2004
  %2133 = vst [vmem:[#allocation3 + $0x79c] sm:$0xf] %v2005
  %2134 = vst [vmem:[#allocation3 + $0x7c0] sm:$0xf] %v2006
  %2135 = vst [vmem:[#allocation3 + $0x7e4] sm:$0xf] %v2007
  %2136 = vst [vmem:[#allocation3 + $0x808] sm:$0xf] %v2008
  %2137 = vst [vmem:[#allocation3 + $0x82c] sm:$0xf] %v2009
  %2138 = vst [vmem:[#allocation3 + $0x850] sm:$0xf] %v2010
  %2139 = vst [vmem:[#allocation3 + $0x874] sm:$0xf] %v2011
  %2140 = vst [vmem:[#allocation3 + $0x898] sm:$0xf] %v2012
  %2141 = vst [vmem:[#allocation3 + $0x8bc] sm:$0xf] %v2013
  %2142 = vst [vmem:[#allocation3 + $0x8e0] sm:$0xf] %v2014
  %v2143 = vld [vmem:[#allocation2 + $0x2] sm:$0xff]
  %v2144 = vld [vmem:[#allocation2 + $0xa] sm:$0xff]
  %v2145 = vld [vmem:[#allocation2 + $0x1a] sm:$0xff]
  %v2146 = vld [vmem:[#allocation2 + $0x22] sm:$0xff]
  %v2147 = vld [vmem:[#allocation2 + $0x32] sm:$0xff]
  %v2148 = vld [vmem:[#allocation2 + $0x3a] sm:$0xff]
  %v2149 = vld [vmem:[#allocation2 + $0x4a] sm:$0xff]
  %v2150 = vld [vmem:[#allocation2 + $0x52] sm:$0xff]
  %v2151 = vld [vmem:[#allocation2 + $0x62] sm:$0xff]
  %v2152 = vld [vmem:[#allocation2 + $0x6a] sm:$0xff]
  %v2153 = vld [vmem:[#allocation2 + $0x7a] sm:$0xff]
  %v2154 = vld [vmem:[#allocation2 + $0x82] sm:$0xff]
  %v2155 = vld [vmem:[#allocation2 + $0x92] sm:$0xff]
  %v2156 = vld [vmem:[#allocation2 + $0x9a] sm:$0xff]
  %v2157 = vld [vmem:[#allocation2 + $0xaa] sm:$0xff]
  %v2158 = vld [vmem:[#allocation2 + $0xb2] sm:$0xff]
  %v2159 = vld [vmem:[#allocation2 + $0xc2] sm:$0xff]
  %v2160 = vld [vmem:[#allocation2 + $0xca] sm:$0xff]
  %v2161 = vld [vmem:[#allocation2 + $0xda] sm:$0xff]
  %v2162 = vld [vmem:[#allocation2 + $0xe2] sm:$0xff]
  %v2163 = vld [vmem:[#allocation2 + $0xf2] sm:$0xff]
  %v2164 = vld [vmem:[#allocation2 + $0xfa] sm:$0xff]
  %v2165 = vld [vmem:[#allocation2 + $0x10a] sm:$0xff]
  %v2166 = vld [vmem:[#allocation2 + $0x112] sm:$0xff]
  %v2167 = vld [vmem:[#allocation2 + $0x122] sm:$0xff]
  %v2168 = vld [vmem:[#allocation2 + $0x12a] sm:$0xff]
  %v2169 = vld [vmem:[#allocation2 + $0x13a] sm:$0xff]
  %v2170 = vld [vmem:[#allocation2 + $0x142] sm:$0xff]
  %v2171 = vld [vmem:[#allocation2 + $0x152] sm:$0xff]
  %v2172 = vld [vmem:[#allocation2 + $0x15a] sm:$0xff]
  %v2173 = vld [vmem:[#allocation2 + $0x16a] sm:$0xff]
  %v2174 = vld [vmem:[#allocation2 + $0x172] sm:$0xff]
  %v2175 = vld [vmem:[#allocation2 + $0x1b2] sm:$0xff]
  %v2176 = vld [vmem:[#allocation2 + $0x1ba] sm:$0xff]
  %v2177 = vld [vmem:[#allocation2 + $0x1ca] sm:$0xff]
  %v2178 = vld [vmem:[#allocation2 + $0x1d2] sm:$0xff]
  %v2179 = vld [vmem:[#allocation2 + $0x1e2] sm:$0xff]
  %v2180 = vld [vmem:[#allocation2 + $0x1ea] sm:$0xff]
  %v2181 = vld [vmem:[#allocation2 + $0x1fa] sm:$0xff]
  %v2182 = vld [vmem:[#allocation2 + $0x202] sm:$0xff]
  %v2183 = vld [vmem:[#allocation2 + $0x212] sm:$0xff]
  %v2184 = vld [vmem:[#allocation2 + $0x21a] sm:$0xff]
  %v2185 = vld [vmem:[#allocation2 + $0x22a] sm:$0xff]
  %v2186 = vld [vmem:[#allocation2 + $0x232] sm:$0xff]
  %v2187 = vld [vmem:[#allocation2 + $0x242] sm:$0xff]
  %v2188 = vld [vmem:[#allocation2 + $0x24a] sm:$0xff]
  %v2189 = vld [vmem:[#allocation2 + $0x25a] sm:$0xff]
  %v2190 = vld [vmem:[#allocation2 + $0x262] sm:$0xff]
  %v2191 = vld [vmem:[#allocation2 + $0x272] sm:$0xff]
  %v2192 = vld [vmem:[#allocation2 + $0x27a] sm:$0xff]
  %v2193 = vld [vmem:[#allocation2 + $0x28a] sm:$0xff]
  %v2194 = vld [vmem:[#allocation2 + $0x292] sm:$0xff]
  %v2195 = vld [vmem:[#allocation2 + $0x2a2] sm:$0xff]
  %v2196 = vld [vmem:[#allocation2 + $0x2aa] sm:$0xff]
  %v2197 = vld [vmem:[#allocation2 + $0x2ba] sm:$0xff]
  %v2198 = vld [vmem:[#allocation2 + $0x2c2] sm:$0xff]
  %v2199 = vld [vmem:[#allocation2 + $0x2d2] sm:$0xff]
  %v2200 = vld [vmem:[#allocation2 + $0x2da] sm:$0xff]
  %v2201 = vld [vmem:[#allocation2 + $0x2ea] sm:$0xff]
  %v2202 = vld [vmem:[#allocation2 + $0x2f2] sm:$0xff]
  %v2203 = vld [vmem:[#allocation2 + $0x302] sm:$0xff]
  %v2204 = vld [vmem:[#allocation2 + $0x30a] sm:$0xff]
  %v2205 = vld [vmem:[#allocation2 + $0x31a] sm:$0xff]
  %v2206 = vld [vmem:[#allocation2 + $0x322] sm:$0xff]
  %v2207 = vpack.c.bf16 %v2144, %v2143
  %v2208 = vpack.c.bf16 %v2146, %v2145
  %v2209 = vpack.c.bf16 %v2148, %v2147
  %v2210 = vpack.c.bf16 %v2150, %v2149
  %v2211 = vpack.c.bf16 %v2152, %v2151
  %v2212 = vpack.c.bf16 %v2154, %v2153
  %v2213 = vpack.c.bf16 %v2156, %v2155
  %v2214 = vpack.c.bf16 %v2158, %v2157
  %v2215 = vpack.c.bf16 %v2160, %v2159
  %v2216 = vpack.c.bf16 %v2162, %v2161
  %v2217 = vpack.c.bf16 %v2164, %v2163
  %v2218 = vpack.c.bf16 %v2166, %v2165
  %v2219 = vpack.c.bf16 %v2168, %v2167
  %v2220 = vpack.c.bf16 %v2170, %v2169
  %v2221 = vpack.c.bf16 %v2172, %v2171
  %v2222 = vpack.c.bf16 %v2174, %v2173
  %v2223 = vpack.c.bf16 %v2176, %v2175
  %v2224 = vpack.c.bf16 %v2178, %v2177
  %v2225 = vpack.c.bf16 %v2180, %v2179
  %v2226 = vpack.c.bf16 %v2182, %v2181
  %v2227 = vpack.c.bf16 %v2184, %v2183
  %v2228 = vpack.c.bf16 %v2186, %v2185
  %v2229 = vpack.c.bf16 %v2188, %v2187
  %v2230 = vpack.c.bf16 %v2190, %v2189
  %v2231 = vpack.c.bf16 %v2192, %v2191
  %v2232 = vpack.c.bf16 %v2194, %v2193
  %v2233 = vpack.c.bf16 %v2196, %v2195
  %v2234 = vpack.c.bf16 %v2198, %v2197
  %v2235 = vpack.c.bf16 %v2200, %v2199
  %v2236 = vpack.c.bf16 %v2202, %v2201
  %v2237 = vpack.c.bf16 %v2204, %v2203
  %v2238 = vpack.c.bf16 %v2206, %v2205
  %v2271 = vunpack.c.l.b16 %v2207
  %v2272 = vunpack.c.h.b16 %v2207
  %v2273 = vunpack.c.l.b16 %v2208
  %v2274 = vunpack.c.h.b16 %v2208
  %v2275 = vunpack.c.l.b16 %v2209
  %v2276 = vunpack.c.h.b16 %v2209
  %v2277 = vunpack.c.l.b16 %v2210
  %v2278 = vunpack.c.h.b16 %v2210
  %v2279 = vunpack.c.l.b16 %v2211
  %v2280 = vunpack.c.h.b16 %v2211
  %v2281 = vunpack.c.l.b16 %v2212
  %v2282 = vunpack.c.h.b16 %v2212
  %v2283 = vunpack.c.l.b16 %v2213
  %v2284 = vunpack.c.h.b16 %v2213
  %v2285 = vunpack.c.l.b16 %v2214
  %v2286 = vunpack.c.h.b16 %v2214
  %v2287 = vunpack.c.l.b16 %v2215
  %v2288 = vunpack.c.h.b16 %v2215
  %v2289 = vunpack.c.l.b16 %v2216
  %v2290 = vunpack.c.h.b16 %v2216
  %v2291 = vunpack.c.l.b16 %v2217
  %v2292 = vunpack.c.h.b16 %v2217
  %v2293 = vunpack.c.l.b16 %v2218
  %v2294 = vunpack.c.h.b16 %v2218
  %v2295 = vunpack.c.l.b16 %v2219
  %v2296 = vunpack.c.h.b16 %v2219
  %v2297 = vunpack.c.l.b16 %v2220
  %v2298 = vunpack.c.h.b16 %v2220
  %v2299 = vunpack.c.l.b16 %v2221
  %v2300 = vunpack.c.h.b16 %v2221
  %v2301 = vunpack.c.l.b16 %v2222
  %v2302 = vunpack.c.h.b16 %v2222
  %v2303 = vunpack.c.l.b16 %v2223
  %v2304 = vunpack.c.h.b16 %v2223
  %v2305 = vunpack.c.l.b16 %v2224
  %v2306 = vunpack.c.h.b16 %v2224
  %v2307 = vunpack.c.l.b16 %v2225
  %v2308 = vunpack.c.h.b16 %v2225
  %v2309 = vunpack.c.l.b16 %v2226
  %v2310 = vunpack.c.h.b16 %v2226
  %v2311 = vunpack.c.l.b16 %v2227
  %v2312 = vunpack.c.h.b16 %v2227
  %v2313 = vunpack.c.l.b16 %v2228
  %v2314 = vunpack.c.h.b16 %v2228
  %v2315 = vunpack.c.l.b16 %v2229
  %v2316 = vunpack.c.h.b16 %v2229
  %v2317 = vunpack.c.l.b16 %v2230
  %v2318 = vunpack.c.h.b16 %v2230
  %v2319 = vunpack.c.l.b16 %v2231
  %v2320 = vunpack.c.h.b16 %v2231
  %v2321 = vunpack.c.l.b16 %v2232
  %v2322 = vunpack.c.h.b16 %v2232
  %v2323 = vunpack.c.l.b16 %v2233
  %v2324 = vunpack.c.h.b16 %v2233
  %v2325 = vunpack.c.l.b16 %v2234
  %v2326 = vunpack.c.h.b16 %v2234
  %v2327 = vunpack.c.l.b16 %v2235
  %v2328 = vunpack.c.h.b16 %v2235
  %v2329 = vunpack.c.l.b16 %v2236
  %v2330 = vunpack.c.h.b16 %v2236
  %v2331 = vunpack.c.l.b16 %v2237
  %v2332 = vunpack.c.h.b16 %v2237
  %v2333 = vunpack.c.l.b16 %v2238
  %v2334 = vunpack.c.h.b16 %v2238
  %v2335 = vpack.c.b16 %v2271, %v2271
  %v2336 = vpack.c.b16 %v2272, %v2272
  %v2337 = vpack.c.b16 %v2273, %v2273
  %v2338 = vpack.c.b16 %v2274, %v2274
  %v2339 = vpack.c.b16 %v2275, %v2275
  %v2340 = vpack.c.b16 %v2276, %v2276
  %v2341 = vpack.c.b16 %v2277, %v2277
  %v2342 = vpack.c.b16 %v2278, %v2278
  %v2343 = vpack.c.b16 %v2279, %v2279
  %v2344 = vpack.c.b16 %v2280, %v2280
  %v2345 = vpack.c.b16 %v2281, %v2281
  %v2346 = vpack.c.b16 %v2282, %v2282
  %v2347 = vpack.c.b16 %v2283, %v2283
  %v2348 = vpack.c.b16 %v2284, %v2284
  %v2349 = vpack.c.b16 %v2285, %v2285
  %v2350 = vpack.c.b16 %v2286, %v2286
  %v2351 = vpack.c.b16 %v2287, %v2287
  %v2352 = vpack.c.b16 %v2288, %v2288
  %v2353 = vpack.c.b16 %v2289, %v2289
  %v2354 = vpack.c.b16 %v2290, %v2290
  %v2355 = vpack.c.b16 %v2291, %v2291
  %v2356 = vpack.c.b16 %v2292, %v2292
  %v2357 = vpack.c.b16 %v2293, %v2293
  %v2358 = vpack.c.b16 %v2294, %v2294
  %v2359 = vpack.c.b16 %v2295, %v2295
  %v2360 = vpack.c.b16 %v2296, %v2296
  %v2361 = vpack.c.b16 %v2297, %v2297
  %v2362 = vpack.c.b16 %v2298, %v2298
  %v2363 = vpack.c.b16 %v2299, %v2299
  %v2364 = vpack.c.b16 %v2300, %v2300
  %v2365 = vpack.c.b16 %v2301, %v2301
  %v2366 = vpack.c.b16 %v2302, %v2302
  %v2367 = vpack.c.b16 %v2303, %v2303
  %v2368 = vpack.c.b16 %v2304, %v2304
  %v2369 = vpack.c.b16 %v2305, %v2305
  %v2370 = vpack.c.b16 %v2306, %v2306
  %v2371 = vpack.c.b16 %v2307, %v2307
  %v2372 = vpack.c.b16 %v2308, %v2308
  %v2373 = vpack.c.b16 %v2309, %v2309
  %v2374 = vpack.c.b16 %v2310, %v2310
  %v2375 = vpack.c.b16 %v2311, %v2311
  %v2376 = vpack.c.b16 %v2312, %v2312
  %v2377 = vpack.c.b16 %v2313, %v2313
  %v2378 = vpack.c.b16 %v2314, %v2314
  %v2379 = vpack.c.b16 %v2315, %v2315
  %v2380 = vpack.c.b16 %v2316, %v2316
  %v2381 = vpack.c.b16 %v2317, %v2317
  %v2382 = vpack.c.b16 %v2318, %v2318
  %v2383 = vpack.c.b16 %v2319, %v2319
  %v2384 = vpack.c.b16 %v2320, %v2320
  %v2385 = vpack.c.b16 %v2321, %v2321
  %v2386 = vpack.c.b16 %v2322, %v2322
  %v2387 = vpack.c.b16 %v2323, %v2323
  %v2388 = vpack.c.b16 %v2324, %v2324
  %v2389 = vpack.c.b16 %v2325, %v2325
  %v2390 = vpack.c.b16 %v2326, %v2326
  %v2391 = vpack.c.b16 %v2327, %v2327
  %v2392 = vpack.c.b16 %v2328, %v2328
  %v2393 = vpack.c.b16 %v2329, %v2329
  %v2394 = vpack.c.b16 %v2330, %v2330
  %v2395 = vpack.c.b16 %v2331, %v2331
  %v2396 = vpack.c.b16 %v2332, %v2332
  %v2397 = vpack.c.b16 %v2333, %v2333
  %v2398 = vpack.c.b16 %v2334, %v2334
  %2463 = vst [vmem:[#allocation3 + $0x8] sm:$0xf] %v2335
  %2464 = vst [vmem:[#allocation3 + $0x2c] sm:$0xf] %v2336
  %2465 = vst [vmem:[#allocation3 + $0x50] sm:$0xf] %v2337
  %2466 = vst [vmem:[#allocation3 + $0x74] sm:$0xf] %v2338
  %2467 = vst [vmem:[#allocation3 + $0x98] sm:$0xf] %v2339
  %2468 = vst [vmem:[#allocation3 + $0xbc] sm:$0xf] %v2340
  %2469 = vst [vmem:[#allocation3 + $0xe0] sm:$0xf] %v2341
  %2470 = vst [vmem:[#allocation3 + $0x104] sm:$0xf] %v2342
  %2471 = vst [vmem:[#allocation3 + $0x128] sm:$0xf] %v2343
  %2472 = vst [vmem:[#allocation3 + $0x14c] sm:$0xf] %v2344
  %2473 = vst [vmem:[#allocation3 + $0x170] sm:$0xf] %v2345
  %2474 = vst [vmem:[#allocation3 + $0x194] sm:$0xf] %v2346
  %2475 = vst [vmem:[#allocation3 + $0x1b8] sm:$0xf] %v2347
  %2476 = vst [vmem:[#allocation3 + $0x1dc] sm:$0xf] %v2348
  %2477 = vst [vmem:[#allocation3 + $0x200] sm:$0xf] %v2349
  %2478 = vst [vmem:[#allocation3 + $0x224] sm:$0xf] %v2350
  %2479 = vst [vmem:[#allocation3 + $0x248] sm:$0xf] %v2351
  %2480 = vst [vmem:[#allocation3 + $0x26c] sm:$0xf] %v2352
  %2481 = vst [vmem:[#allocation3 + $0x290] sm:$0xf] %v2353
  %2482 = vst [vmem:[#allocation3 + $0x2b4] sm:$0xf] %v2354
  %2483 = vst [vmem:[#allocation3 + $0x2d8] sm:$0xf] %v2355
  %2484 = vst [vmem:[#allocation3 + $0x2fc] sm:$0xf] %v2356
  %2485 = vst [vmem:[#allocation3 + $0x320] sm:$0xf] %v2357
  %2486 = vst [vmem:[#allocation3 + $0x344] sm:$0xf] %v2358
  %2487 = vst [vmem:[#allocation3 + $0x368] sm:$0xf] %v2359
  %2488 = vst [vmem:[#allocation3 + $0x38c] sm:$0xf] %v2360
  %2489 = vst [vmem:[#allocation3 + $0x3b0] sm:$0xf] %v2361
  %2490 = vst [vmem:[#allocation3 + $0x3d4] sm:$0xf] %v2362
  %2491 = vst [vmem:[#allocation3 + $0x3f8] sm:$0xf] %v2363
  %2492 = vst [vmem:[#allocation3 + $0x41c] sm:$0xf] %v2364
  %2493 = vst [vmem:[#allocation3 + $0x440] sm:$0xf] %v2365
  %2494 = vst [vmem:[#allocation3 + $0x464] sm:$0xf] %v2366
  %2495 = vst [vmem:[#allocation3 + $0x488] sm:$0xf] %v2367
  %2496 = vst [vmem:[#allocation3 + $0x4ac] sm:$0xf] %v2368
  %2497 = vst [vmem:[#allocation3 + $0x4d0] sm:$0xf] %v2369
  %2498 = vst [vmem:[#allocation3 + $0x4f4] sm:$0xf] %v2370
  %2499 = vst [vmem:[#allocation3 + $0x518] sm:$0xf] %v2371
  %2500 = vst [vmem:[#allocation3 + $0x53c] sm:$0xf] %v2372
  %2501 = vst [vmem:[#allocation3 + $0x560] sm:$0xf] %v2373
  %2502 = vst [vmem:[#allocation3 + $0x584] sm:$0xf] %v2374
  %2503 = vst [vmem:[#allocation3 + $0x5a8] sm:$0xf] %v2375
  %2504 = vst [vmem:[#allocation3 + $0x5cc] sm:$0xf] %v2376
  %2505 = vst [vmem:[#allocation3 + $0x5f0] sm:$0xf] %v2377
  %2506 = vst [vmem:[#allocation3 + $0x614] sm:$0xf] %v2378
  %2507 = vst [vmem:[#allocation3 + $0x638] sm:$0xf] %v2379
  %2508 = vst [vmem:[#allocation3 + $0x65c] sm:$0xf] %v2380
  %2509 = vst [vmem:[#allocation3 + $0x680] sm:$0xf] %v2381
  %2510 = vst [vmem:[#allocation3 + $0x6a4] sm:$0xf] %v2382
  %2511 = vst [vmem:[#allocation3 + $0x6c8] sm:$0xf] %v2383
  %2512 = vst [vmem:[#allocation3 + $0x6ec] sm:$0xf] %v2384
  %2513 = vst [vmem:[#allocation3 + $0x710] sm:$0xf] %v2385
  %2514 = vst [vmem:[#allocation3 + $0x734] sm:$0xf] %v2386
  %2515 = vst [vmem:[#allocation3 + $0x758] sm:$0xf] %v2387
  %2516 = vst [vmem:[#allocation3 + $0x77c] sm:$0xf] %v2388
  %2517 = vst [vmem:[#allocation3 + $0x7a0] sm:$0xf] %v2389
  %2518 = vst [vmem:[#allocation3 + $0x7c4] sm:$0xf] %v2390
  %2519 = vst [vmem:[#allocation3 + $0x7e8] sm:$0xf] %v2391
  %2520 = vst [vmem:[#allocation3 + $0x80c] sm:$0xf] %v2392
  %2521 = vst [vmem:[#allocation3 + $0x830] sm:$0xf] %v2393
  %2522 = vst [vmem:[#allocation3 + $0x854] sm:$0xf] %v2394
  %2523 = vst [vmem:[#allocation3 + $0x878] sm:$0xf] %v2395
  %2524 = vst [vmem:[#allocation3 + $0x89c] sm:$0xf] %v2396
  %2525 = vst [vmem:[#allocation3 + $0x8c0] sm:$0xf] %v2397
  %2526 = vst [vmem:[#allocation3 + $0x8e4] sm:$0xf] %v2398
  %v2527 = vld [vmem:[%s1246] sm:$0xff]
  %v2528 = vld [vmem:[%s1246 + $0x8] sm:$0xff]
  %v2529 = vld [vmem:[%s1246 + $0x18] sm:$0xff]
  %v2530 = vld [vmem:[%s1246 + $0x20] sm:$0xff]
  %v2531 = vld [vmem:[%s1246 + $0x30] sm:$0xff]
  %v2532 = vld [vmem:[%s1246 + $0x38] sm:$0xff]
  %v2533 = vld [vmem:[%s1246 + $0x48] sm:$0xff]
  %v2534 = vld [vmem:[%s1246 + $0x50] sm:$0xff]
  %v2535 = vld [vmem:[%s1246 + $0x60] sm:$0xff]
  %v2536 = vld [vmem:[%s1246 + $0x68] sm:$0xff]
  %v2537 = vld [vmem:[%s1246 + $0x78] sm:$0xff]
  %v2538 = vld [vmem:[%s1246 + $0x80] sm:$0xff]
  %v2539 = vld [vmem:[%s1246 + $0x90] sm:$0xff]
  %v2540 = vld [vmem:[%s1246 + $0x98] sm:$0xff]
  %v2541 = vld [vmem:[%s1246 + $0xa8] sm:$0xff]
  %v2542 = vld [vmem:[%s1246 + $0xb0] sm:$0xff]
  %v2543 = vld [vmem:[%s1246 + $0xc0] sm:$0xff]
  %v2544 = vld [vmem:[%s1246 + $0xc8] sm:$0xff]
  %v2545 = vld [vmem:[%s1246 + $0xd8] sm:$0xff]
  %v2546 = vld [vmem:[%s1246 + $0xe0] sm:$0xff]
  %v2547 = vld [vmem:[%s1246 + $0xf0] sm:$0xff]
  %v2548 = vld [vmem:[%s1246 + $0xf8] sm:$0xff]
  %v2549 = vld [vmem:[%s1246 + $0x108] sm:$0xff]
  %v2550 = vld [vmem:[%s1246 + $0x110] sm:$0xff]
  %v2551 = vld [vmem:[%s1246 + $0x120] sm:$0xff]
  %v2552 = vld [vmem:[%s1246 + $0x128] sm:$0xff]
  %v2553 = vld [vmem:[%s1246 + $0x138] sm:$0xff]
  %v2554 = vld [vmem:[%s1246 + $0x140] sm:$0xff]
  %v2555 = vld [vmem:[%s1246 + $0x150] sm:$0xff]
  %v2556 = vld [vmem:[%s1246 + $0x158] sm:$0xff]
  %v2557 = vld [vmem:[%s1246 + $0x168] sm:$0xff]
  %v2558 = vld [vmem:[%s1246 + $0x170] sm:$0xff]
  %v2559 = vld [vmem:[%s1246 + $0x1b0] sm:$0xff]
  %v2560 = vld [vmem:[%s1246 + $0x1b8] sm:$0xff]
  %v2561 = vld [vmem:[%s1246 + $0x1c8] sm:$0xff]
  %v2562 = vld [vmem:[%s1246 + $0x1d0] sm:$0xff]
  %v2563 = vld [vmem:[%s1246 + $0x1e0] sm:$0xff]
  %v2564 = vld [vmem:[%s1246 + $0x1e8] sm:$0xff]
  %v2565 = vld [vmem:[%s1246 + $0x1f8] sm:$0xff]
  %v2566 = vld [vmem:[%s1246 + $0x200] sm:$0xff]
  %v2567 = vld [vmem:[%s1246 + $0x210] sm:$0xff]
  %v2568 = vld [vmem:[%s1246 + $0x218] sm:$0xff]
  %v2569 = vld [vmem:[%s1246 + $0x228] sm:$0xff]
  %v2570 = vld [vmem:[%s1246 + $0x230] sm:$0xff]
  %v2571 = vld [vmem:[%s1246 + $0x240] sm:$0xff]
  %v2572 = vld [vmem:[%s1246 + $0x248] sm:$0xff]
  %v2573 = vld [vmem:[%s1246 + $0x258] sm:$0xff]
  %v2574 = vld [vmem:[%s1246 + $0x260] sm:$0xff]
  %v2575 = vld [vmem:[%s1246 + $0x270] sm:$0xff]
  %v2576 = vld [vmem:[%s1246 + $0x278] sm:$0xff]
  %v2577 = vld [vmem:[%s1246 + $0x288] sm:$0xff]
  %v2578 = vld [vmem:[%s1246 + $0x290] sm:$0xff]
  %v2579 = vld [vmem:[%s1246 + $0x2a0] sm:$0xff]
  %v2580 = vld [vmem:[%s1246 + $0x2a8] sm:$0xff]
  %v2581 = vld [vmem:[%s1246 + $0x2b8] sm:$0xff]
  %v2582 = vld [vmem:[%s1246 + $0x2c0] sm:$0xff]
  %v2583 = vld [vmem:[%s1246 + $0x2d0] sm:$0xff]
  %v2584 = vld [vmem:[%s1246 + $0x2d8] sm:$0xff]
  %v2585 = vld [vmem:[%s1246 + $0x2e8] sm:$0xff]
  %v2586 = vld [vmem:[%s1246 + $0x2f0] sm:$0xff]
  %v2587 = vld [vmem:[%s1246 + $0x300] sm:$0xff]
  %v2588 = vld [vmem:[%s1246 + $0x308] sm:$0xff]
  %v2589 = vld [vmem:[%s1246 + $0x318] sm:$0xff]
  %v2590 = vld [vmem:[%s1246 + $0x320] sm:$0xff]
  %v2591 = vpack.c.bf16 %v2528, %v2527
  %v2592 = vpack.c.bf16 %v2530, %v2529
  %v2593 = vpack.c.bf16 %v2532, %v2531
  %v2594 = vpack.c.bf16 %v2534, %v2533
  %v2595 = vpack.c.bf16 %v2536, %v2535
  %v2596 = vpack.c.bf16 %v2538, %v2537
  %v2597 = vpack.c.bf16 %v2540, %v2539
  %v2598 = vpack.c.bf16 %v2542, %v2541
  %v2599 = vpack.c.bf16 %v2544, %v2543
  %v2600 = vpack.c.bf16 %v2546, %v2545
  %v2601 = vpack.c.bf16 %v2548, %v2547
  %v2602 = vpack.c.bf16 %v2550, %v2549
  %v2603 = vpack.c.bf16 %v2552, %v2551
  %v2604 = vpack.c.bf16 %v2554, %v2553
  %v2605 = vpack.c.bf16 %v2556, %v2555
  %v2606 = vpack.c.bf16 %v2558, %v2557
  %v2607 = vpack.c.bf16 %v2560, %v2559
  %v2608 = vpack.c.bf16 %v2562, %v2561
  %v2609 = vpack.c.bf16 %v2564, %v2563
  %v2610 = vpack.c.bf16 %v2566, %v2565
  %v2611 = vpack.c.bf16 %v2568, %v2567
  %v2612 = vpack.c.bf16 %v2570, %v2569
  %v2613 = vpack.c.bf16 %v2572, %v2571
  %v2614 = vpack.c.bf16 %v2574, %v2573
  %v2615 = vpack.c.bf16 %v2576, %v2575
  %v2616 = vpack.c.bf16 %v2578, %v2577
  %v2617 = vpack.c.bf16 %v2580, %v2579
  %v2618 = vpack.c.bf16 %v2582, %v2581
  %v2619 = vpack.c.bf16 %v2584, %v2583
  %v2620 = vpack.c.bf16 %v2586, %v2585
  %v2621 = vpack.c.bf16 %v2588, %v2587
  %v2622 = vpack.c.bf16 %v2590, %v2589
  %v2655 = vunpack.c.l.b16 %v2591
  %v2656 = vunpack.c.h.b16 %v2591
  %v2657 = vunpack.c.l.b16 %v2592
  %v2658 = vunpack.c.h.b16 %v2592
  %v2659 = vunpack.c.l.b16 %v2593
  %v2660 = vunpack.c.h.b16 %v2593
  %v2661 = vunpack.c.l.b16 %v2594
  %v2662 = vunpack.c.h.b16 %v2594
  %v2663 = vunpack.c.l.b16 %v2595
  %v2664 = vunpack.c.h.b16 %v2595
  %v2665 = vunpack.c.l.b16 %v2596
  %v2666 = vunpack.c.h.b16 %v2596
  %v2667 = vunpack.c.l.b16 %v2597
  %v2668 = vunpack.c.h.b16 %v2597
  %v2669 = vunpack.c.l.b16 %v2598
  %v2670 = vunpack.c.h.b16 %v2598
  %v2671 = vunpack.c.l.b16 %v2599
  %v2672 = vunpack.c.h.b16 %v2599
  %v2673 = vunpack.c.l.b16 %v2600
  %v2674 = vunpack.c.h.b16 %v2600
  %v2675 = vunpack.c.l.b16 %v2601
  %v2676 = vunpack.c.h.b16 %v2601
  %v2677 = vunpack.c.l.b16 %v2602
  %v2678 = vunpack.c.h.b16 %v2602
  %v2679 = vunpack.c.l.b16 %v2603
  %v2680 = vunpack.c.h.b16 %v2603
  %v2681 = vunpack.c.l.b16 %v2604
  %v2682 = vunpack.c.h.b16 %v2604
  %v2683 = vunpack.c.l.b16 %v2605
  %v2684 = vunpack.c.h.b16 %v2605
  %v2685 = vunpack.c.l.b16 %v2606
  %v2686 = vunpack.c.h.b16 %v2606
  %v2687 = vunpack.c.l.b16 %v2607
  %v2688 = vunpack.c.h.b16 %v2607
  %v2689 = vunpack.c.l.b16 %v2608
  %v2690 = vunpack.c.h.b16 %v2608
  %v2691 = vunpack.c.l.b16 %v2609
  %v2692 = vunpack.c.h.b16 %v2609
  %v2693 = vunpack.c.l.b16 %v2610
  %v2694 = vunpack.c.h.b16 %v2610
  %v2695 = vunpack.c.l.b16 %v2611
  %v2696 = vunpack.c.h.b16 %v2611
  %v2697 = vunpack.c.l.b16 %v2612
  %v2698 = vunpack.c.h.b16 %v2612
  %v2699 = vunpack.c.l.b16 %v2613
  %v2700 = vunpack.c.h.b16 %v2613
  %v2701 = vunpack.c.l.b16 %v2614
  %v2702 = vunpack.c.h.b16 %v2614
  %v2703 = vunpack.c.l.b16 %v2615
  %v2704 = vunpack.c.h.b16 %v2615
  %v2705 = vunpack.c.l.b16 %v2616
  %v2706 = vunpack.c.h.b16 %v2616
  %v2707 = vunpack.c.l.b16 %v2617
  %v2708 = vunpack.c.h.b16 %v2617
  %v2709 = vunpack.c.l.b16 %v2618
  %v2710 = vunpack.c.h.b16 %v2618
  %v2711 = vunpack.c.l.b16 %v2619
  %v2712 = vunpack.c.h.b16 %v2619
  %v2713 = vunpack.c.l.b16 %v2620
  %v2714 = vunpack.c.h.b16 %v2620
  %v2715 = vunpack.c.l.b16 %v2621
  %v2716 = vunpack.c.h.b16 %v2621
  %v2717 = vunpack.c.l.b16 %v2622
  %v2718 = vunpack.c.h.b16 %v2622
  %v2719 = vpack.c.b16 %v2655, %v2655
  %v2720 = vpack.c.b16 %v2656, %v2656
  %v2721 = vpack.c.b16 %v2657, %v2657
  %v2722 = vpack.c.b16 %v2658, %v2658
  %v2723 = vpack.c.b16 %v2659, %v2659
  %v2724 = vpack.c.b16 %v2660, %v2660
  %v2725 = vpack.c.b16 %v2661, %v2661
  %v2726 = vpack.c.b16 %v2662, %v2662
  %v2727 = vpack.c.b16 %v2663, %v2663
  %v2728 = vpack.c.b16 %v2664, %v2664
  %v2729 = vpack.c.b16 %v2665, %v2665
  %v2730 = vpack.c.b16 %v2666, %v2666
  %v2731 = vpack.c.b16 %v2667, %v2667
  %v2732 = vpack.c.b16 %v2668, %v2668
  %v2733 = vpack.c.b16 %v2669, %v2669
  %v2734 = vpack.c.b16 %v2670, %v2670
  %v2735 = vpack.c.b16 %v2671, %v2671
  %v2736 = vpack.c.b16 %v2672, %v2672
  %v2737 = vpack.c.b16 %v2673, %v2673
  %v2738 = vpack.c.b16 %v2674, %v2674
  %v2739 = vpack.c.b16 %v2675, %v2675
  %v2740 = vpack.c.b16 %v2676, %v2676
  %v2741 = vpack.c.b16 %v2677, %v2677
  %v2742 = vpack.c.b16 %v2678, %v2678
  %v2743 = vpack.c.b16 %v2679, %v2679
  %v2744 = vpack.c.b16 %v2680, %v2680
  %v2745 = vpack.c.b16 %v2681, %v2681
  %v2746 = vpack.c.b16 %v2682, %v2682
  %v2747 = vpack.c.b16 %v2683, %v2683
  %v2748 = vpack.c.b16 %v2684, %v2684
  %v2749 = vpack.c.b16 %v2685, %v2685
  %v2750 = vpack.c.b16 %v2686, %v2686
  %v2751 = vpack.c.b16 %v2687, %v2687
  %v2752 = vpack.c.b16 %v2688, %v2688
  %v2753 = vpack.c.b16 %v2689, %v2689
  %v2754 = vpack.c.b16 %v2690, %v2690
  %v2755 = vpack.c.b16 %v2691, %v2691
  %v2756 = vpack.c.b16 %v2692, %v2692
  %v2757 = vpack.c.b16 %v2693, %v2693
  %v2758 = vpack.c.b16 %v2694, %v2694
  %v2759 = vpack.c.b16 %v2695, %v2695
  %v2760 = vpack.c.b16 %v2696, %v2696
  %v2761 = vpack.c.b16 %v2697, %v2697
  %v2762 = vpack.c.b16 %v2698, %v2698
  %v2763 = vpack.c.b16 %v2699, %v2699
  %v2764 = vpack.c.b16 %v2700, %v2700
  %v2765 = vpack.c.b16 %v2701, %v2701
  %v2766 = vpack.c.b16 %v2702, %v2702
  %v2767 = vpack.c.b16 %v2703, %v2703
  %v2768 = vpack.c.b16 %v2704, %v2704
  %v2769 = vpack.c.b16 %v2705, %v2705
  %v2770 = vpack.c.b16 %v2706, %v2706
  %v2771 = vpack.c.b16 %v2707, %v2707
  %v2772 = vpack.c.b16 %v2708, %v2708
  %v2773 = vpack.c.b16 %v2709, %v2709
  %v2774 = vpack.c.b16 %v2710, %v2710
  %v2775 = vpack.c.b16 %v2711, %v2711
  %v2776 = vpack.c.b16 %v2712, %v2712
  %v2777 = vpack.c.b16 %v2713, %v2713
  %v2778 = vpack.c.b16 %v2714, %v2714
  %v2779 = vpack.c.b16 %v2715, %v2715
  %v2780 = vpack.c.b16 %v2716, %v2716
  %v2781 = vpack.c.b16 %v2717, %v2717
  %v2782 = vpack.c.b16 %v2718, %v2718
  %2847 = vst [vmem:[#allocation3 + $0xc] sm:$0xf] %v2719
  %2848 = vst [vmem:[#allocation3 + $0x30] sm:$0xf] %v2720
  %2849 = vst [vmem:[#allocation3 + $0x54] sm:$0xf] %v2721
  %2850 = vst [vmem:[#allocation3 + $0x78] sm:$0xf] %v2722
  %2851 = vst [vmem:[#allocation3 + $0x9c] sm:$0xf] %v2723
  %2852 = vst [vmem:[#allocation3 + $0xc0] sm:$0xf] %v2724
  %2853 = vst [vmem:[#allocation3 + $0xe4] sm:$0xf] %v2725
  %2854 = vst [vmem:[#allocation3 + $0x108] sm:$0xf] %v2726
  %2855 = vst [vmem:[#allocation3 + $0x12c] sm:$0xf] %v2727
  %2856 = vst [vmem:[#allocation3 + $0x150] sm:$0xf] %v2728
  %2857 = vst [vmem:[#allocation3 + $0x174] sm:$0xf] %v2729
  %2858 = vst [vmem:[#allocation3 + $0x198] sm:$0xf] %v2730
  %2859 = vst [vmem:[#allocation3 + $0x1bc] sm:$0xf] %v2731
  %2860 = vst [vmem:[#allocation3 + $0x1e0] sm:$0xf] %v2732
  %2861 = vst [vmem:[#allocation3 + $0x204] sm:$0xf] %v2733
  %2862 = vst [vmem:[#allocation3 + $0x228] sm:$0xf] %v2734
  %2863 = vst [vmem:[#allocation3 + $0x24c] sm:$0xf] %v2735
  %2864 = vst [vmem:[#allocation3 + $0x270] sm:$0xf] %v2736
  %2865 = vst [vmem:[#allocation3 + $0x294] sm:$0xf] %v2737
  %2866 = vst [vmem:[#allocation3 + $0x2b8] sm:$0xf] %v2738
  %2867 = vst [vmem:[#allocation3 + $0x2dc] sm:$0xf] %v2739
  %2868 = vst [vmem:[#allocation3 + $0x300] sm:$0xf] %v2740
  %2869 = vst [vmem:[#allocation3 + $0x324] sm:$0xf] %v2741
  %2870 = vst [vmem:[#allocation3 + $0x348] sm:$0xf] %v2742
  %2871 = vst [vmem:[#allocation3 + $0x36c] sm:$0xf] %v2743
  %2872 = vst [vmem:[#allocation3 + $0x390] sm:$0xf] %v2744
  %2873 = vst [vmem:[#allocation3 + $0x3b4] sm:$0xf] %v2745
  %2874 = vst [vmem:[#allocation3 + $0x3d8] sm:$0xf] %v2746
  %2875 = vst [vmem:[#allocation3 + $0x3fc] sm:$0xf] %v2747
  %2876 = vst [vmem:[#allocation3 + $0x420] sm:$0xf] %v2748
  %2877 = vst [vmem:[#allocation3 + $0x444] sm:$0xf] %v2749
  %2878 = vst [vmem:[#allocation3 + $0x468] sm:$0xf] %v2750
  %2879 = vst [vmem:[#allocation3 + $0x48c] sm:$0xf] %v2751
  %2880 = vst [vmem:[#allocation3 + $0x4b0] sm:$0xf] %v2752
  %2881 = vst [vmem:[#allocation3 + $0x4d4] sm:$0xf] %v2753
  %2882 = vst [vmem:[#allocation3 + $0x4f8] sm:$0xf] %v2754
  %2883 = vst [vmem:[#allocation3 + $0x51c] sm:$0xf] %v2755
  %2884 = vst [vmem:[#allocation3 + $0x540] sm:$0xf] %v2756
  %2885 = vst [vmem:[#allocation3 + $0x564] sm:$0xf] %v2757
  %2886 = vst [vmem:[#allocation3 + $0x588] sm:$0xf] %v2758
  %2887 = vst [vmem:[#allocation3 + $0x5ac] sm:$0xf] %v2759
  %2888 = vst [vmem:[#allocation3 + $0x5d0] sm:$0xf] %v2760
  %2889 = vst [vmem:[#allocation3 + $0x5f4] sm:$0xf] %v2761
  %2890 = vst [vmem:[#allocation3 + $0x618] sm:$0xf] %v2762
  %2891 = vst [vmem:[#allocation3 + $0x63c] sm:$0xf] %v2763
  %2892 = vst [vmem:[#allocation3 + $0x660] sm:$0xf] %v2764
  %2893 = vst [vmem:[#allocation3 + $0x684] sm:$0xf] %v2765
  %2894 = vst [vmem:[#allocation3 + $0x6a8] sm:$0xf] %v2766
  %2895 = vst [vmem:[#allocation3 + $0x6cc] sm:$0xf] %v2767
  %2896 = vst [vmem:[#allocation3 + $0x6f0] sm:$0xf] %v2768
  %2897 = vst [vmem:[#allocation3 + $0x714] sm:$0xf] %v2769
  %2898 = vst [vmem:[#allocation3 + $0x738] sm:$0xf] %v2770
  %2899 = vst [vmem:[#allocation3 + $0x75c] sm:$0xf] %v2771
  %2900 = vst [vmem:[#allocation3 + $0x780] sm:$0xf] %v2772
  %2901 = vst [vmem:[#allocation3 + $0x7a4] sm:$0xf] %v2773
  %2902 = vst [vmem:[#allocation3 + $0x7c8] sm:$0xf] %v2774
  %2903 = vst [vmem:[#allocation3 + $0x7ec] sm:$0xf] %v2775
  %2904 = vst [vmem:[#allocation3 + $0x810] sm:$0xf] %v2776
  %2905 = vst [vmem:[#allocation3 + $0x834] sm:$0xf] %v2777
  %2906 = vst [vmem:[#allocation3 + $0x858] sm:$0xf] %v2778
  %2907 = vst [vmem:[#allocation3 + $0x87c] sm:$0xf] %v2779
  %2908 = vst [vmem:[#allocation3 + $0x8a0] sm:$0xf] %v2780
  %2909 = vst [vmem:[#allocation3 + $0x8c4] sm:$0xf] %v2781
  %2910 = vst [vmem:[#allocation3 + $0x8e8] sm:$0xf] %v2782
  %v2911 = vld [vmem:[%s1246 + $0x1] sm:$0xff]
  %v2912 = vld [vmem:[%s1246 + $0x9] sm:$0xff]
  %v2913 = vld [vmem:[%s1246 + $0x19] sm:$0xff]
  %v2914 = vld [vmem:[%s1246 + $0x21] sm:$0xff]
  %v2915 = vld [vmem:[%s1246 + $0x31] sm:$0xff]
  %v2916 = vld [vmem:[%s1246 + $0x39] sm:$0xff]
  %v2917 = vld [vmem:[%s1246 + $0x49] sm:$0xff]
  %v2918 = vld [vmem:[%s1246 + $0x51] sm:$0xff]
  %v2919 = vld [vmem:[%s1246 + $0x61] sm:$0xff]
  %v2920 = vld [vmem:[%s1246 + $0x69] sm:$0xff]
  %v2921 = vld [vmem:[%s1246 + $0x79] sm:$0xff]
  %v2922 = vld [vmem:[%s1246 + $0x81] sm:$0xff]
  %v2923 = vld [vmem:[%s1246 + $0x91] sm:$0xff]
  %v2924 = vld [vmem:[%s1246 + $0x99] sm:$0xff]
  %v2925 = vld [vmem:[%s1246 + $0xa9] sm:$0xff]
  %v2926 = vld [vmem:[%s1246 + $0xb1] sm:$0xff]
  %v2927 = vld [vmem:[%s1246 + $0xc1] sm:$0xff]
  %v2928 = vld [vmem:[%s1246 + $0xc9] sm:$0xff]
  %v2929 = vld [vmem:[%s1246 + $0xd9] sm:$0xff]
  %v2930 = vld [vmem:[%s1246 + $0xe1] sm:$0xff]
  %v2931 = vld [vmem:[%s1246 + $0xf1] sm:$0xff]
  %v2932 = vld [vmem:[%s1246 + $0xf9] sm:$0xff]
  %v2933 = vld [vmem:[%s1246 + $0x109] sm:$0xff]
  %v2934 = vld [vmem:[%s1246 + $0x111] sm:$0xff]
  %v2935 = vld [vmem:[%s1246 + $0x121] sm:$0xff]
  %v2936 = vld [vmem:[%s1246 + $0x129] sm:$0xff]
  %v2937 = vld [vmem:[%s1246 + $0x139] sm:$0xff]
  %v2938 = vld [vmem:[%s1246 + $0x141] sm:$0xff]
  %v2939 = vld [vmem:[%s1246 + $0x151] sm:$0xff]
  %v2940 = vld [vmem:[%s1246 + $0x159] sm:$0xff]
  %v2941 = vld [vmem:[%s1246 + $0x169] sm:$0xff]
  %v2942 = vld [vmem:[%s1246 + $0x171] sm:$0xff]
  %v2943 = vld [vmem:[%s1246 + $0x1b1] sm:$0xff]
  %v2944 = vld [vmem:[%s1246 + $0x1b9] sm:$0xff]
  %v2945 = vld [vmem:[%s1246 + $0x1c9] sm:$0xff]
  %v2946 = vld [vmem:[%s1246 + $0x1d1] sm:$0xff]
  %v2947 = vld [vmem:[%s1246 + $0x1e1] sm:$0xff]
  %v2948 = vld [vmem:[%s1246 + $0x1e9] sm:$0xff]
  %v2949 = vld [vmem:[%s1246 + $0x1f9] sm:$0xff]
  %v2950 = vld [vmem:[%s1246 + $0x201] sm:$0xff]
  %v2951 = vld [vmem:[%s1246 + $0x211] sm:$0xff]
  %v2952 = vld [vmem:[%s1246 + $0x219] sm:$0xff]
  %v2953 = vld [vmem:[%s1246 + $0x229] sm:$0xff]
  %v2954 = vld [vmem:[%s1246 + $0x231] sm:$0xff]
  %v2955 = vld [vmem:[%s1246 + $0x241] sm:$0xff]
  %v2956 = vld [vmem:[%s1246 + $0x249] sm:$0xff]
  %v2957 = vld [vmem:[%s1246 + $0x259] sm:$0xff]
  %v2958 = vld [vmem:[%s1246 + $0x261] sm:$0xff]
  %v2959 = vld [vmem:[%s1246 + $0x271] sm:$0xff]
  %v2960 = vld [vmem:[%s1246 + $0x279] sm:$0xff]
  %v2961 = vld [vmem:[%s1246 + $0x289] sm:$0xff]
  %v2962 = vld [vmem:[%s1246 + $0x291] sm:$0xff]
  %v2963 = vld [vmem:[%s1246 + $0x2a1] sm:$0xff]
  %v2964 = vld [vmem:[%s1246 + $0x2a9] sm:$0xff]
  %v2965 = vld [vmem:[%s1246 + $0x2b9] sm:$0xff]
  %v2966 = vld [vmem:[%s1246 + $0x2c1] sm:$0xff]
  %v2967 = vld [vmem:[%s1246 + $0x2d1] sm:$0xff]
  %v2968 = vld [vmem:[%s1246 + $0x2d9] sm:$0xff]
  %v2969 = vld [vmem:[%s1246 + $0x2e9] sm:$0xff]
  %v2970 = vld [vmem:[%s1246 + $0x2f1] sm:$0xff]
  %v2971 = vld [vmem:[%s1246 + $0x301] sm:$0xff]
  %v2972 = vld [vmem:[%s1246 + $0x309] sm:$0xff]
  %v2973 = vld [vmem:[%s1246 + $0x319] sm:$0xff]
  %v2974 = vld [vmem:[%s1246 + $0x321] sm:$0xff]
  %v2975 = vpack.c.bf16 %v2912, %v2911
  %v2976 = vpack.c.bf16 %v2914, %v2913
  %v2977 = vpack.c.bf16 %v2916, %v2915
  %v2978 = vpack.c.bf16 %v2918, %v2917
  %v2979 = vpack.c.bf16 %v2920, %v2919
  %v2980 = vpack.c.bf16 %v2922, %v2921
  %v2981 = vpack.c.bf16 %v2924, %v2923
  %v2982 = vpack.c.bf16 %v2926, %v2925
  %v2983 = vpack.c.bf16 %v2928, %v2927
  %v2984 = vpack.c.bf16 %v2930, %v2929
  %v2985 = vpack.c.bf16 %v2932, %v2931
  %v2986 = vpack.c.bf16 %v2934, %v2933
  %v2987 = vpack.c.bf16 %v2936, %v2935
  %v2988 = vpack.c.bf16 %v2938, %v2937
  %v2989 = vpack.c.bf16 %v2940, %v2939
  %v2990 = vpack.c.bf16 %v2942, %v2941
  %v2991 = vpack.c.bf16 %v2944, %v2943
  %v2992 = vpack.c.bf16 %v2946, %v2945
  %v2993 = vpack.c.bf16 %v2948, %v2947
  %v2994 = vpack.c.bf16 %v2950, %v2949
  %v2995 = vpack.c.bf16 %v2952, %v2951
  %v2996 = vpack.c.bf16 %v2954, %v2953
  %v2997 = vpack.c.bf16 %v2956, %v2955
  %v2998 = vpack.c.bf16 %v2958, %v2957
  %v2999 = vpack.c.bf16 %v2960, %v2959
  %v3000 = vpack.c.bf16 %v2962, %v2961
  %v3001 = vpack.c.bf16 %v2964, %v2963
  %v3002 = vpack.c.bf16 %v2966, %v2965
  %v3003 = vpack.c.bf16 %v2968, %v2967
  %v3004 = vpack.c.bf16 %v2970, %v2969
  %v3005 = vpack.c.bf16 %v2972, %v2971
  %v3006 = vpack.c.bf16 %v2974, %v2973
  %v3039 = vunpack.c.l.b16 %v2975
  %v3040 = vunpack.c.h.b16 %v2975
  %v3041 = vunpack.c.l.b16 %v2976
  %v3042 = vunpack.c.h.b16 %v2976
  %v3043 = vunpack.c.l.b16 %v2977
  %v3044 = vunpack.c.h.b16 %v2977
  %v3045 = vunpack.c.l.b16 %v2978
  %v3046 = vunpack.c.h.b16 %v2978
  %v3047 = vunpack.c.l.b16 %v2979
  %v3048 = vunpack.c.h.b16 %v2979
  %v3049 = vunpack.c.l.b16 %v2980
  %v3050 = vunpack.c.h.b16 %v2980
  %v3051 = vunpack.c.l.b16 %v2981
  %v3052 = vunpack.c.h.b16 %v2981
  %v3053 = vunpack.c.l.b16 %v2982
  %v3054 = vunpack.c.h.b16 %v2982
  %v3055 = vunpack.c.l.b16 %v2983
  %v3056 = vunpack.c.h.b16 %v2983
  %v3057 = vunpack.c.l.b16 %v2984
  %v3058 = vunpack.c.h.b16 %v2984
  %v3059 = vunpack.c.l.b16 %v2985
  %v3060 = vunpack.c.h.b16 %v2985
  %v3061 = vunpack.c.l.b16 %v2986
  %v3062 = vunpack.c.h.b16 %v2986
  %v3063 = vunpack.c.l.b16 %v2987
  %v3064 = vunpack.c.h.b16 %v2987
  %v3065 = vunpack.c.l.b16 %v2988
  %v3066 = vunpack.c.h.b16 %v2988
  %v3067 = vunpack.c.l.b16 %v2989
  %v3068 = vunpack.c.h.b16 %v2989
  %v3069 = vunpack.c.l.b16 %v2990
  %v3070 = vunpack.c.h.b16 %v2990
  %v3071 = vunpack.c.l.b16 %v2991
  %v3072 = vunpack.c.h.b16 %v2991
  %v3073 = vunpack.c.l.b16 %v2992
  %v3074 = vunpack.c.h.b16 %v2992
  %v3075 = vunpack.c.l.b16 %v2993
  %v3076 = vunpack.c.h.b16 %v2993
  %v3077 = vunpack.c.l.b16 %v2994
  %v3078 = vunpack.c.h.b16 %v2994
  %v3079 = vunpack.c.l.b16 %v2995
  %v3080 = vunpack.c.h.b16 %v2995
  %v3081 = vunpack.c.l.b16 %v2996
  %v3082 = vunpack.c.h.b16 %v2996
  %v3083 = vunpack.c.l.b16 %v2997
  %v3084 = vunpack.c.h.b16 %v2997
  %v3085 = vunpack.c.l.b16 %v2998
  %v3086 = vunpack.c.h.b16 %v2998
  %v3087 = vunpack.c.l.b16 %v2999
  %v3088 = vunpack.c.h.b16 %v2999
  %v3089 = vunpack.c.l.b16 %v3000
  %v3090 = vunpack.c.h.b16 %v3000
  %v3091 = vunpack.c.l.b16 %v3001
  %v3092 = vunpack.c.h.b16 %v3001
  %v3093 = vunpack.c.l.b16 %v3002
  %v3094 = vunpack.c.h.b16 %v3002
  %v3095 = vunpack.c.l.b16 %v3003
  %v3096 = vunpack.c.h.b16 %v3003
  %v3097 = vunpack.c.l.b16 %v3004
  %v3098 = vunpack.c.h.b16 %v3004
  %v3099 = vunpack.c.l.b16 %v3005
  %v3100 = vunpack.c.h.b16 %v3005
  %v3101 = vunpack.c.l.b16 %v3006
  %v3102 = vunpack.c.h.b16 %v3006
  %v3103 = vpack.c.b16 %v3039, %v3039
  %v3104 = vpack.c.b16 %v3040, %v3040
  %v3105 = vpack.c.b16 %v3041, %v3041
  %v3106 = vpack.c.b16 %v3042, %v3042
  %v3107 = vpack.c.b16 %v3043, %v3043
  %v3108 = vpack.c.b16 %v3044, %v3044
  %v3109 = vpack.c.b16 %v3045, %v3045
  %v3110 = vpack.c.b16 %v3046, %v3046
  %v3111 = vpack.c.b16 %v3047, %v3047
  %v3112 = vpack.c.b16 %v3048, %v3048
  %v3113 = vpack.c.b16 %v3049, %v3049
  %v3114 = vpack.c.b16 %v3050, %v3050
  %v3115 = vpack.c.b16 %v3051, %v3051
  %v3116 = vpack.c.b16 %v3052, %v3052
  %v3117 = vpack.c.b16 %v3053, %v3053
  %v3118 = vpack.c.b16 %v3054, %v3054
  %v3119 = vpack.c.b16 %v3055, %v3055
  %v3120 = vpack.c.b16 %v3056, %v3056
  %v3121 = vpack.c.b16 %v3057, %v3057
  %v3122 = vpack.c.b16 %v3058, %v3058
  %v3123 = vpack.c.b16 %v3059, %v3059
  %v3124 = vpack.c.b16 %v3060, %v3060
  %v3125 = vpack.c.b16 %v3061, %v3061
  %v3126 = vpack.c.b16 %v3062, %v3062
  %v3127 = vpack.c.b16 %v3063, %v3063
  %v3128 = vpack.c.b16 %v3064, %v3064
  %v3129 = vpack.c.b16 %v3065, %v3065
  %v3130 = vpack.c.b16 %v3066, %v3066
  %v3131 = vpack.c.b16 %v3067, %v3067
  %v3132 = vpack.c.b16 %v3068, %v3068
  %v3133 = vpack.c.b16 %v3069, %v3069
  %v3134 = vpack.c.b16 %v3070, %v3070
  %v3135 = vpack.c.b16 %v3071, %v3071
  %v3136 = vpack.c.b16 %v3072, %v3072
  %v3137 = vpack.c.b16 %v3073, %v3073
  %v3138 = vpack.c.b16 %v3074, %v3074
  %v3139 = vpack.c.b16 %v3075, %v3075
  %v3140 = vpack.c.b16 %v3076, %v3076
  %v3141 = vpack.c.b16 %v3077, %v3077
  %v3142 = vpack.c.b16 %v3078, %v3078
  %v3143 = vpack.c.b16 %v3079, %v3079
  %v3144 = vpack.c.b16 %v3080, %v3080
  %v3145 = vpack.c.b16 %v3081, %v3081
  %v3146 = vpack.c.b16 %v3082, %v3082
  %v3147 = vpack.c.b16 %v3083, %v3083
  %v3148 = vpack.c.b16 %v3084, %v3084
  %v3149 = vpack.c.b16 %v3085, %v3085
  %v3150 = vpack.c.b16 %v3086, %v3086
  %v3151 = vpack.c.b16 %v3087, %v3087
  %v3152 = vpack.c.b16 %v3088, %v3088
  %v3153 = vpack.c.b16 %v3089, %v3089
  %v3154 = vpack.c.b16 %v3090, %v3090
  %v3155 = vpack.c.b16 %v3091, %v3091
  %v3156 = vpack.c.b16 %v3092, %v3092
  %v3157 = vpack.c.b16 %v3093, %v3093
  %v3158 = vpack.c.b16 %v3094, %v3094
  %v3159 = vpack.c.b16 %v3095, %v3095
  %v3160 = vpack.c.b16 %v3096, %v3096
  %v3161 = vpack.c.b16 %v3097, %v3097
  %v3162 = vpack.c.b16 %v3098, %v3098
  %v3163 = vpack.c.b16 %v3099, %v3099
  %v3164 = vpack.c.b16 %v3100, %v3100
  %v3165 = vpack.c.b16 %v3101, %v3101
  %v3166 = vpack.c.b16 %v3102, %v3102
  %3231 = vst [vmem:[#allocation3 + $0x10] sm:$0xf] %v3103
  %3232 = vst [vmem:[#allocation3 + $0x34] sm:$0xf] %v3104
  %3233 = vst [vmem:[#allocation3 + $0x58] sm:$0xf] %v3105
  %3234 = vst [vmem:[#allocation3 + $0x7c] sm:$0xf] %v3106
  %3235 = vst [vmem:[#allocation3 + $0xa0] sm:$0xf] %v3107
  %3236 = vst [vmem:[#allocation3 + $0xc4] sm:$0xf] %v3108
  %3237 = vst [vmem:[#allocation3 + $0xe8] sm:$0xf] %v3109
  %3238 = vst [vmem:[#allocation3 + $0x10c] sm:$0xf] %v3110
  %3239 = vst [vmem:[#allocation3 + $0x130] sm:$0xf] %v3111
  %3240 = vst [vmem:[#allocation3 + $0x154] sm:$0xf] %v3112
  %3241 = vst [vmem:[#allocation3 + $0x178] sm:$0xf] %v3113
  %3242 = vst [vmem:[#allocation3 + $0x19c] sm:$0xf] %v3114
  %3243 = vst [vmem:[#allocation3 + $0x1c0] sm:$0xf] %v3115
  %3244 = vst [vmem:[#allocation3 + $0x1e4] sm:$0xf] %v3116
  %3245 = vst [vmem:[#allocation3 + $0x208] sm:$0xf] %v3117
  %3246 = vst [vmem:[#allocation3 + $0x22c] sm:$0xf] %v3118
  %3247 = vst [vmem:[#allocation3 + $0x250] sm:$0xf] %v3119
  %3248 = vst [vmem:[#allocation3 + $0x274] sm:$0xf] %v3120
  %3249 = vst [vmem:[#allocation3 + $0x298] sm:$0xf] %v3121
  %3250 = vst [vmem:[#allocation3 + $0x2bc] sm:$0xf] %v3122
  %3251 = vst [vmem:[#allocation3 + $0x2e0] sm:$0xf] %v3123
  %3252 = vst [vmem:[#allocation3 + $0x304] sm:$0xf] %v3124
  %3253 = vst [vmem:[#allocation3 + $0x328] sm:$0xf] %v3125
  %3254 = vst [vmem:[#allocation3 + $0x34c] sm:$0xf] %v3126
  %3255 = vst [vmem:[#allocation3 + $0x370] sm:$0xf] %v3127
  %3256 = vst [vmem:[#allocation3 + $0x394] sm:$0xf] %v3128
  %3257 = vst [vmem:[#allocation3 + $0x3b8] sm:$0xf] %v3129
  %3258 = vst [vmem:[#allocation3 + $0x3dc] sm:$0xf] %v3130
  %3259 = vst [vmem:[#allocation3 + $0x400] sm:$0xf] %v3131
  %3260 = vst [vmem:[#allocation3 + $0x424] sm:$0xf] %v3132
  %3261 = vst [vmem:[#allocation3 + $0x448] sm:$0xf] %v3133
  %3262 = vst [vmem:[#allocation3 + $0x46c] sm:$0xf] %v3134
  %3263 = vst [vmem:[#allocation3 + $0x490] sm:$0xf] %v3135
  %3264 = vst [vmem:[#allocation3 + $0x4b4] sm:$0xf] %v3136
  %3265 = vst [vmem:[#allocation3 + $0x4d8] sm:$0xf] %v3137
  %3266 = vst [vmem:[#allocation3 + $0x4fc] sm:$0xf] %v3138
  %3267 = vst [vmem:[#allocation3 + $0x520] sm:$0xf] %v3139
  %3268 = vst [vmem:[#allocation3 + $0x544] sm:$0xf] %v3140
  %3269 = vst [vmem:[#allocation3 + $0x568] sm:$0xf] %v3141
  %3270 = vst [vmem:[#allocation3 + $0x58c] sm:$0xf] %v3142
  %3271 = vst [vmem:[#allocation3 + $0x5b0] sm:$0xf] %v3143
  %3272 = vst [vmem:[#allocation3 + $0x5d4] sm:$0xf] %v3144
  %3273 = vst [vmem:[#allocation3 + $0x5f8] sm:$0xf] %v3145
  %3274 = vst [vmem:[#allocation3 + $0x61c] sm:$0xf] %v3146
  %3275 = vst [vmem:[#allocation3 + $0x640] sm:$0xf] %v3147
  %3276 = vst [vmem:[#allocation3 + $0x664] sm:$0xf] %v3148
  %3277 = vst [vmem:[#allocation3 + $0x688] sm:$0xf] %v3149
  %3278 = vst [vmem:[#allocation3 + $0x6ac] sm:$0xf] %v3150
  %3279 = vst [vmem:[#allocation3 + $0x6d0] sm:$0xf] %v3151
  %3280 = vst [vmem:[#allocation3 + $0x6f4] sm:$0xf] %v3152
  %3281 = vst [vmem:[#allocation3 + $0x718] sm:$0xf] %v3153
  %3282 = vst [vmem:[#allocation3 + $0x73c] sm:$0xf] %v3154
  %3283 = vst [vmem:[#allocation3 + $0x760] sm:$0xf] %v3155
  %3284 = vst [vmem:[#allocation3 + $0x784] sm:$0xf] %v3156
  %3285 = vst [vmem:[#allocation3 + $0x7a8] sm:$0xf] %v3157
  %3286 = vst [vmem:[#allocation3 + $0x7cc] sm:$0xf] %v3158
  %3287 = vst [vmem:[#allocation3 + $0x7f0] sm:$0xf] %v3159
  %3288 = vst [vmem:[#allocation3 + $0x814] sm:$0xf] %v3160
  %3289 = vst [vmem:[#allocation3 + $0x838] sm:$0xf] %v3161
  %3290 = vst [vmem:[#allocation3 + $0x85c] sm:$0xf] %v3162
  %3291 = vst [vmem:[#allocation3 + $0x880] sm:$0xf] %v3163
  %3292 = vst [vmem:[#allocation3 + $0x8a4] sm:$0xf] %v3164
  %3293 = vst [vmem:[#allocation3 + $0x8c8] sm:$0xf] %v3165
  %3294 = vst [vmem:[#allocation3 + $0x8ec] sm:$0xf] %v3166
  %v3295 = vld [vmem:[%s1246 + $0x2] sm:$0xff]
  %v3296 = vld [vmem:[%s1246 + $0xa] sm:$0xff]
  %v3297 = vld [vmem:[%s1246 + $0x1a] sm:$0xff]
  %v3298 = vld [vmem:[%s1246 + $0x22] sm:$0xff]
  %v3299 = vld [vmem:[%s1246 + $0x32] sm:$0xff]
  %v3300 = vld [vmem:[%s1246 + $0x3a] sm:$0xff]
  %v3301 = vld [vmem:[%s1246 + $0x4a] sm:$0xff]
  %v3302 = vld [vmem:[%s1246 + $0x52] sm:$0xff]
  %v3303 = vld [vmem:[%s1246 + $0x62] sm:$0xff]
  %v3304 = vld [vmem:[%s1246 + $0x6a] sm:$0xff]
  %v3305 = vld [vmem:[%s1246 + $0x7a] sm:$0xff]
  %v3306 = vld [vmem:[%s1246 + $0x82] sm:$0xff]
  %v3307 = vld [vmem:[%s1246 + $0x92] sm:$0xff]
  %v3308 = vld [vmem:[%s1246 + $0x9a] sm:$0xff]
  %v3309 = vld [vmem:[%s1246 + $0xaa] sm:$0xff]
  %v3310 = vld [vmem:[%s1246 + $0xb2] sm:$0xff]
  %v3311 = vld [vmem:[%s1246 + $0xc2] sm:$0xff]
  %v3312 = vld [vmem:[%s1246 + $0xca] sm:$0xff]
  %v3313 = vld [vmem:[%s1246 + $0xda] sm:$0xff]
  %v3314 = vld [vmem:[%s1246 + $0xe2] sm:$0xff]
  %v3315 = vld [vmem:[%s1246 + $0xf2] sm:$0xff]
  %v3316 = vld [vmem:[%s1246 + $0xfa] sm:$0xff]
  %v3317 = vld [vmem:[%s1246 + $0x10a] sm:$0xff]
  %v3318 = vld [vmem:[%s1246 + $0x112] sm:$0xff]
  %v3319 = vld [vmem:[%s1246 + $0x122] sm:$0xff]
  %v3320 = vld [vmem:[%s1246 + $0x12a] sm:$0xff]
  %v3321 = vld [vmem:[%s1246 + $0x13a] sm:$0xff]
  %v3322 = vld [vmem:[%s1246 + $0x142] sm:$0xff]
  %v3323 = vld [vmem:[%s1246 + $0x152] sm:$0xff]
  %v3324 = vld [vmem:[%s1246 + $0x15a] sm:$0xff]
  %v3325 = vld [vmem:[%s1246 + $0x16a] sm:$0xff]
  %v3326 = vld [vmem:[%s1246 + $0x172] sm:$0xff]
  %v3327 = vld [vmem:[%s1246 + $0x1b2] sm:$0xff]
  %v3328 = vld [vmem:[%s1246 + $0x1ba] sm:$0xff]
  %v3329 = vld [vmem:[%s1246 + $0x1ca] sm:$0xff]
  %v3330 = vld [vmem:[%s1246 + $0x1d2] sm:$0xff]
  %v3331 = vld [vmem:[%s1246 + $0x1e2] sm:$0xff]
  %v3332 = vld [vmem:[%s1246 + $0x1ea] sm:$0xff]
  %v3333 = vld [vmem:[%s1246 + $0x1fa] sm:$0xff]
  %v3334 = vld [vmem:[%s1246 + $0x202] sm:$0xff]
  %v3335 = vld [vmem:[%s1246 + $0x212] sm:$0xff]
  %v3336 = vld [vmem:[%s1246 + $0x21a] sm:$0xff]
  %v3337 = vld [vmem:[%s1246 + $0x22a] sm:$0xff]
  %v3338 = vld [vmem:[%s1246 + $0x232] sm:$0xff]
  %v3339 = vld [vmem:[%s1246 + $0x242] sm:$0xff]
  %v3340 = vld [vmem:[%s1246 + $0x24a] sm:$0xff]
  %v3341 = vld [vmem:[%s1246 + $0x25a] sm:$0xff]
  %v3342 = vld [vmem:[%s1246 + $0x262] sm:$0xff]
  %v3343 = vld [vmem:[%s1246 + $0x272] sm:$0xff]
  %v3344 = vld [vmem:[%s1246 + $0x27a] sm:$0xff]
  %v3345 = vld [vmem:[%s1246 + $0x28a] sm:$0xff]
  %v3346 = vld [vmem:[%s1246 + $0x292] sm:$0xff]
  %v3347 = vld [vmem:[%s1246 + $0x2a2] sm:$0xff]
  %v3348 = vld [vmem:[%s1246 + $0x2aa] sm:$0xff]
  %v3349 = vld [vmem:[%s1246 + $0x2ba] sm:$0xff]
  %v3350 = vld [vmem:[%s1246 + $0x2c2] sm:$0xff]
  %v3351 = vld [vmem:[%s1246 + $0x2d2] sm:$0xff]
  %v3352 = vld [vmem:[%s1246 + $0x2da] sm:$0xff]
  %v3353 = vld [vmem:[%s1246 + $0x2ea] sm:$0xff]
  %v3354 = vld [vmem:[%s1246 + $0x2f2] sm:$0xff]
  %v3355 = vld [vmem:[%s1246 + $0x302] sm:$0xff]
  %v3356 = vld [vmem:[%s1246 + $0x30a] sm:$0xff]
  %v3357 = vld [vmem:[%s1246 + $0x31a] sm:$0xff]
  %v3358 = vld [vmem:[%s1246 + $0x322] sm:$0xff]
  %v3359 = vpack.c.bf16 %v3296, %v3295
  %v3360 = vpack.c.bf16 %v3298, %v3297
  %v3361 = vpack.c.bf16 %v3300, %v3299
  %v3362 = vpack.c.bf16 %v3302, %v3301
  %v3363 = vpack.c.bf16 %v3304, %v3303
  %v3364 = vpack.c.bf16 %v3306, %v3305
  %v3365 = vpack.c.bf16 %v3308, %v3307
  %v3366 = vpack.c.bf16 %v3310, %v3309
  %v3367 = vpack.c.bf16 %v3312, %v3311
  %v3368 = vpack.c.bf16 %v3314, %v3313
  %v3369 = vpack.c.bf16 %v3316, %v3315
  %v3370 = vpack.c.bf16 %v3318, %v3317
  %v3371 = vpack.c.bf16 %v3320, %v3319
  %v3372 = vpack.c.bf16 %v3322, %v3321
  %v3373 = vpack.c.bf16 %v3324, %v3323
  %v3374 = vpack.c.bf16 %v3326, %v3325
  %v3375 = vpack.c.bf16 %v3328, %v3327
  %v3376 = vpack.c.bf16 %v3330, %v3329
  %v3377 = vpack.c.bf16 %v3332, %v3331
  %v3378 = vpack.c.bf16 %v3334, %v3333
  %v3379 = vpack.c.bf16 %v3336, %v3335
  %v3380 = vpack.c.bf16 %v3338, %v3337
  %v3381 = vpack.c.bf16 %v3340, %v3339
  %v3382 = vpack.c.bf16 %v3342, %v3341
  %v3383 = vpack.c.bf16 %v3344, %v3343
  %v3384 = vpack.c.bf16 %v3346, %v3345
  %v3385 = vpack.c.bf16 %v3348, %v3347
  %v3386 = vpack.c.bf16 %v3350, %v3349
  %v3387 = vpack.c.bf16 %v3352, %v3351
  %v3388 = vpack.c.bf16 %v3354, %v3353
  %v3389 = vpack.c.bf16 %v3356, %v3355
  %v3390 = vpack.c.bf16 %v3358, %v3357
  %v3423 = vunpack.c.l.b16 %v3359
  %v3424 = vunpack.c.h.b16 %v3359
  %v3425 = vunpack.c.l.b16 %v3360
  %v3426 = vunpack.c.h.b16 %v3360
  %v3427 = vunpack.c.l.b16 %v3361
  %v3428 = vunpack.c.h.b16 %v3361
  %v3429 = vunpack.c.l.b16 %v3362
  %v3430 = vunpack.c.h.b16 %v3362
  %v3431 = vunpack.c.l.b16 %v3363
  %v3432 = vunpack.c.h.b16 %v3363
  %v3433 = vunpack.c.l.b16 %v3364
  %v3434 = vunpack.c.h.b16 %v3364
  %v3435 = vunpack.c.l.b16 %v3365
  %v3436 = vunpack.c.h.b16 %v3365
  %v3437 = vunpack.c.l.b16 %v3366
  %v3438 = vunpack.c.h.b16 %v3366
  %v3439 = vunpack.c.l.b16 %v3367
  %v3440 = vunpack.c.h.b16 %v3367
  %v3441 = vunpack.c.l.b16 %v3368
  %v3442 = vunpack.c.h.b16 %v3368
  %v3443 = vunpack.c.l.b16 %v3369
  %v3444 = vunpack.c.h.b16 %v3369
  %v3445 = vunpack.c.l.b16 %v3370
  %v3446 = vunpack.c.h.b16 %v3370
  %v3447 = vunpack.c.l.b16 %v3371
  %v3448 = vunpack.c.h.b16 %v3371
  %v3449 = vunpack.c.l.b16 %v3372
  %v3450 = vunpack.c.h.b16 %v3372
  %v3451 = vunpack.c.l.b16 %v3373
  %v3452 = vunpack.c.h.b16 %v3373
  %v3453 = vunpack.c.l.b16 %v3374
  %v3454 = vunpack.c.h.b16 %v3374
  %v3455 = vunpack.c.l.b16 %v3375
  %v3456 = vunpack.c.h.b16 %v3375
  %v3457 = vunpack.c.l.b16 %v3376
  %v3458 = vunpack.c.h.b16 %v3376
  %v3459 = vunpack.c.l.b16 %v3377
  %v3460 = vunpack.c.h.b16 %v3377
  %v3461 = vunpack.c.l.b16 %v3378
  %v3462 = vunpack.c.h.b16 %v3378
  %v3463 = vunpack.c.l.b16 %v3379
  %v3464 = vunpack.c.h.b16 %v3379
  %v3465 = vunpack.c.l.b16 %v3380
  %v3466 = vunpack.c.h.b16 %v3380
  %v3467 = vunpack.c.l.b16 %v3381
  %v3468 = vunpack.c.h.b16 %v3381
  %v3469 = vunpack.c.l.b16 %v3382
  %v3470 = vunpack.c.h.b16 %v3382
  %v3471 = vunpack.c.l.b16 %v3383
  %v3472 = vunpack.c.h.b16 %v3383
  %v3473 = vunpack.c.l.b16 %v3384
  %v3474 = vunpack.c.h.b16 %v3384
  %v3475 = vunpack.c.l.b16 %v3385
  %v3476 = vunpack.c.h.b16 %v3385
  %v3477 = vunpack.c.l.b16 %v3386
  %v3478 = vunpack.c.h.b16 %v3386
  %v3479 = vunpack.c.l.b16 %v3387
  %v3480 = vunpack.c.h.b16 %v3387
  %v3481 = vunpack.c.l.b16 %v3388
  %v3482 = vunpack.c.h.b16 %v3388
  %v3483 = vunpack.c.l.b16 %v3389
  %v3484 = vunpack.c.h.b16 %v3389
  %v3485 = vunpack.c.l.b16 %v3390
  %v3486 = vunpack.c.h.b16 %v3390
  %v3487 = vpack.c.b16 %v3423, %v3423
  %v3488 = vpack.c.b16 %v3424, %v3424
  %v3489 = vpack.c.b16 %v3425, %v3425
  %v3490 = vpack.c.b16 %v3426, %v3426
  %v3491 = vpack.c.b16 %v3427, %v3427
  %v3492 = vpack.c.b16 %v3428, %v3428
  %v3493 = vpack.c.b16 %v3429, %v3429
  %v3494 = vpack.c.b16 %v3430, %v3430
  %v3495 = vpack.c.b16 %v3431, %v3431
  %v3496 = vpack.c.b16 %v3432, %v3432
  %v3497 = vpack.c.b16 %v3433, %v3433
  %v3498 = vpack.c.b16 %v3434, %v3434
  %v3499 = vpack.c.b16 %v3435, %v3435
  %v3500 = vpack.c.b16 %v3436, %v3436
  %v3501 = vpack.c.b16 %v3437, %v3437
  %v3502 = vpack.c.b16 %v3438, %v3438
  %v3503 = vpack.c.b16 %v3439, %v3439
  %v3504 = vpack.c.b16 %v3440, %v3440
  %v3505 = vpack.c.b16 %v3441, %v3441
  %v3506 = vpack.c.b16 %v3442, %v3442
  %v3507 = vpack.c.b16 %v3443, %v3443
  %v3508 = vpack.c.b16 %v3444, %v3444
  %v3509 = vpack.c.b16 %v3445, %v3445
  %v3510 = vpack.c.b16 %v3446, %v3446
  %v3511 = vpack.c.b16 %v3447, %v3447
  %v3512 = vpack.c.b16 %v3448, %v3448
  %v3513 = vpack.c.b16 %v3449, %v3449
  %v3514 = vpack.c.b16 %v3450, %v3450
  %v3515 = vpack.c.b16 %v3451, %v3451
  %v3516 = vpack.c.b16 %v3452, %v3452
  %v3517 = vpack.c.b16 %v3453, %v3453
  %v3518 = vpack.c.b16 %v3454, %v3454
  %v3519 = vpack.c.b16 %v3455, %v3455
  %v3520 = vpack.c.b16 %v3456, %v3456
  %v3521 = vpack.c.b16 %v3457, %v3457
  %v3522 = vpack.c.b16 %v3458, %v3458
  %v3523 = vpack.c.b16 %v3459, %v3459
  %v3524 = vpack.c.b16 %v3460, %v3460
  %v3525 = vpack.c.b16 %v3461, %v3461
  %v3526 = vpack.c.b16 %v3462, %v3462
  %v3527 = vpack.c.b16 %v3463, %v3463
  %v3528 = vpack.c.b16 %v3464, %v3464
  %v3529 = vpack.c.b16 %v3465, %v3465
  %v3530 = vpack.c.b16 %v3466, %v3466
  %v3531 = vpack.c.b16 %v3467, %v3467
  %v3532 = vpack.c.b16 %v3468, %v3468
  %v3533 = vpack.c.b16 %v3469, %v3469
  %v3534 = vpack.c.b16 %v3470, %v3470
  %v3535 = vpack.c.b16 %v3471, %v3471
  %v3536 = vpack.c.b16 %v3472, %v3472
  %v3537 = vpack.c.b16 %v3473, %v3473
  %v3538 = vpack.c.b16 %v3474, %v3474
  %v3539 = vpack.c.b16 %v3475, %v3475
  %v3540 = vpack.c.b16 %v3476, %v3476
  %v3541 = vpack.c.b16 %v3477, %v3477
  %v3542 = vpack.c.b16 %v3478, %v3478
  %v3543 = vpack.c.b16 %v3479, %v3479
  %v3544 = vpack.c.b16 %v3480, %v3480
  %v3545 = vpack.c.b16 %v3481, %v3481
  %v3546 = vpack.c.b16 %v3482, %v3482
  %v3547 = vpack.c.b16 %v3483, %v3483
  %v3548 = vpack.c.b16 %v3484, %v3484
  %v3549 = vpack.c.b16 %v3485, %v3485
  %v3550 = vpack.c.b16 %v3486, %v3486
  %3615 = vst [vmem:[#allocation3 + $0x14] sm:$0xf] %v3487
  %3616 = vst [vmem:[#allocation3 + $0x38] sm:$0xf] %v3488
  %3617 = vst [vmem:[#allocation3 + $0x5c] sm:$0xf] %v3489
  %3618 = vst [vmem:[#allocation3 + $0x80] sm:$0xf] %v3490
  %3619 = vst [vmem:[#allocation3 + $0xa4] sm:$0xf] %v3491
  %3620 = vst [vmem:[#allocation3 + $0xc8] sm:$0xf] %v3492
  %3621 = vst [vmem:[#allocation3 + $0xec] sm:$0xf] %v3493
  %3622 = vst [vmem:[#allocation3 + $0x110] sm:$0xf] %v3494
  %3623 = vst [vmem:[#allocation3 + $0x134] sm:$0xf] %v3495
  %3624 = vst [vmem:[#allocation3 + $0x158] sm:$0xf] %v3496
  %3625 = vst [vmem:[#allocation3 + $0x17c] sm:$0xf] %v3497
  %3626 = vst [vmem:[#allocation3 + $0x1a0] sm:$0xf] %v3498
  %3627 = vst [vmem:[#allocation3 + $0x1c4] sm:$0xf] %v3499
  %3628 = vst [vmem:[#allocation3 + $0x1e8] sm:$0xf] %v3500
  %3629 = vst [vmem:[#allocation3 + $0x20c] sm:$0xf] %v3501
  %3630 = vst [vmem:[#allocation3 + $0x230] sm:$0xf] %v3502
  %3631 = vst [vmem:[#allocation3 + $0x254] sm:$0xf] %v3503
  %3632 = vst [vmem:[#allocation3 + $0x278] sm:$0xf] %v3504
  %3633 = vst [vmem:[#allocation3 + $0x29c] sm:$0xf] %v3505
  %3634 = vst [vmem:[#allocation3 + $0x2c0] sm:$0xf] %v3506
  %3635 = vst [vmem:[#allocation3 + $0x2e4] sm:$0xf] %v3507
  %3636 = vst [vmem:[#allocation3 + $0x308] sm:$0xf] %v3508
  %3637 = vst [vmem:[#allocation3 + $0x32c] sm:$0xf] %v3509
  %3638 = vst [vmem:[#allocation3 + $0x350] sm:$0xf] %v3510
  %3639 = vst [vmem:[#allocation3 + $0x374] sm:$0xf] %v3511
  %3640 = vst [vmem:[#allocation3 + $0x398] sm:$0xf] %v3512
  %3641 = vst [vmem:[#allocation3 + $0x3bc] sm:$0xf] %v3513
  %3642 = vst [vmem:[#allocation3 + $0x3e0] sm:$0xf] %v3514
  %3643 = vst [vmem:[#allocation3 + $0x404] sm:$0xf] %v3515
  %3644 = vst [vmem:[#allocation3 + $0x428] sm:$0xf] %v3516
  %3645 = vst [vmem:[#allocation3 + $0x44c] sm:$0xf] %v3517
  %3646 = vst [vmem:[#allocation3 + $0x470] sm:$0xf] %v3518
  %3647 = vst [vmem:[#allocation3 + $0x494] sm:$0xf] %v3519
  %3648 = vst [vmem:[#allocation3 + $0x4b8] sm:$0xf] %v3520
  %3649 = vst [vmem:[#allocation3 + $0x4dc] sm:$0xf] %v3521
  %3650 = vst [vmem:[#allocation3 + $0x500] sm:$0xf] %v3522
  %3651 = vst [vmem:[#allocation3 + $0x524] sm:$0xf] %v3523
  %3652 = vst [vmem:[#allocation3 + $0x548] sm:$0xf] %v3524
  %3653 = vst [vmem:[#allocation3 + $0x56c] sm:$0xf] %v3525
  %3654 = vst [vmem:[#allocation3 + $0x590] sm:$0xf] %v3526
  %3655 = vst [vmem:[#allocation3 + $0x5b4] sm:$0xf] %v3527
  %3656 = vst [vmem:[#allocation3 + $0x5d8] sm:$0xf] %v3528
  %3657 = vst [vmem:[#allocation3 + $0x5fc] sm:$0xf] %v3529
  %3658 = vst [vmem:[#allocation3 + $0x620] sm:$0xf] %v3530
  %3659 = vst [vmem:[#allocation3 + $0x644] sm:$0xf] %v3531
  %3660 = vst [vmem:[#allocation3 + $0x668] sm:$0xf] %v3532
  %3661 = vst [vmem:[#allocation3 + $0x68c] sm:$0xf] %v3533
  %3662 = vst [vmem:[#allocation3 + $0x6b0] sm:$0xf] %v3534
  %3663 = vst [vmem:[#allocation3 + $0x6d4] sm:$0xf] %v3535
  %3664 = vst [vmem:[#allocation3 + $0x6f8] sm:$0xf] %v3536
  %3665 = vst [vmem:[#allocation3 + $0x71c] sm:$0xf] %v3537
  %3666 = vst [vmem:[#allocation3 + $0x740] sm:$0xf] %v3538
  %3667 = vst [vmem:[#allocation3 + $0x764] sm:$0xf] %v3539
  %3668 = vst [vmem:[#allocation3 + $0x788] sm:$0xf] %v3540
  %3669 = vst [vmem:[#allocation3 + $0x7ac] sm:$0xf] %v3541
  %3670 = vst [vmem:[#allocation3 + $0x7d0] sm:$0xf] %v3542
  %3671 = vst [vmem:[#allocation3 + $0x7f4] sm:$0xf] %v3543
  %3672 = vst [vmem:[#allocation3 + $0x818] sm:$0xf] %v3544
  %3673 = vst [vmem:[#allocation3 + $0x83c] sm:$0xf] %v3545
  %3674 = vst [vmem:[#allocation3 + $0x860] sm:$0xf] %v3546
  %3675 = vst [vmem:[#allocation3 + $0x884] sm:$0xf] %v3547
  %3676 = vst [vmem:[#allocation3 + $0x8a8] sm:$0xf] %v3548
  %3677 = vst [vmem:[#allocation3 + $0x8cc] sm:$0xf] %v3549
  %3678 = vst [vmem:[#allocation3 + $0x8f0] sm:$0xf] %v3550
  %s3679 = scalar_lea.vmem [#allocation2], 48
  %v3680 = vld [vmem:[%s3679] sm:$0xff]
  %v3681 = vld [vmem:[%s3679 + $0x8] sm:$0xff]
  %v3682 = vld [vmem:[%s3679 + $0x18] sm:$0xff]
  %v3683 = vld [vmem:[%s3679 + $0x20] sm:$0xff]
  %v3684 = vld [vmem:[%s3679 + $0x30] sm:$0xff]
  %v3685 = vld [vmem:[%s3679 + $0x38] sm:$0xff]
  %v3686 = vld [vmem:[%s3679 + $0x48] sm:$0xff]
  %v3687 = vld [vmem:[%s3679 + $0x50] sm:$0xff]
  %v3688 = vld [vmem:[%s3679 + $0x60] sm:$0xff]
  %v3689 = vld [vmem:[%s3679 + $0x68] sm:$0xff]
  %v3690 = vld [vmem:[%s3679 + $0x78] sm:$0xff]
  %v3691 = vld [vmem:[%s3679 + $0x80] sm:$0xff]
  %v3692 = vld [vmem:[%s3679 + $0x90] sm:$0xff]
  %v3693 = vld [vmem:[%s3679 + $0x98] sm:$0xff]
  %v3694 = vld [vmem:[%s3679 + $0xa8] sm:$0xff]
  %v3695 = vld [vmem:[%s3679 + $0xb0] sm:$0xff]
  %v3696 = vld [vmem:[%s3679 + $0xc0] sm:$0xff]
  %v3697 = vld [vmem:[%s3679 + $0xc8] sm:$0xff]
  %v3698 = vld [vmem:[%s3679 + $0xd8] sm:$0xff]
  %v3699 = vld [vmem:[%s3679 + $0xe0] sm:$0xff]
  %v3700 = vld [vmem:[%s3679 + $0xf0] sm:$0xff]
  %v3701 = vld [vmem:[%s3679 + $0xf8] sm:$0xff]
  %v3702 = vld [vmem:[%s3679 + $0x108] sm:$0xff]
  %v3703 = vld [vmem:[%s3679 + $0x110] sm:$0xff]
  %v3704 = vld [vmem:[%s3679 + $0x120] sm:$0xff]
  %v3705 = vld [vmem:[%s3679 + $0x128] sm:$0xff]
  %v3706 = vld [vmem:[%s3679 + $0x138] sm:$0xff]
  %v3707 = vld [vmem:[%s3679 + $0x140] sm:$0xff]
  %v3708 = vld [vmem:[%s3679 + $0x150] sm:$0xff]
  %v3709 = vld [vmem:[%s3679 + $0x158] sm:$0xff]
  %v3710 = vld [vmem:[%s3679 + $0x168] sm:$0xff]
  %v3711 = vld [vmem:[%s3679 + $0x170] sm:$0xff]
  %v3712 = vld [vmem:[%s3679 + $0x1b0] sm:$0xff]
  %v3713 = vld [vmem:[%s3679 + $0x1b8] sm:$0xff]
  %v3714 = vld [vmem:[%s3679 + $0x1c8] sm:$0xff]
  %v3715 = vld [vmem:[%s3679 + $0x1d0] sm:$0xff]
  %v3716 = vld [vmem:[%s3679 + $0x1e0] sm:$0xff]
  %v3717 = vld [vmem:[%s3679 + $0x1e8] sm:$0xff]
  %v3718 = vld [vmem:[%s3679 + $0x1f8] sm:$0xff]
  %v3719 = vld [vmem:[%s3679 + $0x200] sm:$0xff]
  %v3720 = vld [vmem:[%s3679 + $0x210] sm:$0xff]
  %v3721 = vld [vmem:[%s3679 + $0x218] sm:$0xff]
  %v3722 = vld [vmem:[%s3679 + $0x228] sm:$0xff]
  %v3723 = vld [vmem:[%s3679 + $0x230] sm:$0xff]
  %v3724 = vld [vmem:[%s3679 + $0x240] sm:$0xff]
  %v3725 = vld [vmem:[%s3679 + $0x248] sm:$0xff]
  %v3726 = vld [vmem:[%s3679 + $0x258] sm:$0xff]
  %v3727 = vld [vmem:[%s3679 + $0x260] sm:$0xff]
  %v3728 = vld [vmem:[%s3679 + $0x270] sm:$0xff]
  %v3729 = vld [vmem:[%s3679 + $0x278] sm:$0xff]
  %v3730 = vld [vmem:[%s3679 + $0x288] sm:$0xff]
  %v3731 = vld [vmem:[%s3679 + $0x290] sm:$0xff]
  %v3732 = vld [vmem:[%s3679 + $0x2a0] sm:$0xff]
  %v3733 = vld [vmem:[%s3679 + $0x2a8] sm:$0xff]
  %v3734 = vld [vmem:[%s3679 + $0x2b8] sm:$0xff]
  %v3735 = vld [vmem:[%s3679 + $0x2c0] sm:$0xff]
  %v3736 = vld [vmem:[%s3679 + $0x2d0] sm:$0xff]
  %v3737 = vld [vmem:[%s3679 + $0x2d8] sm:$0xff]
  %v3738 = vld [vmem:[%s3679 + $0x2e8] sm:$0xff]
  %v3739 = vld [vmem:[%s3679 + $0x2f0] sm:$0xff]
  %v3740 = vld [vmem:[%s3679 + $0x300] sm:$0xff]
  %v3741 = vld [vmem:[%s3679 + $0x308] sm:$0xff]
  %v3742 = vld [vmem:[%s3679 + $0x318] sm:$0xff]
  %v3743 = vld [vmem:[%s3679 + $0x320] sm:$0xff]
  %v3744 = vpack.c.bf16 %v3681, %v3680
  %v3745 = vpack.c.bf16 %v3683, %v3682
  %v3746 = vpack.c.bf16 %v3685, %v3684
  %v3747 = vpack.c.bf16 %v3687, %v3686
  %v3748 = vpack.c.bf16 %v3689, %v3688
  %v3749 = vpack.c.bf16 %v3691, %v3690
  %v3750 = vpack.c.bf16 %v3693, %v3692
  %v3751 = vpack.c.bf16 %v3695, %v3694
  %v3752 = vpack.c.bf16 %v3697, %v3696
  %v3753 = vpack.c.bf16 %v3699, %v3698
  %v3754 = vpack.c.bf16 %v3701, %v3700
  %v3755 = vpack.c.bf16 %v3703, %v3702
  %v3756 = vpack.c.bf16 %v3705, %v3704
  %v3757 = vpack.c.bf16 %v3707, %v3706
  %v3758 = vpack.c.bf16 %v3709, %v3708
  %v3759 = vpack.c.bf16 %v3711, %v3710
  %v3760 = vpack.c.bf16 %v3713, %v3712
  %v3761 = vpack.c.bf16 %v3715, %v3714
  %v3762 = vpack.c.bf16 %v3717, %v3716
  %v3763 = vpack.c.bf16 %v3719, %v3718
  %v3764 = vpack.c.bf16 %v3721, %v3720
  %v3765 = vpack.c.bf16 %v3723, %v3722
  %v3766 = vpack.c.bf16 %v3725, %v3724
  %v3767 = vpack.c.bf16 %v3727, %v3726
  %v3768 = vpack.c.bf16 %v3729, %v3728
  %v3769 = vpack.c.bf16 %v3731, %v3730
  %v3770 = vpack.c.bf16 %v3733, %v3732
  %v3771 = vpack.c.bf16 %v3735, %v3734
  %v3772 = vpack.c.bf16 %v3737, %v3736
  %v3773 = vpack.c.bf16 %v3739, %v3738
  %v3774 = vpack.c.bf16 %v3741, %v3740
  %v3775 = vpack.c.bf16 %v3743, %v3742
  %v3808 = vunpack.c.l.b16 %v3744
  %v3809 = vunpack.c.h.b16 %v3744
  %v3810 = vunpack.c.l.b16 %v3745
  %v3811 = vunpack.c.h.b16 %v3745
  %v3812 = vunpack.c.l.b16 %v3746
  %v3813 = vunpack.c.h.b16 %v3746
  %v3814 = vunpack.c.l.b16 %v3747
  %v3815 = vunpack.c.h.b16 %v3747
  %v3816 = vunpack.c.l.b16 %v3748
  %v3817 = vunpack.c.h.b16 %v3748
  %v3818 = vunpack.c.l.b16 %v3749
  %v3819 = vunpack.c.h.b16 %v3749
  %v3820 = vunpack.c.l.b16 %v3750
  %v3821 = vunpack.c.h.b16 %v3750
  %v3822 = vunpack.c.l.b16 %v3751
  %v3823 = vunpack.c.h.b16 %v3751
  %v3824 = vunpack.c.l.b16 %v3752
  %v3825 = vunpack.c.h.b16 %v3752
  %v3826 = vunpack.c.l.b16 %v3753
  %v3827 = vunpack.c.h.b16 %v3753
  %v3828 = vunpack.c.l.b16 %v3754
  %v3829 = vunpack.c.h.b16 %v3754
  %v3830 = vunpack.c.l.b16 %v3755
  %v3831 = vunpack.c.h.b16 %v3755
  %v3832 = vunpack.c.l.b16 %v3756
  %v3833 = vunpack.c.h.b16 %v3756
  %v3834 = vunpack.c.l.b16 %v3757
  %v3835 = vunpack.c.h.b16 %v3757
  %v3836 = vunpack.c.l.b16 %v3758
  %v3837 = vunpack.c.h.b16 %v3758
  %v3838 = vunpack.c.l.b16 %v3759
  %v3839 = vunpack.c.h.b16 %v3759
  %v3840 = vunpack.c.l.b16 %v3760
  %v3841 = vunpack.c.h.b16 %v3760
  %v3842 = vunpack.c.l.b16 %v3761
  %v3843 = vunpack.c.h.b16 %v3761
  %v3844 = vunpack.c.l.b16 %v3762
  %v3845 = vunpack.c.h.b16 %v3762
  %v3846 = vunpack.c.l.b16 %v3763
  %v3847 = vunpack.c.h.b16 %v3763
  %v3848 = vunpack.c.l.b16 %v3764
  %v3849 = vunpack.c.h.b16 %v3764
  %v3850 = vunpack.c.l.b16 %v3765
  %v3851 = vunpack.c.h.b16 %v3765
  %v3852 = vunpack.c.l.b16 %v3766
  %v3853 = vunpack.c.h.b16 %v3766
  %v3854 = vunpack.c.l.b16 %v3767
  %v3855 = vunpack.c.h.b16 %v3767
  %v3856 = vunpack.c.l.b16 %v3768
  %v3857 = vunpack.c.h.b16 %v3768
  %v3858 = vunpack.c.l.b16 %v3769
  %v3859 = vunpack.c.h.b16 %v3769
  %v3860 = vunpack.c.l.b16 %v3770
  %v3861 = vunpack.c.h.b16 %v3770
  %v3862 = vunpack.c.l.b16 %v3771
  %v3863 = vunpack.c.h.b16 %v3771
  %v3864 = vunpack.c.l.b16 %v3772
  %v3865 = vunpack.c.h.b16 %v3772
  %v3866 = vunpack.c.l.b16 %v3773
  %v3867 = vunpack.c.h.b16 %v3773
  %v3868 = vunpack.c.l.b16 %v3774
  %v3869 = vunpack.c.h.b16 %v3774
  %v3870 = vunpack.c.l.b16 %v3775
  %v3871 = vunpack.c.h.b16 %v3775
  %v3872 = vpack.c.b16 %v3808, %v3808
  %v3873 = vpack.c.b16 %v3809, %v3809
  %v3874 = vpack.c.b16 %v3810, %v3810
  %v3875 = vpack.c.b16 %v3811, %v3811
  %v3876 = vpack.c.b16 %v3812, %v3812
  %v3877 = vpack.c.b16 %v3813, %v3813
  %v3878 = vpack.c.b16 %v3814, %v3814
  %v3879 = vpack.c.b16 %v3815, %v3815
  %v3880 = vpack.c.b16 %v3816, %v3816
  %v3881 = vpack.c.b16 %v3817, %v3817
  %v3882 = vpack.c.b16 %v3818, %v3818
  %v3883 = vpack.c.b16 %v3819, %v3819
  %v3884 = vpack.c.b16 %v3820, %v3820
  %v3885 = vpack.c.b16 %v3821, %v3821
  %v3886 = vpack.c.b16 %v3822, %v3822
  %v3887 = vpack.c.b16 %v3823, %v3823
  %v3888 = vpack.c.b16 %v3824, %v3824
  %v3889 = vpack.c.b16 %v3825, %v3825
  %v3890 = vpack.c.b16 %v3826, %v3826
  %v3891 = vpack.c.b16 %v3827, %v3827
  %v3892 = vpack.c.b16 %v3828, %v3828
  %v3893 = vpack.c.b16 %v3829, %v3829
  %v3894 = vpack.c.b16 %v3830, %v3830
  %v3895 = vpack.c.b16 %v3831, %v3831
  %v3896 = vpack.c.b16 %v3832, %v3832
  %v3897 = vpack.c.b16 %v3833, %v3833
  %v3898 = vpack.c.b16 %v3834, %v3834
  %v3899 = vpack.c.b16 %v3835, %v3835
  %v3900 = vpack.c.b16 %v3836, %v3836
  %v3901 = vpack.c.b16 %v3837, %v3837
  %v3902 = vpack.c.b16 %v3838, %v3838
  %v3903 = vpack.c.b16 %v3839, %v3839
  %v3904 = vpack.c.b16 %v3840, %v3840
  %v3905 = vpack.c.b16 %v3841, %v3841
  %v3906 = vpack.c.b16 %v3842, %v3842
  %v3907 = vpack.c.b16 %v3843, %v3843
  %v3908 = vpack.c.b16 %v3844, %v3844
  %v3909 = vpack.c.b16 %v3845, %v3845
  %v3910 = vpack.c.b16 %v3846, %v3846
  %v3911 = vpack.c.b16 %v3847, %v3847
  %v3912 = vpack.c.b16 %v3848, %v3848
  %v3913 = vpack.c.b16 %v3849, %v3849
  %v3914 = vpack.c.b16 %v3850, %v3850
  %v3915 = vpack.c.b16 %v3851, %v3851
  %v3916 = vpack.c.b16 %v3852, %v3852
  %v3917 = vpack.c.b16 %v3853, %v3853
  %v3918 = vpack.c.b16 %v3854, %v3854
  %v3919 = vpack.c.b16 %v3855, %v3855
  %v3920 = vpack.c.b16 %v3856, %v3856
  %v3921 = vpack.c.b16 %v3857, %v3857
  %v3922 = vpack.c.b16 %v3858, %v3858
  %v3923 = vpack.c.b16 %v3859, %v3859
  %v3924 = vpack.c.b16 %v3860, %v3860
  %v3925 = vpack.c.b16 %v3861, %v3861
  %v3926 = vpack.c.b16 %v3862, %v3862
  %v3927 = vpack.c.b16 %v3863, %v3863
  %v3928 = vpack.c.b16 %v3864, %v3864
  %v3929 = vpack.c.b16 %v3865, %v3865
  %v3930 = vpack.c.b16 %v3866, %v3866
  %v3931 = vpack.c.b16 %v3867, %v3867
  %v3932 = vpack.c.b16 %v3868, %v3868
  %v3933 = vpack.c.b16 %v3869, %v3869
  %v3934 = vpack.c.b16 %v3870, %v3870
  %v3935 = vpack.c.b16 %v3871, %v3871
  %4000 = vst [vmem:[#allocation3 + $0x18] sm:$0xf] %v3872
  %4001 = vst [vmem:[#allocation3 + $0x3c] sm:$0xf] %v3873
  %4002 = vst [vmem:[#allocation3 + $0x60] sm:$0xf] %v3874
  %4003 = vst [vmem:[#allocation3 + $0x84] sm:$0xf] %v3875
  %4004 = vst [vmem:[#allocation3 + $0xa8] sm:$0xf] %v3876
  %4005 = vst [vmem:[#allocation3 + $0xcc] sm:$0xf] %v3877
  %4006 = vst [vmem:[#allocation3 + $0xf0] sm:$0xf] %v3878
  %4007 = vst [vmem:[#allocation3 + $0x114] sm:$0xf] %v3879
  %4008 = vst [vmem:[#allocation3 + $0x138] sm:$0xf] %v3880
  %4009 = vst [vmem:[#allocation3 + $0x15c] sm:$0xf] %v3881
  %4010 = vst [vmem:[#allocation3 + $0x180] sm:$0xf] %v3882
  %4011 = vst [vmem:[#allocation3 + $0x1a4] sm:$0xf] %v3883
  %4012 = vst [vmem:[#allocation3 + $0x1c8] sm:$0xf] %v3884
  %4013 = vst [vmem:[#allocation3 + $0x1ec] sm:$0xf] %v3885
  %4014 = vst [vmem:[#allocation3 + $0x210] sm:$0xf] %v3886
  %4015 = vst [vmem:[#allocation3 + $0x234] sm:$0xf] %v3887
  %4016 = vst [vmem:[#allocation3 + $0x258] sm:$0xf] %v3888
  %4017 = vst [vmem:[#allocation3 + $0x27c] sm:$0xf] %v3889
  %4018 = vst [vmem:[#allocation3 + $0x2a0] sm:$0xf] %v3890
  %4019 = vst [vmem:[#allocation3 + $0x2c4] sm:$0xf] %v3891
  %4020 = vst [vmem:[#allocation3 + $0x2e8] sm:$0xf] %v3892
  %4021 = vst [vmem:[#allocation3 + $0x30c] sm:$0xf] %v3893
  %4022 = vst [vmem:[#allocation3 + $0x330] sm:$0xf] %v3894
  %4023 = vst [vmem:[#allocation3 + $0x354] sm:$0xf] %v3895
  %4024 = vst [vmem:[#allocation3 + $0x378] sm:$0xf] %v3896
  %4025 = vst [vmem:[#allocation3 + $0x39c] sm:$0xf] %v3897
  %4026 = vst [vmem:[#allocation3 + $0x3c0] sm:$0xf] %v3898
  %4027 = vst [vmem:[#allocation3 + $0x3e4] sm:$0xf] %v3899
  %4028 = vst [vmem:[#allocation3 + $0x408] sm:$0xf] %v3900
  %4029 = vst [vmem:[#allocation3 + $0x42c] sm:$0xf] %v3901
  %4030 = vst [vmem:[#allocation3 + $0x450] sm:$0xf] %v3902
  %4031 = vst [vmem:[#allocation3 + $0x474] sm:$0xf] %v3903
  %4032 = vst [vmem:[#allocation3 + $0x498] sm:$0xf] %v3904
  %4033 = vst [vmem:[#allocation3 + $0x4bc] sm:$0xf] %v3905
  %4034 = vst [vmem:[#allocation3 + $0x4e0] sm:$0xf] %v3906
  %4035 = vst [vmem:[#allocation3 + $0x504] sm:$0xf] %v3907
  %4036 = vst [vmem:[#allocation3 + $0x528] sm:$0xf] %v3908
  %4037 = vst [vmem:[#allocation3 + $0x54c] sm:$0xf] %v3909
  %4038 = vst [vmem:[#allocation3 + $0x570] sm:$0xf] %v3910
  %4039 = vst [vmem:[#allocation3 + $0x594] sm:$0xf] %v3911
  %4040 = vst [vmem:[#allocation3 + $0x5b8] sm:$0xf] %v3912
  %4041 = vst [vmem:[#allocation3 + $0x5dc] sm:$0xf] %v3913
  %4042 = vst [vmem:[#allocation3 + $0x600] sm:$0xf] %v3914
  %4043 = vst [vmem:[#allocation3 + $0x624] sm:$0xf] %v3915
  %4044 = vst [vmem:[#allocation3 + $0x648] sm:$0xf] %v3916
  %4045 = vst [vmem:[#allocation3 + $0x66c] sm:$0xf] %v3917
  %4046 = vst [vmem:[#allocation3 + $0x690] sm:$0xf] %v3918
  %4047 = vst [vmem:[#allocation3 + $0x6b4] sm:$0xf] %v3919
  %4048 = vst [vmem:[#allocation3 + $0x6d8] sm:$0xf] %v3920
  %4049 = vst [vmem:[#allocation3 + $0x6fc] sm:$0xf] %v3921
  %4050 = vst [vmem:[#allocation3 + $0x720] sm:$0xf] %v3922
  %4051 = vst [vmem:[#allocation3 + $0x744] sm:$0xf] %v3923
  %4052 = vst [vmem:[#allocation3 + $0x768] sm:$0xf] %v3924
  %4053 = vst [vmem:[#allocation3 + $0x78c] sm:$0xf] %v3925
  %4054 = vst [vmem:[#allocation3 + $0x7b0] sm:$0xf] %v3926
  %4055 = vst [vmem:[#allocation3 + $0x7d4] sm:$0xf] %v3927
  %4056 = vst [vmem:[#allocation3 + $0x7f8] sm:$0xf] %v3928
  %4057 = vst [vmem:[#allocation3 + $0x81c] sm:$0xf] %v3929
  %4058 = vst [vmem:[#allocation3 + $0x840] sm:$0xf] %v3930
  %4059 = vst [vmem:[#allocation3 + $0x864] sm:$0xf] %v3931
  %4060 = vst [vmem:[#allocation3 + $0x888] sm:$0xf] %v3932
  %4061 = vst [vmem:[#allocation3 + $0x8ac] sm:$0xf] %v3933
  %4062 = vst [vmem:[#allocation3 + $0x8d0] sm:$0xf] %v3934
  %4063 = vst [vmem:[#allocation3 + $0x8f4] sm:$0xf] %v3935
  %v4064 = vld [vmem:[%s3679 + $0x1] sm:$0xff]
  %v4065 = vld [vmem:[%s3679 + $0x9] sm:$0xff]
  %v4066 = vld [vmem:[%s3679 + $0x19] sm:$0xff]
  %v4067 = vld [vmem:[%s3679 + $0x21] sm:$0xff]
  %v4068 = vld [vmem:[%s3679 + $0x31] sm:$0xff]
  %v4069 = vld [vmem:[%s3679 + $0x39] sm:$0xff]
  %v4070 = vld [vmem:[%s3679 + $0x49] sm:$0xff]
  %v4071 = vld [vmem:[%s3679 + $0x51] sm:$0xff]
  %v4072 = vld [vmem:[%s3679 + $0x61] sm:$0xff]
  %v4073 = vld [vmem:[%s3679 + $0x69] sm:$0xff]
  %v4074 = vld [vmem:[%s3679 + $0x79] sm:$0xff]
  %v4075 = vld [vmem:[%s3679 + $0x81] sm:$0xff]
  %v4076 = vld [vmem:[%s3679 + $0x91] sm:$0xff]
  %v4077 = vld [vmem:[%s3679 + $0x99] sm:$0xff]
  %v4078 = vld [vmem:[%s3679 + $0xa9] sm:$0xff]
  %v4079 = vld [vmem:[%s3679 + $0xb1] sm:$0xff]
  %v4080 = vld [vmem:[%s3679 + $0xc1] sm:$0xff]
  %v4081 = vld [vmem:[%s3679 + $0xc9] sm:$0xff]
  %v4082 = vld [vmem:[%s3679 + $0xd9] sm:$0xff]
  %v4083 = vld [vmem:[%s3679 + $0xe1] sm:$0xff]
  %v4084 = vld [vmem:[%s3679 + $0xf1] sm:$0xff]
  %v4085 = vld [vmem:[%s3679 + $0xf9] sm:$0xff]
  %v4086 = vld [vmem:[%s3679 + $0x109] sm:$0xff]
  %v4087 = vld [vmem:[%s3679 + $0x111] sm:$0xff]
  %v4088 = vld [vmem:[%s3679 + $0x121] sm:$0xff]
  %v4089 = vld [vmem:[%s3679 + $0x129] sm:$0xff]
  %v4090 = vld [vmem:[%s3679 + $0x139] sm:$0xff]
  %v4091 = vld [vmem:[%s3679 + $0x141] sm:$0xff]
  %v4092 = vld [vmem:[%s3679 + $0x151] sm:$0xff]
  %v4093 = vld [vmem:[%s3679 + $0x159] sm:$0xff]
  %v4094 = vld [vmem:[%s3679 + $0x169] sm:$0xff]
  %v4095 = vld [vmem:[%s3679 + $0x171] sm:$0xff]
  %v4096 = vld [vmem:[%s3679 + $0x1b1] sm:$0xff]
  %v4097 = vld [vmem:[%s3679 + $0x1b9] sm:$0xff]
  %v4098 = vld [vmem:[%s3679 + $0x1c9] sm:$0xff]
  %v4099 = vld [vmem:[%s3679 + $0x1d1] sm:$0xff]
  %v4100 = vld [vmem:[%s3679 + $0x1e1] sm:$0xff]
  %v4101 = vld [vmem:[%s3679 + $0x1e9] sm:$0xff]
  %v4102 = vld [vmem:[%s3679 + $0x1f9] sm:$0xff]
  %v4103 = vld [vmem:[%s3679 + $0x201] sm:$0xff]
  %v4104 = vld [vmem:[%s3679 + $0x211] sm:$0xff]
  %v4105 = vld [vmem:[%s3679 + $0x219] sm:$0xff]
  %v4106 = vld [vmem:[%s3679 + $0x229] sm:$0xff]
  %v4107 = vld [vmem:[%s3679 + $0x231] sm:$0xff]
  %v4108 = vld [vmem:[%s3679 + $0x241] sm:$0xff]
  %v4109 = vld [vmem:[%s3679 + $0x249] sm:$0xff]
  %v4110 = vld [vmem:[%s3679 + $0x259] sm:$0xff]
  %v4111 = vld [vmem:[%s3679 + $0x261] sm:$0xff]
  %v4112 = vld [vmem:[%s3679 + $0x271] sm:$0xff]
  %v4113 = vld [vmem:[%s3679 + $0x279] sm:$0xff]
  %v4114 = vld [vmem:[%s3679 + $0x289] sm:$0xff]
  %v4115 = vld [vmem:[%s3679 + $0x291] sm:$0xff]
  %v4116 = vld [vmem:[%s3679 + $0x2a1] sm:$0xff]
  %v4117 = vld [vmem:[%s3679 + $0x2a9] sm:$0xff]
  %v4118 = vld [vmem:[%s3679 + $0x2b9] sm:$0xff]
  %v4119 = vld [vmem:[%s3679 + $0x2c1] sm:$0xff]
  %v4120 = vld [vmem:[%s3679 + $0x2d1] sm:$0xff]
  %v4121 = vld [vmem:[%s3679 + $0x2d9] sm:$0xff]
  %v4122 = vld [vmem:[%s3679 + $0x2e9] sm:$0xff]
  %v4123 = vld [vmem:[%s3679 + $0x2f1] sm:$0xff]
  %v4124 = vld [vmem:[%s3679 + $0x301] sm:$0xff]
  %v4125 = vld [vmem:[%s3679 + $0x309] sm:$0xff]
  %v4126 = vld [vmem:[%s3679 + $0x319] sm:$0xff]
  %v4127 = vld [vmem:[%s3679 + $0x321] sm:$0xff]
  %v4128 = vpack.c.bf16 %v4065, %v4064
  %v4129 = vpack.c.bf16 %v4067, %v4066
  %v4130 = vpack.c.bf16 %v4069, %v4068
  %v4131 = vpack.c.bf16 %v4071, %v4070
  %v4132 = vpack.c.bf16 %v4073, %v4072
  %v4133 = vpack.c.bf16 %v4075, %v4074
  %v4134 = vpack.c.bf16 %v4077, %v4076
  %v4135 = vpack.c.bf16 %v4079, %v4078
  %v4136 = vpack.c.bf16 %v4081, %v4080
  %v4137 = vpack.c.bf16 %v4083, %v4082
  %v4138 = vpack.c.bf16 %v4085, %v4084
  %v4139 = vpack.c.bf16 %v4087, %v4086
  %v4140 = vpack.c.bf16 %v4089, %v4088
  %v4141 = vpack.c.bf16 %v4091, %v4090
  %v4142 = vpack.c.bf16 %v4093, %v4092
  %v4143 = vpack.c.bf16 %v4095, %v4094
  %v4144 = vpack.c.bf16 %v4097, %v4096
  %v4145 = vpack.c.bf16 %v4099, %v4098
  %v4146 = vpack.c.bf16 %v4101, %v4100
  %v4147 = vpack.c.bf16 %v4103, %v4102
  %v4148 = vpack.c.bf16 %v4105, %v4104
  %v4149 = vpack.c.bf16 %v4107, %v4106
  %v4150 = vpack.c.bf16 %v4109, %v4108
  %v4151 = vpack.c.bf16 %v4111, %v4110
  %v4152 = vpack.c.bf16 %v4113, %v4112
  %v4153 = vpack.c.bf16 %v4115, %v4114
  %v4154 = vpack.c.bf16 %v4117, %v4116
  %v4155 = vpack.c.bf16 %v4119, %v4118
  %v4156 = vpack.c.bf16 %v4121, %v4120
  %v4157 = vpack.c.bf16 %v4123, %v4122
  %v4158 = vpack.c.bf16 %v4125, %v4124
  %v4159 = vpack.c.bf16 %v4127, %v4126
  %v4192 = vunpack.c.l.b16 %v4128
  %v4193 = vunpack.c.h.b16 %v4128
  %v4194 = vunpack.c.l.b16 %v4129
  %v4195 = vunpack.c.h.b16 %v4129
  %v4196 = vunpack.c.l.b16 %v4130
  %v4197 = vunpack.c.h.b16 %v4130
  %v4198 = vunpack.c.l.b16 %v4131
  %v4199 = vunpack.c.h.b16 %v4131
  %v4200 = vunpack.c.l.b16 %v4132
  %v4201 = vunpack.c.h.b16 %v4132
  %v4202 = vunpack.c.l.b16 %v4133
  %v4203 = vunpack.c.h.b16 %v4133
  %v4204 = vunpack.c.l.b16 %v4134
  %v4205 = vunpack.c.h.b16 %v4134
  %v4206 = vunpack.c.l.b16 %v4135
  %v4207 = vunpack.c.h.b16 %v4135
  %v4208 = vunpack.c.l.b16 %v4136
  %v4209 = vunpack.c.h.b16 %v4136
  %v4210 = vunpack.c.l.b16 %v4137
  %v4211 = vunpack.c.h.b16 %v4137
  %v4212 = vunpack.c.l.b16 %v4138
  %v4213 = vunpack.c.h.b16 %v4138
  %v4214 = vunpack.c.l.b16 %v4139
  %v4215 = vunpack.c.h.b16 %v4139
  %v4216 = vunpack.c.l.b16 %v4140
  %v4217 = vunpack.c.h.b16 %v4140
  %v4218 = vunpack.c.l.b16 %v4141
  %v4219 = vunpack.c.h.b16 %v4141
  %v4220 = vunpack.c.l.b16 %v4142
  %v4221 = vunpack.c.h.b16 %v4142
  %v4222 = vunpack.c.l.b16 %v4143
  %v4223 = vunpack.c.h.b16 %v4143
  %v4224 = vunpack.c.l.b16 %v4144
  %v4225 = vunpack.c.h.b16 %v4144
  %v4226 = vunpack.c.l.b16 %v4145
  %v4227 = vunpack.c.h.b16 %v4145
  %v4228 = vunpack.c.l.b16 %v4146
  %v4229 = vunpack.c.h.b16 %v4146
  %v4230 = vunpack.c.l.b16 %v4147
  %v4231 = vunpack.c.h.b16 %v4147
  %v4232 = vunpack.c.l.b16 %v4148
  %v4233 = vunpack.c.h.b16 %v4148
  %v4234 = vunpack.c.l.b16 %v4149
  %v4235 = vunpack.c.h.b16 %v4149
  %v4236 = vunpack.c.l.b16 %v4150
  %v4237 = vunpack.c.h.b16 %v4150
  %v4238 = vunpack.c.l.b16 %v4151
  %v4239 = vunpack.c.h.b16 %v4151
  %v4240 = vunpack.c.l.b16 %v4152
  %v4241 = vunpack.c.h.b16 %v4152
  %v4242 = vunpack.c.l.b16 %v4153
  %v4243 = vunpack.c.h.b16 %v4153
  %v4244 = vunpack.c.l.b16 %v4154
  %v4245 = vunpack.c.h.b16 %v4154
  %v4246 = vunpack.c.l.b16 %v4155
  %v4247 = vunpack.c.h.b16 %v4155
  %v4248 = vunpack.c.l.b16 %v4156
  %v4249 = vunpack.c.h.b16 %v4156
  %v4250 = vunpack.c.l.b16 %v4157
  %v4251 = vunpack.c.h.b16 %v4157
  %v4252 = vunpack.c.l.b16 %v4158
  %v4253 = vunpack.c.h.b16 %v4158
  %v4254 = vunpack.c.l.b16 %v4159
  %v4255 = vunpack.c.h.b16 %v4159
  %v4256 = vpack.c.b16 %v4192, %v4192
  %v4257 = vpack.c.b16 %v4193, %v4193
  %v4258 = vpack.c.b16 %v4194, %v4194
  %v4259 = vpack.c.b16 %v4195, %v4195
  %v4260 = vpack.c.b16 %v4196, %v4196
  %v4261 = vpack.c.b16 %v4197, %v4197
  %v4262 = vpack.c.b16 %v4198, %v4198
  %v4263 = vpack.c.b16 %v4199, %v4199
  %v4264 = vpack.c.b16 %v4200, %v4200
  %v4265 = vpack.c.b16 %v4201, %v4201
  %v4266 = vpack.c.b16 %v4202, %v4202
  %v4267 = vpack.c.b16 %v4203, %v4203
  %v4268 = vpack.c.b16 %v4204, %v4204
  %v4269 = vpack.c.b16 %v4205, %v4205
  %v4270 = vpack.c.b16 %v4206, %v4206
  %v4271 = vpack.c.b16 %v4207, %v4207
  %v4272 = vpack.c.b16 %v4208, %v4208
  %v4273 = vpack.c.b16 %v4209, %v4209
  %v4274 = vpack.c.b16 %v4210, %v4210
  %v4275 = vpack.c.b16 %v4211, %v4211
  %v4276 = vpack.c.b16 %v4212, %v4212
  %v4277 = vpack.c.b16 %v4213, %v4213
  %v4278 = vpack.c.b16 %v4214, %v4214
  %v4279 = vpack.c.b16 %v4215, %v4215
  %v4280 = vpack.c.b16 %v4216, %v4216
  %v4281 = vpack.c.b16 %v4217, %v4217
  %v4282 = vpack.c.b16 %v4218, %v4218
  %v4283 = vpack.c.b16 %v4219, %v4219
  %v4284 = vpack.c.b16 %v4220, %v4220
  %v4285 = vpack.c.b16 %v4221, %v4221
  %v4286 = vpack.c.b16 %v4222, %v4222
  %v4287 = vpack.c.b16 %v4223, %v4223
  %v4288 = vpack.c.b16 %v4224, %v4224
  %v4289 = vpack.c.b16 %v4225, %v4225
  %v4290 = vpack.c.b16 %v4226, %v4226
  %v4291 = vpack.c.b16 %v4227, %v4227
  %v4292 = vpack.c.b16 %v4228, %v4228
  %v4293 = vpack.c.b16 %v4229, %v4229
  %v4294 = vpack.c.b16 %v4230, %v4230
  %v4295 = vpack.c.b16 %v4231, %v4231
  %v4296 = vpack.c.b16 %v4232, %v4232
  %v4297 = vpack.c.b16 %v4233, %v4233
  %v4298 = vpack.c.b16 %v4234, %v4234
  %v4299 = vpack.c.b16 %v4235, %v4235
  %v4300 = vpack.c.b16 %v4236, %v4236
  %v4301 = vpack.c.b16 %v4237, %v4237
  %v4302 = vpack.c.b16 %v4238, %v4238
  %v4303 = vpack.c.b16 %v4239, %v4239
  %v4304 = vpack.c.b16 %v4240, %v4240
  %v4305 = vpack.c.b16 %v4241, %v4241
  %v4306 = vpack.c.b16 %v4242, %v4242
  %v4307 = vpack.c.b16 %v4243, %v4243
  %v4308 = vpack.c.b16 %v4244, %v4244
  %v4309 = vpack.c.b16 %v4245, %v4245
  %v4310 = vpack.c.b16 %v4246, %v4246
  %v4311 = vpack.c.b16 %v4247, %v4247
  %v4312 = vpack.c.b16 %v4248, %v4248
  %v4313 = vpack.c.b16 %v4249, %v4249
  %v4314 = vpack.c.b16 %v4250, %v4250
  %v4315 = vpack.c.b16 %v4251, %v4251
  %v4316 = vpack.c.b16 %v4252, %v4252
  %v4317 = vpack.c.b16 %v4253, %v4253
  %v4318 = vpack.c.b16 %v4254, %v4254
  %v4319 = vpack.c.b16 %v4255, %v4255
  %4384 = vst [vmem:[#allocation3 + $0x1c] sm:$0xf] %v4256
  %4385 = vst [vmem:[#allocation3 + $0x40] sm:$0xf] %v4257
  %4386 = vst [vmem:[#allocation3 + $0x64] sm:$0xf] %v4258
  %4387 = vst [vmem:[#allocation3 + $0x88] sm:$0xf] %v4259
  %4388 = vst [vmem:[#allocation3 + $0xac] sm:$0xf] %v4260
  %4389 = vst [vmem:[#allocation3 + $0xd0] sm:$0xf] %v4261
  %4390 = vst [vmem:[#allocation3 + $0xf4] sm:$0xf] %v4262
  %4391 = vst [vmem:[#allocation3 + $0x118] sm:$0xf] %v4263
  %4392 = vst [vmem:[#allocation3 + $0x13c] sm:$0xf] %v4264
  %4393 = vst [vmem:[#allocation3 + $0x160] sm:$0xf] %v4265
  %4394 = vst [vmem:[#allocation3 + $0x184] sm:$0xf] %v4266
  %4395 = vst [vmem:[#allocation3 + $0x1a8] sm:$0xf] %v4267
  %4396 = vst [vmem:[#allocation3 + $0x1cc] sm:$0xf] %v4268
  %4397 = vst [vmem:[#allocation3 + $0x1f0] sm:$0xf] %v4269
  %4398 = vst [vmem:[#allocation3 + $0x214] sm:$0xf] %v4270
  %4399 = vst [vmem:[#allocation3 + $0x238] sm:$0xf] %v4271
  %4400 = vst [vmem:[#allocation3 + $0x25c] sm:$0xf] %v4272
  %4401 = vst [vmem:[#allocation3 + $0x280] sm:$0xf] %v4273
  %4402 = vst [vmem:[#allocation3 + $0x2a4] sm:$0xf] %v4274
  %4403 = vst [vmem:[#allocation3 + $0x2c8] sm:$0xf] %v4275
  %4404 = vst [vmem:[#allocation3 + $0x2ec] sm:$0xf] %v4276
  %4405 = vst [vmem:[#allocation3 + $0x310] sm:$0xf] %v4277
  %4406 = vst [vmem:[#allocation3 + $0x334] sm:$0xf] %v4278
  %4407 = vst [vmem:[#allocation3 + $0x358] sm:$0xf] %v4279
  %4408 = vst [vmem:[#allocation3 + $0x37c] sm:$0xf] %v4280
  %4409 = vst [vmem:[#allocation3 + $0x3a0] sm:$0xf] %v4281
  %4410 = vst [vmem:[#allocation3 + $0x3c4] sm:$0xf] %v4282
  %4411 = vst [vmem:[#allocation3 + $0x3e8] sm:$0xf] %v4283
  %4412 = vst [vmem:[#allocation3 + $0x40c] sm:$0xf] %v4284
  %4413 = vst [vmem:[#allocation3 + $0x430] sm:$0xf] %v4285
  %4414 = vst [vmem:[#allocation3 + $0x454] sm:$0xf] %v4286
  %4415 = vst [vmem:[#allocation3 + $0x478] sm:$0xf] %v4287
  %4416 = vst [vmem:[#allocation3 + $0x49c] sm:$0xf] %v4288
  %4417 = vst [vmem:[#allocation3 + $0x4c0] sm:$0xf] %v4289
  %4418 = vst [vmem:[#allocation3 + $0x4e4] sm:$0xf] %v4290
  %4419 = vst [vmem:[#allocation3 + $0x508] sm:$0xf] %v4291
  %4420 = vst [vmem:[#allocation3 + $0x52c] sm:$0xf] %v4292
  %4421 = vst [vmem:[#allocation3 + $0x550] sm:$0xf] %v4293
  %4422 = vst [vmem:[#allocation3 + $0x574] sm:$0xf] %v4294
  %4423 = vst [vmem:[#allocation3 + $0x598] sm:$0xf] %v4295
  %4424 = vst [vmem:[#allocation3 + $0x5bc] sm:$0xf] %v4296
  %4425 = vst [vmem:[#allocation3 + $0x5e0] sm:$0xf] %v4297
  %4426 = vst [vmem:[#allocation3 + $0x604] sm:$0xf] %v4298
  %4427 = vst [vmem:[#allocation3 + $0x628] sm:$0xf] %v4299
  %4428 = vst [vmem:[#allocation3 + $0x64c] sm:$0xf] %v4300
  %4429 = vst [vmem:[#allocation3 + $0x670] sm:$0xf] %v4301
  %4430 = vst [vmem:[#allocation3 + $0x694] sm:$0xf] %v4302
  %4431 = vst [vmem:[#allocation3 + $0x6b8] sm:$0xf] %v4303
  %4432 = vst [vmem:[#allocation3 + $0x6dc] sm:$0xf] %v4304
  %4433 = vst [vmem:[#allocation3 + $0x700] sm:$0xf] %v4305
  %4434 = vst [vmem:[#allocation3 + $0x724] sm:$0xf] %v4306
  %4435 = vst [vmem:[#allocation3 + $0x748] sm:$0xf] %v4307
  %4436 = vst [vmem:[#allocation3 + $0x76c] sm:$0xf] %v4308
  %4437 = vst [vmem:[#allocation3 + $0x790] sm:$0xf] %v4309
  %4438 = vst [vmem:[#allocation3 + $0x7b4] sm:$0xf] %v4310
  %4439 = vst [vmem:[#allocation3 + $0x7d8] sm:$0xf] %v4311
  %4440 = vst [vmem:[#allocation3 + $0x7fc] sm:$0xf] %v4312
  %4441 = vst [vmem:[#allocation3 + $0x820] sm:$0xf] %v4313
  %4442 = vst [vmem:[#allocation3 + $0x844] sm:$0xf] %v4314
  %4443 = vst [vmem:[#allocation3 + $0x868] sm:$0xf] %v4315
  %4444 = vst [vmem:[#allocation3 + $0x88c] sm:$0xf] %v4316
  %4445 = vst [vmem:[#allocation3 + $0x8b0] sm:$0xf] %v4317
  %4446 = vst [vmem:[#allocation3 + $0x8d4] sm:$0xf] %v4318
  %4447 = vst [vmem:[#allocation3 + $0x8f8] sm:$0xf] %v4319
  %v4448 = vld [vmem:[%s3679 + $0x2] sm:$0xff]
  %v4449 = vld [vmem:[%s3679 + $0xa] sm:$0xff]
  %v4450 = vld [vmem:[%s3679 + $0x1a] sm:$0xff]
  %v4451 = vld [vmem:[%s3679 + $0x22] sm:$0xff]
  %v4452 = vld [vmem:[%s3679 + $0x32] sm:$0xff]
  %v4453 = vld [vmem:[%s3679 + $0x3a] sm:$0xff]
  %v4454 = vld [vmem:[%s3679 + $0x4a] sm:$0xff]
  %v4455 = vld [vmem:[%s3679 + $0x52] sm:$0xff]
  %v4456 = vld [vmem:[%s3679 + $0x62] sm:$0xff]
  %v4457 = vld [vmem:[%s3679 + $0x6a] sm:$0xff]
  %v4458 = vld [vmem:[%s3679 + $0x7a] sm:$0xff]
  %v4459 = vld [vmem:[%s3679 + $0x82] sm:$0xff]
  %v4460 = vld [vmem:[%s3679 + $0x92] sm:$0xff]
  %v4461 = vld [vmem:[%s3679 + $0x9a] sm:$0xff]
  %v4462 = vld [vmem:[%s3679 + $0xaa] sm:$0xff]
  %v4463 = vld [vmem:[%s3679 + $0xb2] sm:$0xff]
  %v4464 = vld [vmem:[%s3679 + $0xc2] sm:$0xff]
  %v4465 = vld [vmem:[%s3679 + $0xca] sm:$0xff]
  %v4466 = vld [vmem:[%s3679 + $0xda] sm:$0xff]
  %v4467 = vld [vmem:[%s3679 + $0xe2] sm:$0xff]
  %v4468 = vld [vmem:[%s3679 + $0xf2] sm:$0xff]
  %v4469 = vld [vmem:[%s3679 + $0xfa] sm:$0xff]
  %v4470 = vld [vmem:[%s3679 + $0x10a] sm:$0xff]
  %v4471 = vld [vmem:[%s3679 + $0x112] sm:$0xff]
  %v4472 = vld [vmem:[%s3679 + $0x122] sm:$0xff]
  %v4473 = vld [vmem:[%s3679 + $0x12a] sm:$0xff]
  %v4474 = vld [vmem:[%s3679 + $0x13a] sm:$0xff]
  %v4475 = vld [vmem:[%s3679 + $0x142] sm:$0xff]
  %v4476 = vld [vmem:[%s3679 + $0x152] sm:$0xff]
  %v4477 = vld [vmem:[%s3679 + $0x15a] sm:$0xff]
  %v4478 = vld [vmem:[%s3679 + $0x16a] sm:$0xff]
  %v4479 = vld [vmem:[%s3679 + $0x172] sm:$0xff]
  %v4480 = vld [vmem:[%s3679 + $0x1b2] sm:$0xff]
  %v4481 = vld [vmem:[%s3679 + $0x1ba] sm:$0xff]
  %v4482 = vld [vmem:[%s3679 + $0x1ca] sm:$0xff]
  %v4483 = vld [vmem:[%s3679 + $0x1d2] sm:$0xff]
  %v4484 = vld [vmem:[%s3679 + $0x1e2] sm:$0xff]
  %v4485 = vld [vmem:[%s3679 + $0x1ea] sm:$0xff]
  %v4486 = vld [vmem:[%s3679 + $0x1fa] sm:$0xff]
  %v4487 = vld [vmem:[%s3679 + $0x202] sm:$0xff]
  %v4488 = vld [vmem:[%s3679 + $0x212] sm:$0xff]
  %v4489 = vld [vmem:[%s3679 + $0x21a] sm:$0xff]
  %v4490 = vld [vmem:[%s3679 + $0x22a] sm:$0xff]
  %v4491 = vld [vmem:[%s3679 + $0x232] sm:$0xff]
  %v4492 = vld [vmem:[%s3679 + $0x242] sm:$0xff]
  %v4493 = vld [vmem:[%s3679 + $0x24a] sm:$0xff]
  %v4494 = vld [vmem:[%s3679 + $0x25a] sm:$0xff]
  %v4495 = vld [vmem:[%s3679 + $0x262] sm:$0xff]
  %v4496 = vld [vmem:[%s3679 + $0x272] sm:$0xff]
  %v4497 = vld [vmem:[%s3679 + $0x27a] sm:$0xff]
  %v4498 = vld [vmem:[%s3679 + $0x28a] sm:$0xff]
  %v4499 = vld [vmem:[%s3679 + $0x292] sm:$0xff]
  %v4500 = vld [vmem:[%s3679 + $0x2a2] sm:$0xff]
  %v4501 = vld [vmem:[%s3679 + $0x2aa] sm:$0xff]
  %v4502 = vld [vmem:[%s3679 + $0x2ba] sm:$0xff]
  %v4503 = vld [vmem:[%s3679 + $0x2c2] sm:$0xff]
  %v4504 = vld [vmem:[%s3679 + $0x2d2] sm:$0xff]
  %v4505 = vld [vmem:[%s3679 + $0x2da] sm:$0xff]
  %v4506 = vld [vmem:[%s3679 + $0x2ea] sm:$0xff]
  %v4507 = vld [vmem:[%s3679 + $0x2f2] sm:$0xff]
  %v4508 = vld [vmem:[%s3679 + $0x302] sm:$0xff]
  %v4509 = vld [vmem:[%s3679 + $0x30a] sm:$0xff]
  %v4510 = vld [vmem:[%s3679 + $0x31a] sm:$0xff]
  %v4511 = vld [vmem:[%s3679 + $0x322] sm:$0xff]
  %v4512 = vpack.c.bf16 %v4449, %v4448
  %v4513 = vpack.c.bf16 %v4451, %v4450
  %v4514 = vpack.c.bf16 %v4453, %v4452
  %v4515 = vpack.c.bf16 %v4455, %v4454
  %v4516 = vpack.c.bf16 %v4457, %v4456
  %v4517 = vpack.c.bf16 %v4459, %v4458
  %v4518 = vpack.c.bf16 %v4461, %v4460
  %v4519 = vpack.c.bf16 %v4463, %v4462
  %v4520 = vpack.c.bf16 %v4465, %v4464
  %v4521 = vpack.c.bf16 %v4467, %v4466
  %v4522 = vpack.c.bf16 %v4469, %v4468
  %v4523 = vpack.c.bf16 %v4471, %v4470
  %v4524 = vpack.c.bf16 %v4473, %v4472
  %v4525 = vpack.c.bf16 %v4475, %v4474
  %v4526 = vpack.c.bf16 %v4477, %v4476
  %v4527 = vpack.c.bf16 %v4479, %v4478
  %v4528 = vpack.c.bf16 %v4481, %v4480
  %v4529 = vpack.c.bf16 %v4483, %v4482
  %v4530 = vpack.c.bf16 %v4485, %v4484
  %v4531 = vpack.c.bf16 %v4487, %v4486
  %v4532 = vpack.c.bf16 %v4489, %v4488
  %v4533 = vpack.c.bf16 %v4491, %v4490
  %v4534 = vpack.c.bf16 %v4493, %v4492
  %v4535 = vpack.c.bf16 %v4495, %v4494
  %v4536 = vpack.c.bf16 %v4497, %v4496
  %v4537 = vpack.c.bf16 %v4499, %v4498
  %v4538 = vpack.c.bf16 %v4501, %v4500
  %v4539 = vpack.c.bf16 %v4503, %v4502
  %v4540 = vpack.c.bf16 %v4505, %v4504
  %v4541 = vpack.c.bf16 %v4507, %v4506
  %v4542 = vpack.c.bf16 %v4509, %v4508
  %v4543 = vpack.c.bf16 %v4511, %v4510
  %v4576 = vunpack.c.l.b16 %v4512
  %v4577 = vunpack.c.h.b16 %v4512
  %v4578 = vunpack.c.l.b16 %v4513
  %v4579 = vunpack.c.h.b16 %v4513
  %v4580 = vunpack.c.l.b16 %v4514
  %v4581 = vunpack.c.h.b16 %v4514
  %v4582 = vunpack.c.l.b16 %v4515
  %v4583 = vunpack.c.h.b16 %v4515
  %v4584 = vunpack.c.l.b16 %v4516
  %v4585 = vunpack.c.h.b16 %v4516
  %v4586 = vunpack.c.l.b16 %v4517
  %v4587 = vunpack.c.h.b16 %v4517
  %v4588 = vunpack.c.l.b16 %v4518
  %v4589 = vunpack.c.h.b16 %v4518
  %v4590 = vunpack.c.l.b16 %v4519
  %v4591 = vunpack.c.h.b16 %v4519
  %v4592 = vunpack.c.l.b16 %v4520
  %v4593 = vunpack.c.h.b16 %v4520
  %v4594 = vunpack.c.l.b16 %v4521
  %v4595 = vunpack.c.h.b16 %v4521
  %v4596 = vunpack.c.l.b16 %v4522
  %v4597 = vunpack.c.h.b16 %v4522
  %v4598 = vunpack.c.l.b16 %v4523
  %v4599 = vunpack.c.h.b16 %v4523
  %v4600 = vunpack.c.l.b16 %v4524
  %v4601 = vunpack.c.h.b16 %v4524
  %v4602 = vunpack.c.l.b16 %v4525
  %v4603 = vunpack.c.h.b16 %v4525
  %v4604 = vunpack.c.l.b16 %v4526
  %v4605 = vunpack.c.h.b16 %v4526
  %v4606 = vunpack.c.l.b16 %v4527
  %v4607 = vunpack.c.h.b16 %v4527
  %v4608 = vunpack.c.l.b16 %v4528
  %v4609 = vunpack.c.h.b16 %v4528
  %v4610 = vunpack.c.l.b16 %v4529
  %v4611 = vunpack.c.h.b16 %v4529
  %v4612 = vunpack.c.l.b16 %v4530
  %v4613 = vunpack.c.h.b16 %v4530
  %v4614 = vunpack.c.l.b16 %v4531
  %v4615 = vunpack.c.h.b16 %v4531
  %v4616 = vunpack.c.l.b16 %v4532
  %v4617 = vunpack.c.h.b16 %v4532
  %v4618 = vunpack.c.l.b16 %v4533
  %v4619 = vunpack.c.h.b16 %v4533
  %v4620 = vunpack.c.l.b16 %v4534
  %v4621 = vunpack.c.h.b16 %v4534
  %v4622 = vunpack.c.l.b16 %v4535
  %v4623 = vunpack.c.h.b16 %v4535
  %v4624 = vunpack.c.l.b16 %v4536
  %v4625 = vunpack.c.h.b16 %v4536
  %v4626 = vunpack.c.l.b16 %v4537
  %v4627 = vunpack.c.h.b16 %v4537
  %v4628 = vunpack.c.l.b16 %v4538
  %v4629 = vunpack.c.h.b16 %v4538
  %v4630 = vunpack.c.l.b16 %v4539
  %v4631 = vunpack.c.h.b16 %v4539
  %v4632 = vunpack.c.l.b16 %v4540
  %v4633 = vunpack.c.h.b16 %v4540
  %v4634 = vunpack.c.l.b16 %v4541
  %v4635 = vunpack.c.h.b16 %v4541
  %v4636 = vunpack.c.l.b16 %v4542
  %v4637 = vunpack.c.h.b16 %v4542
  %v4638 = vunpack.c.l.b16 %v4543
  %v4639 = vunpack.c.h.b16 %v4543
  %v4640 = vpack.c.b16 %v4576, %v4576
  %v4641 = vpack.c.b16 %v4577, %v4577
  %v4642 = vpack.c.b16 %v4578, %v4578
  %v4643 = vpack.c.b16 %v4579, %v4579
  %v4644 = vpack.c.b16 %v4580, %v4580
  %v4645 = vpack.c.b16 %v4581, %v4581
  %v4646 = vpack.c.b16 %v4582, %v4582
  %v4647 = vpack.c.b16 %v4583, %v4583
  %v4648 = vpack.c.b16 %v4584, %v4584
  %v4649 = vpack.c.b16 %v4585, %v4585
  %v4650 = vpack.c.b16 %v4586, %v4586
  %v4651 = vpack.c.b16 %v4587, %v4587
  %v4652 = vpack.c.b16 %v4588, %v4588
  %v4653 = vpack.c.b16 %v4589, %v4589
  %v4654 = vpack.c.b16 %v4590, %v4590
  %v4655 = vpack.c.b16 %v4591, %v4591
  %v4656 = vpack.c.b16 %v4592, %v4592
  %v4657 = vpack.c.b16 %v4593, %v4593
  %v4658 = vpack.c.b16 %v4594, %v4594
  %v4659 = vpack.c.b16 %v4595, %v4595
  %v4660 = vpack.c.b16 %v4596, %v4596
  %v4661 = vpack.c.b16 %v4597, %v4597
  %v4662 = vpack.c.b16 %v4598, %v4598
  %v4663 = vpack.c.b16 %v4599, %v4599
  %v4664 = vpack.c.b16 %v4600, %v4600
  %v4665 = vpack.c.b16 %v4601, %v4601
  %v4666 = vpack.c.b16 %v4602, %v4602
  %v4667 = vpack.c.b16 %v4603, %v4603
  %v4668 = vpack.c.b16 %v4604, %v4604
  %v4669 = vpack.c.b16 %v4605, %v4605
  %v4670 = vpack.c.b16 %v4606, %v4606
  %v4671 = vpack.c.b16 %v4607, %v4607
  %v4672 = vpack.c.b16 %v4608, %v4608
  %v4673 = vpack.c.b16 %v4609, %v4609
  %v4674 = vpack.c.b16 %v4610, %v4610
  %v4675 = vpack.c.b16 %v4611, %v4611
  %v4676 = vpack.c.b16 %v4612, %v4612
  %v4677 = vpack.c.b16 %v4613, %v4613
  %v4678 = vpack.c.b16 %v4614, %v4614
  %v4679 = vpack.c.b16 %v4615, %v4615
  %v4680 = vpack.c.b16 %v4616, %v4616
  %v4681 = vpack.c.b16 %v4617, %v4617
  %v4682 = vpack.c.b16 %v4618, %v4618
  %v4683 = vpack.c.b16 %v4619, %v4619
  %v4684 = vpack.c.b16 %v4620, %v4620
  %v4685 = vpack.c.b16 %v4621, %v4621
  %v4686 = vpack.c.b16 %v4622, %v4622
  %v4687 = vpack.c.b16 %v4623, %v4623
  %v4688 = vpack.c.b16 %v4624, %v4624
  %v4689 = vpack.c.b16 %v4625, %v4625
  %v4690 = vpack.c.b16 %v4626, %v4626
  %v4691 = vpack.c.b16 %v4627, %v4627
  %v4692 = vpack.c.b16 %v4628, %v4628
  %v4693 = vpack.c.b16 %v4629, %v4629
  %v4694 = vpack.c.b16 %v4630, %v4630
  %v4695 = vpack.c.b16 %v4631, %v4631
  %v4696 = vpack.c.b16 %v4632, %v4632
  %v4697 = vpack.c.b16 %v4633, %v4633
  %v4698 = vpack.c.b16 %v4634, %v4634
  %v4699 = vpack.c.b16 %v4635, %v4635
  %v4700 = vpack.c.b16 %v4636, %v4636
  %v4701 = vpack.c.b16 %v4637, %v4637
  %v4702 = vpack.c.b16 %v4638, %v4638
  %v4703 = vpack.c.b16 %v4639, %v4639
  %4768 = vst [vmem:[#allocation3 + $0x20] sm:$0xf] %v4640
  %4769 = vst [vmem:[#allocation3 + $0x44] sm:$0xf] %v4641
  %4770 = vst [vmem:[#allocation3 + $0x68] sm:$0xf] %v4642
  %4771 = vst [vmem:[#allocation3 + $0x8c] sm:$0xf] %v4643
  %4772 = vst [vmem:[#allocation3 + $0xb0] sm:$0xf] %v4644
  %4773 = vst [vmem:[#allocation3 + $0xd4] sm:$0xf] %v4645
  %4774 = vst [vmem:[#allocation3 + $0xf8] sm:$0xf] %v4646
  %4775 = vst [vmem:[#allocation3 + $0x11c] sm:$0xf] %v4647
  %4776 = vst [vmem:[#allocation3 + $0x140] sm:$0xf] %v4648
  %4777 = vst [vmem:[#allocation3 + $0x164] sm:$0xf] %v4649
  %4778 = vst [vmem:[#allocation3 + $0x188] sm:$0xf] %v4650
  %4779 = vst [vmem:[#allocation3 + $0x1ac] sm:$0xf] %v4651
  %4780 = vst [vmem:[#allocation3 + $0x1d0] sm:$0xf] %v4652
  %4781 = vst [vmem:[#allocation3 + $0x1f4] sm:$0xf] %v4653
  %4782 = vst [vmem:[#allocation3 + $0x218] sm:$0xf] %v4654
  %4783 = vst [vmem:[#allocation3 + $0x23c] sm:$0xf] %v4655
  %4784 = vst [vmem:[#allocation3 + $0x260] sm:$0xf] %v4656
  %4785 = vst [vmem:[#allocation3 + $0x284] sm:$0xf] %v4657
  %4786 = vst [vmem:[#allocation3 + $0x2a8] sm:$0xf] %v4658
  %4787 = vst [vmem:[#allocation3 + $0x2cc] sm:$0xf] %v4659
  %4788 = vst [vmem:[#allocation3 + $0x2f0] sm:$0xf] %v4660
  %4789 = vst [vmem:[#allocation3 + $0x314] sm:$0xf] %v4661
  %4790 = vst [vmem:[#allocation3 + $0x338] sm:$0xf] %v4662
  %4791 = vst [vmem:[#allocation3 + $0x35c] sm:$0xf] %v4663
  %4792 = vst [vmem:[#allocation3 + $0x380] sm:$0xf] %v4664
  %4793 = vst [vmem:[#allocation3 + $0x3a4] sm:$0xf] %v4665
  %4794 = vst [vmem:[#allocation3 + $0x3c8] sm:$0xf] %v4666
  %4795 = vst [vmem:[#allocation3 + $0x3ec] sm:$0xf] %v4667
  %4796 = vst [vmem:[#allocation3 + $0x410] sm:$0xf] %v4668
  %4797 = vst [vmem:[#allocation3 + $0x434] sm:$0xf] %v4669
  %4798 = vst [vmem:[#allocation3 + $0x458] sm:$0xf] %v4670
  %4799 = vst [vmem:[#allocation3 + $0x47c] sm:$0xf] %v4671
  %4800 = vst [vmem:[#allocation3 + $0x4a0] sm:$0xf] %v4672
  %4801 = vst [vmem:[#allocation3 + $0x4c4] sm:$0xf] %v4673
  %4802 = vst [vmem:[#allocation3 + $0x4e8] sm:$0xf] %v4674
  %4803 = vst [vmem:[#allocation3 + $0x50c] sm:$0xf] %v4675
  %4804 = vst [vmem:[#allocation3 + $0x530] sm:$0xf] %v4676
  %4805 = vst [vmem:[#allocation3 + $0x554] sm:$0xf] %v4677
  %4806 = vst [vmem:[#allocation3 + $0x578] sm:$0xf] %v4678
  %4807 = vst [vmem:[#allocation3 + $0x59c] sm:$0xf] %v4679
  %4808 = vst [vmem:[#allocation3 + $0x5c0] sm:$0xf] %v4680
  %4809 = vst [vmem:[#allocation3 + $0x5e4] sm:$0xf] %v4681
  %4810 = vst [vmem:[#allocation3 + $0x608] sm:$0xf] %v4682
  %4811 = vst [vmem:[#allocation3 + $0x62c] sm:$0xf] %v4683
  %4812 = vst [vmem:[#allocation3 + $0x650] sm:$0xf] %v4684
  %4813 = vst [vmem:[#allocation3 + $0x674] sm:$0xf] %v4685
  %4814 = vst [vmem:[#allocation3 + $0x698] sm:$0xf] %v4686
  %4815 = vst [vmem:[#allocation3 + $0x6bc] sm:$0xf] %v4687
  %4816 = vst [vmem:[#allocation3 + $0x6e0] sm:$0xf] %v4688
  %4817 = vst [vmem:[#allocation3 + $0x704] sm:$0xf] %v4689
  %4818 = vst [vmem:[#allocation3 + $0x728] sm:$0xf] %v4690
  %4819 = vst [vmem:[#allocation3 + $0x74c] sm:$0xf] %v4691
  %4820 = vst [vmem:[#allocation3 + $0x770] sm:$0xf] %v4692
  %4821 = vst [vmem:[#allocation3 + $0x794] sm:$0xf] %v4693
  %4822 = vst [vmem:[#allocation3 + $0x7b8] sm:$0xf] %v4694
  %4823 = vst [vmem:[#allocation3 + $0x7dc] sm:$0xf] %v4695
  %4824 = vst [vmem:[#allocation3 + $0x800] sm:$0xf] %v4696
  %4825 = vst [vmem:[#allocation3 + $0x824] sm:$0xf] %v4697
  %4826 = vst [vmem:[#allocation3 + $0x848] sm:$0xf] %v4698
  %4827 = vst [vmem:[#allocation3 + $0x86c] sm:$0xf] %v4699
  %4828 = vst [vmem:[#allocation3 + $0x890] sm:$0xf] %v4700
  %4829 = vst [vmem:[#allocation3 + $0x8b4] sm:$0xf] %v4701
  %4830 = vst [vmem:[#allocation3 + $0x8d8] sm:$0xf] %v4702
  %4831 = vst [vmem:[#allocation3 + $0x8fc] sm:$0xf] %v4703
  %v4832 = vld [vmem:[#allocation3] sm:$0xff]
  %v4833 = vld [vmem:[#allocation3 + $0x8] sm:$0xff]
  %v4834 = vld [vmem:[#allocation3 + $0x10] sm:$0xff]
  %v4835 = vld [vmem:[#allocation3 + $0x18] sm:$0xff]
  %v4836 = vld [vmem:[#allocation3 + $0x20] sm:$0xf]
  %v4837 = vld [vmem:[#allocation3 + $0x24] sm:$0xff]
  %v4838 = vld [vmem:[#allocation3 + $0x2c] sm:$0xff]
  %v4839 = vld [vmem:[#allocation3 + $0x34] sm:$0xff]
  %v4840 = vld [vmem:[#allocation3 + $0x3c] sm:$0xff]
  %v4841 = vld [vmem:[#allocation3 + $0x44] sm:$0xf]
  %v4842 = vld [vmem:[#allocation3 + $0x48] sm:$0xff]
  %v4843 = vld [vmem:[#allocation3 + $0x50] sm:$0xff]
  %v4844 = vld [vmem:[#allocation3 + $0x58] sm:$0xff]
  %v4845 = vld [vmem:[#allocation3 + $0x60] sm:$0xff]
  %v4846 = vld [vmem:[#allocation3 + $0x68] sm:$0xf]
  %v4847 = vld [vmem:[#allocation3 + $0x6c] sm:$0xff]
  %v4848 = vld [vmem:[#allocation3 + $0x74] sm:$0xff]
  %v4849 = vld [vmem:[#allocation3 + $0x7c] sm:$0xff]
  %v4850 = vld [vmem:[#allocation3 + $0x84] sm:$0xff]
  %v4851 = vld [vmem:[#allocation3 + $0x8c] sm:$0xf]
  %v4852 = vld [vmem:[#allocation3 + $0x90] sm:$0xff]
  %v4853 = vld [vmem:[#allocation3 + $0x98] sm:$0xff]
  %v4854 = vld [vmem:[#allocation3 + $0xa0] sm:$0xff]
  %v4855 = vld [vmem:[#allocation3 + $0xa8] sm:$0xff]
  %v4856 = vld [vmem:[#allocation3 + $0xb0] sm:$0xf]
  %v4857 = vld [vmem:[#allocation3 + $0xb4] sm:$0xff]
  %v4858 = vld [vmem:[#allocation3 + $0xbc] sm:$0xff]
  %v4859 = vld [vmem:[#allocation3 + $0xc4] sm:$0xff]
  %v4860 = vld [vmem:[#allocation3 + $0xcc] sm:$0xff]
  %v4861 = vld [vmem:[#allocation3 + $0xd4] sm:$0xf]
  %v4862 = vld [vmem:[#allocation3 + $0xd8] sm:$0xff]
  %v4863 = vld [vmem:[#allocation3 + $0xe0] sm:$0xff]
  %v4864 = vld [vmem:[#allocation3 + $0xe8] sm:$0xff]
  %v4865 = vld [vmem:[#allocation3 + $0xf0] sm:$0xff]
  %v4866 = vld [vmem:[#allocation3 + $0xf8] sm:$0xf]
  %v4867 = vld [vmem:[#allocation3 + $0xfc] sm:$0xff]
  %v4868 = vld [vmem:[#allocation3 + $0x104] sm:$0xff]
  %v4869 = vld [vmem:[#allocation3 + $0x10c] sm:$0xff]
  %v4870 = vld [vmem:[#allocation3 + $0x114] sm:$0xff]
  %v4871 = vld [vmem:[#allocation3 + $0x11c] sm:$0xf]
  %v4872 = vld [vmem:[#allocation3 + $0x120] sm:$0xff]
  %v4873 = vld [vmem:[#allocation3 + $0x128] sm:$0xff]
  %v4874 = vld [vmem:[#allocation3 + $0x130] sm:$0xff]
  %v4875 = vld [vmem:[#allocation3 + $0x138] sm:$0xff]
  %v4876 = vld [vmem:[#allocation3 + $0x140] sm:$0xf]
  %v4877 = vld [vmem:[#allocation3 + $0x144] sm:$0xff]
  %v4878 = vld [vmem:[#allocation3 + $0x14c] sm:$0xff]
  %v4879 = vld [vmem:[#allocation3 + $0x154] sm:$0xff]
  %v4880 = vld [vmem:[#allocation3 + $0x15c] sm:$0xff]
  %v4881 = vld [vmem:[#allocation3 + $0x164] sm:$0xf]
  %v4882 = vld [vmem:[#allocation3 + $0x168] sm:$0xff]
  %v4883 = vld [vmem:[#allocation3 + $0x170] sm:$0xff]
  %v4884 = vld [vmem:[#allocation3 + $0x178] sm:$0xff]
  %v4885 = vld [vmem:[#allocation3 + $0x180] sm:$0xff]
  %v4886 = vld [vmem:[#allocation3 + $0x188] sm:$0xf]
  %v4887 = vld [vmem:[#allocation3 + $0x18c] sm:$0xff]
  %v4888 = vld [vmem:[#allocation3 + $0x194] sm:$0xff]
  %v4889 = vld [vmem:[#allocation3 + $0x19c] sm:$0xff]
  %v4890 = vld [vmem:[#allocation3 + $0x1a4] sm:$0xff]
  %v4891 = vld [vmem:[#allocation3 + $0x1ac] sm:$0xf]
  %v4892 = vld [vmem:[#allocation3 + $0x1b0] sm:$0xff]
  %v4893 = vld [vmem:[#allocation3 + $0x1b8] sm:$0xff]
  %v4894 = vld [vmem:[#allocation3 + $0x1c0] sm:$0xff]
  %v4895 = vld [vmem:[#allocation3 + $0x1c8] sm:$0xff]
  %v4896 = vld [vmem:[#allocation3 + $0x1d0] sm:$0xf]
  %v4897 = vld [vmem:[#allocation3 + $0x1d4] sm:$0xff]
  %v4898 = vld [vmem:[#allocation3 + $0x1dc] sm:$0xff]
  %v4899 = vld [vmem:[#allocation3 + $0x1e4] sm:$0xff]
  %v4900 = vld [vmem:[#allocation3 + $0x1ec] sm:$0xff]
  %v4901 = vld [vmem:[#allocation3 + $0x1f4] sm:$0xf]
  %v4902 = vld [vmem:[#allocation3 + $0x1f8] sm:$0xff]
  %v4903 = vld [vmem:[#allocation3 + $0x200] sm:$0xff]
  %v4904 = vld [vmem:[#allocation3 + $0x208] sm:$0xff]
  %v4905 = vld [vmem:[#allocation3 + $0x210] sm:$0xff]
  %v4906 = vld [vmem:[#allocation3 + $0x218] sm:$0xf]
  %v4907 = vld [vmem:[#allocation3 + $0x21c] sm:$0xff]
  %v4908 = vld [vmem:[#allocation3 + $0x224] sm:$0xff]
  %v4909 = vld [vmem:[#allocation3 + $0x22c] sm:$0xff]
  %v4910 = vld [vmem:[#allocation3 + $0x234] sm:$0xff]
  %v4911 = vld [vmem:[#allocation3 + $0x23c] sm:$0xf]
  %v4912 = vld [vmem:[#allocation3 + $0x240] sm:$0xff]
  %v4913 = vld [vmem:[#allocation3 + $0x248] sm:$0xff]
  %v4914 = vld [vmem:[#allocation3 + $0x250] sm:$0xff]
  %v4915 = vld [vmem:[#allocation3 + $0x258] sm:$0xff]
  %v4916 = vld [vmem:[#allocation3 + $0x260] sm:$0xf]
  %v4917 = vld [vmem:[#allocation3 + $0x264] sm:$0xff]
  %v4918 = vld [vmem:[#allocation3 + $0x26c] sm:$0xff]
  %v4919 = vld [vmem:[#allocation3 + $0x274] sm:$0xff]
  %v4920 = vld [vmem:[#allocation3 + $0x27c] sm:$0xff]
  %v4921 = vld [vmem:[#allocation3 + $0x284] sm:$0xf]
  %v4922 = vld [vmem:[#allocation3 + $0x288] sm:$0xff]
  %v4923 = vld [vmem:[#allocation3 + $0x290] sm:$0xff]
  %v4924 = vld [vmem:[#allocation3 + $0x298] sm:$0xff]
  %v4925 = vld [vmem:[#allocation3 + $0x2a0] sm:$0xff]
  %v4926 = vld [vmem:[#allocation3 + $0x2a8] sm:$0xf]
  %v4927 = vld [vmem:[#allocation3 + $0x2ac] sm:$0xff]
  %v4928 = vld [vmem:[#allocation3 + $0x2b4] sm:$0xff]
  %v4929 = vld [vmem:[#allocation3 + $0x2bc] sm:$0xff]
  %v4930 = vld [vmem:[#allocation3 + $0x2c4] sm:$0xff]
  %v4931 = vld [vmem:[#allocation3 + $0x2cc] sm:$0xf]
  %v4932 = vld [vmem:[#allocation3 + $0x2d0] sm:$0xff]
  %v4933 = vld [vmem:[#allocation3 + $0x2d8] sm:$0xff]
  %v4934 = vld [vmem:[#allocation3 + $0x2e0] sm:$0xff]
  %v4935 = vld [vmem:[#allocation3 + $0x2e8] sm:$0xff]
  %v4936 = vld [vmem:[#allocation3 + $0x2f0] sm:$0xf]
  %v4937 = vld [vmem:[#allocation3 + $0x2f4] sm:$0xff]
  %v4938 = vld [vmem:[#allocation3 + $0x2fc] sm:$0xff]
  %v4939 = vld [vmem:[#allocation3 + $0x304] sm:$0xff]
  %v4940 = vld [vmem:[#allocation3 + $0x30c] sm:$0xff]
  %v4941 = vld [vmem:[#allocation3 + $0x314] sm:$0xf]
  %v4942 = vld [vmem:[#allocation3 + $0x318] sm:$0xff]
  %v4943 = vld [vmem:[#allocation3 + $0x320] sm:$0xff]
  %v4944 = vld [vmem:[#allocation3 + $0x328] sm:$0xff]
  %v4945 = vld [vmem:[#allocation3 + $0x330] sm:$0xff]
  %v4946 = vld [vmem:[#allocation3 + $0x338] sm:$0xf]
  %v4947 = vld [vmem:[#allocation3 + $0x33c] sm:$0xff]
  %v4948 = vld [vmem:[#allocation3 + $0x344] sm:$0xff]
  %v4949 = vld [vmem:[#allocation3 + $0x34c] sm:$0xff]
  %v4950 = vld [vmem:[#allocation3 + $0x354] sm:$0xff]
  %v4951 = vld [vmem:[#allocation3 + $0x35c] sm:$0xf]
  %v4952 = vld [vmem:[#allocation3 + $0x360] sm:$0xff]
  %v4953 = vld [vmem:[#allocation3 + $0x368] sm:$0xff]
  %v4954 = vld [vmem:[#allocation3 + $0x370] sm:$0xff]
  %v4955 = vld [vmem:[#allocation3 + $0x378] sm:$0xff]
  %v4956 = vld [vmem:[#allocation3 + $0x380] sm:$0xf]
  %v4957 = vld [vmem:[#allocation3 + $0x384] sm:$0xff]
  %v4958 = vld [vmem:[#allocation3 + $0x38c] sm:$0xff]
  %v4959 = vld [vmem:[#allocation3 + $0x394] sm:$0xff]
  %v4960 = vld [vmem:[#allocation3 + $0x39c] sm:$0xff]
  %v4961 = vld [vmem:[#allocation3 + $0x3a4] sm:$0xf]
  %v4962 = vld [vmem:[#allocation3 + $0x3a8] sm:$0xff]
  %v4963 = vld [vmem:[#allocation3 + $0x3b0] sm:$0xff]
  %v4964 = vld [vmem:[#allocation3 + $0x3b8] sm:$0xff]
  %v4965 = vld [vmem:[#allocation3 + $0x3c0] sm:$0xff]
  %v4966 = vld [vmem:[#allocation3 + $0x3c8] sm:$0xf]
  %v4967 = vld [vmem:[#allocation3 + $0x3cc] sm:$0xff]
  %v4968 = vld [vmem:[#allocation3 + $0x3d4] sm:$0xff]
  %v4969 = vld [vmem:[#allocation3 + $0x3dc] sm:$0xff]
  %v4970 = vld [vmem:[#allocation3 + $0x3e4] sm:$0xff]
  %v4971 = vld [vmem:[#allocation3 + $0x3ec] sm:$0xf]
  %v4972 = vld [vmem:[#allocation3 + $0x3f0] sm:$0xff]
  %v4973 = vld [vmem:[#allocation3 + $0x3f8] sm:$0xff]
  %v4974 = vld [vmem:[#allocation3 + $0x400] sm:$0xff]
  %v4975 = vld [vmem:[#allocation3 + $0x408] sm:$0xff]
  %v4976 = vld [vmem:[#allocation3 + $0x410] sm:$0xf]
  %v4977 = vld [vmem:[#allocation3 + $0x414] sm:$0xff]
  %v4978 = vld [vmem:[#allocation3 + $0x41c] sm:$0xff]
  %v4979 = vld [vmem:[#allocation3 + $0x424] sm:$0xff]
  %v4980 = vld [vmem:[#allocation3 + $0x42c] sm:$0xff]
  %v4981 = vld [vmem:[#allocation3 + $0x434] sm:$0xf]
  %v4982 = vld [vmem:[#allocation3 + $0x438] sm:$0xff]
  %v4983 = vld [vmem:[#allocation3 + $0x440] sm:$0xff]
  %v4984 = vld [vmem:[#allocation3 + $0x448] sm:$0xff]
  %v4985 = vld [vmem:[#allocation3 + $0x450] sm:$0xff]
  %v4986 = vld [vmem:[#allocation3 + $0x458] sm:$0xf]
  %v4987 = vld [vmem:[#allocation3 + $0x45c] sm:$0xff]
  %v4988 = vld [vmem:[#allocation3 + $0x464] sm:$0xff]
  %v4989 = vld [vmem:[#allocation3 + $0x46c] sm:$0xff]
  %v4990 = vld [vmem:[#allocation3 + $0x474] sm:$0xff]
  %v4991 = vld [vmem:[#allocation3 + $0x47c] sm:$0xf]
  %v4992 = vld [vmem:[#allocation3 + $0x480] sm:$0xff]
  %v4993 = vld [vmem:[#allocation3 + $0x488] sm:$0xff]
  %v4994 = vld [vmem:[#allocation3 + $0x490] sm:$0xff]
  %v4995 = vld [vmem:[#allocation3 + $0x498] sm:$0xff]
  %v4996 = vld [vmem:[#allocation3 + $0x4a0] sm:$0xf]
  %v4997 = vld [vmem:[#allocation3 + $0x4a4] sm:$0xff]
  %v4998 = vld [vmem:[#allocation3 + $0x4ac] sm:$0xff]
  %v4999 = vld [vmem:[#allocation3 + $0x4b4] sm:$0xff]
  %v5000 = vld [vmem:[#allocation3 + $0x4bc] sm:$0xff]
  %v5001 = vld [vmem:[#allocation3 + $0x4c4] sm:$0xf]
  %v5002 = vld [vmem:[#allocation3 + $0x4c8] sm:$0xff]
  %v5003 = vld [vmem:[#allocation3 + $0x4d0] sm:$0xff]
  %v5004 = vld [vmem:[#allocation3 + $0x4d8] sm:$0xff]
  %v5005 = vld [vmem:[#allocation3 + $0x4e0] sm:$0xff]
  %v5006 = vld [vmem:[#allocation3 + $0x4e8] sm:$0xf]
  %v5007 = vld [vmem:[#allocation3 + $0x4ec] sm:$0xff]
  %v5008 = vld [vmem:[#allocation3 + $0x4f4] sm:$0xff]
  %v5009 = vld [vmem:[#allocation3 + $0x4fc] sm:$0xff]
  %v5010 = vld [vmem:[#allocation3 + $0x504] sm:$0xff]
  %v5011 = vld [vmem:[#allocation3 + $0x50c] sm:$0xf]
  %v5012 = vld [vmem:[#allocation3 + $0x510] sm:$0xff]
  %v5013 = vld [vmem:[#allocation3 + $0x518] sm:$0xff]
  %v5014 = vld [vmem:[#allocation3 + $0x520] sm:$0xff]
  %v5015 = vld [vmem:[#allocation3 + $0x528] sm:$0xff]
  %v5016 = vld [vmem:[#allocation3 + $0x530] sm:$0xf]
  %v5017 = vld [vmem:[#allocation3 + $0x534] sm:$0xff]
  %v5018 = vld [vmem:[#allocation3 + $0x53c] sm:$0xff]
  %v5019 = vld [vmem:[#allocation3 + $0x544] sm:$0xff]
  %v5020 = vld [vmem:[#allocation3 + $0x54c] sm:$0xff]
  %v5021 = vld [vmem:[#allocation3 + $0x554] sm:$0xf]
  %v5022 = vld [vmem:[#allocation3 + $0x558] sm:$0xff]
  %v5023 = vld [vmem:[#allocation3 + $0x560] sm:$0xff]
  %v5024 = vld [vmem:[#allocation3 + $0x568] sm:$0xff]
  %v5025 = vld [vmem:[#allocation3 + $0x570] sm:$0xff]
  %v5026 = vld [vmem:[#allocation3 + $0x578] sm:$0xf]
  %v5027 = vld [vmem:[#allocation3 + $0x57c] sm:$0xff]
  %v5028 = vld [vmem:[#allocation3 + $0x584] sm:$0xff]
  %v5029 = vld [vmem:[#allocation3 + $0x58c] sm:$0xff]
  %v5030 = vld [vmem:[#allocation3 + $0x594] sm:$0xff]
  %v5031 = vld [vmem:[#allocation3 + $0x59c] sm:$0xf]
  %v5032 = vld [vmem:[#allocation3 + $0x5a0] sm:$0xff]
  %v5033 = vld [vmem:[#allocation3 + $0x5a8] sm:$0xff]
  %v5034 = vld [vmem:[#allocation3 + $0x5b0] sm:$0xff]
  %v5035 = vld [vmem:[#allocation3 + $0x5b8] sm:$0xff]
  %v5036 = vld [vmem:[#allocation3 + $0x5c0] sm:$0xf]
  %v5037 = vld [vmem:[#allocation3 + $0x5c4] sm:$0xff]
  %v5038 = vld [vmem:[#allocation3 + $0x5cc] sm:$0xff]
  %v5039 = vld [vmem:[#allocation3 + $0x5d4] sm:$0xff]
  %v5040 = vld [vmem:[#allocation3 + $0x5dc] sm:$0xff]
  %v5041 = vld [vmem:[#allocation3 + $0x5e4] sm:$0xf]
  %v5042 = vld [vmem:[#allocation3 + $0x5e8] sm:$0xff]
  %v5043 = vld [vmem:[#allocation3 + $0x5f0] sm:$0xff]
  %v5044 = vld [vmem:[#allocation3 + $0x5f8] sm:$0xff]
  %v5045 = vld [vmem:[#allocation3 + $0x600] sm:$0xff]
  %v5046 = vld [vmem:[#allocation3 + $0x608] sm:$0xf]
  %v5047 = vld [vmem:[#allocation3 + $0x60c] sm:$0xff]
  %v5048 = vld [vmem:[#allocation3 + $0x614] sm:$0xff]
  %v5049 = vld [vmem:[#allocation3 + $0x61c] sm:$0xff]
  %v5050 = vld [vmem:[#allocation3 + $0x624] sm:$0xff]
  %v5051 = vld [vmem:[#allocation3 + $0x62c] sm:$0xf]
  %v5052 = vld [vmem:[#allocation3 + $0x630] sm:$0xff]
  %v5053 = vld [vmem:[#allocation3 + $0x638] sm:$0xff]
  %v5054 = vld [vmem:[#allocation3 + $0x640] sm:$0xff]
  %v5055 = vld [vmem:[#allocation3 + $0x648] sm:$0xff]
  %v5056 = vld [vmem:[#allocation3 + $0x650] sm:$0xf]
  %v5057 = vld [vmem:[#allocation3 + $0x654] sm:$0xff]
  %v5058 = vld [vmem:[#allocation3 + $0x65c] sm:$0xff]
  %v5059 = vld [vmem:[#allocation3 + $0x664] sm:$0xff]
  %v5060 = vld [vmem:[#allocation3 + $0x66c] sm:$0xff]
  %v5061 = vld [vmem:[#allocation3 + $0x674] sm:$0xf]
  %v5062 = vld [vmem:[#allocation3 + $0x678] sm:$0xff]
  %v5063 = vld [vmem:[#allocation3 + $0x680] sm:$0xff]
  %v5064 = vld [vmem:[#allocation3 + $0x688] sm:$0xff]
  %v5065 = vld [vmem:[#allocation3 + $0x690] sm:$0xff]
  %v5066 = vld [vmem:[#allocation3 + $0x698] sm:$0xf]
  %v5067 = vld [vmem:[#allocation3 + $0x69c] sm:$0xff]
  %v5068 = vld [vmem:[#allocation3 + $0x6a4] sm:$0xff]
  %v5069 = vld [vmem:[#allocation3 + $0x6ac] sm:$0xff]
  %v5070 = vld [vmem:[#allocation3 + $0x6b4] sm:$0xff]
  %v5071 = vld [vmem:[#allocation3 + $0x6bc] sm:$0xf]
  %v5072 = vld [vmem:[#allocation3 + $0x6c0] sm:$0xff]
  %v5073 = vld [vmem:[#allocation3 + $0x6c8] sm:$0xff]
  %v5074 = vld [vmem:[#allocation3 + $0x6d0] sm:$0xff]
  %v5075 = vld [vmem:[#allocation3 + $0x6d8] sm:$0xff]
  %v5076 = vld [vmem:[#allocation3 + $0x6e0] sm:$0xf]
  %v5077 = vld [vmem:[#allocation3 + $0x6e4] sm:$0xff]
  %v5078 = vld [vmem:[#allocation3 + $0x6ec] sm:$0xff]
  %v5079 = vld [vmem:[#allocation3 + $0x6f4] sm:$0xff]
  %v5080 = vld [vmem:[#allocation3 + $0x6fc] sm:$0xff]
  %v5081 = vld [vmem:[#allocation3 + $0x704] sm:$0xf]
  %v5082 = vld [vmem:[#allocation3 + $0x708] sm:$0xff]
  %v5083 = vld [vmem:[#allocation3 + $0x710] sm:$0xff]
  %v5084 = vld [vmem:[#allocation3 + $0x718] sm:$0xff]
  %v5085 = vld [vmem:[#allocation3 + $0x720] sm:$0xff]
  %v5086 = vld [vmem:[#allocation3 + $0x728] sm:$0xf]
  %v5087 = vld [vmem:[#allocation3 + $0x72c] sm:$0xff]
  %v5088 = vld [vmem:[#allocation3 + $0x734] sm:$0xff]
  %v5089 = vld [vmem:[#allocation3 + $0x73c] sm:$0xff]
  %v5090 = vld [vmem:[#allocation3 + $0x744] sm:$0xff]
  %v5091 = vld [vmem:[#allocation3 + $0x74c] sm:$0xf]
  %v5092 = vld [vmem:[#allocation3 + $0x750] sm:$0xff]
  %v5093 = vld [vmem:[#allocation3 + $0x758] sm:$0xff]
  %v5094 = vld [vmem:[#allocation3 + $0x760] sm:$0xff]
  %v5095 = vld [vmem:[#allocation3 + $0x768] sm:$0xff]
  %v5096 = vld [vmem:[#allocation3 + $0x770] sm:$0xf]
  %v5097 = vld [vmem:[#allocation3 + $0x774] sm:$0xff]
  %v5098 = vld [vmem:[#allocation3 + $0x77c] sm:$0xff]
  %v5099 = vld [vmem:[#allocation3 + $0x784] sm:$0xff]
  %v5100 = vld [vmem:[#allocation3 + $0x78c] sm:$0xff]
  %v5101 = vld [vmem:[#allocation3 + $0x794] sm:$0xf]
  %v5102 = vld [vmem:[#allocation3 + $0x798] sm:$0xff]
  %v5103 = vld [vmem:[#allocation3 + $0x7a0] sm:$0xff]
  %v5104 = vld [vmem:[#allocation3 + $0x7a8] sm:$0xff]
  %v5105 = vld [vmem:[#allocation3 + $0x7b0] sm:$0xff]
  %v5106 = vld [vmem:[#allocation3 + $0x7b8] sm:$0xf]
  %v5107 = vld [vmem:[#allocation3 + $0x7bc] sm:$0xff]
  %v5108 = vld [vmem:[#allocation3 + $0x7c4] sm:$0xff]
  %v5109 = vld [vmem:[#allocation3 + $0x7cc] sm:$0xff]
  %v5110 = vld [vmem:[#allocation3 + $0x7d4] sm:$0xff]
  %v5111 = vld [vmem:[#allocation3 + $0x7dc] sm:$0xf]
  %v5112 = vld [vmem:[#allocation3 + $0x7e0] sm:$0xff]
  %v5113 = vld [vmem:[#allocation3 + $0x7e8] sm:$0xff]
  %v5114 = vld [vmem:[#allocation3 + $0x7f0] sm:$0xff]
  %v5115 = vld [vmem:[#allocation3 + $0x7f8] sm:$0xff]
  %v5116 = vld [vmem:[#allocation3 + $0x800] sm:$0xf]
  %v5117 = vld [vmem:[#allocation3 + $0x804] sm:$0xff]
  %v5118 = vld [vmem:[#allocation3 + $0x80c] sm:$0xff]
  %v5119 = vld [vmem:[#allocation3 + $0x814] sm:$0xff]
  %v5120 = vld [vmem:[#allocation3 + $0x81c] sm:$0xff]
  %v5121 = vld [vmem:[#allocation3 + $0x824] sm:$0xf]
  %v5122 = vld [vmem:[#allocation3 + $0x828] sm:$0xff]
  %v5123 = vld [vmem:[#allocation3 + $0x830] sm:$0xff]
  %v5124 = vld [vmem:[#allocation3 + $0x838] sm:$0xff]
  %v5125 = vld [vmem:[#allocation3 + $0x840] sm:$0xff]
  %v5126 = vld [vmem:[#allocation3 + $0x848] sm:$0xf]
  %v5127 = vld [vmem:[#allocation3 + $0x84c] sm:$0xff]
  %v5128 = vld [vmem:[#allocation3 + $0x854] sm:$0xff]
  %v5129 = vld [vmem:[#allocation3 + $0x85c] sm:$0xff]
  %v5130 = vld [vmem:[#allocation3 + $0x864] sm:$0xff]
  %v5131 = vld [vmem:[#allocation3 + $0x86c] sm:$0xf]
  %v5132 = vld [vmem:[#allocation3 + $0x870] sm:$0xff]
  %v5133 = vld [vmem:[#allocation3 + $0x878] sm:$0xff]
  %v5134 = vld [vmem:[#allocation3 + $0x880] sm:$0xff]
  %v5135 = vld [vmem:[#allocation3 + $0x888] sm:$0xff]
  %v5136 = vld [vmem:[#allocation3 + $0x890] sm:$0xf]
  %v5137 = vld [vmem:[#allocation3 + $0x894] sm:$0xff]
  %v5138 = vld [vmem:[#allocation3 + $0x89c] sm:$0xff]
  %v5139 = vld [vmem:[#allocation3 + $0x8a4] sm:$0xff]
  %v5140 = vld [vmem:[#allocation3 + $0x8ac] sm:$0xff]
  %v5141 = vld [vmem:[#allocation3 + $0x8b4] sm:$0xf]
  %v5142 = vld [vmem:[#allocation3 + $0x8b8] sm:$0xff]
  %v5143 = vld [vmem:[#allocation3 + $0x8c0] sm:$0xff]
  %v5144 = vld [vmem:[#allocation3 + $0x8c8] sm:$0xff]
  %v5145 = vld [vmem:[#allocation3 + $0x8d0] sm:$0xff]
  %v5146 = vld [vmem:[#allocation3 + $0x8d8] sm:$0xf]
  %v5147 = vld [vmem:[#allocation3 + $0x8dc] sm:$0xff]
  %v5148 = vld [vmem:[#allocation3 + $0x8e4] sm:$0xff]
  %v5149 = vld [vmem:[#allocation3 + $0x8ec] sm:$0xff]
  %v5150 = vld [vmem:[#allocation3 + $0x8f4] sm:$0xff]
  %v5151 = vld [vmem:[#allocation3 + $0x8fc] sm:$0xf]
  %v5152 = vld [vmem:[%s2] sm:$0xf]
  %v5153 = vld [vmem:[%s2 + $0x4] sm:$0xf]
  %v5154 = vld [vmem:[%s2 + $0x8] sm:$0xf]
  %v5155 = vld [vmem:[%s2 + $0xc] sm:$0xf]
  %v5156 = vld [vmem:[%s2 + $0x10] sm:$0xf]
  %v5157 = vld [vmem:[%s2 + $0x14] sm:$0xf]
  %v5158 = vld [vmem:[%s2 + $0x18] sm:$0xf]
  %v5159 = vld [vmem:[%s2 + $0x1c] sm:$0xf]
  %v5160 = vld [vmem:[%s2 + $0x20] sm:$0xf]
  %v5161 = vld [vmem:[%s2 + $0x24] sm:$0xf]
  %v5162 = vld [vmem:[%s2 + $0x28] sm:$0xf]
  %v5163 = vld [vmem:[%s2 + $0x2c] sm:$0xf]
  %v5164 = vld [vmem:[%s2 + $0x30] sm:$0xf]
  %v5165 = vld [vmem:[%s2 + $0x34] sm:$0xf]
  %v5166 = vld [vmem:[%s2 + $0x38] sm:$0xf]
  %v5167 = vld [vmem:[%s2 + $0x3c] sm:$0xf]
  %v5168 = vld [vmem:[%s2 + $0x40] sm:$0xf]
  %v5169 = vld [vmem:[%s2 + $0x44] sm:$0xf]
  %v5170 = vld [vmem:[%s2 + $0x48] sm:$0xf]
  %v5171 = vld [vmem:[%s2 + $0x4c] sm:$0xf]
  %v5172 = vld [vmem:[%s2 + $0x50] sm:$0xf]
  %v5173 = vld [vmem:[%s2 + $0x54] sm:$0xf]
  %v5174 = vld [vmem:[%s2 + $0x58] sm:$0xf]
  %v5175 = vld [vmem:[%s2 + $0x5c] sm:$0xf]
  %v5176 = vld [vmem:[%s2 + $0x60] sm:$0xf]
  %v5177 = vld [vmem:[%s2 + $0x64] sm:$0xf]
  %v5178 = vld [vmem:[%s2 + $0x68] sm:$0xf]
  %v5179 = vld [vmem:[%s2 + $0x6c] sm:$0xf]
  %v5180 = vld [vmem:[%s2 + $0x70] sm:$0xf]
  %v5181 = vld [vmem:[%s2 + $0x74] sm:$0xf]
  %v5182 = vld [vmem:[%s2 + $0x78] sm:$0xf]
  %v5183 = vld [vmem:[%s2 + $0x7c] sm:$0xf]
  %v5184 = vld [vmem:[%s2 + $0x80] sm:$0xf]
  %v5185 = vld [vmem:[%s2 + $0x84] sm:$0xf]
  %v5186 = vld [vmem:[%s2 + $0x88] sm:$0xf]
  %v5187 = vld [vmem:[%s2 + $0x8c] sm:$0xf]
  %v5188 = vld [vmem:[%s2 + $0x90] sm:$0xf]
  %v5189 = vld [vmem:[%s2 + $0x94] sm:$0xf]
  %v5190 = vld [vmem:[%s2 + $0x98] sm:$0xf]
  %v5191 = vld [vmem:[%s2 + $0x9c] sm:$0xf]
  %v5192 = vld [vmem:[%s2 + $0xa0] sm:$0xf]
  %v5193 = vld [vmem:[%s2 + $0xa4] sm:$0xf]
  %v5194 = vld [vmem:[%s2 + $0xa8] sm:$0xf]
  %v5195 = vld [vmem:[%s2 + $0xac] sm:$0xf]
  %v5196 = vld [vmem:[%s2 + $0xb0] sm:$0xf]
  %v5197 = vld [vmem:[%s2 + $0xb4] sm:$0xf]
  %v5198 = vld [vmem:[%s2 + $0xb8] sm:$0xf]
  %v5199 = vld [vmem:[%s2 + $0xbc] sm:$0xf]
  %v5200 = vld [vmem:[%s2 + $0xc0] sm:$0xf]
  %v5201 = vld [vmem:[%s2 + $0xc4] sm:$0xf]
  %v5202 = vld [vmem:[%s2 + $0xc8] sm:$0xf]
  %v5203 = vld [vmem:[%s2 + $0xcc] sm:$0xf]
  %v5204 = vld [vmem:[%s2 + $0xd0] sm:$0xf]
  %v5205 = vld [vmem:[%s2 + $0xd4] sm:$0xf]
  %v5206 = vld [vmem:[%s2 + $0xd8] sm:$0xf]
  %v5207 = vld [vmem:[%s2 + $0xdc] sm:$0xf]
  %v5208 = vld [vmem:[%s2 + $0xe0] sm:$0xf]
  %v5209 = vld [vmem:[%s2 + $0xe4] sm:$0xf]
  %v5210 = vld [vmem:[%s2 + $0xe8] sm:$0xf]
  %v5211 = vld [vmem:[%s2 + $0xec] sm:$0xf]
  %v5212 = vld [vmem:[%s2 + $0xf0] sm:$0xf]
  %v5213 = vld [vmem:[%s2 + $0xf4] sm:$0xf]
  %v5214 = vld [vmem:[%s2 + $0xf8] sm:$0xf]
  %v5215 = vld [vmem:[%s2 + $0xfc] sm:$0xf]
  %v5216 = vld [vmem:[%s2 + $0x100] sm:$0xf]
  %v5217 = vld [vmem:[%s2 + $0x104] sm:$0xf]
  %v5218 = vld [vmem:[%s2 + $0x108] sm:$0xf]
  %v5219 = vld [vmem:[%s2 + $0x10c] sm:$0xf]
  %v5220 = vld [vmem:[%s2 + $0x110] sm:$0xf]
  %v5221 = vld [vmem:[%s2 + $0x114] sm:$0xf]
  %v5222 = vld [vmem:[%s2 + $0x118] sm:$0xf]
  %v5223 = vld [vmem:[%s2 + $0x11c] sm:$0xf]
  %v5224 = vld [vmem:[%s2 + $0x120] sm:$0xf]
  %v5225 = vld [vmem:[%s2 + $0x124] sm:$0xf]
  %v5226 = vld [vmem:[%s2 + $0x128] sm:$0xf]
  %v5227 = vld [vmem:[%s2 + $0x12c] sm:$0xf]
  %v5228 = vld [vmem:[%s2 + $0x130] sm:$0xf]
  %v5229 = vld [vmem:[%s2 + $0x134] sm:$0xf]
  %v5230 = vld [vmem:[%s2 + $0x138] sm:$0xf]
  %v5231 = vld [vmem:[%s2 + $0x13c] sm:$0xf]
  %v5232 = vld [vmem:[%s2 + $0x140] sm:$0xf]
  %v5233 = vld [vmem:[%s2 + $0x144] sm:$0xf]
  %v5234 = vld [vmem:[%s2 + $0x148] sm:$0xf]
  %v5235 = vld [vmem:[%s2 + $0x14c] sm:$0xf]
  %v5236 = vld [vmem:[%s2 + $0x150] sm:$0xf]
  %v5237 = vld [vmem:[%s2 + $0x154] sm:$0xf]
  %v5238 = vld [vmem:[%s2 + $0x158] sm:$0xf]
  %v5239 = vld [vmem:[%s2 + $0x15c] sm:$0xf]
  %v5240 = vld [vmem:[%s2 + $0x160] sm:$0xf]
  %v5241 = vld [vmem:[%s2 + $0x164] sm:$0xf]
  %v5242 = vld [vmem:[%s2 + $0x168] sm:$0xf]
  %v5243 = vld [vmem:[%s2 + $0x16c] sm:$0xf]
  %v5244 = vld [vmem:[%s2 + $0x170] sm:$0xf]
  %v5245 = vld [vmem:[%s2 + $0x174] sm:$0xf]
  %v5246 = vld [vmem:[%s2 + $0x178] sm:$0xf]
  %v5247 = vld [vmem:[%s2 + $0x17c] sm:$0xf]
  %v5248 = vld [vmem:[%s2 + $0x180] sm:$0xf]
  %v5249 = vld [vmem:[%s2 + $0x184] sm:$0xf]
  %v5250 = vld [vmem:[%s2 + $0x188] sm:$0xf]
  %v5251 = vld [vmem:[%s2 + $0x18c] sm:$0xf]
  %v5252 = vld [vmem:[%s2 + $0x190] sm:$0xf]
  %v5253 = vld [vmem:[%s2 + $0x194] sm:$0xf]
  %v5254 = vld [vmem:[%s2 + $0x198] sm:$0xf]
  %v5255 = vld [vmem:[%s2 + $0x19c] sm:$0xf]
  %v5256 = vld [vmem:[%s2 + $0x1a0] sm:$0xf]
  %v5257 = vld [vmem:[%s2 + $0x1a4] sm:$0xf]
  %v5258 = vld [vmem:[%s2 + $0x1a8] sm:$0xf]
  %v5259 = vld [vmem:[%s2 + $0x1ac] sm:$0xf]
  %v5260 = vld [vmem:[%s2 + $0x1b0] sm:$0xf]
  %v5261 = vld [vmem:[%s2 + $0x1b4] sm:$0xf]
  %v5262 = vld [vmem:[%s2 + $0x1b8] sm:$0xf]
  %v5263 = vld [vmem:[%s2 + $0x1bc] sm:$0xf]
  %v5264 = vld [vmem:[%s2 + $0x1c0] sm:$0xf]
  %v5265 = vld [vmem:[%s2 + $0x1c4] sm:$0xf]
  %v5266 = vld [vmem:[%s2 + $0x1c8] sm:$0xf]
  %v5267 = vld [vmem:[%s2 + $0x1cc] sm:$0xf]
  %v5268 = vld [vmem:[%s2 + $0x1d0] sm:$0xf]
  %v5269 = vld [vmem:[%s2 + $0x1d4] sm:$0xf]
  %v5270 = vld [vmem:[%s2 + $0x1d8] sm:$0xf]
  %v5271 = vld [vmem:[%s2 + $0x1dc] sm:$0xf]
  %v5272 = vld [vmem:[%s2 + $0x1e0] sm:$0xf]
  %v5273 = vld [vmem:[%s2 + $0x1e4] sm:$0xf]
  %v5274 = vld [vmem:[%s2 + $0x1e8] sm:$0xf]
  %v5275 = vld [vmem:[%s2 + $0x1ec] sm:$0xf]
  %v5276 = vld [vmem:[%s2 + $0x1f0] sm:$0xf]
  %v5277 = vld [vmem:[%s2 + $0x1f4] sm:$0xf]
  %v5278 = vld [vmem:[%s2 + $0x1f8] sm:$0xf]
  %v5279 = vld [vmem:[%s2 + $0x1fc] sm:$0xf]
  %v5280 = vld [vmem:[%s2 + $0x200] sm:$0xf]
  %v5281 = vld [vmem:[%s2 + $0x204] sm:$0xf]
  %v5282 = vld [vmem:[%s2 + $0x208] sm:$0xf]
  %v5283 = vld [vmem:[%s2 + $0x20c] sm:$0xf]
  %v5284 = vld [vmem:[%s2 + $0x210] sm:$0xf]
  %v5285 = vld [vmem:[%s2 + $0x214] sm:$0xf]
  %v5286 = vld [vmem:[%s2 + $0x218] sm:$0xf]
  %v5287 = vld [vmem:[%s2 + $0x21c] sm:$0xf]
  %v5288 = vld [vmem:[%s2 + $0x220] sm:$0xf]
  %v5289 = vld [vmem:[%s2 + $0x224] sm:$0xf]
  %v5290 = vld [vmem:[%s2 + $0x228] sm:$0xf]
  %v5291 = vld [vmem:[%s2 + $0x22c] sm:$0xf]
  %v5292 = vld [vmem:[%s2 + $0x230] sm:$0xf]
  %v5293 = vld [vmem:[%s2 + $0x234] sm:$0xf]
  %v5294 = vld [vmem:[%s2 + $0x238] sm:$0xf]
  %v5295 = vld [vmem:[%s2 + $0x23c] sm:$0xf]
  %v5616 = vunpack.c.l.b16 %v4832
  %v5617 = vunpack.c.h.b16 %v4832
  %v5618 = vunpack.c.l.b16 %v4833
  %v5619 = vunpack.c.h.b16 %v4833
  %v5620 = vunpack.c.l.b16 %v4834
  %v5621 = vunpack.c.h.b16 %v4834
  %v5622 = vunpack.c.l.b16 %v4835
  %v5623 = vunpack.c.h.b16 %v4835
  %v5624 = vunpack.c.l.b16 %v4836
  %v5625 = vunpack.c.l.b16 %v4837
  %v5626 = vunpack.c.h.b16 %v4837
  %v5627 = vunpack.c.l.b16 %v4838
  %v5628 = vunpack.c.h.b16 %v4838
  %v5629 = vunpack.c.l.b16 %v4839
  %v5630 = vunpack.c.h.b16 %v4839
  %v5631 = vunpack.c.l.b16 %v4840
  %v5632 = vunpack.c.h.b16 %v4840
  %v5633 = vunpack.c.l.b16 %v4841
  %v5634 = vunpack.c.l.b16 %v4842
  %v5635 = vunpack.c.h.b16 %v4842
  %v5636 = vunpack.c.l.b16 %v4843
  %v5637 = vunpack.c.h.b16 %v4843
  %v5638 = vunpack.c.l.b16 %v4844
  %v5639 = vunpack.c.h.b16 %v4844
  %v5640 = vunpack.c.l.b16 %v4845
  %v5641 = vunpack.c.h.b16 %v4845
  %v5642 = vunpack.c.l.b16 %v4846
  %v5643 = vunpack.c.l.b16 %v4847
  %v5644 = vunpack.c.h.b16 %v4847
  %v5645 = vunpack.c.l.b16 %v4848
  %v5646 = vunpack.c.h.b16 %v4848
  %v5647 = vunpack.c.l.b16 %v4849
  %v5648 = vunpack.c.h.b16 %v4849
  %v5649 = vunpack.c.l.b16 %v4850
  %v5650 = vunpack.c.h.b16 %v4850
  %v5651 = vunpack.c.l.b16 %v4851
  %v5652 = vunpack.c.l.b16 %v4852
  %v5653 = vunpack.c.h.b16 %v4852
  %v5654 = vunpack.c.l.b16 %v4853
  %v5655 = vunpack.c.h.b16 %v4853
  %v5656 = vunpack.c.l.b16 %v4854
  %v5657 = vunpack.c.h.b16 %v4854
  %v5658 = vunpack.c.l.b16 %v4855
  %v5659 = vunpack.c.h.b16 %v4855
  %v5660 = vunpack.c.l.b16 %v4856
  %v5661 = vunpack.c.l.b16 %v4857
  %v5662 = vunpack.c.h.b16 %v4857
  %v5663 = vunpack.c.l.b16 %v4858
  %v5664 = vunpack.c.h.b16 %v4858
  %v5665 = vunpack.c.l.b16 %v4859
  %v5666 = vunpack.c.h.b16 %v4859
  %v5667 = vunpack.c.l.b16 %v4860
  %v5668 = vunpack.c.h.b16 %v4860
  %v5669 = vunpack.c.l.b16 %v4861
  %v5670 = vunpack.c.l.b16 %v4862
  %v5671 = vunpack.c.h.b16 %v4862
  %v5672 = vunpack.c.l.b16 %v4863
  %v5673 = vunpack.c.h.b16 %v4863
  %v5674 = vunpack.c.l.b16 %v4864
  %v5675 = vunpack.c.h.b16 %v4864
  %v5676 = vunpack.c.l.b16 %v4865
  %v5677 = vunpack.c.h.b16 %v4865
  %v5678 = vunpack.c.l.b16 %v4866
  %v5679 = vunpack.c.l.b16 %v4867
  %v5680 = vunpack.c.h.b16 %v4867
  %v5681 = vunpack.c.l.b16 %v4868
  %v5682 = vunpack.c.h.b16 %v4868
  %v5683 = vunpack.c.l.b16 %v4869
  %v5684 = vunpack.c.h.b16 %v4869
  %v5685 = vunpack.c.l.b16 %v4870
  %v5686 = vunpack.c.h.b16 %v4870
  %v5687 = vunpack.c.l.b16 %v4871
  %v5688 = vunpack.c.l.b16 %v4872
  %v5689 = vunpack.c.h.b16 %v4872
  %v5690 = vunpack.c.l.b16 %v4873
  %v5691 = vunpack.c.h.b16 %v4873
  %v5692 = vunpack.c.l.b16 %v4874
  %v5693 = vunpack.c.h.b16 %v4874
  %v5694 = vunpack.c.l.b16 %v4875
  %v5695 = vunpack.c.h.b16 %v4875
  %v5696 = vunpack.c.l.b16 %v4876
  %v5697 = vunpack.c.l.b16 %v4877
  %v5698 = vunpack.c.h.b16 %v4877
  %v5699 = vunpack.c.l.b16 %v4878
  %v5700 = vunpack.c.h.b16 %v4878
  %v5701 = vunpack.c.l.b16 %v4879
  %v5702 = vunpack.c.h.b16 %v4879
  %v5703 = vunpack.c.l.b16 %v4880
  %v5704 = vunpack.c.h.b16 %v4880
  %v5705 = vunpack.c.l.b16 %v4881
  %v5706 = vunpack.c.l.b16 %v4882
  %v5707 = vunpack.c.h.b16 %v4882
  %v5708 = vunpack.c.l.b16 %v4883
  %v5709 = vunpack.c.h.b16 %v4883
  %v5710 = vunpack.c.l.b16 %v4884
  %v5711 = vunpack.c.h.b16 %v4884
  %v5712 = vunpack.c.l.b16 %v4885
  %v5713 = vunpack.c.h.b16 %v4885
  %v5714 = vunpack.c.l.b16 %v4886
  %v5715 = vunpack.c.l.b16 %v4887
  %v5716 = vunpack.c.h.b16 %v4887
  %v5717 = vunpack.c.l.b16 %v4888
  %v5718 = vunpack.c.h.b16 %v4888
  %v5719 = vunpack.c.l.b16 %v4889
  %v5720 = vunpack.c.h.b16 %v4889
  %v5721 = vunpack.c.l.b16 %v4890
  %v5722 = vunpack.c.h.b16 %v4890
  %v5723 = vunpack.c.l.b16 %v4891
  %v5724 = vunpack.c.l.b16 %v4892
  %v5725 = vunpack.c.h.b16 %v4892
  %v5726 = vunpack.c.l.b16 %v4893
  %v5727 = vunpack.c.h.b16 %v4893
  %v5728 = vunpack.c.l.b16 %v4894
  %v5729 = vunpack.c.h.b16 %v4894
  %v5730 = vunpack.c.l.b16 %v4895
  %v5731 = vunpack.c.h.b16 %v4895
  %v5732 = vunpack.c.l.b16 %v4896
  %v5733 = vunpack.c.l.b16 %v4897
  %v5734 = vunpack.c.h.b16 %v4897
  %v5735 = vunpack.c.l.b16 %v4898
  %v5736 = vunpack.c.h.b16 %v4898
  %v5737 = vunpack.c.l.b16 %v4899
  %v5738 = vunpack.c.h.b16 %v4899
  %v5739 = vunpack.c.l.b16 %v4900
  %v5740 = vunpack.c.h.b16 %v4900
  %v5741 = vunpack.c.l.b16 %v4901
  %v5742 = vunpack.c.l.b16 %v4902
  %v5743 = vunpack.c.h.b16 %v4902
  %v5744 = vunpack.c.l.b16 %v4903
  %v5745 = vunpack.c.h.b16 %v4903
  %v5746 = vunpack.c.l.b16 %v4904
  %v5747 = vunpack.c.h.b16 %v4904
  %v5748 = vunpack.c.l.b16 %v4905
  %v5749 = vunpack.c.h.b16 %v4905
  %v5750 = vunpack.c.l.b16 %v4906
  %v5751 = vunpack.c.l.b16 %v4907
  %v5752 = vunpack.c.h.b16 %v4907
  %v5753 = vunpack.c.l.b16 %v4908
  %v5754 = vunpack.c.h.b16 %v4908
  %v5755 = vunpack.c.l.b16 %v4909
  %v5756 = vunpack.c.h.b16 %v4909
  %v5757 = vunpack.c.l.b16 %v4910
  %v5758 = vunpack.c.h.b16 %v4910
  %v5759 = vunpack.c.l.b16 %v4911
  %v5760 = vunpack.c.l.b16 %v4912
  %v5761 = vunpack.c.h.b16 %v4912
  %v5762 = vunpack.c.l.b16 %v4913
  %v5763 = vunpack.c.h.b16 %v4913
  %v5764 = vunpack.c.l.b16 %v4914
  %v5765 = vunpack.c.h.b16 %v4914
  %v5766 = vunpack.c.l.b16 %v4915
  %v5767 = vunpack.c.h.b16 %v4915
  %v5768 = vunpack.c.l.b16 %v4916
  %v5769 = vunpack.c.l.b16 %v4917
  %v5770 = vunpack.c.h.b16 %v4917
  %v5771 = vunpack.c.l.b16 %v4918
  %v5772 = vunpack.c.h.b16 %v4918
  %v5773 = vunpack.c.l.b16 %v4919
  %v5774 = vunpack.c.h.b16 %v4919
  %v5775 = vunpack.c.l.b16 %v4920
  %v5776 = vunpack.c.h.b16 %v4920
  %v5777 = vunpack.c.l.b16 %v4921
  %v5778 = vunpack.c.l.b16 %v4922
  %v5779 = vunpack.c.h.b16 %v4922
  %v5780 = vunpack.c.l.b16 %v4923
  %v5781 = vunpack.c.h.b16 %v4923
  %v5782 = vunpack.c.l.b16 %v4924
  %v5783 = vunpack.c.h.b16 %v4924
  %v5784 = vunpack.c.l.b16 %v4925
  %v5785 = vunpack.c.h.b16 %v4925
  %v5786 = vunpack.c.l.b16 %v4926
  %v5787 = vunpack.c.l.b16 %v4927
  %v5788 = vunpack.c.h.b16 %v4927
  %v5789 = vunpack.c.l.b16 %v4928
  %v5790 = vunpack.c.h.b16 %v4928
  %v5791 = vunpack.c.l.b16 %v4929
  %v5792 = vunpack.c.h.b16 %v4929
  %v5793 = vunpack.c.l.b16 %v4930
  %v5794 = vunpack.c.h.b16 %v4930
  %v5795 = vunpack.c.l.b16 %v4931
  %v5796 = vunpack.c.l.b16 %v4932
  %v5797 = vunpack.c.h.b16 %v4932
  %v5798 = vunpack.c.l.b16 %v4933
  %v5799 = vunpack.c.h.b16 %v4933
  %v5800 = vunpack.c.l.b16 %v4934
  %v5801 = vunpack.c.h.b16 %v4934
  %v5802 = vunpack.c.l.b16 %v4935
  %v5803 = vunpack.c.h.b16 %v4935
  %v5804 = vunpack.c.l.b16 %v4936
  %v5805 = vunpack.c.l.b16 %v4937
  %v5806 = vunpack.c.h.b16 %v4937
  %v5807 = vunpack.c.l.b16 %v4938
  %v5808 = vunpack.c.h.b16 %v4938
  %v5809 = vunpack.c.l.b16 %v4939
  %v5810 = vunpack.c.h.b16 %v4939
  %v5811 = vunpack.c.l.b16 %v4940
  %v5812 = vunpack.c.h.b16 %v4940
  %v5813 = vunpack.c.l.b16 %v4941
  %v5814 = vunpack.c.l.b16 %v4942
  %v5815 = vunpack.c.h.b16 %v4942
  %v5816 = vunpack.c.l.b16 %v4943
  %v5817 = vunpack.c.h.b16 %v4943
  %v5818 = vunpack.c.l.b16 %v4944
  %v5819 = vunpack.c.h.b16 %v4944
  %v5820 = vunpack.c.l.b16 %v4945
  %v5821 = vunpack.c.h.b16 %v4945
  %v5822 = vunpack.c.l.b16 %v4946
  %v5823 = vunpack.c.l.b16 %v4947
  %v5824 = vunpack.c.h.b16 %v4947
  %v5825 = vunpack.c.l.b16 %v4948
  %v5826 = vunpack.c.h.b16 %v4948
  %v5827 = vunpack.c.l.b16 %v4949
  %v5828 = vunpack.c.h.b16 %v4949
  %v5829 = vunpack.c.l.b16 %v4950
  %v5830 = vunpack.c.h.b16 %v4950
  %v5831 = vunpack.c.l.b16 %v4951
  %v5832 = vunpack.c.l.b16 %v4952
  %v5833 = vunpack.c.h.b16 %v4952
  %v5834 = vunpack.c.l.b16 %v4953
  %v5835 = vunpack.c.h.b16 %v4953
  %v5836 = vunpack.c.l.b16 %v4954
  %v5837 = vunpack.c.h.b16 %v4954
  %v5838 = vunpack.c.l.b16 %v4955
  %v5839 = vunpack.c.h.b16 %v4955
  %v5840 = vunpack.c.l.b16 %v4956
  %v5841 = vunpack.c.l.b16 %v4957
  %v5842 = vunpack.c.h.b16 %v4957
  %v5843 = vunpack.c.l.b16 %v4958
  %v5844 = vunpack.c.h.b16 %v4958
  %v5845 = vunpack.c.l.b16 %v4959
  %v5846 = vunpack.c.h.b16 %v4959
  %v5847 = vunpack.c.l.b16 %v4960
  %v5848 = vunpack.c.h.b16 %v4960
  %v5849 = vunpack.c.l.b16 %v4961
  %v5850 = vunpack.c.l.b16 %v4962
  %v5851 = vunpack.c.h.b16 %v4962
  %v5852 = vunpack.c.l.b16 %v4963
  %v5853 = vunpack.c.h.b16 %v4963
  %v5854 = vunpack.c.l.b16 %v4964
  %v5855 = vunpack.c.h.b16 %v4964
  %v5856 = vunpack.c.l.b16 %v4965
  %v5857 = vunpack.c.h.b16 %v4965
  %v5858 = vunpack.c.l.b16 %v4966
  %v5859 = vunpack.c.l.b16 %v4967
  %v5860 = vunpack.c.h.b16 %v4967
  %v5861 = vunpack.c.l.b16 %v4968
  %v5862 = vunpack.c.h.b16 %v4968
  %v5863 = vunpack.c.l.b16 %v4969
  %v5864 = vunpack.c.h.b16 %v4969
  %v5865 = vunpack.c.l.b16 %v4970
  %v5866 = vunpack.c.h.b16 %v4970
  %v5867 = vunpack.c.l.b16 %v4971
  %v5868 = vunpack.c.l.b16 %v4972
  %v5869 = vunpack.c.h.b16 %v4972
  %v5870 = vunpack.c.l.b16 %v4973
  %v5871 = vunpack.c.h.b16 %v4973
  %v5872 = vunpack.c.l.b16 %v4974
  %v5873 = vunpack.c.h.b16 %v4974
  %v5874 = vunpack.c.l.b16 %v4975
  %v5875 = vunpack.c.h.b16 %v4975
  %v5876 = vunpack.c.l.b16 %v4976
  %v5877 = vunpack.c.l.b16 %v4977
  %v5878 = vunpack.c.h.b16 %v4977
  %v5879 = vunpack.c.l.b16 %v4978
  %v5880 = vunpack.c.h.b16 %v4978
  %v5881 = vunpack.c.l.b16 %v4979
  %v5882 = vunpack.c.h.b16 %v4979
  %v5883 = vunpack.c.l.b16 %v4980
  %v5884 = vunpack.c.h.b16 %v4980
  %v5885 = vunpack.c.l.b16 %v4981
  %v5886 = vunpack.c.l.b16 %v4982
  %v5887 = vunpack.c.h.b16 %v4982
  %v5888 = vunpack.c.l.b16 %v4983
  %v5889 = vunpack.c.h.b16 %v4983
  %v5890 = vunpack.c.l.b16 %v4984
  %v5891 = vunpack.c.h.b16 %v4984
  %v5892 = vunpack.c.l.b16 %v4985
  %v5893 = vunpack.c.h.b16 %v4985
  %v5894 = vunpack.c.l.b16 %v4986
  %v5895 = vunpack.c.l.b16 %v4987
  %v5896 = vunpack.c.h.b16 %v4987
  %v5897 = vunpack.c.l.b16 %v4988
  %v5898 = vunpack.c.h.b16 %v4988
  %v5899 = vunpack.c.l.b16 %v4989
  %v5900 = vunpack.c.h.b16 %v4989
  %v5901 = vunpack.c.l.b16 %v4990
  %v5902 = vunpack.c.h.b16 %v4990
  %v5903 = vunpack.c.l.b16 %v4991
  %v5904 = vunpack.c.l.b16 %v4992
  %v5905 = vunpack.c.h.b16 %v4992
  %v5906 = vunpack.c.l.b16 %v4993
  %v5907 = vunpack.c.h.b16 %v4993
  %v5908 = vunpack.c.l.b16 %v4994
  %v5909 = vunpack.c.h.b16 %v4994
  %v5910 = vunpack.c.l.b16 %v4995
  %v5911 = vunpack.c.h.b16 %v4995
  %v5912 = vunpack.c.l.b16 %v4996
  %v5913 = vunpack.c.l.b16 %v4997
  %v5914 = vunpack.c.h.b16 %v4997
  %v5915 = vunpack.c.l.b16 %v4998
  %v5916 = vunpack.c.h.b16 %v4998
  %v5917 = vunpack.c.l.b16 %v4999
  %v5918 = vunpack.c.h.b16 %v4999
  %v5919 = vunpack.c.l.b16 %v5000
  %v5920 = vunpack.c.h.b16 %v5000
  %v5921 = vunpack.c.l.b16 %v5001
  %v5922 = vunpack.c.l.b16 %v5002
  %v5923 = vunpack.c.h.b16 %v5002
  %v5924 = vunpack.c.l.b16 %v5003
  %v5925 = vunpack.c.h.b16 %v5003
  %v5926 = vunpack.c.l.b16 %v5004
  %v5927 = vunpack.c.h.b16 %v5004
  %v5928 = vunpack.c.l.b16 %v5005
  %v5929 = vunpack.c.h.b16 %v5005
  %v5930 = vunpack.c.l.b16 %v5006
  %v5931 = vunpack.c.l.b16 %v5007
  %v5932 = vunpack.c.h.b16 %v5007
  %v5933 = vunpack.c.l.b16 %v5008
  %v5934 = vunpack.c.h.b16 %v5008
  %v5935 = vunpack.c.l.b16 %v5009
  %v5936 = vunpack.c.h.b16 %v5009
  %v5937 = vunpack.c.l.b16 %v5010
  %v5938 = vunpack.c.h.b16 %v5010
  %v5939 = vunpack.c.l.b16 %v5011
  %v5940 = vunpack.c.l.b16 %v5012
  %v5941 = vunpack.c.h.b16 %v5012
  %v5942 = vunpack.c.l.b16 %v5013
  %v5943 = vunpack.c.h.b16 %v5013
  %v5944 = vunpack.c.l.b16 %v5014
  %v5945 = vunpack.c.h.b16 %v5014
  %v5946 = vunpack.c.l.b16 %v5015
  %v5947 = vunpack.c.h.b16 %v5015
  %v5948 = vunpack.c.l.b16 %v5016
  %v5949 = vunpack.c.l.b16 %v5017
  %v5950 = vunpack.c.h.b16 %v5017
  %v5951 = vunpack.c.l.b16 %v5018
  %v5952 = vunpack.c.h.b16 %v5018
  %v5953 = vunpack.c.l.b16 %v5019
  %v5954 = vunpack.c.h.b16 %v5019
  %v5955 = vunpack.c.l.b16 %v5020
  %v5956 = vunpack.c.h.b16 %v5020
  %v5957 = vunpack.c.l.b16 %v5021
  %v5958 = vunpack.c.l.b16 %v5022
  %v5959 = vunpack.c.h.b16 %v5022
  %v5960 = vunpack.c.l.b16 %v5023
  %v5961 = vunpack.c.h.b16 %v5023
  %v5962 = vunpack.c.l.b16 %v5024
  %v5963 = vunpack.c.h.b16 %v5024
  %v5964 = vunpack.c.l.b16 %v5025
  %v5965 = vunpack.c.h.b16 %v5025
  %v5966 = vunpack.c.l.b16 %v5026
  %v5967 = vunpack.c.l.b16 %v5027
  %v5968 = vunpack.c.h.b16 %v5027
  %v5969 = vunpack.c.l.b16 %v5028
  %v5970 = vunpack.c.h.b16 %v5028
  %v5971 = vunpack.c.l.b16 %v5029
  %v5972 = vunpack.c.h.b16 %v5029
  %v5973 = vunpack.c.l.b16 %v5030
  %v5974 = vunpack.c.h.b16 %v5030
  %v5975 = vunpack.c.l.b16 %v5031
  %v5976 = vunpack.c.l.b16 %v5032
  %v5977 = vunpack.c.h.b16 %v5032
  %v5978 = vunpack.c.l.b16 %v5033
  %v5979 = vunpack.c.h.b16 %v5033
  %v5980 = vunpack.c.l.b16 %v5034
  %v5981 = vunpack.c.h.b16 %v5034
  %v5982 = vunpack.c.l.b16 %v5035
  %v5983 = vunpack.c.h.b16 %v5035
  %v5984 = vunpack.c.l.b16 %v5036
  %v5985 = vunpack.c.l.b16 %v5037
  %v5986 = vunpack.c.h.b16 %v5037
  %v5987 = vunpack.c.l.b16 %v5038
  %v5988 = vunpack.c.h.b16 %v5038
  %v5989 = vunpack.c.l.b16 %v5039
  %v5990 = vunpack.c.h.b16 %v5039
  %v5991 = vunpack.c.l.b16 %v5040
  %v5992 = vunpack.c.h.b16 %v5040
  %v5993 = vunpack.c.l.b16 %v5041
  %v5994 = vunpack.c.l.b16 %v5042
  %v5995 = vunpack.c.h.b16 %v5042
  %v5996 = vunpack.c.l.b16 %v5043
  %v5997 = vunpack.c.h.b16 %v5043
  %v5998 = vunpack.c.l.b16 %v5044
  %v5999 = vunpack.c.h.b16 %v5044
  %v6000 = vunpack.c.l.b16 %v5045
  %v6001 = vunpack.c.h.b16 %v5045
  %v6002 = vunpack.c.l.b16 %v5046
  %v6003 = vunpack.c.l.b16 %v5047
  %v6004 = vunpack.c.h.b16 %v5047
  %v6005 = vunpack.c.l.b16 %v5048
  %v6006 = vunpack.c.h.b16 %v5048
  %v6007 = vunpack.c.l.b16 %v5049
  %v6008 = vunpack.c.h.b16 %v5049
  %v6009 = vunpack.c.l.b16 %v5050
  %v6010 = vunpack.c.h.b16 %v5050
  %v6011 = vunpack.c.l.b16 %v5051
  %v6012 = vunpack.c.l.b16 %v5052
  %v6013 = vunpack.c.h.b16 %v5052
  %v6014 = vunpack.c.l.b16 %v5053
  %v6015 = vunpack.c.h.b16 %v5053
  %v6016 = vunpack.c.l.b16 %v5054
  %v6017 = vunpack.c.h.b16 %v5054
  %v6018 = vunpack.c.l.b16 %v5055
  %v6019 = vunpack.c.h.b16 %v5055
  %v6020 = vunpack.c.l.b16 %v5056
  %v6021 = vunpack.c.l.b16 %v5057
  %v6022 = vunpack.c.h.b16 %v5057
  %v6023 = vunpack.c.l.b16 %v5058
  %v6024 = vunpack.c.h.b16 %v5058
  %v6025 = vunpack.c.l.b16 %v5059
  %v6026 = vunpack.c.h.b16 %v5059
  %v6027 = vunpack.c.l.b16 %v5060
  %v6028 = vunpack.c.h.b16 %v5060
  %v6029 = vunpack.c.l.b16 %v5061
  %v6030 = vunpack.c.l.b16 %v5062
  %v6031 = vunpack.c.h.b16 %v5062
  %v6032 = vunpack.c.l.b16 %v5063
  %v6033 = vunpack.c.h.b16 %v5063
  %v6034 = vunpack.c.l.b16 %v5064
  %v6035 = vunpack.c.h.b16 %v5064
  %v6036 = vunpack.c.l.b16 %v5065
  %v6037 = vunpack.c.h.b16 %v5065
  %v6038 = vunpack.c.l.b16 %v5066
  %v6039 = vunpack.c.l.b16 %v5067
  %v6040 = vunpack.c.h.b16 %v5067
  %v6041 = vunpack.c.l.b16 %v5068
  %v6042 = vunpack.c.h.b16 %v5068
  %v6043 = vunpack.c.l.b16 %v5069
  %v6044 = vunpack.c.h.b16 %v5069
  %v6045 = vunpack.c.l.b16 %v5070
  %v6046 = vunpack.c.h.b16 %v5070
  %v6047 = vunpack.c.l.b16 %v5071
  %v6048 = vunpack.c.l.b16 %v5072
  %v6049 = vunpack.c.h.b16 %v5072
  %v6050 = vunpack.c.l.b16 %v5073
  %v6051 = vunpack.c.h.b16 %v5073
  %v6052 = vunpack.c.l.b16 %v5074
  %v6053 = vunpack.c.h.b16 %v5074
  %v6054 = vunpack.c.l.b16 %v5075
  %v6055 = vunpack.c.h.b16 %v5075
  %v6056 = vunpack.c.l.b16 %v5076
  %v6057 = vunpack.c.l.b16 %v5077
  %v6058 = vunpack.c.h.b16 %v5077
  %v6059 = vunpack.c.l.b16 %v5078
  %v6060 = vunpack.c.h.b16 %v5078
  %v6061 = vunpack.c.l.b16 %v5079
  %v6062 = vunpack.c.h.b16 %v5079
  %v6063 = vunpack.c.l.b16 %v5080
  %v6064 = vunpack.c.h.b16 %v5080
  %v6065 = vunpack.c.l.b16 %v5081
  %v6066 = vunpack.c.l.b16 %v5082
  %v6067 = vunpack.c.h.b16 %v5082
  %v6068 = vunpack.c.l.b16 %v5083
  %v6069 = vunpack.c.h.b16 %v5083
  %v6070 = vunpack.c.l.b16 %v5084
  %v6071 = vunpack.c.h.b16 %v5084
  %v6072 = vunpack.c.l.b16 %v5085
  %v6073 = vunpack.c.h.b16 %v5085
  %v6074 = vunpack.c.l.b16 %v5086
  %v6075 = vunpack.c.l.b16 %v5087
  %v6076 = vunpack.c.h.b16 %v5087
  %v6077 = vunpack.c.l.b16 %v5088
  %v6078 = vunpack.c.h.b16 %v5088
  %v6079 = vunpack.c.l.b16 %v5089
  %v6080 = vunpack.c.h.b16 %v5089
  %v6081 = vunpack.c.l.b16 %v5090
  %v6082 = vunpack.c.h.b16 %v5090
  %v6083 = vunpack.c.l.b16 %v5091
  %v6084 = vunpack.c.l.b16 %v5092
  %v6085 = vunpack.c.h.b16 %v5092
  %v6086 = vunpack.c.l.b16 %v5093
  %v6087 = vunpack.c.h.b16 %v5093
  %v6088 = vunpack.c.l.b16 %v5094
  %v6089 = vunpack.c.h.b16 %v5094
  %v6090 = vunpack.c.l.b16 %v5095
  %v6091 = vunpack.c.h.b16 %v5095
  %v6092 = vunpack.c.l.b16 %v5096
  %v6093 = vunpack.c.l.b16 %v5097
  %v6094 = vunpack.c.h.b16 %v5097
  %v6095 = vunpack.c.l.b16 %v5098
  %v6096 = vunpack.c.h.b16 %v5098
  %v6097 = vunpack.c.l.b16 %v5099
  %v6098 = vunpack.c.h.b16 %v5099
  %v6099 = vunpack.c.l.b16 %v5100
  %v6100 = vunpack.c.h.b16 %v5100
  %v6101 = vunpack.c.l.b16 %v5101
  %v6102 = vunpack.c.l.b16 %v5102
  %v6103 = vunpack.c.h.b16 %v5102
  %v6104 = vunpack.c.l.b16 %v5103
  %v6105 = vunpack.c.h.b16 %v5103
  %v6106 = vunpack.c.l.b16 %v5104
  %v6107 = vunpack.c.h.b16 %v5104
  %v6108 = vunpack.c.l.b16 %v5105
  %v6109 = vunpack.c.h.b16 %v5105
  %v6110 = vunpack.c.l.b16 %v5106
  %v6111 = vunpack.c.l.b16 %v5107
  %v6112 = vunpack.c.h.b16 %v5107
  %v6113 = vunpack.c.l.b16 %v5108
  %v6114 = vunpack.c.h.b16 %v5108
  %v6115 = vunpack.c.l.b16 %v5109
  %v6116 = vunpack.c.h.b16 %v5109
  %v6117 = vunpack.c.l.b16 %v5110
  %v6118 = vunpack.c.h.b16 %v5110
  %v6119 = vunpack.c.l.b16 %v5111
  %v6120 = vunpack.c.l.b16 %v5112
  %v6121 = vunpack.c.h.b16 %v5112
  %v6122 = vunpack.c.l.b16 %v5113
  %v6123 = vunpack.c.h.b16 %v5113
  %v6124 = vunpack.c.l.b16 %v5114
  %v6125 = vunpack.c.h.b16 %v5114
  %v6126 = vunpack.c.l.b16 %v5115
  %v6127 = vunpack.c.h.b16 %v5115
  %v6128 = vunpack.c.l.b16 %v5116
  %v6129 = vunpack.c.l.b16 %v5117
  %v6130 = vunpack.c.h.b16 %v5117
  %v6131 = vunpack.c.l.b16 %v5118
  %v6132 = vunpack.c.h.b16 %v5118
  %v6133 = vunpack.c.l.b16 %v5119
  %v6134 = vunpack.c.h.b16 %v5119
  %v6135 = vunpack.c.l.b16 %v5120
  %v6136 = vunpack.c.h.b16 %v5120
  %v6137 = vunpack.c.l.b16 %v5121
  %v6138 = vunpack.c.l.b16 %v5122
  %v6139 = vunpack.c.h.b16 %v5122
  %v6140 = vunpack.c.l.b16 %v5123
  %v6141 = vunpack.c.h.b16 %v5123
  %v6142 = vunpack.c.l.b16 %v5124
  %v6143 = vunpack.c.h.b16 %v5124
  %v6144 = vunpack.c.l.b16 %v5125
  %v6145 = vunpack.c.h.b16 %v5125
  %v6146 = vunpack.c.l.b16 %v5126
  %v6147 = vunpack.c.l.b16 %v5127
  %v6148 = vunpack.c.h.b16 %v5127
  %v6149 = vunpack.c.l.b16 %v5128
  %v6150 = vunpack.c.h.b16 %v5128
  %v6151 = vunpack.c.l.b16 %v5129
  %v6152 = vunpack.c.h.b16 %v5129
  %v6153 = vunpack.c.l.b16 %v5130
  %v6154 = vunpack.c.h.b16 %v5130
  %v6155 = vunpack.c.l.b16 %v5131
  %v6156 = vunpack.c.l.b16 %v5132
  %v6157 = vunpack.c.h.b16 %v5132
  %v6158 = vunpack.c.l.b16 %v5133
  %v6159 = vunpack.c.h.b16 %v5133
  %v6160 = vunpack.c.l.b16 %v5134
  %v6161 = vunpack.c.h.b16 %v5134
  %v6162 = vunpack.c.l.b16 %v5135
  %v6163 = vunpack.c.h.b16 %v5135
  %v6164 = vunpack.c.l.b16 %v5136
  %v6165 = vunpack.c.l.b16 %v5137
  %v6166 = vunpack.c.h.b16 %v5137
  %v6167 = vunpack.c.l.b16 %v5138
  %v6168 = vunpack.c.h.b16 %v5138
  %v6169 = vunpack.c.l.b16 %v5139
  %v6170 = vunpack.c.h.b16 %v5139
  %v6171 = vunpack.c.l.b16 %v5140
  %v6172 = vunpack.c.h.b16 %v5140
  %v6173 = vunpack.c.l.b16 %v5141
  %v6174 = vunpack.c.l.b16 %v5142
  %v6175 = vunpack.c.h.b16 %v5142
  %v6176 = vunpack.c.l.b16 %v5143
  %v6177 = vunpack.c.h.b16 %v5143
  %v6178 = vunpack.c.l.b16 %v5144
  %v6179 = vunpack.c.h.b16 %v5144
  %v6180 = vunpack.c.l.b16 %v5145
  %v6181 = vunpack.c.h.b16 %v5145
  %v6182 = vunpack.c.l.b16 %v5146
  %v6183 = vunpack.c.l.b16 %v5147
  %v6184 = vunpack.c.h.b16 %v5147
  %v6185 = vunpack.c.l.b16 %v5148
  %v6186 = vunpack.c.h.b16 %v5148
  %v6187 = vunpack.c.l.b16 %v5149
  %v6188 = vunpack.c.h.b16 %v5149
  %v6189 = vunpack.c.l.b16 %v5150
  %v6190 = vunpack.c.h.b16 %v5150
  %v6191 = vunpack.c.l.b16 %v5151
  %v6192 = vpack.c.b16 %v5625, %v5616
  %v6193 = vpack.c.b16 %v5626, %v5617
  %v6194 = vpack.c.b16 %v5627, %v5618
  %v6195 = vpack.c.b16 %v5628, %v5619
  %v6196 = vpack.c.b16 %v5629, %v5620
  %v6197 = vpack.c.b16 %v5630, %v5621
  %v6198 = vpack.c.b16 %v5631, %v5622
  %v6199 = vpack.c.b16 %v5632, %v5623
  %v6200 = vpack.c.b16 %v5633, %v5624
  %v6201 = vpack.c.b16 %v5643, %v5634
  %v6202 = vpack.c.b16 %v5644, %v5635
  %v6203 = vpack.c.b16 %v5645, %v5636
  %v6204 = vpack.c.b16 %v5646, %v5637
  %v6205 = vpack.c.b16 %v5647, %v5638
  %v6206 = vpack.c.b16 %v5648, %v5639
  %v6207 = vpack.c.b16 %v5649, %v5640
  %v6208 = vpack.c.b16 %v5650, %v5641
  %v6209 = vpack.c.b16 %v5651, %v5642
  %v6210 = vpack.c.b16 %v5661, %v5652
  %v6211 = vpack.c.b16 %v5662, %v5653
  %v6212 = vpack.c.b16 %v5663, %v5654
  %v6213 = vpack.c.b16 %v5664, %v5655
  %v6214 = vpack.c.b16 %v5665, %v5656
  %v6215 = vpack.c.b16 %v5666, %v5657
  %v6216 = vpack.c.b16 %v5667, %v5658
  %v6217 = vpack.c.b16 %v5668, %v5659
  %v6218 = vpack.c.b16 %v5669, %v5660
  %v6219 = vpack.c.b16 %v5679, %v5670
  %v6220 = vpack.c.b16 %v5680, %v5671
  %v6221 = vpack.c.b16 %v5681, %v5672
  %v6222 = vpack.c.b16 %v5682, %v5673
  %v6223 = vpack.c.b16 %v5683, %v5674
  %v6224 = vpack.c.b16 %v5684, %v5675
  %v6225 = vpack.c.b16 %v5685, %v5676
  %v6226 = vpack.c.b16 %v5686, %v5677
  %v6227 = vpack.c.b16 %v5687, %v5678
  %v6228 = vpack.c.b16 %v5697, %v5688
  %v6229 = vpack.c.b16 %v5698, %v5689
  %v6230 = vpack.c.b16 %v5699, %v5690
  %v6231 = vpack.c.b16 %v5700, %v5691
  %v6232 = vpack.c.b16 %v5701, %v5692
  %v6233 = vpack.c.b16 %v5702, %v5693
  %v6234 = vpack.c.b16 %v5703, %v5694
  %v6235 = vpack.c.b16 %v5704, %v5695
  %v6236 = vpack.c.b16 %v5705, %v5696
  %v6237 = vpack.c.b16 %v5715, %v5706
  %v6238 = vpack.c.b16 %v5716, %v5707
  %v6239 = vpack.c.b16 %v5717, %v5708
  %v6240 = vpack.c.b16 %v5718, %v5709
  %v6241 = vpack.c.b16 %v5719, %v5710
  %v6242 = vpack.c.b16 %v5720, %v5711
  %v6243 = vpack.c.b16 %v5721, %v5712
  %v6244 = vpack.c.b16 %v5722, %v5713
  %v6245 = vpack.c.b16 %v5723, %v5714
  %v6246 = vpack.c.b16 %v5733, %v5724
  %v6247 = vpack.c.b16 %v5734, %v5725
  %v6248 = vpack.c.b16 %v5735, %v5726
  %v6249 = vpack.c.b16 %v5736, %v5727
  %v6250 = vpack.c.b16 %v5737, %v5728
  %v6251 = vpack.c.b16 %v5738, %v5729
  %v6252 = vpack.c.b16 %v5739, %v5730
  %v6253 = vpack.c.b16 %v5740, %v5731
  %v6254 = vpack.c.b16 %v5741, %v5732
  %v6255 = vpack.c.b16 %v5751, %v5742
  %v6256 = vpack.c.b16 %v5752, %v5743
  %v6257 = vpack.c.b16 %v5753, %v5744
  %v6258 = vpack.c.b16 %v5754, %v5745
  %v6259 = vpack.c.b16 %v5755, %v5746
  %v6260 = vpack.c.b16 %v5756, %v5747
  %v6261 = vpack.c.b16 %v5757, %v5748
  %v6262 = vpack.c.b16 %v5758, %v5749
  %v6263 = vpack.c.b16 %v5759, %v5750
  %v6264 = vpack.c.b16 %v5769, %v5760
  %v6265 = vpack.c.b16 %v5770, %v5761
  %v6266 = vpack.c.b16 %v5771, %v5762
  %v6267 = vpack.c.b16 %v5772, %v5763
  %v6268 = vpack.c.b16 %v5773, %v5764
  %v6269 = vpack.c.b16 %v5774, %v5765
  %v6270 = vpack.c.b16 %v5775, %v5766
  %v6271 = vpack.c.b16 %v5776, %v5767
  %v6272 = vpack.c.b16 %v5777, %v5768
  %v6273 = vpack.c.b16 %v5787, %v5778
  %v6274 = vpack.c.b16 %v5788, %v5779
  %v6275 = vpack.c.b16 %v5789, %v5780
  %v6276 = vpack.c.b16 %v5790, %v5781
  %v6277 = vpack.c.b16 %v5791, %v5782
  %v6278 = vpack.c.b16 %v5792, %v5783
  %v6279 = vpack.c.b16 %v5793, %v5784
  %v6280 = vpack.c.b16 %v5794, %v5785
  %v6281 = vpack.c.b16 %v5795, %v5786
  %v6282 = vpack.c.b16 %v5805, %v5796
  %v6283 = vpack.c.b16 %v5806, %v5797
  %v6284 = vpack.c.b16 %v5807, %v5798
  %v6285 = vpack.c.b16 %v5808, %v5799
  %v6286 = vpack.c.b16 %v5809, %v5800
  %v6287 = vpack.c.b16 %v5810, %v5801
  %v6288 = vpack.c.b16 %v5811, %v5802
  %v6289 = vpack.c.b16 %v5812, %v5803
  %v6290 = vpack.c.b16 %v5813, %v5804
  %v6291 = vpack.c.b16 %v5823, %v5814
  %v6292 = vpack.c.b16 %v5824, %v5815
  %v6293 = vpack.c.b16 %v5825, %v5816
  %v6294 = vpack.c.b16 %v5826, %v5817
  %v6295 = vpack.c.b16 %v5827, %v5818
  %v6296 = vpack.c.b16 %v5828, %v5819
  %v6297 = vpack.c.b16 %v5829, %v5820
  %v6298 = vpack.c.b16 %v5830, %v5821
  %v6299 = vpack.c.b16 %v5831, %v5822
  %v6300 = vpack.c.b16 %v5841, %v5832
  %v6301 = vpack.c.b16 %v5842, %v5833
  %v6302 = vpack.c.b16 %v5843, %v5834
  %v6303 = vpack.c.b16 %v5844, %v5835
  %v6304 = vpack.c.b16 %v5845, %v5836
  %v6305 = vpack.c.b16 %v5846, %v5837
  %v6306 = vpack.c.b16 %v5847, %v5838
  %v6307 = vpack.c.b16 %v5848, %v5839
  %v6308 = vpack.c.b16 %v5849, %v5840
  %v6309 = vpack.c.b16 %v5859, %v5850
  %v6310 = vpack.c.b16 %v5860, %v5851
  %v6311 = vpack.c.b16 %v5861, %v5852
  %v6312 = vpack.c.b16 %v5862, %v5853
  %v6313 = vpack.c.b16 %v5863, %v5854
  %v6314 = vpack.c.b16 %v5864, %v5855
  %v6315 = vpack.c.b16 %v5865, %v5856
  %v6316 = vpack.c.b16 %v5866, %v5857
  %v6317 = vpack.c.b16 %v5867, %v5858
  %v6318 = vpack.c.b16 %v5877, %v5868
  %v6319 = vpack.c.b16 %v5878, %v5869
  %v6320 = vpack.c.b16 %v5879, %v5870
  %v6321 = vpack.c.b16 %v5880, %v5871
  %v6322 = vpack.c.b16 %v5881, %v5872
  %v6323 = vpack.c.b16 %v5882, %v5873
  %v6324 = vpack.c.b16 %v5883, %v5874
  %v6325 = vpack.c.b16 %v5884, %v5875
  %v6326 = vpack.c.b16 %v5885, %v5876
  %v6327 = vpack.c.b16 %v5895, %v5886
  %v6328 = vpack.c.b16 %v5896, %v5887
  %v6329 = vpack.c.b16 %v5897, %v5888
  %v6330 = vpack.c.b16 %v5898, %v5889
  %v6331 = vpack.c.b16 %v5899, %v5890
  %v6332 = vpack.c.b16 %v5900, %v5891
  %v6333 = vpack.c.b16 %v5901, %v5892
  %v6334 = vpack.c.b16 %v5902, %v5893
  %v6335 = vpack.c.b16 %v5903, %v5894
  %v6336 = vpack.c.b16 %v5913, %v5904
  %v6337 = vpack.c.b16 %v5914, %v5905
  %v6338 = vpack.c.b16 %v5915, %v5906
  %v6339 = vpack.c.b16 %v5916, %v5907
  %v6340 = vpack.c.b16 %v5917, %v5908
  %v6341 = vpack.c.b16 %v5918, %v5909
  %v6342 = vpack.c.b16 %v5919, %v5910
  %v6343 = vpack.c.b16 %v5920, %v5911
  %v6344 = vpack.c.b16 %v5921, %v5912
  %v6345 = vpack.c.b16 %v5931, %v5922
  %v6346 = vpack.c.b16 %v5932, %v5923
  %v6347 = vpack.c.b16 %v5933, %v5924
  %v6348 = vpack.c.b16 %v5934, %v5925
  %v6349 = vpack.c.b16 %v5935, %v5926
  %v6350 = vpack.c.b16 %v5936, %v5927
  %v6351 = vpack.c.b16 %v5937, %v5928
  %v6352 = vpack.c.b16 %v5938, %v5929
  %v6353 = vpack.c.b16 %v5939, %v5930
  %v6354 = vpack.c.b16 %v5949, %v5940
  %v6355 = vpack.c.b16 %v5950, %v5941
  %v6356 = vpack.c.b16 %v5951, %v5942
  %v6357 = vpack.c.b16 %v5952, %v5943
  %v6358 = vpack.c.b16 %v5953, %v5944
  %v6359 = vpack.c.b16 %v5954, %v5945
  %v6360 = vpack.c.b16 %v5955, %v5946
  %v6361 = vpack.c.b16 %v5956, %v5947
  %v6362 = vpack.c.b16 %v5957, %v5948
  %v6363 = vpack.c.b16 %v5967, %v5958
  %v6364 = vpack.c.b16 %v5968, %v5959
  %v6365 = vpack.c.b16 %v5969, %v5960
  %v6366 = vpack.c.b16 %v5970, %v5961
  %v6367 = vpack.c.b16 %v5971, %v5962
  %v6368 = vpack.c.b16 %v5972, %v5963
  %v6369 = vpack.c.b16 %v5973, %v5964
  %v6370 = vpack.c.b16 %v5974, %v5965
  %v6371 = vpack.c.b16 %v5975, %v5966
  %v6372 = vpack.c.b16 %v5985, %v5976
  %v6373 = vpack.c.b16 %v5986, %v5977
  %v6374 = vpack.c.b16 %v5987, %v5978
  %v6375 = vpack.c.b16 %v5988, %v5979
  %v6376 = vpack.c.b16 %v5989, %v5980
  %v6377 = vpack.c.b16 %v5990, %v5981
  %v6378 = vpack.c.b16 %v5991, %v5982
  %v6379 = vpack.c.b16 %v5992, %v5983
  %v6380 = vpack.c.b16 %v5993, %v5984
  %v6381 = vpack.c.b16 %v6003, %v5994
  %v6382 = vpack.c.b16 %v6004, %v5995
  %v6383 = vpack.c.b16 %v6005, %v5996
  %v6384 = vpack.c.b16 %v6006, %v5997
  %v6385 = vpack.c.b16 %v6007, %v5998
  %v6386 = vpack.c.b16 %v6008, %v5999
  %v6387 = vpack.c.b16 %v6009, %v6000
  %v6388 = vpack.c.b16 %v6010, %v6001
  %v6389 = vpack.c.b16 %v6011, %v6002
  %v6390 = vpack.c.b16 %v6021, %v6012
  %v6391 = vpack.c.b16 %v6022, %v6013
  %v6392 = vpack.c.b16 %v6023, %v6014
  %v6393 = vpack.c.b16 %v6024, %v6015
  %v6394 = vpack.c.b16 %v6025, %v6016
  %v6395 = vpack.c.b16 %v6026, %v6017
  %v6396 = vpack.c.b16 %v6027, %v6018
  %v6397 = vpack.c.b16 %v6028, %v6019
  %v6398 = vpack.c.b16 %v6029, %v6020
  %v6399 = vpack.c.b16 %v6039, %v6030
  %v6400 = vpack.c.b16 %v6040, %v6031
  %v6401 = vpack.c.b16 %v6041, %v6032
  %v6402 = vpack.c.b16 %v6042, %v6033
  %v6403 = vpack.c.b16 %v6043, %v6034
  %v6404 = vpack.c.b16 %v6044, %v6035
  %v6405 = vpack.c.b16 %v6045, %v6036
  %v6406 = vpack.c.b16 %v6046, %v6037
  %v6407 = vpack.c.b16 %v6047, %v6038
  %v6408 = vpack.c.b16 %v6057, %v6048
  %v6409 = vpack.c.b16 %v6058, %v6049
  %v6410 = vpack.c.b16 %v6059, %v6050
  %v6411 = vpack.c.b16 %v6060, %v6051
  %v6412 = vpack.c.b16 %v6061, %v6052
  %v6413 = vpack.c.b16 %v6062, %v6053
  %v6414 = vpack.c.b16 %v6063, %v6054
  %v6415 = vpack.c.b16 %v6064, %v6055
  %v6416 = vpack.c.b16 %v6065, %v6056
  %v6417 = vpack.c.b16 %v6075, %v6066
  %v6418 = vpack.c.b16 %v6076, %v6067
  %v6419 = vpack.c.b16 %v6077, %v6068
  %v6420 = vpack.c.b16 %v6078, %v6069
  %v6421 = vpack.c.b16 %v6079, %v6070
  %v6422 = vpack.c.b16 %v6080, %v6071
  %v6423 = vpack.c.b16 %v6081, %v6072
  %v6424 = vpack.c.b16 %v6082, %v6073
  %v6425 = vpack.c.b16 %v6083, %v6074
  %v6426 = vpack.c.b16 %v6093, %v6084
  %v6427 = vpack.c.b16 %v6094, %v6085
  %v6428 = vpack.c.b16 %v6095, %v6086
  %v6429 = vpack.c.b16 %v6096, %v6087
  %v6430 = vpack.c.b16 %v6097, %v6088
  %v6431 = vpack.c.b16 %v6098, %v6089
  %v6432 = vpack.c.b16 %v6099, %v6090
  %v6433 = vpack.c.b16 %v6100, %v6091
  %v6434 = vpack.c.b16 %v6101, %v6092
  %v6435 = vpack.c.b16 %v6111, %v6102
  %v6436 = vpack.c.b16 %v6112, %v6103
  %v6437 = vpack.c.b16 %v6113, %v6104
  %v6438 = vpack.c.b16 %v6114, %v6105
  %v6439 = vpack.c.b16 %v6115, %v6106
  %v6440 = vpack.c.b16 %v6116, %v6107
  %v6441 = vpack.c.b16 %v6117, %v6108
  %v6442 = vpack.c.b16 %v6118, %v6109
  %v6443 = vpack.c.b16 %v6119, %v6110
  %v6444 = vpack.c.b16 %v6129, %v6120
  %v6445 = vpack.c.b16 %v6130, %v6121
  %v6446 = vpack.c.b16 %v6131, %v6122
  %v6447 = vpack.c.b16 %v6132, %v6123
  %v6448 = vpack.c.b16 %v6133, %v6124
  %v6449 = vpack.c.b16 %v6134, %v6125
  %v6450 = vpack.c.b16 %v6135, %v6126
  %v6451 = vpack.c.b16 %v6136, %v6127
  %v6452 = vpack.c.b16 %v6137, %v6128
  %v6453 = vpack.c.b16 %v6147, %v6138
  %v6454 = vpack.c.b16 %v6148, %v6139
  %v6455 = vpack.c.b16 %v6149, %v6140
  %v6456 = vpack.c.b16 %v6150, %v6141
  %v6457 = vpack.c.b16 %v6151, %v6142
  %v6458 = vpack.c.b16 %v6152, %v6143
  %v6459 = vpack.c.b16 %v6153, %v6144
  %v6460 = vpack.c.b16 %v6154, %v6145
  %v6461 = vpack.c.b16 %v6155, %v6146
  %v6462 = vpack.c.b16 %v6165, %v6156
  %v6463 = vpack.c.b16 %v6166, %v6157
  %v6464 = vpack.c.b16 %v6167, %v6158
  %v6465 = vpack.c.b16 %v6168, %v6159
  %v6466 = vpack.c.b16 %v6169, %v6160
  %v6467 = vpack.c.b16 %v6170, %v6161
  %v6468 = vpack.c.b16 %v6171, %v6162
  %v6469 = vpack.c.b16 %v6172, %v6163
  %v6470 = vpack.c.b16 %v6173, %v6164
  %v6471 = vpack.c.b16 %v6183, %v6174
  %v6472 = vpack.c.b16 %v6184, %v6175
  %v6473 = vpack.c.b16 %v6185, %v6176
  %v6474 = vpack.c.b16 %v6186, %v6177
  %v6475 = vpack.c.b16 %v6187, %v6178
  %v6476 = vpack.c.b16 %v6188, %v6179
  %v6477 = vpack.c.b16 %v6189, %v6180
  %v6478 = vpack.c.b16 %v6190, %v6181
  %v6479 = vpack.c.b16 %v6191, %v6182
  %v6912 = vunpack.c.l.b16 %v5152
  %v6913 = vunpack.c.l.b16 %v5153
  %v6914 = vunpack.c.l.b16 %v5154
  %v6915 = vunpack.c.l.b16 %v5155
  %v6916 = vunpack.c.l.b16 %v5156
  %v6917 = vunpack.c.l.b16 %v5157
  %v6918 = vunpack.c.l.b16 %v5158
  %v6919 = vunpack.c.l.b16 %v5159
  %v6920 = vunpack.c.l.b16 %v5160
  %v6921 = vunpack.c.l.b16 %v5161
  %v6922 = vunpack.c.l.b16 %v5162
  %v6923 = vunpack.c.l.b16 %v5163
  %v6924 = vunpack.c.l.b16 %v5164
  %v6925 = vunpack.c.l.b16 %v5165
  %v6926 = vunpack.c.l.b16 %v5166
  %v6927 = vunpack.c.l.b16 %v5167
  %v6928 = vunpack.c.l.b16 %v5168
  %v6929 = vunpack.c.l.b16 %v5169
  %v6930 = vunpack.c.l.b16 %v5170
  %v6931 = vunpack.c.l.b16 %v5171
  %v6932 = vunpack.c.l.b16 %v5172
  %v6933 = vunpack.c.l.b16 %v5173
  %v6934 = vunpack.c.l.b16 %v5174
  %v6935 = vunpack.c.l.b16 %v5175
  %v6936 = vunpack.c.l.b16 %v5176
  %v6937 = vunpack.c.l.b16 %v5177
  %v6938 = vunpack.c.l.b16 %v5178
  %v6939 = vunpack.c.l.b16 %v5179
  %v6940 = vunpack.c.l.b16 %v5180
  %v6941 = vunpack.c.l.b16 %v5181
  %v6942 = vunpack.c.l.b16 %v5182
  %v6943 = vunpack.c.l.b16 %v5183
  %v6944 = vunpack.c.l.b16 %v5184
  %v6945 = vunpack.c.l.b16 %v5185
  %v6946 = vunpack.c.l.b16 %v5186
  %v6947 = vunpack.c.l.b16 %v5187
  %v6948 = vunpack.c.l.b16 %v5188
  %v6949 = vunpack.c.l.b16 %v5189
  %v6950 = vunpack.c.l.b16 %v5190
  %v6951 = vunpack.c.l.b16 %v5191
  %v6952 = vunpack.c.l.b16 %v5192
  %v6953 = vunpack.c.l.b16 %v5193
  %v6954 = vunpack.c.l.b16 %v5194
  %v6955 = vunpack.c.l.b16 %v5195
  %v6956 = vunpack.c.l.b16 %v5196
  %v6957 = vunpack.c.l.b16 %v5197
  %v6958 = vunpack.c.l.b16 %v5198
  %v6959 = vunpack.c.l.b16 %v5199
  %v6960 = vunpack.c.l.b16 %v5200
  %v6961 = vunpack.c.l.b16 %v5201
  %v6962 = vunpack.c.l.b16 %v5202
  %v6963 = vunpack.c.l.b16 %v5203
  %v6964 = vunpack.c.l.b16 %v5204
  %v6965 = vunpack.c.l.b16 %v5205
  %v6966 = vunpack.c.l.b16 %v5206
  %v6967 = vunpack.c.l.b16 %v5207
  %v6968 = vunpack.c.l.b16 %v5208
  %v6969 = vunpack.c.l.b16 %v5209
  %v6970 = vunpack.c.l.b16 %v5210
  %v6971 = vunpack.c.l.b16 %v5211
  %v6972 = vunpack.c.l.b16 %v5212
  %v6973 = vunpack.c.l.b16 %v5213
  %v6974 = vunpack.c.l.b16 %v5214
  %v6975 = vunpack.c.l.b16 %v5215
  %v6976 = vunpack.c.l.b16 %v5216
  %v6977 = vunpack.c.l.b16 %v5217
  %v6978 = vunpack.c.l.b16 %v5218
  %v6979 = vunpack.c.l.b16 %v5219
  %v6980 = vunpack.c.l.b16 %v5220
  %v6981 = vunpack.c.l.b16 %v5221
  %v6982 = vunpack.c.l.b16 %v5222
  %v6983 = vunpack.c.l.b16 %v5223
  %v6984 = vunpack.c.l.b16 %v5224
  %v6985 = vunpack.c.l.b16 %v5225
  %v6986 = vunpack.c.l.b16 %v5226
  %v6987 = vunpack.c.l.b16 %v5227
  %v6988 = vunpack.c.l.b16 %v5228
  %v6989 = vunpack.c.l.b16 %v5229
  %v6990 = vunpack.c.l.b16 %v5230
  %v6991 = vunpack.c.l.b16 %v5231
  %v6992 = vunpack.c.l.b16 %v5232
  %v6993 = vunpack.c.l.b16 %v5233
  %v6994 = vunpack.c.l.b16 %v5234
  %v6995 = vunpack.c.l.b16 %v5235
  %v6996 = vunpack.c.l.b16 %v5236
  %v6997 = vunpack.c.l.b16 %v5237
  %v6998 = vunpack.c.l.b16 %v5238
  %v6999 = vunpack.c.l.b16 %v5239
  %v7000 = vunpack.c.l.b16 %v5240
  %v7001 = vunpack.c.l.b16 %v5241
  %v7002 = vunpack.c.l.b16 %v5242
  %v7003 = vunpack.c.l.b16 %v5243
  %v7004 = vunpack.c.l.b16 %v5244
  %v7005 = vunpack.c.l.b16 %v5245
  %v7006 = vunpack.c.l.b16 %v5246
  %v7007 = vunpack.c.l.b16 %v5247
  %v7008 = vunpack.c.l.b16 %v5248
  %v7009 = vunpack.c.l.b16 %v5249
  %v7010 = vunpack.c.l.b16 %v5250
  %v7011 = vunpack.c.l.b16 %v5251
  %v7012 = vunpack.c.l.b16 %v5252
  %v7013 = vunpack.c.l.b16 %v5253
  %v7014 = vunpack.c.l.b16 %v5254
  %v7015 = vunpack.c.l.b16 %v5255
  %v7016 = vunpack.c.l.b16 %v5256
  %v7017 = vunpack.c.l.b16 %v5257
  %v7018 = vunpack.c.l.b16 %v5258
  %v7019 = vunpack.c.l.b16 %v5259
  %v7020 = vunpack.c.l.b16 %v5260
  %v7021 = vunpack.c.l.b16 %v5261
  %v7022 = vunpack.c.l.b16 %v5262
  %v7023 = vunpack.c.l.b16 %v5263
  %v7024 = vunpack.c.l.b16 %v5264
  %v7025 = vunpack.c.l.b16 %v5265
  %v7026 = vunpack.c.l.b16 %v5266
  %v7027 = vunpack.c.l.b16 %v5267
  %v7028 = vunpack.c.l.b16 %v5268
  %v7029 = vunpack.c.l.b16 %v5269
  %v7030 = vunpack.c.l.b16 %v5270
  %v7031 = vunpack.c.l.b16 %v5271
  %v7032 = vunpack.c.l.b16 %v5272
  %v7033 = vunpack.c.l.b16 %v5273
  %v7034 = vunpack.c.l.b16 %v5274
  %v7035 = vunpack.c.l.b16 %v5275
  %v7036 = vunpack.c.l.b16 %v5276
  %v7037 = vunpack.c.l.b16 %v5277
  %v7038 = vunpack.c.l.b16 %v5278
  %v7039 = vunpack.c.l.b16 %v5279
  %v7040 = vunpack.c.l.b16 %v5280
  %v7041 = vunpack.c.l.b16 %v5281
  %v7042 = vunpack.c.l.b16 %v5282
  %v7043 = vunpack.c.l.b16 %v5283
  %v7044 = vunpack.c.l.b16 %v5284
  %v7045 = vunpack.c.l.b16 %v5285
  %v7046 = vunpack.c.l.b16 %v5286
  %v7047 = vunpack.c.l.b16 %v5287
  %v7048 = vunpack.c.l.b16 %v5288
  %v7049 = vunpack.c.l.b16 %v5289
  %v7050 = vunpack.c.l.b16 %v5290
  %v7051 = vunpack.c.l.b16 %v5291
  %v7052 = vunpack.c.l.b16 %v5292
  %v7053 = vunpack.c.l.b16 %v5293
  %v7054 = vunpack.c.l.b16 %v5294
  %v7055 = vunpack.c.l.b16 %v5295
  %v7056 = vpack.c.b16 %v6913, %v6912
  %v7057 = vpack.c.b16 %v6915, %v6914
  %v7058 = vpack.c.b16 %v6917, %v6916
  %v7059 = vpack.c.b16 %v6919, %v6918
  %v7060 = vpack.c.b16 %v6921, %v6920
  %v7061 = vpack.c.b16 %v6923, %v6922
  %v7062 = vpack.c.b16 %v6925, %v6924
  %v7063 = vpack.c.b16 %v6927, %v6926
  %v7064 = vpack.c.b16 %v6929, %v6928
  %v7065 = vpack.c.b16 %v6931, %v6930
  %v7066 = vpack.c.b16 %v6933, %v6932
  %v7067 = vpack.c.b16 %v6935, %v6934
  %v7068 = vpack.c.b16 %v6937, %v6936
  %v7069 = vpack.c.b16 %v6939, %v6938
  %v7070 = vpack.c.b16 %v6941, %v6940
  %v7071 = vpack.c.b16 %v6943, %v6942
  %v7072 = vpack.c.b16 %v6945, %v6944
  %v7073 = vpack.c.b16 %v6947, %v6946
  %v7074 = vpack.c.b16 %v6949, %v6948
  %v7075 = vpack.c.b16 %v6951, %v6950
  %v7076 = vpack.c.b16 %v6953, %v6952
  %v7077 = vpack.c.b16 %v6955, %v6954
  %v7078 = vpack.c.b16 %v6957, %v6956
  %v7079 = vpack.c.b16 %v6959, %v6958
  %v7080 = vpack.c.b16 %v6961, %v6960
  %v7081 = vpack.c.b16 %v6963, %v6962
  %v7082 = vpack.c.b16 %v6965, %v6964
  %v7083 = vpack.c.b16 %v6967, %v6966
  %v7084 = vpack.c.b16 %v6969, %v6968
  %v7085 = vpack.c.b16 %v6971, %v6970
  %v7086 = vpack.c.b16 %v6973, %v6972
  %v7087 = vpack.c.b16 %v6975, %v6974
  %v7088 = vpack.c.b16 %v6977, %v6976
  %v7089 = vpack.c.b16 %v6979, %v6978
  %v7090 = vpack.c.b16 %v6981, %v6980
  %v7091 = vpack.c.b16 %v6983, %v6982
  %v7092 = vpack.c.b16 %v6985, %v6984
  %v7093 = vpack.c.b16 %v6987, %v6986
  %v7094 = vpack.c.b16 %v6989, %v6988
  %v7095 = vpack.c.b16 %v6991, %v6990
  %v7096 = vpack.c.b16 %v6993, %v6992
  %v7097 = vpack.c.b16 %v6995, %v6994
  %v7098 = vpack.c.b16 %v6997, %v6996
  %v7099 = vpack.c.b16 %v6999, %v6998
  %v7100 = vpack.c.b16 %v7001, %v7000
  %v7101 = vpack.c.b16 %v7003, %v7002
  %v7102 = vpack.c.b16 %v7005, %v7004
  %v7103 = vpack.c.b16 %v7007, %v7006
  %v7104 = vpack.c.b16 %v7009, %v7008
  %v7105 = vpack.c.b16 %v7011, %v7010
  %v7106 = vpack.c.b16 %v7013, %v7012
  %v7107 = vpack.c.b16 %v7015, %v7014
  %v7108 = vpack.c.b16 %v7017, %v7016
  %v7109 = vpack.c.b16 %v7019, %v7018
  %v7110 = vpack.c.b16 %v7021, %v7020
  %v7111 = vpack.c.b16 %v7023, %v7022
  %v7112 = vpack.c.b16 %v7025, %v7024
  %v7113 = vpack.c.b16 %v7027, %v7026
  %v7114 = vpack.c.b16 %v7029, %v7028
  %v7115 = vpack.c.b16 %v7031, %v7030
  %v7116 = vpack.c.b16 %v7033, %v7032
  %v7117 = vpack.c.b16 %v7035, %v7034
  %v7118 = vpack.c.b16 %v7037, %v7036
  %v7119 = vpack.c.b16 %v7039, %v7038
  %v7120 = vpack.c.b16 %v7041, %v7040
  %v7121 = vpack.c.b16 %v7043, %v7042
  %v7122 = vpack.c.b16 %v7045, %v7044
  %v7123 = vpack.c.b16 %v7047, %v7046
  %v7124 = vpack.c.b16 %v7049, %v7048
  %v7125 = vpack.c.b16 %v7051, %v7050
  %v7126 = vpack.c.b16 %v7053, %v7052
  %v7127 = vpack.c.b16 %v7055, %v7054
  %7200 = vmatprep.subr.bf16.mxu0 0
  %7201 = vmatpush1.bf16.msra.mxu0 %v7063
  %7202 = vmatprep.subr.bf16.mxu0 0
  %7203 = vmatpush1.bf16.msra.mxu0 %v7062
  %7204 = vmatprep.subr.bf16.mxu0 0
  %7205 = vmatpush1.bf16.msra.mxu0 %v7061
  %7206 = vmatprep.subr.bf16.mxu0 0
  %7207 = vmatpush1.bf16.msra.mxu0 %v7060
  %7208 = vmatprep.subr.bf16.mxu0 0
  %7209 = vmatpush1.bf16.msra.mxu0 %v7059
  %7210 = vmatprep.subr.bf16.mxu0 0
  %7211 = vmatpush1.bf16.msra.mxu0 %v7058
  %7212 = vmatprep.subr.bf16.mxu0 0
  %7213 = vmatpush1.bf16.msra.mxu0 %v7057
  %7214 = vmatprep.subr.bf16.mxu0 0
  %7215 = vmatpush1.bf16.msra.mxu0 %v7056
  %7216 = vmatprep.subr.bf16.mxu0 0
  %7217 = vmatpush2.bf16.msra.mxu0 %v7071
  %7218 = vmatprep.subr.bf16.mxu0 0
  %7219 = vmatpush2.bf16.msra.mxu0 %v7070
  %7220 = vmatprep.subr.bf16.mxu0 0
  %7221 = vmatpush2.bf16.msra.mxu0 %v7069
  %7222 = vmatprep.subr.bf16.mxu0 0
  %7223 = vmatpush2.bf16.msra.mxu0 %v7068
  %7224 = vmatprep.subr.bf16.mxu0 0
  %7225 = vmatpush2.bf16.msra.mxu0 %v7067
  %7226 = vmatprep.subr.bf16.mxu0 0
  %7227 = vmatpush2.bf16.msra.mxu0 %v7066
  %7228 = vmatprep.subr.bf16.mxu0 0
  %7229 = vmatpush2.bf16.msra.mxu0 %v7065
  %7230 = vmatprep.subr.bf16.mxu0 0
  %7231 = vmatpush2.bf16.msra.mxu0 %v7064
  %7232 = vmatprep.mubr.bf16.mxu0 %v6193
  %7233 = vmatmul.mubr.bf16.gmra.mxu0 %v6192
  %v7234 = vpop.f32.mrf.mxu0
  %v7235 = vadd.f32 0.0, %v7234
  %v7236 = vpop.f32.mrf.mxu0
  %v7237 = vpop.f32.mrf.mxu0
  %v7238 = vadd.f32 0.0, %v7237
  %v7239 = vpop.f32.mrf.mxu0
  %7240 = vmatprep.mubr.bf16.mxu0 %v6202
  %7241 = vmatmul.mubr.bf16.gmra.mxu0 %v6201
  %v7242 = vpop.f32.mrf.mxu0
  %v7243 = vadd.f32 0.0, %v7242
  %v7244 = vpop.f32.mrf.mxu0
  %v7245 = vpop.f32.mrf.mxu0
  %v7246 = vadd.f32 0.0, %v7245
  %v7247 = vpop.f32.mrf.mxu0
  %7248 = vmatprep.mubr.bf16.mxu0 %v6211
  %7249 = vmatmul.mubr.bf16.gmra.mxu0 %v6210
  %v7250 = vpop.f32.mrf.mxu0
  %v7251 = vadd.f32 0.0, %v7250
  %v7252 = vpop.f32.mrf.mxu0
  %v7253 = vpop.f32.mrf.mxu0
  %v7254 = vadd.f32 0.0, %v7253
  %v7255 = vpop.f32.mrf.mxu0
  %7256 = vmatprep.mubr.bf16.mxu0 %v6220
  %7257 = vmatmul.mubr.bf16.gmra.mxu0 %v6219
  %v7258 = vpop.f32.mrf.mxu0
  %v7259 = vadd.f32 0.0, %v7258
  %v7260 = vpop.f32.mrf.mxu0
  %v7261 = vpop.f32.mrf.mxu0
  %v7262 = vadd.f32 0.0, %v7261
  %v7263 = vpop.f32.mrf.mxu0
  %7264 = vmatprep.mubr.bf16.mxu0 %v6229
  %7265 = vmatmul.mubr.bf16.gmra.mxu0 %v6228
  %v7266 = vpop.f32.mrf.mxu0
  %v7267 = vadd.f32 0.0, %v7266
  %v7268 = vpop.f32.mrf.mxu0
  %v7269 = vpop.f32.mrf.mxu0
  %v7270 = vadd.f32 0.0, %v7269
  %v7271 = vpop.f32.mrf.mxu0
  %7272 = vmatprep.mubr.bf16.mxu0 %v6238
  %7273 = vmatmul.mubr.bf16.gmra.mxu0 %v6237
  %v7274 = vpop.f32.mrf.mxu0
  %v7275 = vadd.f32 0.0, %v7274
  %v7276 = vpop.f32.mrf.mxu0
  %v7277 = vpop.f32.mrf.mxu0
  %v7278 = vadd.f32 0.0, %v7277
  %v7279 = vpop.f32.mrf.mxu0
  %7280 = vmatprep.mubr.bf16.mxu0 %v6247
  %7281 = vmatmul.mubr.bf16.gmra.mxu0 %v6246
  %v7282 = vpop.f32.mrf.mxu0
  %v7283 = vadd.f32 0.0, %v7282
  %v7284 = vpop.f32.mrf.mxu0
  %v7285 = vpop.f32.mrf.mxu0
  %v7286 = vadd.f32 0.0, %v7285
  %v7287 = vpop.f32.mrf.mxu0
  %7288 = vmatprep.mubr.bf16.mxu0 %v6256
  %7289 = vmatmul.mubr.bf16.gmra.mxu0 %v6255
  %v7290 = vpop.f32.mrf.mxu0
  %v7291 = vadd.f32 0.0, %v7290
  %v7292 = vpop.f32.mrf.mxu0
  %v7293 = vpop.f32.mrf.mxu0
  %v7294 = vadd.f32 0.0, %v7293
  %v7295 = vpop.f32.mrf.mxu0
  %7296 = vmatprep.mubr.bf16.mxu0 %v6265
  %7297 = vmatmul.mubr.bf16.gmra.mxu0 %v6264
  %v7298 = vpop.f32.mrf.mxu0
  %v7299 = vadd.f32 0.0, %v7298
  %v7300 = vpop.f32.mrf.mxu0
  %v7301 = vpop.f32.mrf.mxu0
  %v7302 = vadd.f32 0.0, %v7301
  %v7303 = vpop.f32.mrf.mxu0
  %7304 = vmatprep.mubr.bf16.mxu0 %v6274
  %7305 = vmatmul.mubr.bf16.gmra.mxu0 %v6273
  %v7306 = vpop.f32.mrf.mxu0
  %v7307 = vadd.f32 0.0, %v7306
  %v7308 = vpop.f32.mrf.mxu0
  %v7309 = vpop.f32.mrf.mxu0
  %v7310 = vadd.f32 0.0, %v7309
  %v7311 = vpop.f32.mrf.mxu0
  %7312 = vmatprep.mubr.bf16.mxu0 %v6283
  %7313 = vmatmul.mubr.bf16.gmra.mxu0 %v6282
  %v7314 = vpop.f32.mrf.mxu0
  %v7315 = vadd.f32 0.0, %v7314
  %v7316 = vpop.f32.mrf.mxu0
  %v7317 = vpop.f32.mrf.mxu0
  %v7318 = vadd.f32 0.0, %v7317
  %v7319 = vpop.f32.mrf.mxu0
  %7320 = vmatprep.mubr.bf16.mxu0 %v6292
  %7321 = vmatmul.mubr.bf16.gmra.mxu0 %v6291
  %v7322 = vpop.f32.mrf.mxu0
  %v7323 = vadd.f32 0.0, %v7322
  %v7324 = vpop.f32.mrf.mxu0
  %v7325 = vpop.f32.mrf.mxu0
  %v7326 = vadd.f32 0.0, %v7325
  %v7327 = vpop.f32.mrf.mxu0
  %7328 = vmatprep.mubr.bf16.mxu0 %v6301
  %7329 = vmatmul.mubr.bf16.gmra.mxu0 %v6300
  %v7330 = vpop.f32.mrf.mxu0
  %v7331 = vadd.f32 0.0, %v7330
  %v7332 = vpop.f32.mrf.mxu0
  %v7333 = vpop.f32.mrf.mxu0
  %v7334 = vadd.f32 0.0, %v7333
  %v7335 = vpop.f32.mrf.mxu0
  %7336 = vmatprep.mubr.bf16.mxu0 %v6310
  %7337 = vmatmul.mubr.bf16.gmra.mxu0 %v6309
  %v7338 = vpop.f32.mrf.mxu0
  %v7339 = vadd.f32 0.0, %v7338
  %v7340 = vpop.f32.mrf.mxu0
  %v7341 = vpop.f32.mrf.mxu0
  %v7342 = vadd.f32 0.0, %v7341
  %v7343 = vpop.f32.mrf.mxu0
  %7344 = vmatprep.mubr.bf16.mxu0 %v6319
  %7345 = vmatmul.mubr.bf16.gmra.mxu0 %v6318
  %v7346 = vpop.f32.mrf.mxu0
  %v7347 = vadd.f32 0.0, %v7346
  %v7348 = vpop.f32.mrf.mxu0
  %v7349 = vpop.f32.mrf.mxu0
  %v7350 = vadd.f32 0.0, %v7349
  %v7351 = vpop.f32.mrf.mxu0
  %7352 = vmatprep.mubr.bf16.mxu0 %v6328
  %7353 = vmatmul.mubr.bf16.gmra.mxu0 %v6327
  %v7354 = vpop.f32.mrf.mxu0
  %v7355 = vadd.f32 0.0, %v7354
  %v7356 = vpop.f32.mrf.mxu0
  %v7357 = vpop.f32.mrf.mxu0
  %v7358 = vadd.f32 0.0, %v7357
  %v7359 = vpop.f32.mrf.mxu0
  %7360 = vmatprep.mubr.bf16.mxu0 %v6337
  %7361 = vmatmul.mubr.bf16.gmra.mxu0 %v6336
  %v7362 = vpop.f32.mrf.mxu0
  %v7363 = vadd.f32 0.0, %v7362
  %v7364 = vpop.f32.mrf.mxu0
  %v7365 = vpop.f32.mrf.mxu0
  %v7366 = vadd.f32 0.0, %v7365
  %v7367 = vpop.f32.mrf.mxu0
  %7368 = vmatprep.mubr.bf16.mxu0 %v6346
  %7369 = vmatmul.mubr.bf16.gmra.mxu0 %v6345
  %v7370 = vpop.f32.mrf.mxu0
  %v7371 = vadd.f32 0.0, %v7370
  %v7372 = vpop.f32.mrf.mxu0
  %v7373 = vpop.f32.mrf.mxu0
  %v7374 = vadd.f32 0.0, %v7373
  %v7375 = vpop.f32.mrf.mxu0
  %7376 = vmatprep.mubr.bf16.mxu0 %v6355
  %7377 = vmatmul.mubr.bf16.gmra.mxu0 %v6354
  %v7378 = vpop.f32.mrf.mxu0
  %v7379 = vadd.f32 0.0, %v7378
  %v7380 = vpop.f32.mrf.mxu0
  %v7381 = vpop.f32.mrf.mxu0
  %v7382 = vadd.f32 0.0, %v7381
  %v7383 = vpop.f32.mrf.mxu0
  %7384 = vmatprep.mubr.bf16.mxu0 %v6364
  %7385 = vmatmul.mubr.bf16.gmra.mxu0 %v6363
  %v7386 = vpop.f32.mrf.mxu0
  %v7387 = vadd.f32 0.0, %v7386
  %v7388 = vpop.f32.mrf.mxu0
  %v7389 = vpop.f32.mrf.mxu0
  %v7390 = vadd.f32 0.0, %v7389
  %v7391 = vpop.f32.mrf.mxu0
  %7392 = vmatprep.mubr.bf16.mxu0 %v6373
  %7393 = vmatmul.mubr.bf16.gmra.mxu0 %v6372
  %v7394 = vpop.f32.mrf.mxu0
  %v7395 = vadd.f32 0.0, %v7394
  %v7396 = vpop.f32.mrf.mxu0
  %v7397 = vpop.f32.mrf.mxu0
  %v7398 = vadd.f32 0.0, %v7397
  %v7399 = vpop.f32.mrf.mxu0
  %7400 = vmatprep.mubr.bf16.mxu0 %v6382
  %7401 = vmatmul.mubr.bf16.gmra.mxu0 %v6381
  %v7402 = vpop.f32.mrf.mxu0
  %v7403 = vadd.f32 0.0, %v7402
  %v7404 = vpop.f32.mrf.mxu0
  %v7405 = vpop.f32.mrf.mxu0
  %v7406 = vadd.f32 0.0, %v7405
  %v7407 = vpop.f32.mrf.mxu0
  %7408 = vmatprep.mubr.bf16.mxu0 %v6391
  %7409 = vmatmul.mubr.bf16.gmra.mxu0 %v6390
  %v7410 = vpop.f32.mrf.mxu0
  %v7411 = vadd.f32 0.0, %v7410
  %v7412 = vpop.f32.mrf.mxu0
  %v7413 = vpop.f32.mrf.mxu0
  %v7414 = vadd.f32 0.0, %v7413
  %v7415 = vpop.f32.mrf.mxu0
  %7416 = vmatprep.mubr.bf16.mxu0 %v6400
  %7417 = vmatmul.mubr.bf16.gmra.mxu0 %v6399
  %v7418 = vpop.f32.mrf.mxu0
  %v7419 = vadd.f32 0.0, %v7418
  %v7420 = vpop.f32.mrf.mxu0
  %v7421 = vpop.f32.mrf.mxu0
  %v7422 = vadd.f32 0.0, %v7421
  %v7423 = vpop.f32.mrf.mxu0
  %7424 = vmatprep.mubr.bf16.mxu0 %v6409
  %7425 = vmatmul.mubr.bf16.gmra.mxu0 %v6408
  %v7426 = vpop.f32.mrf.mxu0
  %v7427 = vadd.f32 0.0, %v7426
  %v7428 = vpop.f32.mrf.mxu0
  %v7429 = vpop.f32.mrf.mxu0
  %v7430 = vadd.f32 0.0, %v7429
  %v7431 = vpop.f32.mrf.mxu0
  %7432 = vmatprep.mubr.bf16.mxu0 %v6418
  %7433 = vmatmul.mubr.bf16.gmra.mxu0 %v6417
  %v7434 = vpop.f32.mrf.mxu0
  %v7435 = vadd.f32 0.0, %v7434
  %v7436 = vpop.f32.mrf.mxu0
  %v7437 = vpop.f32.mrf.mxu0
  %v7438 = vadd.f32 0.0, %v7437
  %v7439 = vpop.f32.mrf.mxu0
  %7440 = vmatprep.mubr.bf16.mxu0 %v6427
  %7441 = vmatmul.mubr.bf16.gmra.mxu0 %v6426
  %v7442 = vpop.f32.mrf.mxu0
  %v7443 = vadd.f32 0.0, %v7442
  %v7444 = vpop.f32.mrf.mxu0
  %v7445 = vpop.f32.mrf.mxu0
  %v7446 = vadd.f32 0.0, %v7445
  %v7447 = vpop.f32.mrf.mxu0
  %7448 = vmatprep.mubr.bf16.mxu0 %v6436
  %7449 = vmatmul.mubr.bf16.gmra.mxu0 %v6435
  %v7450 = vpop.f32.mrf.mxu0
  %v7451 = vadd.f32 0.0, %v7450
  %v7452 = vpop.f32.mrf.mxu0
  %v7453 = vpop.f32.mrf.mxu0
  %v7454 = vadd.f32 0.0, %v7453
  %v7455 = vpop.f32.mrf.mxu0
  %7456 = vmatprep.mubr.bf16.mxu0 %v6445
  %7457 = vmatmul.mubr.bf16.gmra.mxu0 %v6444
  %v7458 = vpop.f32.mrf.mxu0
  %v7459 = vadd.f32 0.0, %v7458
  %v7460 = vpop.f32.mrf.mxu0
  %v7461 = vpop.f32.mrf.mxu0
  %v7462 = vadd.f32 0.0, %v7461
  %v7463 = vpop.f32.mrf.mxu0
  %7464 = vmatprep.mubr.bf16.mxu0 %v6454
  %7465 = vmatmul.mubr.bf16.gmra.mxu0 %v6453
  %v7466 = vpop.f32.mrf.mxu0
  %v7467 = vadd.f32 0.0, %v7466
  %v7468 = vpop.f32.mrf.mxu0
  %v7469 = vpop.f32.mrf.mxu0
  %v7470 = vadd.f32 0.0, %v7469
  %v7471 = vpop.f32.mrf.mxu0
  %7472 = vmatprep.mubr.bf16.mxu0 %v6463
  %7473 = vmatmul.mubr.bf16.gmra.mxu0 %v6462
  %v7474 = vpop.f32.mrf.mxu0
  %v7475 = vadd.f32 0.0, %v7474
  %v7476 = vpop.f32.mrf.mxu0
  %v7477 = vpop.f32.mrf.mxu0
  %v7478 = vadd.f32 0.0, %v7477
  %v7479 = vpop.f32.mrf.mxu0
  %7480 = vmatprep.mubr.bf16.mxu0 %v6472
  %7481 = vmatmul.mubr.bf16.gmra.mxu0 %v6471
  %v7482 = vpop.f32.mrf.mxu0
  %v7483 = vadd.f32 0.0, %v7482
  %v7484 = vpop.f32.mrf.mxu0
  %v7485 = vpop.f32.mrf.mxu0
  %v7486 = vadd.f32 0.0, %v7485
  %v7487 = vpop.f32.mrf.mxu0
  %7488 = vdwg.mxu0
  %7489 = vmatprep.subr.bf16.mxu0 0
  %7490 = vmatpush1.bf16.msra.mxu0 %v7079
  %7491 = vmatprep.subr.bf16.mxu0 0
  %7492 = vmatpush1.bf16.msra.mxu0 %v7078
  %7493 = vmatprep.subr.bf16.mxu0 0
  %7494 = vmatpush1.bf16.msra.mxu0 %v7077
  %7495 = vmatprep.subr.bf16.mxu0 0
  %7496 = vmatpush1.bf16.msra.mxu0 %v7076
  %7497 = vmatprep.subr.bf16.mxu0 0
  %7498 = vmatpush1.bf16.msra.mxu0 %v7075
  %7499 = vmatprep.subr.bf16.mxu0 0
  %7500 = vmatpush1.bf16.msra.mxu0 %v7074
  %7501 = vmatprep.subr.bf16.mxu0 0
  %7502 = vmatpush1.bf16.msra.mxu0 %v7073
  %7503 = vmatprep.subr.bf16.mxu0 0
  %7504 = vmatpush1.bf16.msra.mxu0 %v7072
  %7505 = vmatprep.subr.bf16.mxu0 0
  %7506 = vmatpush2.bf16.msra.mxu0 %v7087
  %7507 = vmatprep.subr.bf16.mxu0 0
  %7508 = vmatpush2.bf16.msra.mxu0 %v7086
  %7509 = vmatprep.subr.bf16.mxu0 0
  %7510 = vmatpush2.bf16.msra.mxu0 %v7085
  %7511 = vmatprep.subr.bf16.mxu0 0
  %7512 = vmatpush2.bf16.msra.mxu0 %v7084
  %7513 = vmatprep.subr.bf16.mxu0 0
  %7514 = vmatpush2.bf16.msra.mxu0 %v7083
  %7515 = vmatprep.subr.bf16.mxu0 0
  %7516 = vmatpush2.bf16.msra.mxu0 %v7082
  %7517 = vmatprep.subr.bf16.mxu0 0
  %7518 = vmatpush2.bf16.msra.mxu0 %v7081
  %7519 = vmatprep.subr.bf16.mxu0 0
  %7520 = vmatpush2.bf16.msra.mxu0 %v7080
  %7521 = vmatprep.mubr.bf16.mxu0 %v6195
  %7522 = vmatmul.mubr.bf16.gmra.mxu0 %v6194
  %v7523 = vpop.f32.mrf.mxu0
  %v7524 = vadd.f32 %v7235, %v7523
  %v7525 = vpop.f32.mrf.mxu0
  %v7526 = vpop.f32.mrf.mxu0
  %v7527 = vadd.f32 %v7238, %v7526
  %v7528 = vpop.f32.mrf.mxu0
  %7529 = vmatprep.mubr.bf16.mxu0 %v6204
  %7530 = vmatmul.mubr.bf16.gmra.mxu0 %v6203
  %v7531 = vpop.f32.mrf.mxu0
  %v7532 = vadd.f32 %v7243, %v7531
  %v7533 = vpop.f32.mrf.mxu0
  %v7534 = vpop.f32.mrf.mxu0
  %v7535 = vadd.f32 %v7246, %v7534
  %v7536 = vpop.f32.mrf.mxu0
  %7537 = vmatprep.mubr.bf16.mxu0 %v6213
  %7538 = vmatmul.mubr.bf16.gmra.mxu0 %v6212
  %v7539 = vpop.f32.mrf.mxu0
  %v7540 = vadd.f32 %v7251, %v7539
  %v7541 = vpop.f32.mrf.mxu0
  %v7542 = vpop.f32.mrf.mxu0
  %v7543 = vadd.f32 %v7254, %v7542
  %v7544 = vpop.f32.mrf.mxu0
  %7545 = vmatprep.mubr.bf16.mxu0 %v6222
  %7546 = vmatmul.mubr.bf16.gmra.mxu0 %v6221
  %v7547 = vpop.f32.mrf.mxu0
  %v7548 = vadd.f32 %v7259, %v7547
  %v7549 = vpop.f32.mrf.mxu0
  %v7550 = vpop.f32.mrf.mxu0
  %v7551 = vadd.f32 %v7262, %v7550
  %v7552 = vpop.f32.mrf.mxu0
  %7553 = vmatprep.mubr.bf16.mxu0 %v6231
  %7554 = vmatmul.mubr.bf16.gmra.mxu0 %v6230
  %v7555 = vpop.f32.mrf.mxu0
  %v7556 = vadd.f32 %v7267, %v7555
  %v7557 = vpop.f32.mrf.mxu0
  %v7558 = vpop.f32.mrf.mxu0
  %v7559 = vadd.f32 %v7270, %v7558
  %v7560 = vpop.f32.mrf.mxu0
  %7561 = vmatprep.mubr.bf16.mxu0 %v6240
  %7562 = vmatmul.mubr.bf16.gmra.mxu0 %v6239
  %v7563 = vpop.f32.mrf.mxu0
  %v7564 = vadd.f32 %v7275, %v7563
  %v7565 = vpop.f32.mrf.mxu0
  %v7566 = vpop.f32.mrf.mxu0
  %v7567 = vadd.f32 %v7278, %v7566
  %v7568 = vpop.f32.mrf.mxu0
  %7569 = vmatprep.mubr.bf16.mxu0 %v6249
  %7570 = vmatmul.mubr.bf16.gmra.mxu0 %v6248
  %v7571 = vpop.f32.mrf.mxu0
  %v7572 = vadd.f32 %v7283, %v7571
  %v7573 = vpop.f32.mrf.mxu0
  %v7574 = vpop.f32.mrf.mxu0
  %v7575 = vadd.f32 %v7286, %v7574
  %v7576 = vpop.f32.mrf.mxu0
  %7577 = vmatprep.mubr.bf16.mxu0 %v6258
  %7578 = vmatmul.mubr.bf16.gmra.mxu0 %v6257
  %v7579 = vpop.f32.mrf.mxu0
  %v7580 = vadd.f32 %v7291, %v7579
  %v7581 = vpop.f32.mrf.mxu0
  %v7582 = vpop.f32.mrf.mxu0
  %v7583 = vadd.f32 %v7294, %v7582
  %v7584 = vpop.f32.mrf.mxu0
  %7585 = vmatprep.mubr.bf16.mxu0 %v6267
  %7586 = vmatmul.mubr.bf16.gmra.mxu0 %v6266
  %v7587 = vpop.f32.mrf.mxu0
  %v7588 = vadd.f32 %v7299, %v7587
  %v7589 = vpop.f32.mrf.mxu0
  %v7590 = vpop.f32.mrf.mxu0
  %v7591 = vadd.f32 %v7302, %v7590
  %v7592 = vpop.f32.mrf.mxu0
  %7593 = vmatprep.mubr.bf16.mxu0 %v6276
  %7594 = vmatmul.mubr.bf16.gmra.mxu0 %v6275
  %v7595 = vpop.f32.mrf.mxu0
  %v7596 = vadd.f32 %v7307, %v7595
  %v7597 = vpop.f32.mrf.mxu0
  %v7598 = vpop.f32.mrf.mxu0
  %v7599 = vadd.f32 %v7310, %v7598
  %v7600 = vpop.f32.mrf.mxu0
  %7601 = vmatprep.mubr.bf16.mxu0 %v6285
  %7602 = vmatmul.mubr.bf16.gmra.mxu0 %v6284
  %v7603 = vpop.f32.mrf.mxu0
  %v7604 = vadd.f32 %v7315, %v7603
  %v7605 = vpop.f32.mrf.mxu0
  %v7606 = vpop.f32.mrf.mxu0
  %v7607 = vadd.f32 %v7318, %v7606
  %v7608 = vpop.f32.mrf.mxu0
  %7609 = vmatprep.mubr.bf16.mxu0 %v6294
  %7610 = vmatmul.mubr.bf16.gmra.mxu0 %v6293
  %v7611 = vpop.f32.mrf.mxu0
  %v7612 = vadd.f32 %v7323, %v7611
  %v7613 = vpop.f32.mrf.mxu0
  %v7614 = vpop.f32.mrf.mxu0
  %v7615 = vadd.f32 %v7326, %v7614
  %v7616 = vpop.f32.mrf.mxu0
  %7617 = vmatprep.mubr.bf16.mxu0 %v6303
  %7618 = vmatmul.mubr.bf16.gmra.mxu0 %v6302
  %v7619 = vpop.f32.mrf.mxu0
  %v7620 = vadd.f32 %v7331, %v7619
  %v7621 = vpop.f32.mrf.mxu0
  %v7622 = vpop.f32.mrf.mxu0
  %v7623 = vadd.f32 %v7334, %v7622
  %v7624 = vpop.f32.mrf.mxu0
  %7625 = vmatprep.mubr.bf16.mxu0 %v6312
  %7626 = vmatmul.mubr.bf16.gmra.mxu0 %v6311
  %v7627 = vpop.f32.mrf.mxu0
  %v7628 = vadd.f32 %v7339, %v7627
  %v7629 = vpop.f32.mrf.mxu0
  %v7630 = vpop.f32.mrf.mxu0
  %v7631 = vadd.f32 %v7342, %v7630
  %v7632 = vpop.f32.mrf.mxu0
  %7633 = vmatprep.mubr.bf16.mxu0 %v6321
  %7634 = vmatmul.mubr.bf16.gmra.mxu0 %v6320
  %v7635 = vpop.f32.mrf.mxu0
  %v7636 = vadd.f32 %v7347, %v7635
  %v7637 = vpop.f32.mrf.mxu0
  %v7638 = vpop.f32.mrf.mxu0
  %v7639 = vadd.f32 %v7350, %v7638
  %v7640 = vpop.f32.mrf.mxu0
  %7641 = vmatprep.mubr.bf16.mxu0 %v6330
  %7642 = vmatmul.mubr.bf16.gmra.mxu0 %v6329
  %v7643 = vpop.f32.mrf.mxu0
  %v7644 = vadd.f32 %v7355, %v7643
  %v7645 = vpop.f32.mrf.mxu0
  %v7646 = vpop.f32.mrf.mxu0
  %v7647 = vadd.f32 %v7358, %v7646
  %v7648 = vpop.f32.mrf.mxu0
  %7649 = vmatprep.mubr.bf16.mxu0 %v6339
  %7650 = vmatmul.mubr.bf16.gmra.mxu0 %v6338
  %v7651 = vpop.f32.mrf.mxu0
  %v7652 = vadd.f32 %v7363, %v7651
  %v7653 = vpop.f32.mrf.mxu0
  %v7654 = vpop.f32.mrf.mxu0
  %v7655 = vadd.f32 %v7366, %v7654
  %v7656 = vpop.f32.mrf.mxu0
  %7657 = vmatprep.mubr.bf16.mxu0 %v6348
  %7658 = vmatmul.mubr.bf16.gmra.mxu0 %v6347
  %v7659 = vpop.f32.mrf.mxu0
  %v7660 = vadd.f32 %v7371, %v7659
  %v7661 = vpop.f32.mrf.mxu0
  %v7662 = vpop.f32.mrf.mxu0
  %v7663 = vadd.f32 %v7374, %v7662
  %v7664 = vpop.f32.mrf.mxu0
  %7665 = vmatprep.mubr.bf16.mxu0 %v6357
  %7666 = vmatmul.mubr.bf16.gmra.mxu0 %v6356
  %v7667 = vpop.f32.mrf.mxu0
  %v7668 = vadd.f32 %v7379, %v7667
  %v7669 = vpop.f32.mrf.mxu0
  %v7670 = vpop.f32.mrf.mxu0
  %v7671 = vadd.f32 %v7382, %v7670
  %v7672 = vpop.f32.mrf.mxu0
  %7673 = vmatprep.mubr.bf16.mxu0 %v6366
  %7674 = vmatmul.mubr.bf16.gmra.mxu0 %v6365
  %v7675 = vpop.f32.mrf.mxu0
  %v7676 = vadd.f32 %v7387, %v7675
  %v7677 = vpop.f32.mrf.mxu0
  %v7678 = vpop.f32.mrf.mxu0
  %v7679 = vadd.f32 %v7390, %v7678
  %v7680 = vpop.f32.mrf.mxu0
  %7681 = vmatprep.mubr.bf16.mxu0 %v6375
  %7682 = vmatmul.mubr.bf16.gmra.mxu0 %v6374
  %v7683 = vpop.f32.mrf.mxu0
  %v7684 = vadd.f32 %v7395, %v7683
  %v7685 = vpop.f32.mrf.mxu0
  %v7686 = vpop.f32.mrf.mxu0
  %v7687 = vadd.f32 %v7398, %v7686
  %v7688 = vpop.f32.mrf.mxu0
  %7689 = vmatprep.mubr.bf16.mxu0 %v6384
  %7690 = vmatmul.mubr.bf16.gmra.mxu0 %v6383
  %v7691 = vpop.f32.mrf.mxu0
  %v7692 = vadd.f32 %v7403, %v7691
  %v7693 = vpop.f32.mrf.mxu0
  %v7694 = vpop.f32.mrf.mxu0
  %v7695 = vadd.f32 %v7406, %v7694
  %v7696 = vpop.f32.mrf.mxu0
  %7697 = vmatprep.mubr.bf16.mxu0 %v6393
  %7698 = vmatmul.mubr.bf16.gmra.mxu0 %v6392
  %v7699 = vpop.f32.mrf.mxu0
  %v7700 = vadd.f32 %v7411, %v7699
  %v7701 = vpop.f32.mrf.mxu0
  %v7702 = vpop.f32.mrf.mxu0
  %v7703 = vadd.f32 %v7414, %v7702
  %v7704 = vpop.f32.mrf.mxu0
  %7705 = vmatprep.mubr.bf16.mxu0 %v6402
  %7706 = vmatmul.mubr.bf16.gmra.mxu0 %v6401
  %v7707 = vpop.f32.mrf.mxu0
  %v7708 = vadd.f32 %v7419, %v7707
  %v7709 = vpop.f32.mrf.mxu0
  %v7710 = vpop.f32.mrf.mxu0
  %v7711 = vadd.f32 %v7422, %v7710
  %v7712 = vpop.f32.mrf.mxu0
  %7713 = vmatprep.mubr.bf16.mxu0 %v6411
  %7714 = vmatmul.mubr.bf16.gmra.mxu0 %v6410
  %v7715 = vpop.f32.mrf.mxu0
  %v7716 = vadd.f32 %v7427, %v7715
  %v7717 = vpop.f32.mrf.mxu0
  %v7718 = vpop.f32.mrf.mxu0
  %v7719 = vadd.f32 %v7430, %v7718
  %v7720 = vpop.f32.mrf.mxu0
  %7721 = vmatprep.mubr.bf16.mxu0 %v6420
  %7722 = vmatmul.mubr.bf16.gmra.mxu0 %v6419
  %v7723 = vpop.f32.mrf.mxu0
  %v7724 = vadd.f32 %v7435, %v7723
  %v7725 = vpop.f32.mrf.mxu0
  %v7726 = vpop.f32.mrf.mxu0
  %v7727 = vadd.f32 %v7438, %v7726
  %v7728 = vpop.f32.mrf.mxu0
  %7729 = vmatprep.mubr.bf16.mxu0 %v6429
  %7730 = vmatmul.mubr.bf16.gmra.mxu0 %v6428
  %v7731 = vpop.f32.mrf.mxu0
  %v7732 = vadd.f32 %v7443, %v7731
  %v7733 = vpop.f32.mrf.mxu0
  %v7734 = vpop.f32.mrf.mxu0
  %v7735 = vadd.f32 %v7446, %v7734
  %v7736 = vpop.f32.mrf.mxu0
  %7737 = vmatprep.mubr.bf16.mxu0 %v6438
  %7738 = vmatmul.mubr.bf16.gmra.mxu0 %v6437
  %v7739 = vpop.f32.mrf.mxu0
  %v7740 = vadd.f32 %v7451, %v7739
  %v7741 = vpop.f32.mrf.mxu0
  %v7742 = vpop.f32.mrf.mxu0
  %v7743 = vadd.f32 %v7454, %v7742
  %v7744 = vpop.f32.mrf.mxu0
  %7745 = vmatprep.mubr.bf16.mxu0 %v6447
  %7746 = vmatmul.mubr.bf16.gmra.mxu0 %v6446
  %v7747 = vpop.f32.mrf.mxu0
  %v7748 = vadd.f32 %v7459, %v7747
  %v7749 = vpop.f32.mrf.mxu0
  %v7750 = vpop.f32.mrf.mxu0
  %v7751 = vadd.f32 %v7462, %v7750
  %v7752 = vpop.f32.mrf.mxu0
  %7753 = vmatprep.mubr.bf16.mxu0 %v6456
  %7754 = vmatmul.mubr.bf16.gmra.mxu0 %v6455
  %v7755 = vpop.f32.mrf.mxu0
  %v7756 = vadd.f32 %v7467, %v7755
  %v7757 = vpop.f32.mrf.mxu0
  %v7758 = vpop.f32.mrf.mxu0
  %v7759 = vadd.f32 %v7470, %v7758
  %v7760 = vpop.f32.mrf.mxu0
  %7761 = vmatprep.mubr.bf16.mxu0 %v6465
  %7762 = vmatmul.mubr.bf16.gmra.mxu0 %v6464
  %v7763 = vpop.f32.mrf.mxu0
  %v7764 = vadd.f32 %v7475, %v7763
  %v7765 = vpop.f32.mrf.mxu0
  %v7766 = vpop.f32.mrf.mxu0
  %v7767 = vadd.f32 %v7478, %v7766
  %v7768 = vpop.f32.mrf.mxu0
  %7769 = vmatprep.mubr.bf16.mxu0 %v6474
  %7770 = vmatmul.mubr.bf16.gmra.mxu0 %v6473
  %v7771 = vpop.f32.mrf.mxu0
  %v7772 = vadd.f32 %v7483, %v7771
  %v7773 = vpop.f32.mrf.mxu0
  %v7774 = vpop.f32.mrf.mxu0
  %v7775 = vadd.f32 %v7486, %v7774
  %v7776 = vpop.f32.mrf.mxu0
  %7777 = vdwg.mxu0
  %7778 = vmatprep.subr.bf16.mxu0 0
  %7779 = vmatpush1.bf16.msra.mxu0 %v7095
  %7780 = vmatprep.subr.bf16.mxu0 0
  %7781 = vmatpush1.bf16.msra.mxu0 %v7094
  %7782 = vmatprep.subr.bf16.mxu0 0
  %7783 = vmatpush1.bf16.msra.mxu0 %v7093
  %7784 = vmatprep.subr.bf16.mxu0 0
  %7785 = vmatpush1.bf16.msra.mxu0 %v7092
  %7786 = vmatprep.subr.bf16.mxu0 0
  %7787 = vmatpush1.bf16.msra.mxu0 %v7091
  %7788 = vmatprep.subr.bf16.mxu0 0
  %7789 = vmatpush1.bf16.msra.mxu0 %v7090
  %7790 = vmatprep.subr.bf16.mxu0 0
  %7791 = vmatpush1.bf16.msra.mxu0 %v7089
  %7792 = vmatprep.subr.bf16.mxu0 0
  %7793 = vmatpush1.bf16.msra.mxu0 %v7088
  %7794 = vmatprep.subr.bf16.mxu0 0
  %7795 = vmatpush2.bf16.msra.mxu0 %v7103
  %7796 = vmatprep.subr.bf16.mxu0 0
  %7797 = vmatpush2.bf16.msra.mxu0 %v7102
  %7798 = vmatprep.subr.bf16.mxu0 0
  %7799 = vmatpush2.bf16.msra.mxu0 %v7101
  %7800 = vmatprep.subr.bf16.mxu0 0
  %7801 = vmatpush2.bf16.msra.mxu0 %v7100
  %7802 = vmatprep.subr.bf16.mxu0 0
  %7803 = vmatpush2.bf16.msra.mxu0 %v7099
  %7804 = vmatprep.subr.bf16.mxu0 0
  %7805 = vmatpush2.bf16.msra.mxu0 %v7098
  %7806 = vmatprep.subr.bf16.mxu0 0
  %7807 = vmatpush2.bf16.msra.mxu0 %v7097
  %7808 = vmatprep.subr.bf16.mxu0 0
  %7809 = vmatpush2.bf16.msra.mxu0 %v7096
  %7810 = vmatprep.mubr.bf16.mxu0 %v6197
  %7811 = vmatmul.mubr.bf16.gmra.mxu0 %v6196
  %v7812 = vpop.f32.mrf.mxu0
  %v7813 = vadd.f32 %v7524, %v7812
  %v7814 = vpop.f32.mrf.mxu0
  %v7815 = vpop.f32.mrf.mxu0
  %v7816 = vadd.f32 %v7527, %v7815
  %v7817 = vpop.f32.mrf.mxu0
  %7818 = vmatprep.mubr.bf16.mxu0 %v6206
  %7819 = vmatmul.mubr.bf16.gmra.mxu0 %v6205
  %v7820 = vpop.f32.mrf.mxu0
  %v7821 = vadd.f32 %v7532, %v7820
  %v7822 = vpop.f32.mrf.mxu0
  %v7823 = vpop.f32.mrf.mxu0
  %v7824 = vadd.f32 %v7535, %v7823
  %v7825 = vpop.f32.mrf.mxu0
  %7826 = vmatprep.mubr.bf16.mxu0 %v6215
  %7827 = vmatmul.mubr.bf16.gmra.mxu0 %v6214
  %v7828 = vpop.f32.mrf.mxu0
  %v7829 = vadd.f32 %v7540, %v7828
  %v7830 = vpop.f32.mrf.mxu0
  %v7831 = vpop.f32.mrf.mxu0
  %v7832 = vadd.f32 %v7543, %v7831
  %v7833 = vpop.f32.mrf.mxu0
  %7834 = vmatprep.mubr.bf16.mxu0 %v6224
  %7835 = vmatmul.mubr.bf16.gmra.mxu0 %v6223
  %v7836 = vpop.f32.mrf.mxu0
  %v7837 = vadd.f32 %v7548, %v7836
  %v7838 = vpop.f32.mrf.mxu0
  %v7839 = vpop.f32.mrf.mxu0
  %v7840 = vadd.f32 %v7551, %v7839
  %v7841 = vpop.f32.mrf.mxu0
  %7842 = vmatprep.mubr.bf16.mxu0 %v6233
  %7843 = vmatmul.mubr.bf16.gmra.mxu0 %v6232
  %v7844 = vpop.f32.mrf.mxu0
  %v7845 = vadd.f32 %v7556, %v7844
  %v7846 = vpop.f32.mrf.mxu0
  %v7847 = vpop.f32.mrf.mxu0
  %v7848 = vadd.f32 %v7559, %v7847
  %v7849 = vpop.f32.mrf.mxu0
  %7850 = vmatprep.mubr.bf16.mxu0 %v6242
  %7851 = vmatmul.mubr.bf16.gmra.mxu0 %v6241
  %v7852 = vpop.f32.mrf.mxu0
  %v7853 = vadd.f32 %v7564, %v7852
  %v7854 = vpop.f32.mrf.mxu0
  %v7855 = vpop.f32.mrf.mxu0
  %v7856 = vadd.f32 %v7567, %v7855
  %v7857 = vpop.f32.mrf.mxu0
  %7858 = vmatprep.mubr.bf16.mxu0 %v6251
  %7859 = vmatmul.mubr.bf16.gmra.mxu0 %v6250
  %v7860 = vpop.f32.mrf.mxu0
  %v7861 = vadd.f32 %v7572, %v7860
  %v7862 = vpop.f32.mrf.mxu0
  %v7863 = vpop.f32.mrf.mxu0
  %v7864 = vadd.f32 %v7575, %v7863
  %v7865 = vpop.f32.mrf.mxu0
  %7866 = vmatprep.mubr.bf16.mxu0 %v6260
  %7867 = vmatmul.mubr.bf16.gmra.mxu0 %v6259
  %v7868 = vpop.f32.mrf.mxu0
  %v7869 = vadd.f32 %v7580, %v7868
  %v7870 = vpop.f32.mrf.mxu0
  %v7871 = vpop.f32.mrf.mxu0
  %v7872 = vadd.f32 %v7583, %v7871
  %v7873 = vpop.f32.mrf.mxu0
  %7874 = vmatprep.mubr.bf16.mxu0 %v6269
  %7875 = vmatmul.mubr.bf16.gmra.mxu0 %v6268
  %v7876 = vpop.f32.mrf.mxu0
  %v7877 = vadd.f32 %v7588, %v7876
  %v7878 = vpop.f32.mrf.mxu0
  %v7879 = vpop.f32.mrf.mxu0
  %v7880 = vadd.f32 %v7591, %v7879
  %v7881 = vpop.f32.mrf.mxu0
  %7882 = vmatprep.mubr.bf16.mxu0 %v6278
  %7883 = vmatmul.mubr.bf16.gmra.mxu0 %v6277
  %v7884 = vpop.f32.mrf.mxu0
  %v7885 = vadd.f32 %v7596, %v7884
  %v7886 = vpop.f32.mrf.mxu0
  %v7887 = vpop.f32.mrf.mxu0
  %v7888 = vadd.f32 %v7599, %v7887
  %v7889 = vpop.f32.mrf.mxu0
  %7890 = vmatprep.mubr.bf16.mxu0 %v6287
  %7891 = vmatmul.mubr.bf16.gmra.mxu0 %v6286
  %v7892 = vpop.f32.mrf.mxu0
  %v7893 = vadd.f32 %v7604, %v7892
  %v7894 = vpop.f32.mrf.mxu0
  %v7895 = vpop.f32.mrf.mxu0
  %v7896 = vadd.f32 %v7607, %v7895
  %v7897 = vpop.f32.mrf.mxu0
  %7898 = vmatprep.mubr.bf16.mxu0 %v6296
  %7899 = vmatmul.mubr.bf16.gmra.mxu0 %v6295
  %v7900 = vpop.f32.mrf.mxu0
  %v7901 = vadd.f32 %v7612, %v7900
  %v7902 = vpop.f32.mrf.mxu0
  %v7903 = vpop.f32.mrf.mxu0
  %v7904 = vadd.f32 %v7615, %v7903
  %v7905 = vpop.f32.mrf.mxu0
  %7906 = vmatprep.mubr.bf16.mxu0 %v6305
  %7907 = vmatmul.mubr.bf16.gmra.mxu0 %v6304
  %v7908 = vpop.f32.mrf.mxu0
  %v7909 = vadd.f32 %v7620, %v7908
  %v7910 = vpop.f32.mrf.mxu0
  %v7911 = vpop.f32.mrf.mxu0
  %v7912 = vadd.f32 %v7623, %v7911
  %v7913 = vpop.f32.mrf.mxu0
  %7914 = vmatprep.mubr.bf16.mxu0 %v6314
  %7915 = vmatmul.mubr.bf16.gmra.mxu0 %v6313
  %v7916 = vpop.f32.mrf.mxu0
  %v7917 = vadd.f32 %v7628, %v7916
  %v7918 = vpop.f32.mrf.mxu0
  %v7919 = vpop.f32.mrf.mxu0
  %v7920 = vadd.f32 %v7631, %v7919
  %v7921 = vpop.f32.mrf.mxu0
  %7922 = vmatprep.mubr.bf16.mxu0 %v6323
  %7923 = vmatmul.mubr.bf16.gmra.mxu0 %v6322
  %v7924 = vpop.f32.mrf.mxu0
  %v7925 = vadd.f32 %v7636, %v7924
  %v7926 = vpop.f32.mrf.mxu0
  %v7927 = vpop.f32.mrf.mxu0
  %v7928 = vadd.f32 %v7639, %v7927
  %v7929 = vpop.f32.mrf.mxu0
  %7930 = vmatprep.mubr.bf16.mxu0 %v6332
  %7931 = vmatmul.mubr.bf16.gmra.mxu0 %v6331
  %v7932 = vpop.f32.mrf.mxu0
  %v7933 = vadd.f32 %v7644, %v7932
  %v7934 = vpop.f32.mrf.mxu0
  %v7935 = vpop.f32.mrf.mxu0
  %v7936 = vadd.f32 %v7647, %v7935
  %v7937 = vpop.f32.mrf.mxu0
  %7938 = vmatprep.mubr.bf16.mxu0 %v6341
  %7939 = vmatmul.mubr.bf16.gmra.mxu0 %v6340
  %v7940 = vpop.f32.mrf.mxu0
  %v7941 = vadd.f32 %v7652, %v7940
  %v7942 = vpop.f32.mrf.mxu0
  %v7943 = vpop.f32.mrf.mxu0
  %v7944 = vadd.f32 %v7655, %v7943
  %v7945 = vpop.f32.mrf.mxu0
  %7946 = vmatprep.mubr.bf16.mxu0 %v6350
  %7947 = vmatmul.mubr.bf16.gmra.mxu0 %v6349
  %v7948 = vpop.f32.mrf.mxu0
  %v7949 = vadd.f32 %v7660, %v7948
  %v7950 = vpop.f32.mrf.mxu0
  %v7951 = vpop.f32.mrf.mxu0
  %v7952 = vadd.f32 %v7663, %v7951
  %v7953 = vpop.f32.mrf.mxu0
  %7954 = vmatprep.mubr.bf16.mxu0 %v6359
  %7955 = vmatmul.mubr.bf16.gmra.mxu0 %v6358
  %v7956 = vpop.f32.mrf.mxu0
  %v7957 = vadd.f32 %v7668, %v7956
  %v7958 = vpop.f32.mrf.mxu0
  %v7959 = vpop.f32.mrf.mxu0
  %v7960 = vadd.f32 %v7671, %v7959
  %v7961 = vpop.f32.mrf.mxu0
  %7962 = vmatprep.mubr.bf16.mxu0 %v6368
  %7963 = vmatmul.mubr.bf16.gmra.mxu0 %v6367
  %v7964 = vpop.f32.mrf.mxu0
  %v7965 = vadd.f32 %v7676, %v7964
  %v7966 = vpop.f32.mrf.mxu0
  %v7967 = vpop.f32.mrf.mxu0
  %v7968 = vadd.f32 %v7679, %v7967
  %v7969 = vpop.f32.mrf.mxu0
  %7970 = vmatprep.mubr.bf16.mxu0 %v6377
  %7971 = vmatmul.mubr.bf16.gmra.mxu0 %v6376
  %v7972 = vpop.f32.mrf.mxu0
  %v7973 = vadd.f32 %v7684, %v7972
  %v7974 = vpop.f32.mrf.mxu0
  %v7975 = vpop.f32.mrf.mxu0
  %v7976 = vadd.f32 %v7687, %v7975
  %v7977 = vpop.f32.mrf.mxu0
  %7978 = vmatprep.mubr.bf16.mxu0 %v6386
  %7979 = vmatmul.mubr.bf16.gmra.mxu0 %v6385
  %v7980 = vpop.f32.mrf.mxu0
  %v7981 = vadd.f32 %v7692, %v7980
  %v7982 = vpop.f32.mrf.mxu0
  %v7983 = vpop.f32.mrf.mxu0
  %v7984 = vadd.f32 %v7695, %v7983
  %v7985 = vpop.f32.mrf.mxu0
  %7986 = vmatprep.mubr.bf16.mxu0 %v6395
  %7987 = vmatmul.mubr.bf16.gmra.mxu0 %v6394
  %v7988 = vpop.f32.mrf.mxu0
  %v7989 = vadd.f32 %v7700, %v7988
  %v7990 = vpop.f32.mrf.mxu0
  %v7991 = vpop.f32.mrf.mxu0
  %v7992 = vadd.f32 %v7703, %v7991
  %v7993 = vpop.f32.mrf.mxu0
  %7994 = vmatprep.mubr.bf16.mxu0 %v6404
  %7995 = vmatmul.mubr.bf16.gmra.mxu0 %v6403
  %v7996 = vpop.f32.mrf.mxu0
  %v7997 = vadd.f32 %v7708, %v7996
  %v7998 = vpop.f32.mrf.mxu0
  %v7999 = vpop.f32.mrf.mxu0
  %v8000 = vadd.f32 %v7711, %v7999
  %v8001 = vpop.f32.mrf.mxu0
  %8002 = vmatprep.mubr.bf16.mxu0 %v6413
  %8003 = vmatmul.mubr.bf16.gmra.mxu0 %v6412
  %v8004 = vpop.f32.mrf.mxu0
  %v8005 = vadd.f32 %v7716, %v8004
  %v8006 = vpop.f32.mrf.mxu0
  %v8007 = vpop.f32.mrf.mxu0
  %v8008 = vadd.f32 %v7719, %v8007
  %v8009 = vpop.f32.mrf.mxu0
  %8010 = vmatprep.mubr.bf16.mxu0 %v6422
  %8011 = vmatmul.mubr.bf16.gmra.mxu0 %v6421
  %v8012 = vpop.f32.mrf.mxu0
  %v8013 = vadd.f32 %v7724, %v8012
  %v8014 = vpop.f32.mrf.mxu0
  %v8015 = vpop.f32.mrf.mxu0
  %v8016 = vadd.f32 %v7727, %v8015
  %v8017 = vpop.f32.mrf.mxu0
  %8018 = vmatprep.mubr.bf16.mxu0 %v6431
  %8019 = vmatmul.mubr.bf16.gmra.mxu0 %v6430
  %v8020 = vpop.f32.mrf.mxu0
  %v8021 = vadd.f32 %v7732, %v8020
  %v8022 = vpop.f32.mrf.mxu0
  %v8023 = vpop.f32.mrf.mxu0
  %v8024 = vadd.f32 %v7735, %v8023
  %v8025 = vpop.f32.mrf.mxu0
  %8026 = vmatprep.mubr.bf16.mxu0 %v6440
  %8027 = vmatmul.mubr.bf16.gmra.mxu0 %v6439
  %v8028 = vpop.f32.mrf.mxu0
  %v8029 = vadd.f32 %v7740, %v8028
  %v8030 = vpop.f32.mrf.mxu0
  %v8031 = vpop.f32.mrf.mxu0
  %v8032 = vadd.f32 %v7743, %v8031
  %v8033 = vpop.f32.mrf.mxu0
  %8034 = vmatprep.mubr.bf16.mxu0 %v6449
  %8035 = vmatmul.mubr.bf16.gmra.mxu0 %v6448
  %v8036 = vpop.f32.mrf.mxu0
  %v8037 = vadd.f32 %v7748, %v8036
  %v8038 = vpop.f32.mrf.mxu0
  %v8039 = vpop.f32.mrf.mxu0
  %v8040 = vadd.f32 %v7751, %v8039
  %v8041 = vpop.f32.mrf.mxu0
  %8042 = vmatprep.mubr.bf16.mxu0 %v6458
  %8043 = vmatmul.mubr.bf16.gmra.mxu0 %v6457
  %v8044 = vpop.f32.mrf.mxu0
  %v8045 = vadd.f32 %v7756, %v8044
  %v8046 = vpop.f32.mrf.mxu0
  %v8047 = vpop.f32.mrf.mxu0
  %v8048 = vadd.f32 %v7759, %v8047
  %v8049 = vpop.f32.mrf.mxu0
  %8050 = vmatprep.mubr.bf16.mxu0 %v6467
  %8051 = vmatmul.mubr.bf16.gmra.mxu0 %v6466
  %v8052 = vpop.f32.mrf.mxu0
  %v8053 = vadd.f32 %v7764, %v8052
  %v8054 = vpop.f32.mrf.mxu0
  %v8055 = vpop.f32.mrf.mxu0
  %v8056 = vadd.f32 %v7767, %v8055
  %v8057 = vpop.f32.mrf.mxu0
  %8058 = vmatprep.mubr.bf16.mxu0 %v6476
  %8059 = vmatmul.mubr.bf16.gmra.mxu0 %v6475
  %v8060 = vpop.f32.mrf.mxu0
  %v8061 = vadd.f32 %v7772, %v8060
  %v8062 = vpop.f32.mrf.mxu0
  %v8063 = vpop.f32.mrf.mxu0
  %v8064 = vadd.f32 %v7775, %v8063
  %v8065 = vpop.f32.mrf.mxu0
  %8066 = vdwg.mxu0
  %8067 = vmatprep.subr.bf16.mxu0 0
  %8068 = vmatpush1.bf16.msra.mxu0 %v7111
  %8069 = vmatprep.subr.bf16.mxu0 0
  %8070 = vmatpush1.bf16.msra.mxu0 %v7110
  %8071 = vmatprep.subr.bf16.mxu0 0
  %8072 = vmatpush1.bf16.msra.mxu0 %v7109
  %8073 = vmatprep.subr.bf16.mxu0 0
  %8074 = vmatpush1.bf16.msra.mxu0 %v7108
  %8075 = vmatprep.subr.bf16.mxu0 0
  %8076 = vmatpush1.bf16.msra.mxu0 %v7107
  %8077 = vmatprep.subr.bf16.mxu0 0
  %8078 = vmatpush1.bf16.msra.mxu0 %v7106
  %8079 = vmatprep.subr.bf16.mxu0 0
  %8080 = vmatpush1.bf16.msra.mxu0 %v7105
  %8081 = vmatprep.subr.bf16.mxu0 0
  %8082 = vmatpush1.bf16.msra.mxu0 %v7104
  %8083 = vmatprep.subr.bf16.mxu0 0
  %8084 = vmatpush2.bf16.msra.mxu0 %v7119
  %8085 = vmatprep.subr.bf16.mxu0 0
  %8086 = vmatpush2.bf16.msra.mxu0 %v7118
  %8087 = vmatprep.subr.bf16.mxu0 0
  %8088 = vmatpush2.bf16.msra.mxu0 %v7117
  %8089 = vmatprep.subr.bf16.mxu0 0
  %8090 = vmatpush2.bf16.msra.mxu0 %v7116
  %8091 = vmatprep.subr.bf16.mxu0 0
  %8092 = vmatpush2.bf16.msra.mxu0 %v7115
  %8093 = vmatprep.subr.bf16.mxu0 0
  %8094 = vmatpush2.bf16.msra.mxu0 %v7114
  %8095 = vmatprep.subr.bf16.mxu0 0
  %8096 = vmatpush2.bf16.msra.mxu0 %v7113
  %8097 = vmatprep.subr.bf16.mxu0 0
  %8098 = vmatpush2.bf16.msra.mxu0 %v7112
  %8099 = vmatprep.mubr.bf16.mxu0 %v6199
  %8100 = vmatmul.mubr.bf16.gmra.mxu0 %v6198
  %v8101 = vpop.f32.mrf.mxu0
  %v8102 = vadd.f32 %v7813, %v8101
  %v8103 = vpop.f32.mrf.mxu0
  %v8104 = vpop.f32.mrf.mxu0
  %v8105 = vadd.f32 %v7816, %v8104
  %v8106 = vpop.f32.mrf.mxu0
  %8107 = vmatprep.mubr.bf16.mxu0 %v6208
  %8108 = vmatmul.mubr.bf16.gmra.mxu0 %v6207
  %v8109 = vpop.f32.mrf.mxu0
  %v8110 = vadd.f32 %v7821, %v8109
  %v8111 = vpop.f32.mrf.mxu0
  %v8112 = vpop.f32.mrf.mxu0
  %v8113 = vadd.f32 %v7824, %v8112
  %v8114 = vpop.f32.mrf.mxu0
  %8115 = vmatprep.mubr.bf16.mxu0 %v6217
  %8116 = vmatmul.mubr.bf16.gmra.mxu0 %v6216
  %v8117 = vpop.f32.mrf.mxu0
  %v8118 = vadd.f32 %v7829, %v8117
  %v8119 = vpop.f32.mrf.mxu0
  %v8120 = vpop.f32.mrf.mxu0
  %v8121 = vadd.f32 %v7832, %v8120
  %v8122 = vpop.f32.mrf.mxu0
  %8123 = vmatprep.mubr.bf16.mxu0 %v6226
  %8124 = vmatmul.mubr.bf16.gmra.mxu0 %v6225
  %v8125 = vpop.f32.mrf.mxu0
  %v8126 = vadd.f32 %v7837, %v8125
  %v8127 = vpop.f32.mrf.mxu0
  %v8128 = vpop.f32.mrf.mxu0
  %v8129 = vadd.f32 %v7840, %v8128
  %v8130 = vpop.f32.mrf.mxu0
  %8131 = vmatprep.mubr.bf16.mxu0 %v6235
  %8132 = vmatmul.mubr.bf16.gmra.mxu0 %v6234
  %v8133 = vpop.f32.mrf.mxu0
  %v8134 = vadd.f32 %v7845, %v8133
  %v8135 = vpop.f32.mrf.mxu0
  %v8136 = vpop.f32.mrf.mxu0
  %v8137 = vadd.f32 %v7848, %v8136
  %v8138 = vpop.f32.mrf.mxu0
  %8139 = vmatprep.mubr.bf16.mxu0 %v6244
  %8140 = vmatmul.mubr.bf16.gmra.mxu0 %v6243
  %v8141 = vpop.f32.mrf.mxu0
  %v8142 = vadd.f32 %v7853, %v8141
  %v8143 = vpop.f32.mrf.mxu0
  %v8144 = vpop.f32.mrf.mxu0
  %v8145 = vadd.f32 %v7856, %v8144
  %v8146 = vpop.f32.mrf.mxu0
  %8147 = vmatprep.mubr.bf16.mxu0 %v6253
  %8148 = vmatmul.mubr.bf16.gmra.mxu0 %v6252
  %v8149 = vpop.f32.mrf.mxu0
  %v8150 = vadd.f32 %v7861, %v8149
  %v8151 = vpop.f32.mrf.mxu0
  %v8152 = vpop.f32.mrf.mxu0
  %v8153 = vadd.f32 %v7864, %v8152
  %v8154 = vpop.f32.mrf.mxu0
  %8155 = vmatprep.mubr.bf16.mxu0 %v6262
  %8156 = vmatmul.mubr.bf16.gmra.mxu0 %v6261
  %v8157 = vpop.f32.mrf.mxu0
  %v8158 = vadd.f32 %v7869, %v8157
  %v8159 = vpop.f32.mrf.mxu0
  %v8160 = vpop.f32.mrf.mxu0
  %v8161 = vadd.f32 %v7872, %v8160
  %v8162 = vpop.f32.mrf.mxu0
  %8163 = vmatprep.mubr.bf16.mxu0 %v6271
  %8164 = vmatmul.mubr.bf16.gmra.mxu0 %v6270
  %v8165 = vpop.f32.mrf.mxu0
  %v8166 = vadd.f32 %v7877, %v8165
  %v8167 = vpop.f32.mrf.mxu0
  %v8168 = vpop.f32.mrf.mxu0
  %v8169 = vadd.f32 %v7880, %v8168
  %v8170 = vpop.f32.mrf.mxu0
  %8171 = vmatprep.mubr.bf16.mxu0 %v6280
  %8172 = vmatmul.mubr.bf16.gmra.mxu0 %v6279
  %v8173 = vpop.f32.mrf.mxu0
  %v8174 = vadd.f32 %v7885, %v8173
  %v8175 = vpop.f32.mrf.mxu0
  %v8176 = vpop.f32.mrf.mxu0
  %v8177 = vadd.f32 %v7888, %v8176
  %v8178 = vpop.f32.mrf.mxu0
  %8179 = vmatprep.mubr.bf16.mxu0 %v6289
  %8180 = vmatmul.mubr.bf16.gmra.mxu0 %v6288
  %v8181 = vpop.f32.mrf.mxu0
  %v8182 = vadd.f32 %v7893, %v8181
  %v8183 = vpop.f32.mrf.mxu0
  %v8184 = vpop.f32.mrf.mxu0
  %v8185 = vadd.f32 %v7896, %v8184
  %v8186 = vpop.f32.mrf.mxu0
  %8187 = vmatprep.mubr.bf16.mxu0 %v6298
  %8188 = vmatmul.mubr.bf16.gmra.mxu0 %v6297
  %v8189 = vpop.f32.mrf.mxu0
  %v8190 = vadd.f32 %v7901, %v8189
  %v8191 = vpop.f32.mrf.mxu0
  %v8192 = vpop.f32.mrf.mxu0
  %v8193 = vadd.f32 %v7904, %v8192
  %v8194 = vpop.f32.mrf.mxu0
  %8195 = vmatprep.mubr.bf16.mxu0 %v6307
  %8196 = vmatmul.mubr.bf16.gmra.mxu0 %v6306
  %v8197 = vpop.f32.mrf.mxu0
  %v8198 = vadd.f32 %v7909, %v8197
  %v8199 = vpop.f32.mrf.mxu0
  %v8200 = vpop.f32.mrf.mxu0
  %v8201 = vadd.f32 %v7912, %v8200
  %v8202 = vpop.f32.mrf.mxu0
  %8203 = vmatprep.mubr.bf16.mxu0 %v6316
  %8204 = vmatmul.mubr.bf16.gmra.mxu0 %v6315
  %v8205 = vpop.f32.mrf.mxu0
  %v8206 = vadd.f32 %v7917, %v8205
  %v8207 = vpop.f32.mrf.mxu0
  %v8208 = vpop.f32.mrf.mxu0
  %v8209 = vadd.f32 %v7920, %v8208
  %v8210 = vpop.f32.mrf.mxu0
  %8211 = vmatprep.mubr.bf16.mxu0 %v6325
  %8212 = vmatmul.mubr.bf16.gmra.mxu0 %v6324
  %v8213 = vpop.f32.mrf.mxu0
  %v8214 = vadd.f32 %v7925, %v8213
  %v8215 = vpop.f32.mrf.mxu0
  %v8216 = vpop.f32.mrf.mxu0
  %v8217 = vadd.f32 %v7928, %v8216
  %v8218 = vpop.f32.mrf.mxu0
  %8219 = vmatprep.mubr.bf16.mxu0 %v6334
  %8220 = vmatmul.mubr.bf16.gmra.mxu0 %v6333
  %v8221 = vpop.f32.mrf.mxu0
  %v8222 = vadd.f32 %v7933, %v8221
  %v8223 = vpop.f32.mrf.mxu0
  %v8224 = vpop.f32.mrf.mxu0
  %v8225 = vadd.f32 %v7936, %v8224
  %v8226 = vpop.f32.mrf.mxu0
  %8227 = vmatprep.mubr.bf16.mxu0 %v6343
  %8228 = vmatmul.mubr.bf16.gmra.mxu0 %v6342
  %v8229 = vpop.f32.mrf.mxu0
  %v8230 = vadd.f32 %v7941, %v8229
  %v8231 = vpop.f32.mrf.mxu0
  %v8232 = vpop.f32.mrf.mxu0
  %v8233 = vadd.f32 %v7944, %v8232
  %v8234 = vpop.f32.mrf.mxu0
  %8235 = vmatprep.mubr.bf16.mxu0 %v6352
  %8236 = vmatmul.mubr.bf16.gmra.mxu0 %v6351
  %v8237 = vpop.f32.mrf.mxu0
  %v8238 = vadd.f32 %v7949, %v8237
  %v8239 = vpop.f32.mrf.mxu0
  %v8240 = vpop.f32.mrf.mxu0
  %v8241 = vadd.f32 %v7952, %v8240
  %v8242 = vpop.f32.mrf.mxu0
  %8243 = vmatprep.mubr.bf16.mxu0 %v6361
  %8244 = vmatmul.mubr.bf16.gmra.mxu0 %v6360
  %v8245 = vpop.f32.mrf.mxu0
  %v8246 = vadd.f32 %v7957, %v8245
  %v8247 = vpop.f32.mrf.mxu0
  %v8248 = vpop.f32.mrf.mxu0
  %v8249 = vadd.f32 %v7960, %v8248
  %v8250 = vpop.f32.mrf.mxu0
  %8251 = vmatprep.mubr.bf16.mxu0 %v6370
  %8252 = vmatmul.mubr.bf16.gmra.mxu0 %v6369
  %v8253 = vpop.f32.mrf.mxu0
  %v8254 = vadd.f32 %v7965, %v8253
  %v8255 = vpop.f32.mrf.mxu0
  %v8256 = vpop.f32.mrf.mxu0
  %v8257 = vadd.f32 %v7968, %v8256
  %v8258 = vpop.f32.mrf.mxu0
  %8259 = vmatprep.mubr.bf16.mxu0 %v6379
  %8260 = vmatmul.mubr.bf16.gmra.mxu0 %v6378
  %v8261 = vpop.f32.mrf.mxu0
  %v8262 = vadd.f32 %v7973, %v8261
  %v8263 = vpop.f32.mrf.mxu0
  %v8264 = vpop.f32.mrf.mxu0
  %v8265 = vadd.f32 %v7976, %v8264
  %v8266 = vpop.f32.mrf.mxu0
  %8267 = vmatprep.mubr.bf16.mxu0 %v6388
  %8268 = vmatmul.mubr.bf16.gmra.mxu0 %v6387
  %v8269 = vpop.f32.mrf.mxu0
  %v8270 = vadd.f32 %v7981, %v8269
  %v8271 = vpop.f32.mrf.mxu0
  %v8272 = vpop.f32.mrf.mxu0
  %v8273 = vadd.f32 %v7984, %v8272
  %v8274 = vpop.f32.mrf.mxu0
  %8275 = vmatprep.mubr.bf16.mxu0 %v6397
  %8276 = vmatmul.mubr.bf16.gmra.mxu0 %v6396
  %v8277 = vpop.f32.mrf.mxu0
  %v8278 = vadd.f32 %v7989, %v8277
  %v8279 = vpop.f32.mrf.mxu0
  %v8280 = vpop.f32.mrf.mxu0
  %v8281 = vadd.f32 %v7992, %v8280
  %v8282 = vpop.f32.mrf.mxu0
  %8283 = vmatprep.mubr.bf16.mxu0 %v6406
  %8284 = vmatmul.mubr.bf16.gmra.mxu0 %v6405
  %v8285 = vpop.f32.mrf.mxu0
  %v8286 = vadd.f32 %v7997, %v8285
  %v8287 = vpop.f32.mrf.mxu0
  %v8288 = vpop.f32.mrf.mxu0
  %v8289 = vadd.f32 %v8000, %v8288
  %v8290 = vpop.f32.mrf.mxu0
  %8291 = vmatprep.mubr.bf16.mxu0 %v6415
  %8292 = vmatmul.mubr.bf16.gmra.mxu0 %v6414
  %v8293 = vpop.f32.mrf.mxu0
  %v8294 = vadd.f32 %v8005, %v8293
  %v8295 = vpop.f32.mrf.mxu0
  %v8296 = vpop.f32.mrf.mxu0
  %v8297 = vadd.f32 %v8008, %v8296
  %v8298 = vpop.f32.mrf.mxu0
  %8299 = vmatprep.mubr.bf16.mxu0 %v6424
  %8300 = vmatmul.mubr.bf16.gmra.mxu0 %v6423
  %v8301 = vpop.f32.mrf.mxu0
  %v8302 = vadd.f32 %v8013, %v8301
  %v8303 = vpop.f32.mrf.mxu0
  %v8304 = vpop.f32.mrf.mxu0
  %v8305 = vadd.f32 %v8016, %v8304
  %v8306 = vpop.f32.mrf.mxu0
  %8307 = vmatprep.mubr.bf16.mxu0 %v6433
  %8308 = vmatmul.mubr.bf16.gmra.mxu0 %v6432
  %v8309 = vpop.f32.mrf.mxu0
  %v8310 = vadd.f32 %v8021, %v8309
  %v8311 = vpop.f32.mrf.mxu0
  %v8312 = vpop.f32.mrf.mxu0
  %v8313 = vadd.f32 %v8024, %v8312
  %v8314 = vpop.f32.mrf.mxu0
  %8315 = vmatprep.mubr.bf16.mxu0 %v6442
  %8316 = vmatmul.mubr.bf16.gmra.mxu0 %v6441
  %v8317 = vpop.f32.mrf.mxu0
  %v8318 = vadd.f32 %v8029, %v8317
  %v8319 = vpop.f32.mrf.mxu0
  %v8320 = vpop.f32.mrf.mxu0
  %v8321 = vadd.f32 %v8032, %v8320
  %v8322 = vpop.f32.mrf.mxu0
  %8323 = vmatprep.mubr.bf16.mxu0 %v6451
  %8324 = vmatmul.mubr.bf16.gmra.mxu0 %v6450
  %v8325 = vpop.f32.mrf.mxu0
  %v8326 = vadd.f32 %v8037, %v8325
  %v8327 = vpop.f32.mrf.mxu0
  %v8328 = vpop.f32.mrf.mxu0
  %v8329 = vadd.f32 %v8040, %v8328
  %v8330 = vpop.f32.mrf.mxu0
  %8331 = vmatprep.mubr.bf16.mxu0 %v6460
  %8332 = vmatmul.mubr.bf16.gmra.mxu0 %v6459
  %v8333 = vpop.f32.mrf.mxu0
  %v8334 = vadd.f32 %v8045, %v8333
  %v8335 = vpop.f32.mrf.mxu0
  %v8336 = vpop.f32.mrf.mxu0
  %v8337 = vadd.f32 %v8048, %v8336
  %v8338 = vpop.f32.mrf.mxu0
  %8339 = vmatprep.mubr.bf16.mxu0 %v6469
  %8340 = vmatmul.mubr.bf16.gmra.mxu0 %v6468
  %v8341 = vpop.f32.mrf.mxu0
  %v8342 = vadd.f32 %v8053, %v8341
  %v8343 = vpop.f32.mrf.mxu0
  %v8344 = vpop.f32.mrf.mxu0
  %v8345 = vadd.f32 %v8056, %v8344
  %v8346 = vpop.f32.mrf.mxu0
  %8347 = vmatprep.mubr.bf16.mxu0 %v6478
  %8348 = vmatmul.mubr.bf16.gmra.mxu0 %v6477
  %v8349 = vpop.f32.mrf.mxu0
  %v8350 = vadd.f32 %v8061, %v8349
  %v8351 = vpop.f32.mrf.mxu0
  %v8352 = vpop.f32.mrf.mxu0
  %v8353 = vadd.f32 %v8064, %v8352
  %v8354 = vpop.f32.mrf.mxu0
  %8355 = vdwg.mxu0
  %8356 = vmatprep.subr.bf16.mxu0 0
  %8357 = vmatpush1.bf16.msra.mxu0 %v7127
  %8358 = vmatprep.subr.bf16.mxu0 0
  %8359 = vmatpush1.bf16.msra.mxu0 %v7126
  %8360 = vmatprep.subr.bf16.mxu0 0
  %8361 = vmatpush1.bf16.msra.mxu0 %v7125
  %8362 = vmatprep.subr.bf16.mxu0 0
  %8363 = vmatpush1.bf16.msra.mxu0 %v7124
  %8364 = vmatprep.subr.bf16.mxu0 0
  %8365 = vmatpush1.bf16.msra.mxu0 %v7123
  %8366 = vmatprep.subr.bf16.mxu0 0
  %8367 = vmatpush1.bf16.msra.mxu0 %v7122
  %8368 = vmatprep.subr.bf16.mxu0 0
  %8369 = vmatpush1.bf16.msra.mxu0 %v7121
  %8370 = vmatprep.subr.bf16.mxu0 0
  %8371 = vmatpush1.bf16.msra.mxu0 %v7120
  %8372 = vmatprep.subr.bf16.mxu0 0
  %8373 = vmatpush2.bf16.msra.mxu0 0
  %8374 = vmatprep.subr.bf16.mxu0 0
  %8375 = vmatpush2.bf16.msra.mxu0 0
  %8376 = vmatprep.subr.bf16.mxu0 0
  %8377 = vmatpush2.bf16.msra.mxu0 0
  %8378 = vmatprep.subr.bf16.mxu0 0
  %8379 = vmatpush2.bf16.msra.mxu0 0
  %8380 = vmatprep.subr.bf16.mxu0 0
  %8381 = vmatpush2.bf16.msra.mxu0 0
  %8382 = vmatprep.subr.bf16.mxu0 0
  %8383 = vmatpush2.bf16.msra.mxu0 0
  %8384 = vmatprep.subr.bf16.mxu0 0
  %8385 = vmatpush2.bf16.msra.mxu0 0
  %8386 = vmatprep.subr.bf16.mxu0 0
  %8387 = vmatpush2.bf16.msra.mxu0 0
  %8388 = vmatprep.mubr.bf16.mxu0 0
  %8389 = vmatmul.mubr.bf16.gmra.mxu0 %v6200
  %v8390 = vpop.f32.mrf.mxu0
  %v8391 = vadd.f32 %v8102, %v8390
  %v8392 = vpop.f32.mrf.mxu0
  %v8393 = vpop.f32.mrf.mxu0
  %v8394 = vadd.f32 %v8105, %v8393
  %v8395 = vpop.f32.mrf.mxu0
  %8396 = vmatprep.mubr.bf16.mxu0 0
  %8397 = vmatmul.mubr.bf16.gmra.mxu0 %v6209
  %v8398 = vpop.f32.mrf.mxu0
  %v8399 = vadd.f32 %v8110, %v8398
  %v8400 = vpop.f32.mrf.mxu0
  %v8401 = vpop.f32.mrf.mxu0
  %v8402 = vadd.f32 %v8113, %v8401
  %v8403 = vpop.f32.mrf.mxu0
  %8404 = vmatprep.mubr.bf16.mxu0 0
  %8405 = vmatmul.mubr.bf16.gmra.mxu0 %v6218
  %v8406 = vpop.f32.mrf.mxu0
  %v8407 = vadd.f32 %v8118, %v8406
  %v8408 = vpop.f32.mrf.mxu0
  %v8409 = vpop.f32.mrf.mxu0
  %v8410 = vadd.f32 %v8121, %v8409
  %v8411 = vpop.f32.mrf.mxu0
  %8412 = vmatprep.mubr.bf16.mxu0 0
  %8413 = vmatmul.mubr.bf16.gmra.mxu0 %v6227
  %v8414 = vpop.f32.mrf.mxu0
  %v8415 = vadd.f32 %v8126, %v8414
  %v8416 = vpop.f32.mrf.mxu0
  %v8417 = vpop.f32.mrf.mxu0
  %v8418 = vadd.f32 %v8129, %v8417
  %v8419 = vpop.f32.mrf.mxu0
  %8420 = vmatprep.mubr.bf16.mxu0 0
  %8421 = vmatmul.mubr.bf16.gmra.mxu0 %v6236
  %v8422 = vpop.f32.mrf.mxu0
  %v8423 = vadd.f32 %v8134, %v8422
  %v8424 = vpop.f32.mrf.mxu0
  %v8425 = vpop.f32.mrf.mxu0
  %v8426 = vadd.f32 %v8137, %v8425
  %v8427 = vpop.f32.mrf.mxu0
  %8428 = vmatprep.mubr.bf16.mxu0 0
  %8429 = vmatmul.mubr.bf16.gmra.mxu0 %v6245
  %v8430 = vpop.f32.mrf.mxu0
  %v8431 = vadd.f32 %v8142, %v8430
  %v8432 = vpop.f32.mrf.mxu0
  %v8433 = vpop.f32.mrf.mxu0
  %v8434 = vadd.f32 %v8145, %v8433
  %v8435 = vpop.f32.mrf.mxu0
  %8436 = vmatprep.mubr.bf16.mxu0 0
  %8437 = vmatmul.mubr.bf16.gmra.mxu0 %v6254
  %v8438 = vpop.f32.mrf.mxu0
  %v8439 = vadd.f32 %v8150, %v8438
  %v8440 = vpop.f32.mrf.mxu0
  %v8441 = vpop.f32.mrf.mxu0
  %v8442 = vadd.f32 %v8153, %v8441
  %v8443 = vpop.f32.mrf.mxu0
  %8444 = vmatprep.mubr.bf16.mxu0 0
  %8445 = vmatmul.mubr.bf16.gmra.mxu0 %v6263
  %v8446 = vpop.f32.mrf.mxu0
  %v8447 = vadd.f32 %v8158, %v8446
  %v8448 = vpop.f32.mrf.mxu0
  %v8449 = vpop.f32.mrf.mxu0
  %v8450 = vadd.f32 %v8161, %v8449
  %v8451 = vpop.f32.mrf.mxu0
  %8452 = vmatprep.mubr.bf16.mxu0 0
  %8453 = vmatmul.mubr.bf16.gmra.mxu0 %v6272
  %v8454 = vpop.f32.mrf.mxu0
  %v8455 = vadd.f32 %v8166, %v8454
  %v8456 = vpop.f32.mrf.mxu0
  %v8457 = vpop.f32.mrf.mxu0
  %v8458 = vadd.f32 %v8169, %v8457
  %v8459 = vpop.f32.mrf.mxu0
  %8460 = vmatprep.mubr.bf16.mxu0 0
  %8461 = vmatmul.mubr.bf16.gmra.mxu0 %v6281
  %v8462 = vpop.f32.mrf.mxu0
  %v8463 = vadd.f32 %v8174, %v8462
  %v8464 = vpop.f32.mrf.mxu0
  %v8465 = vpop.f32.mrf.mxu0
  %v8466 = vadd.f32 %v8177, %v8465
  %v8467 = vpop.f32.mrf.mxu0
  %8468 = vmatprep.mubr.bf16.mxu0 0
  %8469 = vmatmul.mubr.bf16.gmra.mxu0 %v6290
  %v8470 = vpop.f32.mrf.mxu0
  %v8471 = vadd.f32 %v8182, %v8470
  %v8472 = vpop.f32.mrf.mxu0
  %v8473 = vpop.f32.mrf.mxu0
  %v8474 = vadd.f32 %v8185, %v8473
  %v8475 = vpop.f32.mrf.mxu0
  %8476 = vmatprep.mubr.bf16.mxu0 0
  %8477 = vmatmul.mubr.bf16.gmra.mxu0 %v6299
  %v8478 = vpop.f32.mrf.mxu0
  %v8479 = vadd.f32 %v8190, %v8478
  %v8480 = vpop.f32.mrf.mxu0
  %v8481 = vpop.f32.mrf.mxu0
  %v8482 = vadd.f32 %v8193, %v8481
  %v8483 = vpop.f32.mrf.mxu0
  %8484 = vmatprep.mubr.bf16.mxu0 0
  %8485 = vmatmul.mubr.bf16.gmra.mxu0 %v6308
  %v8486 = vpop.f32.mrf.mxu0
  %v8487 = vadd.f32 %v8198, %v8486
  %v8488 = vpop.f32.mrf.mxu0
  %v8489 = vpop.f32.mrf.mxu0
  %v8490 = vadd.f32 %v8201, %v8489
  %v8491 = vpop.f32.mrf.mxu0
  %8492 = vmatprep.mubr.bf16.mxu0 0
  %8493 = vmatmul.mubr.bf16.gmra.mxu0 %v6317
  %v8494 = vpop.f32.mrf.mxu0
  %v8495 = vadd.f32 %v8206, %v8494
  %v8496 = vpop.f32.mrf.mxu0
  %v8497 = vpop.f32.mrf.mxu0
  %v8498 = vadd.f32 %v8209, %v8497
  %v8499 = vpop.f32.mrf.mxu0
  %8500 = vmatprep.mubr.bf16.mxu0 0
  %8501 = vmatmul.mubr.bf16.gmra.mxu0 %v6326
  %v8502 = vpop.f32.mrf.mxu0
  %v8503 = vadd.f32 %v8214, %v8502
  %v8504 = vpop.f32.mrf.mxu0
  %v8505 = vpop.f32.mrf.mxu0
  %v8506 = vadd.f32 %v8217, %v8505
  %v8507 = vpop.f32.mrf.mxu0
  %8508 = vmatprep.mubr.bf16.mxu0 0
  %8509 = vmatmul.mubr.bf16.gmra.mxu0 %v6335
  %v8510 = vpop.f32.mrf.mxu0
  %v8511 = vadd.f32 %v8222, %v8510
  %v8512 = vpop.f32.mrf.mxu0
  %v8513 = vpop.f32.mrf.mxu0
  %v8514 = vadd.f32 %v8225, %v8513
  %v8515 = vpop.f32.mrf.mxu0
  %8516 = vmatprep.mubr.bf16.mxu0 0
  %8517 = vmatmul.mubr.bf16.gmra.mxu0 %v6344
  %v8518 = vpop.f32.mrf.mxu0
  %v8519 = vadd.f32 %v8230, %v8518
  %v8520 = vpop.f32.mrf.mxu0
  %v8521 = vpop.f32.mrf.mxu0
  %v8522 = vadd.f32 %v8233, %v8521
  %v8523 = vpop.f32.mrf.mxu0
  %8524 = vmatprep.mubr.bf16.mxu0 0
  %8525 = vmatmul.mubr.bf16.gmra.mxu0 %v6353
  %v8526 = vpop.f32.mrf.mxu0
  %v8527 = vadd.f32 %v8238, %v8526
  %v8528 = vpop.f32.mrf.mxu0
  %v8529 = vpop.f32.mrf.mxu0
  %v8530 = vadd.f32 %v8241, %v8529
  %v8531 = vpop.f32.mrf.mxu0
  %8532 = vmatprep.mubr.bf16.mxu0 0
  %8533 = vmatmul.mubr.bf16.gmra.mxu0 %v6362
  %v8534 = vpop.f32.mrf.mxu0
  %v8535 = vadd.f32 %v8246, %v8534
  %v8536 = vpop.f32.mrf.mxu0
  %v8537 = vpop.f32.mrf.mxu0
  %v8538 = vadd.f32 %v8249, %v8537
  %v8539 = vpop.f32.mrf.mxu0
  %8540 = vmatprep.mubr.bf16.mxu0 0
  %8541 = vmatmul.mubr.bf16.gmra.mxu0 %v6371
  %v8542 = vpop.f32.mrf.mxu0
  %v8543 = vadd.f32 %v8254, %v8542
  %v8544 = vpop.f32.mrf.mxu0
  %v8545 = vpop.f32.mrf.mxu0
  %v8546 = vadd.f32 %v8257, %v8545
  %v8547 = vpop.f32.mrf.mxu0
  %8548 = vmatprep.mubr.bf16.mxu0 0
  %8549 = vmatmul.mubr.bf16.gmra.mxu0 %v6380
  %v8550 = vpop.f32.mrf.mxu0
  %v8551 = vadd.f32 %v8262, %v8550
  %v8552 = vpop.f32.mrf.mxu0
  %v8553 = vpop.f32.mrf.mxu0
  %v8554 = vadd.f32 %v8265, %v8553
  %v8555 = vpop.f32.mrf.mxu0
  %8556 = vmatprep.mubr.bf16.mxu0 0
  %8557 = vmatmul.mubr.bf16.gmra.mxu0 %v6389
  %v8558 = vpop.f32.mrf.mxu0
  %v8559 = vadd.f32 %v8270, %v8558
  %v8560 = vpop.f32.mrf.mxu0
  %v8561 = vpop.f32.mrf.mxu0
  %v8562 = vadd.f32 %v8273, %v8561
  %v8563 = vpop.f32.mrf.mxu0
  %8564 = vmatprep.mubr.bf16.mxu0 0
  %8565 = vmatmul.mubr.bf16.gmra.mxu0 %v6398
  %v8566 = vpop.f32.mrf.mxu0
  %v8567 = vadd.f32 %v8278, %v8566
  %v8568 = vpop.f32.mrf.mxu0
  %v8569 = vpop.f32.mrf.mxu0
  %v8570 = vadd.f32 %v8281, %v8569
  %v8571 = vpop.f32.mrf.mxu0
  %8572 = vmatprep.mubr.bf16.mxu0 0
  %8573 = vmatmul.mubr.bf16.gmra.mxu0 %v6407
  %v8574 = vpop.f32.mrf.mxu0
  %v8575 = vadd.f32 %v8286, %v8574
  %v8576 = vpop.f32.mrf.mxu0
  %v8577 = vpop.f32.mrf.mxu0
  %v8578 = vadd.f32 %v8289, %v8577
  %v8579 = vpop.f32.mrf.mxu0
  %8580 = vmatprep.mubr.bf16.mxu0 0
  %8581 = vmatmul.mubr.bf16.gmra.mxu0 %v6416
  %v8582 = vpop.f32.mrf.mxu0
  %v8583 = vadd.f32 %v8294, %v8582
  %v8584 = vpop.f32.mrf.mxu0
  %v8585 = vpop.f32.mrf.mxu0
  %v8586 = vadd.f32 %v8297, %v8585
  %v8587 = vpop.f32.mrf.mxu0
  %8588 = vmatprep.mubr.bf16.mxu0 0
  %8589 = vmatmul.mubr.bf16.gmra.mxu0 %v6425
  %v8590 = vpop.f32.mrf.mxu0
  %v8591 = vadd.f32 %v8302, %v8590
  %v8592 = vpop.f32.mrf.mxu0
  %v8593 = vpop.f32.mrf.mxu0
  %v8594 = vadd.f32 %v8305, %v8593
  %v8595 = vpop.f32.mrf.mxu0
  %8596 = vmatprep.mubr.bf16.mxu0 0
  %8597 = vmatmul.mubr.bf16.gmra.mxu0 %v6434
  %v8598 = vpop.f32.mrf.mxu0
  %v8599 = vadd.f32 %v8310, %v8598
  %v8600 = vpop.f32.mrf.mxu0
  %v8601 = vpop.f32.mrf.mxu0
  %v8602 = vadd.f32 %v8313, %v8601
  %v8603 = vpop.f32.mrf.mxu0
  %8604 = vmatprep.mubr.bf16.mxu0 0
  %8605 = vmatmul.mubr.bf16.gmra.mxu0 %v6443
  %v8606 = vpop.f32.mrf.mxu0
  %v8607 = vadd.f32 %v8318, %v8606
  %v8608 = vpop.f32.mrf.mxu0
  %v8609 = vpop.f32.mrf.mxu0
  %v8610 = vadd.f32 %v8321, %v8609
  %v8611 = vpop.f32.mrf.mxu0
  %8612 = vmatprep.mubr.bf16.mxu0 0
  %8613 = vmatmul.mubr.bf16.gmra.mxu0 %v6452
  %v8614 = vpop.f32.mrf.mxu0
  %v8615 = vadd.f32 %v8326, %v8614
  %v8616 = vpop.f32.mrf.mxu0
  %v8617 = vpop.f32.mrf.mxu0
  %v8618 = vadd.f32 %v8329, %v8617
  %v8619 = vpop.f32.mrf.mxu0
  %8620 = vmatprep.mubr.bf16.mxu0 0
  %8621 = vmatmul.mubr.bf16.gmra.mxu0 %v6461
  %v8622 = vpop.f32.mrf.mxu0
  %v8623 = vadd.f32 %v8334, %v8622
  %v8624 = vpop.f32.mrf.mxu0
  %v8625 = vpop.f32.mrf.mxu0
  %v8626 = vadd.f32 %v8337, %v8625
  %v8627 = vpop.f32.mrf.mxu0
  %8628 = vmatprep.mubr.bf16.mxu0 0
  %8629 = vmatmul.mubr.bf16.gmra.mxu0 %v6470
  %v8630 = vpop.f32.mrf.mxu0
  %v8631 = vadd.f32 %v8342, %v8630
  %v8632 = vpop.f32.mrf.mxu0
  %v8633 = vpop.f32.mrf.mxu0
  %v8634 = vadd.f32 %v8345, %v8633
  %v8635 = vpop.f32.mrf.mxu0
  %8636 = vmatprep.mubr.bf16.mxu0 0
  %8637 = vmatmul.mubr.bf16.gmra.mxu0 %v6479
  %v8638 = vpop.f32.mrf.mxu0
  %v8639 = vadd.f32 %v8350, %v8638
  %v8640 = vpop.f32.mrf.mxu0
  %v8641 = vpop.f32.mrf.mxu0
  %v8642 = vadd.f32 %v8353, %v8641
  %v8643 = vpop.f32.mrf.mxu0
  %8644 = vdwg.mxu0
  %v8645 = vld [vmem:[%s3 + $0x3] sm:$0x1]
  %v8646 = vld [vmem:[%s3 + $0x4] sm:$0x1]
  %v8647 = vadd.f32 %v8391, %v8394
  %v8648 = vadd.f32 %v8647, %v8399
  %v8649 = vadd.f32 %v8648, %v8402
  %v8650 = vadd.f32 %v8649, %v8407
  %v8651 = vadd.f32 %v8650, %v8410
  %v8652 = vadd.f32 %v8651, %v8415
  %v8653 = vadd.f32 %v8652, %v8418
  %v8654 = vadd.f32 %v8653, %v8423
  %v8655 = vadd.f32 %v8654, %v8426
  %v8656 = vadd.f32 %v8655, %v8431
  %v8657 = vadd.f32 %v8656, %v8434
  %v8658 = vadd.f32 %v8657, %v8439
  %v8659 = vadd.f32 %v8658, %v8442
  %v8660 = vadd.f32 %v8659, %v8447
  %v8661 = vadd.f32 %v8660, %v8450
  %v8662 = vadd.f32 %v8661, %v8455
  %v8663 = vadd.f32 %v8662, %v8458
  %v8664 = vadd.f32 %v8663, %v8463
  %v8665 = vadd.f32 %v8664, %v8466
  %v8666 = vadd.f32 %v8665, %v8471
  %v8667 = vadd.f32 %v8666, %v8474
  %v8668 = vadd.f32 %v8667, %v8479
  %v8669 = vadd.f32 %v8668, %v8482
  %v8670 = vadd.f32 %v8669, %v8487
  %v8671 = vadd.f32 %v8670, %v8490
  %v8672 = vadd.f32 %v8671, %v8495
  %v8673 = vadd.f32 %v8672, %v8498
  %v8674 = vadd.f32 %v8673, %v8503
  %v8675 = vadd.f32 %v8674, %v8506
  %v8676 = vadd.f32 %v8675, %v8511
  %v8677 = vadd.f32 %v8676, %v8514
  %v8678 = vadd.f32 %v8677, %v8519
  %v8679 = vadd.f32 %v8678, %v8522
  %v8680 = vadd.f32 %v8679, %v8527
  %v8681 = vadd.f32 %v8680, %v8530
  %v8682 = vadd.f32 %v8681, %v8535
  %v8683 = vadd.f32 %v8682, %v8538
  %v8684 = vadd.f32 %v8683, %v8543
  %v8685 = vadd.f32 %v8684, %v8546
  %v8686 = vadd.f32 %v8685, %v8551
  %v8687 = vadd.f32 %v8686, %v8554
  %v8688 = vadd.f32 %v8687, %v8559
  %v8689 = vadd.f32 %v8688, %v8562
  %v8690 = vadd.f32 %v8689, %v8567
  %v8691 = vadd.f32 %v8690, %v8570
  %v8692 = vadd.f32 %v8691, %v8575
  %v8693 = vadd.f32 %v8692, %v8578
  %v8694 = vadd.f32 %v8693, %v8583
  %v8695 = vadd.f32 %v8694, %v8586
  %v8696 = vadd.f32 %v8695, %v8591
  %v8697 = vadd.f32 %v8696, %v8594
  %v8698 = vadd.f32 %v8697, %v8599
  %v8699 = vadd.f32 %v8698, %v8602
  %v8700 = vadd.f32 %v8699, %v8607
  %v8701 = vadd.f32 %v8700, %v8610
  %v8702 = vadd.f32 %v8701, %v8615
  %v8703 = vadd.f32 %v8702, %v8618
  %v8704 = vadd.f32 %v8703, %v8623
  %v8705 = vadd.f32 %v8704, %v8626
  %v8706 = vadd.f32 %v8705, %v8631
  %v8707 = vadd.f32 %v8706, %v8634
  %v8708 = vadd.f32 %v8707, %v8639
  %v8709 = vadd.f32 %v8708, %v8642
  %v8710 = vrot.slane %v8709, 4
  %v8711 = vadd.f32 %v8709, %v8710
  %v8712 = vrot.slane %v8711, 2
  %v8713 = vadd.f32 %v8711, %v8712
  %v8714 = vrot.slane %v8713, 1
  %v8715 = vadd.f32 %v8713, %v8714
  %v8716 = vmul.f32 %v8715, 0.001953125
  %v8717 = vsub.f32 %v8391, %v8716
  %v8718 = vsub.f32 %v8394, %v8716
  %v8719 = vsub.f32 %v8399, %v8716
  %v8720 = vsub.f32 %v8402, %v8716
  %v8721 = vsub.f32 %v8407, %v8716
  %v8722 = vsub.f32 %v8410, %v8716
  %v8723 = vsub.f32 %v8415, %v8716
  %v8724 = vsub.f32 %v8418, %v8716
  %v8725 = vsub.f32 %v8423, %v8716
  %v8726 = vsub.f32 %v8426, %v8716
  %v8727 = vsub.f32 %v8431, %v8716
  %v8728 = vsub.f32 %v8434, %v8716
  %v8729 = vsub.f32 %v8439, %v8716
  %v8730 = vsub.f32 %v8442, %v8716
  %v8731 = vsub.f32 %v8447, %v8716
  %v8732 = vsub.f32 %v8450, %v8716
  %v8733 = vsub.f32 %v8455, %v8716
  %v8734 = vsub.f32 %v8458, %v8716
  %v8735 = vsub.f32 %v8463, %v8716
  %v8736 = vsub.f32 %v8466, %v8716
  %v8737 = vsub.f32 %v8471, %v8716
  %v8738 = vsub.f32 %v8474, %v8716
  %v8739 = vsub.f32 %v8479, %v8716
  %v8740 = vsub.f32 %v8482, %v8716
  %v8741 = vsub.f32 %v8487, %v8716
  %v8742 = vsub.f32 %v8490, %v8716
  %v8743 = vsub.f32 %v8495, %v8716
  %v8744 = vsub.f32 %v8498, %v8716
  %v8745 = vsub.f32 %v8503, %v8716
  %v8746 = vsub.f32 %v8506, %v8716
  %v8747 = vsub.f32 %v8511, %v8716
  %v8748 = vsub.f32 %v8514, %v8716
  %v8749 = vsub.f32 %v8519, %v8716
  %v8750 = vsub.f32 %v8522, %v8716
  %v8751 = vsub.f32 %v8527, %v8716
  %v8752 = vsub.f32 %v8530, %v8716
  %v8753 = vsub.f32 %v8535, %v8716
  %v8754 = vsub.f32 %v8538, %v8716
  %v8755 = vsub.f32 %v8543, %v8716
  %v8756 = vsub.f32 %v8546, %v8716
  %v8757 = vsub.f32 %v8551, %v8716
  %v8758 = vsub.f32 %v8554, %v8716
  %v8759 = vsub.f32 %v8559, %v8716
  %v8760 = vsub.f32 %v8562, %v8716
  %v8761 = vsub.f32 %v8567, %v8716
  %v8762 = vsub.f32 %v8570, %v8716
  %v8763 = vsub.f32 %v8575, %v8716
  %v8764 = vsub.f32 %v8578, %v8716
  %v8765 = vsub.f32 %v8583, %v8716
  %v8766 = vsub.f32 %v8586, %v8716
  %v8767 = vsub.f32 %v8591, %v8716
  %v8768 = vsub.f32 %v8594, %v8716
  %v8769 = vsub.f32 %v8599, %v8716
  %v8770 = vsub.f32 %v8602, %v8716
  %v8771 = vsub.f32 %v8607, %v8716
  %v8772 = vsub.f32 %v8610, %v8716
  %v8773 = vsub.f32 %v8615, %v8716
  %v8774 = vsub.f32 %v8618, %v8716
  %v8775 = vsub.f32 %v8623, %v8716
  %v8776 = vsub.f32 %v8626, %v8716
  %v8777 = vsub.f32 %v8631, %v8716
  %v8778 = vsub.f32 %v8634, %v8716
  %v8779 = vsub.f32 %v8639, %v8716
  %v8780 = vsub.f32 %v8642, %v8716
  %v8781 = vmul.f32 %v8717, %v8717
  %v8782 = vmul.f32 %v8718, %v8718
  %v8783 = vmul.f32 %v8719, %v8719
  %v8784 = vmul.f32 %v8720, %v8720
  %v8785 = vmul.f32 %v8721, %v8721
  %v8786 = vmul.f32 %v8722, %v8722
  %v8787 = vmul.f32 %v8723, %v8723
  %v8788 = vmul.f32 %v8724, %v8724
  %v8789 = vmul.f32 %v8725, %v8725
  %v8790 = vmul.f32 %v8726, %v8726
  %v8791 = vmul.f32 %v8727, %v8727
  %v8792 = vmul.f32 %v8728, %v8728
  %v8793 = vmul.f32 %v8729, %v8729
  %v8794 = vmul.f32 %v8730, %v8730
  %v8795 = vmul.f32 %v8731, %v8731
  %v8796 = vmul.f32 %v8732, %v8732
  %v8797 = vmul.f32 %v8733, %v8733
  %v8798 = vmul.f32 %v8734, %v8734
  %v8799 = vmul.f32 %v8735, %v8735
  %v8800 = vmul.f32 %v8736, %v8736
  %v8801 = vmul.f32 %v8737, %v8737
  %v8802 = vmul.f32 %v8738, %v8738
  %v8803 = vmul.f32 %v8739, %v8739
  %v8804 = vmul.f32 %v8740, %v8740
  %v8805 = vmul.f32 %v8741, %v8741
  %v8806 = vmul.f32 %v8742, %v8742
  %v8807 = vmul.f32 %v8743, %v8743
  %v8808 = vmul.f32 %v8744, %v8744
  %v8809 = vmul.f32 %v8745, %v8745
  %v8810 = vmul.f32 %v8746, %v8746
  %v8811 = vmul.f32 %v8747, %v8747
  %v8812 = vmul.f32 %v8748, %v8748
  %v8813 = vmul.f32 %v8749, %v8749
  %v8814 = vmul.f32 %v8750, %v8750
  %v8815 = vmul.f32 %v8751, %v8751
  %v8816 = vmul.f32 %v8752, %v8752
  %v8817 = vmul.f32 %v8753, %v8753
  %v8818 = vmul.f32 %v8754, %v8754
  %v8819 = vmul.f32 %v8755, %v8755
  %v8820 = vmul.f32 %v8756, %v8756
  %v8821 = vmul.f32 %v8757, %v8757
  %v8822 = vmul.f32 %v8758, %v8758
  %v8823 = vmul.f32 %v8759, %v8759
  %v8824 = vmul.f32 %v8760, %v8760
  %v8825 = vmul.f32 %v8761, %v8761
  %v8826 = vmul.f32 %v8762, %v8762
  %v8827 = vmul.f32 %v8763, %v8763
  %v8828 = vmul.f32 %v8764, %v8764
  %v8829 = vmul.f32 %v8765, %v8765
  %v8830 = vmul.f32 %v8766, %v8766
  %v8831 = vmul.f32 %v8767, %v8767
  %v8832 = vmul.f32 %v8768, %v8768
  %v8833 = vmul.f32 %v8769, %v8769
  %v8834 = vmul.f32 %v8770, %v8770
  %v8835 = vmul.f32 %v8771, %v8771
  %v8836 = vmul.f32 %v8772, %v8772
  %v8837 = vmul.f32 %v8773, %v8773
  %v8838 = vmul.f32 %v8774, %v8774
  %v8839 = vmul.f32 %v8775, %v8775
  %v8840 = vmul.f32 %v8776, %v8776
  %v8841 = vmul.f32 %v8777, %v8777
  %v8842 = vmul.f32 %v8778, %v8778
  %v8843 = vmul.f32 %v8779, %v8779
  %v8844 = vmul.f32 %v8780, %v8780
  %v8845 = vadd.f32 %v8781, %v8782
  %v8846 = vadd.f32 %v8845, %v8783
  %v8847 = vadd.f32 %v8846, %v8784
  %v8848 = vadd.f32 %v8847, %v8785
  %v8849 = vadd.f32 %v8848, %v8786
  %v8850 = vadd.f32 %v8849, %v8787
  %v8851 = vadd.f32 %v8850, %v8788
  %v8852 = vadd.f32 %v8851, %v8789
  %v8853 = vadd.f32 %v8852, %v8790
  %v8854 = vadd.f32 %v8853, %v8791
  %v8855 = vadd.f32 %v8854, %v8792
  %v8856 = vadd.f32 %v8855, %v8793
  %v8857 = vadd.f32 %v8856, %v8794
  %v8858 = vadd.f32 %v8857, %v8795
  %v8859 = vadd.f32 %v8858, %v8796
  %v8860 = vadd.f32 %v8859, %v8797
  %v8861 = vadd.f32 %v8860, %v8798
  %v8862 = vadd.f32 %v8861, %v8799
  %v8863 = vadd.f32 %v8862, %v8800
  %v8864 = vadd.f32 %v8863, %v8801
  %v8865 = vadd.f32 %v8864, %v8802
  %v8866 = vadd.f32 %v8865, %v8803
  %v8867 = vadd.f32 %v8866, %v8804
  %v8868 = vadd.f32 %v8867, %v8805
  %v8869 = vadd.f32 %v8868, %v8806
  %v8870 = vadd.f32 %v8869, %v8807
  %v8871 = vadd.f32 %v8870, %v8808
  %v8872 = vadd.f32 %v8871, %v8809
  %v8873 = vadd.f32 %v8872, %v8810
  %v8874 = vadd.f32 %v8873, %v8811
  %v8875 = vadd.f32 %v8874, %v8812
  %v8876 = vadd.f32 %v8875, %v8813
  %v8877 = vadd.f32 %v8876, %v8814
  %v8878 = vadd.f32 %v8877, %v8815
  %v8879 = vadd.f32 %v8878, %v8816
  %v8880 = vadd.f32 %v8879, %v8817
  %v8881 = vadd.f32 %v8880, %v8818
  %v8882 = vadd.f32 %v8881, %v8819
  %v8883 = vadd.f32 %v8882, %v8820
  %v8884 = vadd.f32 %v8883, %v8821
  %v8885 = vadd.f32 %v8884, %v8822
  %v8886 = vadd.f32 %v8885, %v8823
  %v8887 = vadd.f32 %v8886, %v8824
  %v8888 = vadd.f32 %v8887, %v8825
  %v8889 = vadd.f32 %v8888, %v8826
  %v8890 = vadd.f32 %v8889, %v8827
  %v8891 = vadd.f32 %v8890, %v8828
  %v8892 = vadd.f32 %v8891, %v8829
  %v8893 = vadd.f32 %v8892, %v8830
  %v8894 = vadd.f32 %v8893, %v8831
  %v8895 = vadd.f32 %v8894, %v8832
  %v8896 = vadd.f32 %v8895, %v8833
  %v8897 = vadd.f32 %v8896, %v8834
  %v8898 = vadd.f32 %v8897, %v8835
  %v8899 = vadd.f32 %v8898, %v8836
  %v8900 = vadd.f32 %v8899, %v8837
  %v8901 = vadd.f32 %v8900, %v8838
  %v8902 = vadd.f32 %v8901, %v8839
  %v8903 = vadd.f32 %v8902, %v8840
  %v8904 = vadd.f32 %v8903, %v8841
  %v8905 = vadd.f32 %v8904, %v8842
  %v8906 = vadd.f32 %v8905, %v8843
  %v8907 = vadd.f32 %v8906, %v8844
  %v8908 = vrot.slane %v8907, 4
  %v8909 = vadd.f32 %v8907, %v8908
  %v8910 = vrot.slane %v8909, 2
  %v8911 = vadd.f32 %v8909, %v8910
  %v8912 = vrot.slane %v8911, 1
  %v8913 = vadd.f32 %v8911, %v8912
  %v8914 = vmul.f32 %v8913, 0.001953125
  %v8915 = vadd.f32 %v8914, 1e-05
  %v8916 = vrsqrt.pop %v8915
  %v8917 = vmul.f32 %v8916, %v8645
  %v8918 = vlaneseq
  %v8919 = vshrl.u32 %v8918, 7
  %v8920 = vsub.s32 0, %v8919
  %v8921 = vrot.slane %v8917, %v8920
  %v8922 = vmul.f32 %v8717, %v8921
  %v8923 = vmul.f32 %v8718, %v8921
  %v8924 = vmul.f32 %v8719, %v8921
  %v8925 = vmul.f32 %v8720, %v8921
  %v8926 = vmul.f32 %v8721, %v8921
  %v8927 = vmul.f32 %v8722, %v8921
  %v8928 = vmul.f32 %v8723, %v8921
  %v8929 = vmul.f32 %v8724, %v8921
  %v8930 = vmul.f32 %v8725, %v8921
  %v8931 = vmul.f32 %v8726, %v8921
  %v8932 = vmul.f32 %v8727, %v8921
  %v8933 = vmul.f32 %v8728, %v8921
  %v8934 = vmul.f32 %v8729, %v8921
  %v8935 = vmul.f32 %v8730, %v8921
  %v8936 = vmul.f32 %v8731, %v8921
  %v8937 = vmul.f32 %v8732, %v8921
  %v8938 = vmul.f32 %v8733, %v8921
  %v8939 = vmul.f32 %v8734, %v8921
  %v8940 = vmul.f32 %v8735, %v8921
  %v8941 = vmul.f32 %v8736, %v8921
  %v8942 = vmul.f32 %v8737, %v8921
  %v8943 = vmul.f32 %v8738, %v8921
  %v8944 = vmul.f32 %v8739, %v8921
  %v8945 = vmul.f32 %v8740, %v8921
  %v8946 = vmul.f32 %v8741, %v8921
  %v8947 = vmul.f32 %v8742, %v8921
  %v8948 = vmul.f32 %v8743, %v8921
  %v8949 = vmul.f32 %v8744, %v8921
  %v8950 = vmul.f32 %v8745, %v8921
  %v8951 = vmul.f32 %v8746, %v8921
  %v8952 = vmul.f32 %v8747, %v8921
  %v8953 = vmul.f32 %v8748, %v8921
  %v8954 = vmul.f32 %v8749, %v8921
  %v8955 = vmul.f32 %v8750, %v8921
  %v8956 = vmul.f32 %v8751, %v8921
  %v8957 = vmul.f32 %v8752, %v8921
  %v8958 = vmul.f32 %v8753, %v8921
  %v8959 = vmul.f32 %v8754, %v8921
  %v8960 = vmul.f32 %v8755, %v8921
  %v8961 = vmul.f32 %v8756, %v8921
  %v8962 = vmul.f32 %v8757, %v8921
  %v8963 = vmul.f32 %v8758, %v8921
  %v8964 = vmul.f32 %v8759, %v8921
  %v8965 = vmul.f32 %v8760, %v8921
  %v8966 = vmul.f32 %v8761, %v8921
  %v8967 = vmul.f32 %v8762, %v8921
  %v8968 = vmul.f32 %v8763, %v8921
  %v8969 = vmul.f32 %v8764, %v8921
  %v8970 = vmul.f32 %v8765, %v8921
  %v8971 = vmul.f32 %v8766, %v8921
  %v8972 = vmul.f32 %v8767, %v8921
  %v8973 = vmul.f32 %v8768, %v8921
  %v8974 = vmul.f32 %v8769, %v8921
  %v8975 = vmul.f32 %v8770, %v8921
  %v8976 = vmul.f32 %v8771, %v8921
  %v8977 = vmul.f32 %v8772, %v8921
  %v8978 = vmul.f32 %v8773, %v8921
  %v8979 = vmul.f32 %v8774, %v8921
  %v8980 = vmul.f32 %v8775, %v8921
  %v8981 = vmul.f32 %v8776, %v8921
  %v8982 = vmul.f32 %v8777, %v8921
  %v8983 = vmul.f32 %v8778, %v8921
  %v8984 = vmul.f32 %v8779, %v8921
  %v8985 = vmul.f32 %v8780, %v8921
  %v8986 = vlaneseq
  %v8987 = vshrl.u32 %v8986, 7
  %v8988 = vsub.s32 0, %v8987
  %v8989 = vrot.slane %v8646, %v8988
  %v8990 = vadd.f32 %v8922, %v8989
  %v8991 = vadd.f32 %v8923, %v8989
  %v8992 = vadd.f32 %v8924, %v8989
  %v8993 = vadd.f32 %v8925, %v8989
  %v8994 = vadd.f32 %v8926, %v8989
  %v8995 = vadd.f32 %v8927, %v8989
  %v8996 = vadd.f32 %v8928, %v8989
  %v8997 = vadd.f32 %v8929, %v8989
  %v8998 = vadd.f32 %v8930, %v8989
  %v8999 = vadd.f32 %v8931, %v8989
  %v9000 = vadd.f32 %v8932, %v8989
  %v9001 = vadd.f32 %v8933, %v8989
  %v9002 = vadd.f32 %v8934, %v8989
  %v9003 = vadd.f32 %v8935, %v8989
  %v9004 = vadd.f32 %v8936, %v8989
  %v9005 = vadd.f32 %v8937, %v8989
  %v9006 = vadd.f32 %v8938, %v8989
  %v9007 = vadd.f32 %v8939, %v8989
  %v9008 = vadd.f32 %v8940, %v8989
  %v9009 = vadd.f32 %v8941, %v8989
  %v9010 = vadd.f32 %v8942, %v8989
  %v9011 = vadd.f32 %v8943, %v8989
  %v9012 = vadd.f32 %v8944, %v8989
  %v9013 = vadd.f32 %v8945, %v8989
  %v9014 = vadd.f32 %v8946, %v8989
  %v9015 = vadd.f32 %v8947, %v8989
  %v9016 = vadd.f32 %v8948, %v8989
  %v9017 = vadd.f32 %v8949, %v8989
  %v9018 = vadd.f32 %v8950, %v8989
  %v9019 = vadd.f32 %v8951, %v8989
  %v9020 = vadd.f32 %v8952, %v8989
  %v9021 = vadd.f32 %v8953, %v8989
  %v9022 = vadd.f32 %v8954, %v8989
  %v9023 = vadd.f32 %v8955, %v8989
  %v9024 = vadd.f32 %v8956, %v8989
  %v9025 = vadd.f32 %v8957, %v8989
  %v9026 = vadd.f32 %v8958, %v8989
  %v9027 = vadd.f32 %v8959, %v8989
  %v9028 = vadd.f32 %v8960, %v8989
  %v9029 = vadd.f32 %v8961, %v8989
  %v9030 = vadd.f32 %v8962, %v8989
  %v9031 = vadd.f32 %v8963, %v8989
  %v9032 = vadd.f32 %v8964, %v8989
  %v9033 = vadd.f32 %v8965, %v8989
  %v9034 = vadd.f32 %v8966, %v8989
  %v9035 = vadd.f32 %v8967, %v8989
  %v9036 = vadd.f32 %v8968, %v8989
  %v9037 = vadd.f32 %v8969, %v8989
  %v9038 = vadd.f32 %v8970, %v8989
  %v9039 = vadd.f32 %v8971, %v8989
  %v9040 = vadd.f32 %v8972, %v8989
  %v9041 = vadd.f32 %v8973, %v8989
  %v9042 = vadd.f32 %v8974, %v8989
  %v9043 = vadd.f32 %v8975, %v8989
  %v9044 = vadd.f32 %v8976, %v8989
  %v9045 = vadd.f32 %v8977, %v8989
  %v9046 = vadd.f32 %v8978, %v8989
  %v9047 = vadd.f32 %v8979, %v8989
  %v9048 = vadd.f32 %v8980, %v8989
  %v9049 = vadd.f32 %v8981, %v8989
  %v9050 = vadd.f32 %v8982, %v8989
  %v9051 = vadd.f32 %v8983, %v8989
  %v9052 = vadd.f32 %v8984, %v8989
  %v9053 = vadd.f32 %v8985, %v8989
  %9054 = vxpose.xlu0.b32.start [1/16] %v8990, 128
  %9055 = vxpose.xlu0.b32.cont [2/16] %v8991, 128
  %9056 = vxpose.xlu0.b32.cont [3/16] %v8992, 128
  %9057 = vxpose.xlu0.b32.cont [4/16] %v8993, 128
  %9058 = vxpose.xlu0.b32.cont [5/16] %v8994, 128
  %9059 = vxpose.xlu0.b32.cont [6/16] %v8995, 128
  %9060 = vxpose.xlu0.b32.cont [7/16] %v8996, 128
  %9061 = vxpose.xlu0.b32.cont [8/16] %v8997, 128
  %9062 = vxpose.xlu0.b32.cont [9/16] %v8998, 128
  %9063 = vxpose.xlu0.b32.cont [10/16] %v8999, 128
  %9064 = vxpose.xlu0.b32.cont [11/16] %v9000, 128
  %9065 = vxpose.xlu0.b32.cont [12/16] %v9001, 128
  %9066 = vxpose.xlu0.b32.cont [13/16] %v9002, 128
  %9067 = vxpose.xlu0.b32.cont [14/16] %v9003, 128
  %9068 = vxpose.xlu0.b32.cont [15/16] %v9004, 128
  %9069 = vxpose.xlu0.b32.end [16/16] %v9005, 128
  %v9070 = vpop.trf.xlu0
  %v9071 = vpop.trf.xlu0
  %v9072 = vpop.trf.xlu0
  %v9073 = vpop.trf.xlu0
  %v9074 = vpop.trf.xlu0
  %v9075 = vpop.trf.xlu0
  %v9076 = vpop.trf.xlu0
  %v9077 = vpop.trf.xlu0
  %v9078 = vpop.trf.xlu0
  %v9079 = vpop.trf.xlu0
  %v9080 = vpop.trf.xlu0
  %v9081 = vpop.trf.xlu0
  %v9082 = vpop.trf.xlu0
  %v9083 = vpop.trf.xlu0
  %v9084 = vpop.trf.xlu0
  %v9085 = vpop.trf.xlu0
  %9086 = vxpose.xlu0.b32.start [1/16] %v9006, 128
  %9087 = vxpose.xlu0.b32.cont [2/16] %v9007, 128
  %9088 = vxpose.xlu0.b32.cont [3/16] %v9008, 128
  %9089 = vxpose.xlu0.b32.cont [4/16] %v9009, 128
  %9090 = vxpose.xlu0.b32.cont [5/16] %v9010, 128
  %9091 = vxpose.xlu0.b32.cont [6/16] %v9011, 128
  %9092 = vxpose.xlu0.b32.cont [7/16] %v9012, 128
  %9093 = vxpose.xlu0.b32.cont [8/16] %v9013, 128
  %9094 = vxpose.xlu0.b32.cont [9/16] %v9014, 128
  %9095 = vxpose.xlu0.b32.cont [10/16] %v9015, 128
  %9096 = vxpose.xlu0.b32.cont [11/16] %v9016, 128
  %9097 = vxpose.xlu0.b32.cont [12/16] %v9017, 128
  %9098 = vxpose.xlu0.b32.cont [13/16] %v9018, 128
  %9099 = vxpose.xlu0.b32.cont [14/16] %v9019, 128
  %9100 = vxpose.xlu0.b32.cont [15/16] %v9020, 128
  %9101 = vxpose.xlu0.b32.end [16/16] %v9021, 128
  %v9102 = vpop.trf.xlu0
  %v9103 = vpop.trf.xlu0
  %v9104 = vpop.trf.xlu0
  %v9105 = vpop.trf.xlu0
  %v9106 = vpop.trf.xlu0
  %v9107 = vpop.trf.xlu0
  %v9108 = vpop.trf.xlu0
  %v9109 = vpop.trf.xlu0
  %v9110 = vpop.trf.xlu0
  %v9111 = vpop.trf.xlu0
  %v9112 = vpop.trf.xlu0
  %v9113 = vpop.trf.xlu0
  %v9114 = vpop.trf.xlu0
  %v9115 = vpop.trf.xlu0
  %v9116 = vpop.trf.xlu0
  %v9117 = vpop.trf.xlu0
  %9118 = vst [vmem:[%s4] sm:$0xff] %v9070
  %9119 = vst [vmem:[%s4 + $0x8] sm:$0xff] %v9102
  %9120 = vst [vmem:[%s4 + $0x10] sm:$0xff] %v9071
  %9121 = vst [vmem:[%s4 + $0x18] sm:$0xff] %v9103
  %9122 = vst [vmem:[%s4 + $0x20] sm:$0xff] %v9072
  %9123 = vst [vmem:[%s4 + $0x28] sm:$0xff] %v9104
  %9124 = vst [vmem:[%s4 + $0x30] sm:$0xff] %v9073
  %9125 = vst [vmem:[%s4 + $0x38] sm:$0xff] %v9105
  %9126 = vst [vmem:[%s4 + $0x40] sm:$0xff] %v9074
  %9127 = vst [vmem:[%s4 + $0x48] sm:$0xff] %v9106
  %9128 = vst [vmem:[%s4 + $0x50] sm:$0xff] %v9075
  %9129 = vst [vmem:[%s4 + $0x58] sm:$0xff] %v9107
  %9130 = vst [vmem:[%s4 + $0x60] sm:$0xff] %v9076
  %9131 = vst [vmem:[%s4 + $0x68] sm:$0xff] %v9108
  %9132 = vst [vmem:[%s4 + $0x70] sm:$0xff] %v9077
  %9133 = vst [vmem:[%s4 + $0x78] sm:$0xff] %v9109
  %9134 = vst [vmem:[%s4 + $0x80] sm:$0xff] %v9078
  %9135 = vst [vmem:[%s4 + $0x88] sm:$0xff] %v9110
  %9136 = vst [vmem:[%s4 + $0x90] sm:$0xff] %v9079
  %9137 = vst [vmem:[%s4 + $0x98] sm:$0xff] %v9111
  %9138 = vst [vmem:[%s4 + $0xa0] sm:$0xff] %v9080
  %9139 = vst [vmem:[%s4 + $0xa8] sm:$0xff] %v9112
  %9140 = vst [vmem:[%s4 + $0xb0] sm:$0xff] %v9081
  %9141 = vst [vmem:[%s4 + $0xb8] sm:$0xff] %v9113
  %9142 = vst [vmem:[%s4 + $0xc0] sm:$0xff] %v9082
  %9143 = vst [vmem:[%s4 + $0xc8] sm:$0xff] %v9114
  %9144 = vst [vmem:[%s4 + $0xd0] sm:$0xff] %v9083
  %9145 = vst [vmem:[%s4 + $0xd8] sm:$0xff] %v9115
  %9146 = vst [vmem:[%s4 + $0xe0] sm:$0xff] %v9084
  %9147 = vst [vmem:[%s4 + $0xe8] sm:$0xff] %v9116
  %9148 = vst [vmem:[%s4 + $0xf0] sm:$0xff] %v9085
  %9149 = vst [vmem:[%s4 + $0xf8] sm:$0xff] %v9117
  %9150 = vxpose.xlu0.b32.start [1/16] %v9022, 128
  %9151 = vxpose.xlu0.b32.cont [2/16] %v9023, 128
  %9152 = vxpose.xlu0.b32.cont [3/16] %v9024, 128
  %9153 = vxpose.xlu0.b32.cont [4/16] %v9025, 128
  %9154 = vxpose.xlu0.b32.cont [5/16] %v9026, 128
  %9155 = vxpose.xlu0.b32.cont [6/16] %v9027, 128
  %9156 = vxpose.xlu0.b32.cont [7/16] %v9028, 128
  %9157 = vxpose.xlu0.b32.cont [8/16] %v9029, 128
  %9158 = vxpose.xlu0.b32.cont [9/16] %v9030, 128
  %9159 = vxpose.xlu0.b32.cont [10/16] %v9031, 128
  %9160 = vxpose.xlu0.b32.cont [11/16] %v9032, 128
  %9161 = vxpose.xlu0.b32.cont [12/16] %v9033, 128
  %9162 = vxpose.xlu0.b32.cont [13/16] %v9034, 128
  %9163 = vxpose.xlu0.b32.cont [14/16] %v9035, 128
  %9164 = vxpose.xlu0.b32.cont [15/16] %v9036, 128
  %9165 = vxpose.xlu0.b32.end [16/16] %v9037, 128
  %v9166 = vpop.trf.xlu0
  %v9167 = vpop.trf.xlu0
  %v9168 = vpop.trf.xlu0
  %v9169 = vpop.trf.xlu0
  %v9170 = vpop.trf.xlu0
  %v9171 = vpop.trf.xlu0
  %v9172 = vpop.trf.xlu0
  %v9173 = vpop.trf.xlu0
  %v9174 = vpop.trf.xlu0
  %v9175 = vpop.trf.xlu0
  %v9176 = vpop.trf.xlu0
  %v9177 = vpop.trf.xlu0
  %v9178 = vpop.trf.xlu0
  %v9179 = vpop.trf.xlu0
  %v9180 = vpop.trf.xlu0
  %v9181 = vpop.trf.xlu0
  %9182 = vxpose.xlu0.b32.start [1/16] %v9038, 128
  %9183 = vxpose.xlu0.b32.cont [2/16] %v9039, 128
  %9184 = vxpose.xlu0.b32.cont [3/16] %v9040, 128
  %9185 = vxpose.xlu0.b32.cont [4/16] %v9041, 128
  %9186 = vxpose.xlu0.b32.cont [5/16] %v9042, 128
  %9187 = vxpose.xlu0.b32.cont [6/16] %v9043, 128
  %9188 = vxpose.xlu0.b32.cont [7/16] %v9044, 128
  %9189 = vxpose.xlu0.b32.cont [8/16] %v9045, 128
  %9190 = vxpose.xlu0.b32.cont [9/16] %v9046, 128
  %9191 = vxpose.xlu0.b32.cont [10/16] %v9047, 128
  %9192 = vxpose.xlu0.b32.cont [11/16] %v9048, 128
  %9193 = vxpose.xlu0.b32.cont [12/16] %v9049, 128
  %9194 = vxpose.xlu0.b32.cont [13/16] %v9050, 128
  %9195 = vxpose.xlu0.b32.cont [14/16] %v9051, 128
  %9196 = vxpose.xlu0.b32.cont [15/16] %v9052, 128
  %9197 = vxpose.xlu0.b32.end [16/16] %v9053, 128
  %v9198 = vpop.trf.xlu0
  %v9199 = vpop.trf.xlu0
  %v9200 = vpop.trf.xlu0
  %v9201 = vpop.trf.xlu0
  %v9202 = vpop.trf.xlu0
  %v9203 = vpop.trf.xlu0
  %v9204 = vpop.trf.xlu0
  %v9205 = vpop.trf.xlu0
  %v9206 = vpop.trf.xlu0
  %v9207 = vpop.trf.xlu0
  %v9208 = vpop.trf.xlu0
  %v9209 = vpop.trf.xlu0
  %v9210 = vpop.trf.xlu0
  %v9211 = vpop.trf.xlu0
  %v9212 = vpop.trf.xlu0
  %v9213 = vpop.trf.xlu0
  %s9214 = scalar_lea.vmem %s4, 256
  %9215 = vst [vmem:[%s9214] sm:$0xff] %v9166
  %9216 = vst [vmem:[%s9214 + $0x8] sm:$0xff] %v9198
  %9217 = vst [vmem:[%s9214 + $0x10] sm:$0xff] %v9167
  %9218 = vst [vmem:[%s9214 + $0x18] sm:$0xff] %v9199
  %9219 = vst [vmem:[%s9214 + $0x20] sm:$0xff] %v9168
  %9220 = vst [vmem:[%s9214 + $0x28] sm:$0xff] %v9200
  %9221 = vst [vmem:[%s9214 + $0x30] sm:$0xff] %v9169
  %9222 = vst [vmem:[%s9214 + $0x38] sm:$0xff] %v9201
  %9223 = vst [vmem:[%s9214 + $0x40] sm:$0xff] %v9170
  %9224 = vst [vmem:[%s9214 + $0x48] sm:$0xff] %v9202
  %9225 = vst [vmem:[%s9214 + $0x50] sm:$0xff] %v9171
  %9226 = vst [vmem:[%s9214 + $0x58] sm:$0xff] %v9203
  %9227 = vst [vmem:[%s9214 + $0x60] sm:$0xff] %v9172
  %9228 = vst [vmem:[%s9214 + $0x68] sm:$0xff] %v9204
  %9229 = vst [vmem:[%s9214 + $0x70] sm:$0xff] %v9173
  %9230 = vst [vmem:[%s9214 + $0x78] sm:$0xff] %v9205
  %9231 = vst [vmem:[%s9214 + $0x80] sm:$0xff] %v9174
  %9232 = vst [vmem:[%s9214 + $0x88] sm:$0xff] %v9206
  %9233 = vst [vmem:[%s9214 + $0x90] sm:$0xff] %v9175
  %9234 = vst [vmem:[%s9214 + $0x98] sm:$0xff] %v9207
  %9235 = vst [vmem:[%s9214 + $0xa0] sm:$0xff] %v9176
  %9236 = vst [vmem:[%s9214 + $0xa8] sm:$0xff] %v9208
  %9237 = vst [vmem:[%s9214 + $0xb0] sm:$0xff] %v9177
  %9238 = vst [vmem:[%s9214 + $0xb8] sm:$0xff] %v9209
  %9239 = vst [vmem:[%s9214 + $0xc0] sm:$0xff] %v9178
  %9240 = vst [vmem:[%s9214 + $0xc8] sm:$0xff] %v9210
  %9241 = vst [vmem:[%s9214 + $0xd0] sm:$0xff] %v9179
  %9242 = vst [vmem:[%s9214 + $0xd8] sm:$0xff] %v9211
  %9243 = vst [vmem:[%s9214 + $0xe0] sm:$0xff] %v9180
  %9244 = vst [vmem:[%s9214 + $0xe8] sm:$0xff] %v9212
  %9245 = vst [vmem:[%s9214 + $0xf0] sm:$0xff] %v9181
  %9246 = vst [vmem:[%s9214 + $0xf8] sm:$0xff] %v9213
  // Predicated region
  $region18: #{augodefunc_forward.1} parent=0 // pred_check
    _
  $region19: #{augodefunc_forward.1} parent=0 // pred_check_branch
    %9248 = sbr.rel (0) target = $region21
  $region20: #{augodefunc_forward.1} parent=0 // pred_region
    _
  $region21: #{augodefunc_forward.1} parent=0 // pred_fallthru
    _
  // Predicated region
  $region22: #{augodefunc_forward.1} parent=0 // pred_check
    _
  $region23: #{augodefunc_forward.1} parent=0 // pred_check_branch
    %9250 = sbr.rel (0) target = $region25
  $region24: #{augodefunc_forward.1} parent=0 // pred_region
    _
  $region25: #{augodefunc_forward.1} parent=0 // pred_fallthru
    _

</llo_original>
